<compile_context>
chip_gen: v7x
topology: tpu7x:2x2x1
jax: 0.10.0
libtpu: 0.0.40
codegen_flags: <defaults>
</compile_context>

<pallas_src>
import functools

import numpy as np

import jax
import jax.numpy as jnp
from jax import lax
from jax.experimental import pallas as pl
from jax.experimental.pallas import tpu as pltpu


C_PAD = 128       # lane-dense channel padding for all activations / weights
BN_EPS = 1e-5


# ----------------------------------------------------------------------------
# Fused Pallas kernel: the entire network, G graphs per grid step
# ----------------------------------------------------------------------------
def _make_fused_kernel(block_downsample, graphs_per_step):
    """Build the fused kernel.

    block_downsample: static tuple of bools (one per residual block).  The
    layer schedule and the per-step graph loop are unrolled at trace time, so
    the stacked weight tensor is indexed with static indices only.
    """
    G = graphs_per_step

    def kernel(a_ref, x_ref, w_ref, b_ref, g_ref, be_ref, o_ref):

        def conv(h, a, li, do_bn, do_relu):
            # GCNConv: A_hat @ X @ W (+ b).  f32 adjacency matmul (K is tiny),
            # bf16 MXU operands for the channel matmul with f32 accumulation.
            ax = jnp.dot(a, h, preferred_element_type=jnp.float32)
            y = jnp.dot(ax.astype(jnp.bfloat16), w_ref[li],
                        preferred_element_type=jnp.float32)
            if do_bn:
                # Train-mode BatchNorm1d, one-pass stats + folded scale/shift.
                # The conv bias is skipped here: mean subtraction cancels it.
                mu = jnp.mean(y, axis=0, keepdims=True)
                msq = jnp.mean(y * y, axis=0, keepdims=True)
                var = jnp.maximum(msq - mu * mu, 0.0)     # biased variance
                scale = g_ref[li] * lax.rsqrt(var + BN_EPS)
                shift = be_ref[li] - mu * scale
                y = y * scale + shift
            else:
                y = y + b_ref[li]
            if do_relu:
                y = jnp.maximum(y, 0.0)
            return y

        def forward_one(a, x):
            # data.x = F.normalize(x, p=2, dim=0): per-column L2 normalization.
            norm = jnp.sqrt(jnp.sum(x * x, axis=0, keepdims=True))
            x = x / jnp.maximum(norm, 1e-12)

            li = 0
            # out = relu(conv1(x))         (bias used, no BN)
            x = conv(x, a, li, do_bn=False, do_relu=True)
            li += 1
            # residual blocks (schedule unrolled statically)
            for has_ds in block_downsample:
                identity = x
                h = conv(x, a, li, do_bn=True, do_relu=True)
                li += 1
                h = conv(h, a, li, do_bn=True, do_relu=True)
                li += 1
                if has_ds:
                    identity = conv(identity, a, li, do_bn=True, do_relu=False)
                    li += 1
                x = h + identity            # ReLU before add (matches reference)
            # final conv2 (bias, no BN/ReLU), then global_mean_pool over nodes.
            x = conv(x, a, li, do_bn=False, do_relu=False)
            return jnp.mean(x, axis=0, keepdims=True)     # (1, C_PAD)

        # Static unroll over the G graphs of this grid step (G is small);
        # store one lane/sublane-dense (G, C_PAD) slab.
        rows = [forward_one(a_ref[g], x_ref[g]) for g in range(G)]
        o_ref[0, :, :] = jnp.concatenate(rows, axis=0)

    return kernel


@functools.lru_cache(maxsize=None)
def _build_pallas_call(num_layers, num_graphs, graphs_per_step, num_nodes,
                       block_downsample):
    assert num_graphs % graphs_per_step == 0
    G = graphs_per_step
    T = num_graphs // G
    N = num_nodes
    L = num_layers

    kernel = _make_fused_kernel(block_downsample, G)

    grid_spec = pltpu.PrefetchScalarGridSpec(
        num_scalar_prefetch=0,
        grid=(T,),
        in_specs=[
            # per-step graph data (pipelined across the grid)
            pl.BlockSpec((G, N, N), lambda t: (t, 0, 0)),         # A_hat
            pl.BlockSpec((G, N, C_PAD), lambda t: (t, 0, 0)),     # node features
            # network params: constant index map -> DMA'd once, VMEM-resident
            pl.BlockSpec((L, C_PAD, C_PAD), lambda t: (0, 0, 0)),  # W (bf16)
            pl.BlockSpec((L, 1, C_PAD), lambda t: (0, 0, 0)),      # bias
            pl.BlockSpec((L, 1, C_PAD), lambda t: (0, 0, 0)),      # gamma
            pl.BlockSpec((L, 1, C_PAD), lambda t: (0, 0, 0)),      # beta
        ],
        out_specs=pl.BlockSpec((1, G, C_PAD), lambda t: (t, 0, 0)),
    )

    return pl.pallas_call(
        kernel,
        out_shape=jax.ShapeDtypeStruct((T, G, C_PAD), jnp.float32),
        grid_spec=grid_spec,
        # Parallel graph axis -> sharded across both TensorCores on v7x.
        compiler_params=pltpu.CompilerParams(
            dimension_semantics=("parallel",)),
    )


@functools.partial(jax.jit,
                   static_argnames=("block_downsample", "graphs_per_step"))
def resnet_gcn_forward(a_hat, x_padded, w, b, gamma, beta, *,
                       block_downsample, graphs_per_step):
    """Batched forward: a_hat (B,N,N), x_padded (B,N,128) -> (B,128)."""
    B, N, _ = a_hat.shape
    L = w.shape[0]
    call = _build_pallas_call(L, B, graphs_per_step, N, block_downsample)
    out = call(a_hat, x_padded, w, b, gamma, beta)
    return out.reshape(B, C_PAD)


# ----------------------------------------------------------------------------
# Graph normalization + parameter construction (plain JAX host-side glue)
# ----------------------------------------------------------------------------
def build_norm_adj(edges, num_nodes):
    """Dense A_hat = D^{-1/2}(A + I)D^{-1/2}, PyG gcn_norm convention.

    edges: (E, 2) int array of (source, target) pairs; A_hat[target, source].
    """
    a = jnp.zeros((num_nodes, num_nodes), jnp.float32)
    a = a.at[edges[:, 1], edges[:, 0]].add(1.0)      # rows = target, cols = source
    a = a + jnp.eye(num_nodes, dtype=jnp.float32)    # add self loops
    deg = jnp.sum(a, axis=1)                         # degree incl. self loop
    dinv = lax.rsqrt(deg)
    return a * dinv[:, None] * dinv[None, :]


def _glorot(key, shape):
    fan_in, fan_out = shape
    limit = (6.0 / (fan_in + fan_out)) ** 0.5
    return jax.random.uniform(key, shape, jnp.float32, -limit, limit)


def make_resnet_gcn_params(key, in_channels, hidden_channels, out_channels):
    """Per-layer params (true shapes) in execution order + downsample flags."""
    layers = []
    block_downsample = []

    def add_layer(k, c_in, c_out, with_bn):
        kw, kg, kb = jax.random.split(k, 3)
        layers.append(dict(
            w=_glorot(kw, (c_in, c_out)),
            b=jnp.zeros((c_out,), jnp.float32),
            gamma=(1.0 + 0.1 * jax.random.normal(kg, (c_out,), jnp.float32))
            if with_bn else jnp.ones((c_out,), jnp.float32),
            beta=(0.1 * jax.random.normal(kb, (c_out,), jnp.float32))
            if with_bn else jnp.zeros((c_out,), jnp.float32),
        ))

    max_layers = 2 + 3 * max(len(hidden_channels) - 1, 0)
    keys = jax.random.split(key, max_layers)
    ki = iter(keys)

    add_layer(next(ki), in_channels, hidden_channels[0], False)        # conv1
    for i in range(1, len(hidden_channels)):
        c_in, c_out = hidden_channels[i - 1], hidden_channels[i]
        add_layer(next(ki), c_in, c_out, True)                         # block conv1
        add_layer(next(ki), c_out, c_out, True)                        # block conv2
        has_ds = c_in != c_out
        if has_ds:
            add_layer(next(ki), c_in, c_out, True)                     # downsample
        block_downsample.append(has_ds)
    add_layer(next(ki), hidden_channels[-1], out_channels, False)      # final conv2
    return layers, tuple(block_downsample)


def pack_params(layers, c_pad=C_PAD):
    """Stack all layer params, zero-padded to 128 lanes. Weights -> bf16."""
    n_layers = len(layers)
    w = jnp.zeros((n_layers, c_pad, c_pad), jnp.float32)
    b = jnp.zeros((n_layers, 1, c_pad), jnp.float32)
    g = jnp.zeros((n_layers, 1, c_pad), jnp.float32)   # zeros in pad lanes keep them 0
    be = jnp.zeros((n_layers, 1, c_pad), jnp.float32)
    for i, lyr in enumerate(layers):
        c_in, c_out = lyr["w"].shape
        w = w.at[i, :c_in, :c_out].set(lyr["w"])
        b = b.at[i, 0, :c_out].set(lyr["b"])
        g = g.at[i, 0, :c_out].set(lyr["gamma"])
        be = be.at[i, 0, :c_out].set(lyr["beta"])
    return dict(w=w.astype(jnp.bfloat16), b=b, gamma=g, beta=be)


# ----------------------------------------------------------------------------
# Pure-JAX reference (numerical sanity check of the fused kernel, single graph)
# ----------------------------------------------------------------------------
def reference_forward(node_features, a_hat, layers, block_downsample):
    x = node_features.astype(jnp.float32)
    norm = jnp.sqrt(jnp.sum(x * x, axis=0, keepdims=True))
    x = x / jnp.maximum(norm, 1e-12)

    def conv(h, lyr, do_bn, do_relu):
        y = a_hat @ h @ lyr["w"] + lyr["b"]
        if do_bn:
            mu = jnp.mean(y, axis=0, keepdims=True)
            var = jnp.mean((y - mu) * (y - mu), axis=0, keepdims=True)
            y = (y - mu) * lax.rsqrt(var + BN_EPS) * lyr["gamma"] + lyr["beta"]
        if do_relu:
            y = jnp.maximum(y, 0.0)
        return y

    li = 0
    x = conv(x, layers[li], False, True); li += 1
    for has_ds in block_downsample:
        identity = x
        h = conv(x, layers[li], True, True); li += 1
        h = conv(h, layers[li], True, True); li += 1
        if has_ds:
            identity = conv(identity, layers[li], True, False); li += 1
        x = h + identity
    x = conv(x, layers[li], False, False); li += 1
    return jnp.mean(x, axis=0)


# ----------------------------------------------------------------------------
if __name__ == "__main__":
    key = jax.random.PRNGKey(0)
    k_x, k_p = jax.random.split(key)

    # Small shapes consistent with the module's forward.
    num_nodes = 16
    in_channels = 12
    hidden_channels = [32, 32, 64, 64]   # blocks: 32->32, 32->64 (downsample), 64->64
    out_channels = 128
    num_graphs = 8                        # batch of independent graphs
    graphs_per_step = 4                   # G graphs per grid step -> (4,128) output slab

    layers, block_downsample = make_resnet_gcn_params(
        k_p, in_channels, hidden_channels, out_channels)
    packed = pack_params(layers)

    # Per-graph adjacency: bidirectional ring + one graph-specific chord.
    src = jnp.arange(num_nodes, dtype=jnp.int32)
    dst = (src + 1) % num_nodes
    ring = jnp.concatenate(
        [jnp.stack([src, dst], axis=1), jnp.stack([dst, src], axis=1)], axis=0)

    a_hats = []
    for g in range(num_graphs):
        u, v = g % num_nodes, (g + 5) % num_nodes
        extra = jnp.array([[u, v], [v, u]], jnp.int32)
        edges_g = jnp.concatenate([ring, extra], axis=0)
        a_hats.append(build_norm_adj(edges_g, num_nodes))
    a_hat = jnp.stack(a_hats, axis=0)                         # (B, N, N)

    node_features = jax.random.normal(
        k_x, (num_graphs, num_nodes, in_channels), jnp.float32)
    x_padded = jnp.zeros((num_graphs, num_nodes, C_PAD), jnp.float32)
    x_padded = x_padded.at[:, :, :in_channels].set(node_features)

    out_pad = resnet_gcn_forward(
        a_hat, x_padded, packed["w"], packed["b"], packed["gamma"], packed["beta"],
        block_downsample=block_downsample, graphs_per_step=graphs_per_step)
    out_pad = jax.block_until_ready(out_pad)
    assert out_pad.shape == (num_graphs, C_PAD), out_pad.shape
    out = out_pad[:, :out_channels]                            # per-graph .squeeze()
    assert bool(jnp.all(jnp.isfinite(out)))

    # Sanity-check every graph against a pure-JAX f32 reference (loose tol:
    # kernel uses bf16 MXU operands for the channel matmuls).
    for g in range(num_graphs):
        ref = reference_forward(node_features[g], a_hat[g], layers, block_downsample)
        np.testing.assert_allclose(
            np.asarray(out[g]), np.asarray(ref), rtol=5e-2, atol=5e-2)

    print("KERNEL_OK")
</pallas_src>

<mosaic_0001>
module attributes {stable_mosaic.version = 11 : i64} {
  func.func @kernel(%arg0: i32, %arg1: memref<4x16x16xf32, #tpu.memory_space<vmem>>, %arg2: memref<4x16x128xf32, #tpu.memory_space<vmem>>, %arg3: memref<9x128x128xbf16, #tpu.memory_space<vmem>>, %arg4: memref<9x1x128xf32, #tpu.memory_space<vmem>>, %arg5: memref<9x1x128xf32, #tpu.memory_space<vmem>>, %arg6: memref<9x1x128xf32, #tpu.memory_space<vmem>>, %arg7: memref<1x4x128xf32, #tpu.memory_space<vmem>>) attributes {dimension_semantics = [#tpu.dimension_semantics<parallel>], iteration_bounds = array<i64: 2>, scalar_prefetch = 0 : i64, scratch_operands = 0 : i64, tpu.core_type = #tpu.core_type<tc>, window_params = [{transform_indices = @transform_0, window_bounds = array<i64: 4, 16, 16>}, {transform_indices = @transform_1, window_bounds = array<i64: 4, 16, 128>}, {pipeline_mode = #tpu.pipeline_mode<synchronous>, transform_indices = @transform_2, window_bounds = array<i64: 9, 128, 128>}, {pipeline_mode = #tpu.pipeline_mode<synchronous>, transform_indices = @transform_3, window_bounds = array<i64: 9, 1, 128>}, {pipeline_mode = #tpu.pipeline_mode<synchronous>, transform_indices = @transform_4, window_bounds = array<i64: 9, 1, 128>}, {pipeline_mode = #tpu.pipeline_mode<synchronous>, transform_indices = @transform_5, window_bounds = array<i64: 9, 1, 128>}, {transform_indices = @transform_6, window_bounds = array<i64: 1, 4, 128>}]} {
    %c0 = arith.constant 0 : index
    %c0_0 = arith.constant 0 : index
    %c0_1 = arith.constant 0 : index
    %0 = vector.load %arg1[%c0, %c0_0, %c0_1] : memref<4x16x16xf32, #tpu.memory_space<vmem>>, vector<1x16x16xf32>
    %1 = vector.shape_cast %0 : vector<1x16x16xf32> to vector<16x16xf32>
    %c0_2 = arith.constant 0 : index
    %c0_3 = arith.constant 0 : index
    %c0_4 = arith.constant 0 : index
    %2 = vector.load %arg2[%c0_2, %c0_3, %c0_4] : memref<4x16x128xf32, #tpu.memory_space<vmem>>, vector<1x16x128xf32>
    %3 = vector.shape_cast %2 : vector<1x16x128xf32> to vector<16x128xf32>
    %4 = arith.mulf %3, %3 : vector<16x128xf32>
    %cst = arith.constant dense<0.000000e+00> : vector<128xf32>
    %5 = vector.multi_reduction <add>, %4, %cst [0] : vector<16x128xf32> to vector<128xf32>
    %6 = vector.shape_cast %5 : vector<128xf32> to vector<1x128xf32>
    %7 = math.sqrt %6 : vector<1x128xf32>
    %cst_5 = arith.constant 9.99999996E-13 : f32
    %8 = vector.broadcast %cst_5 : f32 to vector<1x128xf32>
    %9 = arith.maximumf %7, %8 : vector<1x128xf32>
    %10 = vector.broadcast %9 : vector<1x128xf32> to vector<16x128xf32>
    %11 = arith.divf %3, %10 : vector<16x128xf32>
    %cst_6 = arith.constant dense<0.000000e+00> : vector<16x128xf32>
    %12 = tpu.matmul %1, %11, %cst_6 {dimension_numbers = #tpu.dot_dimension_numbers<[1], [0], [0], [1], [0, 0, 1, 1], [], []>} : vector<16x16xf32>, vector<16x128xf32>, vector<16x128xf32> -> vector<16x128xf32>
    %13 = arith.truncf %12 : vector<16x128xf32> to vector<16x128xbf16>
    %c0_7 = arith.constant 0 : index
    %c0_8 = arith.constant 0 : index
    %c0_9 = arith.constant 0 : index
    %14 = vector.load %arg3[%c0_7, %c0_8, %c0_9] : memref<9x128x128xbf16, #tpu.memory_space<vmem>>, vector<1x128x128xbf16>
    %15 = vector.shape_cast %14 : vector<1x128x128xbf16> to vector<128x128xbf16>
    %cst_10 = arith.constant dense<0.000000e+00> : vector<16x128xf32>
    %16 = tpu.matmul %13, %15, %cst_10 {dimension_numbers = #tpu.dot_dimension_numbers<[1], [0], [0], [1], [0, 0, 1, 1], [], []>} : vector<16x128xbf16>, vector<128x128xbf16>, vector<16x128xf32> -> vector<16x128xf32>
    %c0_11 = arith.constant 0 : index
    %c0_12 = arith.constant 0 : index
    %c0_13 = arith.constant 0 : index
    %17 = vector.load %arg4[%c0_11, %c0_12, %c0_13] : memref<9x1x128xf32, #tpu.memory_space<vmem>>, vector<1x1x128xf32>
    %18 = vector.shape_cast %17 : vector<1x1x128xf32> to vector<1x128xf32>
    %19 = vector.broadcast %18 : vector<1x128xf32> to vector<16x128xf32>
    %20 = arith.addf %16, %19 : vector<16x128xf32>
    %cst_14 = arith.constant 0.000000e+00 : f32
    %21 = vector.broadcast %cst_14 : f32 to vector<16x128xf32>
    %22 = arith.maximumf %20, %21 : vector<16x128xf32>
    %cst_15 = arith.constant dense<0.000000e+00> : vector<16x128xf32>
    %23 = tpu.matmul %1, %22, %cst_15 {dimension_numbers = #tpu.dot_dimension_numbers<[1], [0], [0], [1], [0, 0, 1, 1], [], []>} : vector<16x16xf32>, vector<16x128xf32>, vector<16x128xf32> -> vector<16x128xf32>
    %24 = arith.truncf %23 : vector<16x128xf32> to vector<16x128xbf16>
    %c1 = arith.constant 1 : index
    %c0_16 = arith.constant 0 : index
    %c0_17 = arith.constant 0 : index
    %25 = vector.load %arg3[%c1, %c0_16, %c0_17] : memref<9x128x128xbf16, #tpu.memory_space<vmem>>, vector<1x128x128xbf16>
    %26 = vector.shape_cast %25 : vector<1x128x128xbf16> to vector<128x128xbf16>
    %cst_18 = arith.constant dense<0.000000e+00> : vector<16x128xf32>
    %27 = tpu.matmul %24, %26, %cst_18 {dimension_numbers = #tpu.dot_dimension_numbers<[1], [0], [0], [1], [0, 0, 1, 1], [], []>} : vector<16x128xbf16>, vector<128x128xbf16>, vector<16x128xf32> -> vector<16x128xf32>
    %cst_19 = arith.constant dense<0.000000e+00> : vector<128xf32>
    %28 = vector.multi_reduction <add>, %27, %cst_19 [0] : vector<16x128xf32> to vector<128xf32>
    %29 = vector.shape_cast %28 : vector<128xf32> to vector<1x128xf32>
    %cst_20 = arith.constant 1.600000e+01 : f32
    %30 = vector.broadcast %cst_20 : f32 to vector<1x128xf32>
    %31 = arith.divf %29, %30 : vector<1x128xf32>
    %32 = arith.mulf %27, %27 : vector<16x128xf32>
    %cst_21 = arith.constant dense<0.000000e+00> : vector<128xf32>
    %33 = vector.multi_reduction <add>, %32, %cst_21 [0] : vector<16x128xf32> to vector<128xf32>
    %34 = vector.shape_cast %33 : vector<128xf32> to vector<1x128xf32>
    %cst_22 = arith.constant 1.600000e+01 : f32
    %35 = vector.broadcast %cst_22 : f32 to vector<1x128xf32>
    %36 = arith.divf %34, %35 : vector<1x128xf32>
    %37 = arith.mulf %31, %31 : vector<1x128xf32>
    %38 = arith.subf %36, %37 : vector<1x128xf32>
    %cst_23 = arith.constant 0.000000e+00 : f32
    %39 = vector.broadcast %cst_23 : f32 to vector<1x128xf32>
    %40 = arith.maximumf %38, %39 : vector<1x128xf32>
    %c1_24 = arith.constant 1 : index
    %c0_25 = arith.constant 0 : index
    %c0_26 = arith.constant 0 : index
    %41 = vector.load %arg5[%c1_24, %c0_25, %c0_26] : memref<9x1x128xf32, #tpu.memory_space<vmem>>, vector<1x1x128xf32>
    %42 = vector.shape_cast %41 : vector<1x1x128xf32> to vector<1x128xf32>
    %cst_27 = arith.constant 9.99999974E-6 : f32
    %43 = vector.broadcast %cst_27 : f32 to vector<1x128xf32>
    %44 = arith.addf %40, %43 : vector<1x128xf32>
    %45 = math.rsqrt %44 : vector<1x128xf32>
    %46 = arith.mulf %42, %45 : vector<1x128xf32>
    %c1_28 = arith.constant 1 : index
    %c0_29 = arith.constant 0 : index
    %c0_30 = arith.constant 0 : index
    %47 = vector.load %arg6[%c1_28, %c0_29, %c0_30] : memref<9x1x128xf32, #tpu.memory_space<vmem>>, vector<1x1x128xf32>
    %48 = vector.shape_cast %47 : vector<1x1x128xf32> to vector<1x128xf32>
    %49 = arith.mulf %31, %46 : vector<1x128xf32>
    %50 = arith.subf %48, %49 : vector<1x128xf32>
    %51 = vector.broadcast %46 : vector<1x128xf32> to vector<16x128xf32>
    %52 = arith.mulf %27, %51 : vector<16x128xf32>
    %53 = vector.broadcast %50 : vector<1x128xf32> to vector<16x128xf32>
    %54 = arith.addf %52, %53 : vector<16x128xf32>
    %cst_31 = arith.constant 0.000000e+00 : f32
    %55 = vector.broadcast %cst_31 : f32 to vector<16x128xf32>
    %56 = arith.maximumf %54, %55 : vector<16x128xf32>
    %cst_32 = arith.constant dense<0.000000e+00> : vector<16x128xf32>
    %57 = tpu.matmul %1, %56, %cst_32 {dimension_numbers = #tpu.dot_dimension_numbers<[1], [0], [0], [1], [0, 0, 1, 1], [], []>} : vector<16x16xf32>, vector<16x128xf32>, vector<16x128xf32> -> vector<16x128xf32>
    %58 = arith.truncf %57 : vector<16x128xf32> to vector<16x128xbf16>
    %c2 = arith.constant 2 : index
    %c0_33 = arith.constant 0 : index
    %c0_34 = arith.constant 0 : index
    %59 = vector.load %arg3[%c2, %c0_33, %c0_34] : memref<9x128x128xbf16, #tpu.memory_space<vmem>>, vector<1x128x128xbf16>
    %60 = vector.shape_cast %59 : vector<1x128x128xbf16> to vector<128x128xbf16>
    %cst_35 = arith.constant dense<0.000000e+00> : vector<16x128xf32>
    %61 = tpu.matmul %58, %60, %cst_35 {dimension_numbers = #tpu.dot_dimension_numbers<[1], [0], [0], [1], [0, 0, 1, 1], [], []>} : vector<16x128xbf16>, vector<128x128xbf16>, vector<16x128xf32> -> vector<16x128xf32>
    %cst_36 = arith.constant dense<0.000000e+00> : vector<128xf32>
    %62 = vector.multi_reduction <add>, %61, %cst_36 [0] : vector<16x128xf32> to vector<128xf32>
    %63 = vector.shape_cast %62 : vector<128xf32> to vector<1x128xf32>
    %cst_37 = arith.constant 1.600000e+01 : f32
    %64 = vector.broadcast %cst_37 : f32 to vector<1x128xf32>
    %65 = arith.divf %63, %64 : vector<1x128xf32>
    %66 = arith.mulf %61, %61 : vector<16x128xf32>
    %cst_38 = arith.constant dense<0.000000e+00> : vector<128xf32>
    %67 = vector.multi_reduction <add>, %66, %cst_38 [0] : vector<16x128xf32> to vector<128xf32>
    %68 = vector.shape_cast %67 : vector<128xf32> to vector<1x128xf32>
    %cst_39 = arith.constant 1.600000e+01 : f32
    %69 = vector.broadcast %cst_39 : f32 to vector<1x128xf32>
    %70 = arith.divf %68, %69 : vector<1x128xf32>
    %71 = arith.mulf %65, %65 : vector<1x128xf32>
    %72 = arith.subf %70, %71 : vector<1x128xf32>
    %cst_40 = arith.constant 0.000000e+00 : f32
    %73 = vector.broadcast %cst_40 : f32 to vector<1x128xf32>
    %74 = arith.maximumf %72, %73 : vector<1x128xf32>
    %c2_41 = arith.constant 2 : index
    %c0_42 = arith.constant 0 : index
    %c0_43 = arith.constant 0 : index
    %75 = vector.load %arg5[%c2_41, %c0_42, %c0_43] : memref<9x1x128xf32, #tpu.memory_space<vmem>>, vector<1x1x128xf32>
    %76 = vector.shape_cast %75 : vector<1x1x128xf32> to vector<1x128xf32>
    %cst_44 = arith.constant 9.99999974E-6 : f32
    %77 = vector.broadcast %cst_44 : f32 to vector<1x128xf32>
    %78 = arith.addf %74, %77 : vector<1x128xf32>
    %79 = math.rsqrt %78 : vector<1x128xf32>
    %80 = arith.mulf %76, %79 : vector<1x128xf32>
    %c2_45 = arith.constant 2 : index
    %c0_46 = arith.constant 0 : index
    %c0_47 = arith.constant 0 : index
    %81 = vector.load %arg6[%c2_45, %c0_46, %c0_47] : memref<9x1x128xf32, #tpu.memory_space<vmem>>, vector<1x1x128xf32>
    %82 = vector.shape_cast %81 : vector<1x1x128xf32> to vector<1x128xf32>
    %83 = arith.mulf %65, %80 : vector<1x128xf32>
    %84 = arith.subf %82, %83 : vector<1x128xf32>
    %85 = vector.broadcast %80 : vector<1x128xf32> to vector<16x128xf32>
    %86 = arith.mulf %61, %85 : vector<16x128xf32>
    %87 = vector.broadcast %84 : vector<1x128xf32> to vector<16x128xf32>
    %88 = arith.addf %86, %87 : vector<16x128xf32>
    %cst_48 = arith.constant 0.000000e+00 : f32
    %89 = vector.broadcast %cst_48 : f32 to vector<16x128xf32>
    %90 = arith.maximumf %88, %89 : vector<16x128xf32>
    %91 = arith.addf %90, %22 : vector<16x128xf32>
    %cst_49 = arith.constant dense<0.000000e+00> : vector<16x128xf32>
    %92 = tpu.matmul %1, %91, %cst_49 {dimension_numbers = #tpu.dot_dimension_numbers<[1], [0], [0], [1], [0, 0, 1, 1], [], []>} : vector<16x16xf32>, vector<16x128xf32>, vector<16x128xf32> -> vector<16x128xf32>
    %93 = arith.truncf %92 : vector<16x128xf32> to vector<16x128xbf16>
    %c3 = arith.constant 3 : index
    %c0_50 = arith.constant 0 : index
    %c0_51 = arith.constant 0 : index
    %94 = vector.load %arg3[%c3, %c0_50, %c0_51] : memref<9x128x128xbf16, #tpu.memory_space<vmem>>, vector<1x128x128xbf16>
    %95 = vector.shape_cast %94 : vector<1x128x128xbf16> to vector<128x128xbf16>
    %cst_52 = arith.constant dense<0.000000e+00> : vector<16x128xf32>
    %96 = tpu.matmul %93, %95, %cst_52 {dimension_numbers = #tpu.dot_dimension_numbers<[1], [0], [0], [1], [0, 0, 1, 1], [], []>} : vector<16x128xbf16>, vector<128x128xbf16>, vector<16x128xf32> -> vector<16x128xf32>
    %cst_53 = arith.constant dense<0.000000e+00> : vector<128xf32>
    %97 = vector.multi_reduction <add>, %96, %cst_53 [0] : vector<16x128xf32> to vector<128xf32>
    %98 = vector.shape_cast %97 : vector<128xf32> to vector<1x128xf32>
    %cst_54 = arith.constant 1.600000e+01 : f32
    %99 = vector.broadcast %cst_54 : f32 to vector<1x128xf32>
    %100 = arith.divf %98, %99 : vector<1x128xf32>
    %101 = arith.mulf %96, %96 : vector<16x128xf32>
    %cst_55 = arith.constant dense<0.000000e+00> : vector<128xf32>
    %102 = vector.multi_reduction <add>, %101, %cst_55 [0] : vector<16x128xf32> to vector<128xf32>
    %103 = vector.shape_cast %102 : vector<128xf32> to vector<1x128xf32>
    %cst_56 = arith.constant 1.600000e+01 : f32
    %104 = vector.broadcast %cst_56 : f32 to vector<1x128xf32>
    %105 = arith.divf %103, %104 : vector<1x128xf32>
    %106 = arith.mulf %100, %100 : vector<1x128xf32>
    %107 = arith.subf %105, %106 : vector<1x128xf32>
    %cst_57 = arith.constant 0.000000e+00 : f32
    %108 = vector.broadcast %cst_57 : f32 to vector<1x128xf32>
    %109 = arith.maximumf %107, %108 : vector<1x128xf32>
    %c3_58 = arith.constant 3 : index
    %c0_59 = arith.constant 0 : index
    %c0_60 = arith.constant 0 : index
    %110 = vector.load %arg5[%c3_58, %c0_59, %c0_60] : memref<9x1x128xf32, #tpu.memory_space<vmem>>, vector<1x1x128xf32>
    %111 = vector.shape_cast %110 : vector<1x1x128xf32> to vector<1x128xf32>
    %cst_61 = arith.constant 9.99999974E-6 : f32
    %112 = vector.broadcast %cst_61 : f32 to vector<1x128xf32>
    %113 = arith.addf %109, %112 : vector<1x128xf32>
    %114 = math.rsqrt %113 : vector<1x128xf32>
    %115 = arith.mulf %111, %114 : vector<1x128xf32>
    %c3_62 = arith.constant 3 : index
    %c0_63 = arith.constant 0 : index
    %c0_64 = arith.constant 0 : index
    %116 = vector.load %arg6[%c3_62, %c0_63, %c0_64] : memref<9x1x128xf32, #tpu.memory_space<vmem>>, vector<1x1x128xf32>
    %117 = vector.shape_cast %116 : vector<1x1x128xf32> to vector<1x128xf32>
    %118 = arith.mulf %100, %115 : vector<1x128xf32>
    %119 = arith.subf %117, %118 : vector<1x128xf32>
    %120 = vector.broadcast %115 : vector<1x128xf32> to vector<16x128xf32>
    %121 = arith.mulf %96, %120 : vector<16x128xf32>
    %122 = vector.broadcast %119 : vector<1x128xf32> to vector<16x128xf32>
    %123 = arith.addf %121, %122 : vector<16x128xf32>
    %cst_65 = arith.constant 0.000000e+00 : f32
    %124 = vector.broadcast %cst_65 : f32 to vector<16x128xf32>
    %125 = arith.maximumf %123, %124 : vector<16x128xf32>
    %cst_66 = arith.constant dense<0.000000e+00> : vector<16x128xf32>
    %126 = tpu.matmul %1, %125, %cst_66 {dimension_numbers = #tpu.dot_dimension_numbers<[1], [0], [0], [1], [0, 0, 1, 1], [], []>} : vector<16x16xf32>, vector<16x128xf32>, vector<16x128xf32> -> vector<16x128xf32>
    %127 = arith.truncf %126 : vector<16x128xf32> to vector<16x128xbf16>
    %c4 = arith.constant 4 : index
    %c0_67 = arith.constant 0 : index
    %c0_68 = arith.constant 0 : index
    %128 = vector.load %arg3[%c4, %c0_67, %c0_68] : memref<9x128x128xbf16, #tpu.memory_space<vmem>>, vector<1x128x128xbf16>
    %129 = vector.shape_cast %128 : vector<1x128x128xbf16> to vector<128x128xbf16>
    %cst_69 = arith.constant dense<0.000000e+00> : vector<16x128xf32>
    %130 = tpu.matmul %127, %129, %cst_69 {dimension_numbers = #tpu.dot_dimension_numbers<[1], [0], [0], [1], [0, 0, 1, 1], [], []>} : vector<16x128xbf16>, vector<128x128xbf16>, vector<16x128xf32> -> vector<16x128xf32>
    %cst_70 = arith.constant dense<0.000000e+00> : vector<128xf32>
    %131 = vector.multi_reduction <add>, %130, %cst_70 [0] : vector<16x128xf32> to vector<128xf32>
    %132 = vector.shape_cast %131 : vector<128xf32> to vector<1x128xf32>
    %cst_71 = arith.constant 1.600000e+01 : f32
    %133 = vector.broadcast %cst_71 : f32 to vector<1x128xf32>
    %134 = arith.divf %132, %133 : vector<1x128xf32>
    %135 = arith.mulf %130, %130 : vector<16x128xf32>
    %cst_72 = arith.constant dense<0.000000e+00> : vector<128xf32>
    %136 = vector.multi_reduction <add>, %135, %cst_72 [0] : vector<16x128xf32> to vector<128xf32>
    %137 = vector.shape_cast %136 : vector<128xf32> to vector<1x128xf32>
    %cst_73 = arith.constant 1.600000e+01 : f32
    %138 = vector.broadcast %cst_73 : f32 to vector<1x128xf32>
    %139 = arith.divf %137, %138 : vector<1x128xf32>
    %140 = arith.mulf %134, %134 : vector<1x128xf32>
    %141 = arith.subf %139, %140 : vector<1x128xf32>
    %cst_74 = arith.constant 0.000000e+00 : f32
    %142 = vector.broadcast %cst_74 : f32 to vector<1x128xf32>
    %143 = arith.maximumf %141, %142 : vector<1x128xf32>
    %c4_75 = arith.constant 4 : index
    %c0_76 = arith.constant 0 : index
    %c0_77 = arith.constant 0 : index
    %144 = vector.load %arg5[%c4_75, %c0_76, %c0_77] : memref<9x1x128xf32, #tpu.memory_space<vmem>>, vector<1x1x128xf32>
    %145 = vector.shape_cast %144 : vector<1x1x128xf32> to vector<1x128xf32>
    %cst_78 = arith.constant 9.99999974E-6 : f32
    %146 = vector.broadcast %cst_78 : f32 to vector<1x128xf32>
    %147 = arith.addf %143, %146 : vector<1x128xf32>
    %148 = math.rsqrt %147 : vector<1x128xf32>
    %149 = arith.mulf %145, %148 : vector<1x128xf32>
    %c4_79 = arith.constant 4 : index
    %c0_80 = arith.constant 0 : index
    %c0_81 = arith.constant 0 : index
    %150 = vector.load %arg6[%c4_79, %c0_80, %c0_81] : memref<9x1x128xf32, #tpu.memory_space<vmem>>, vector<1x1x128xf32>
    %151 = vector.shape_cast %150 : vector<1x1x128xf32> to vector<1x128xf32>
    %152 = arith.mulf %134, %149 : vector<1x128xf32>
    %153 = arith.subf %151, %152 : vector<1x128xf32>
    %154 = vector.broadcast %149 : vector<1x128xf32> to vector<16x128xf32>
    %155 = arith.mulf %130, %154 : vector<16x128xf32>
    %156 = vector.broadcast %153 : vector<1x128xf32> to vector<16x128xf32>
    %157 = arith.addf %155, %156 : vector<16x128xf32>
    %cst_82 = arith.constant 0.000000e+00 : f32
    %158 = vector.broadcast %cst_82 : f32 to vector<16x128xf32>
    %159 = arith.maximumf %157, %158 : vector<16x128xf32>
    %cst_83 = arith.constant dense<0.000000e+00> : vector<16x128xf32>
    %160 = tpu.matmul %1, %91, %cst_83 {dimension_numbers = #tpu.dot_dimension_numbers<[1], [0], [0], [1], [0, 0, 1, 1], [], []>} : vector<16x16xf32>, vector<16x128xf32>, vector<16x128xf32> -> vector<16x128xf32>
    %161 = arith.truncf %160 : vector<16x128xf32> to vector<16x128xbf16>
    %c5 = arith.constant 5 : index
    %c0_84 = arith.constant 0 : index
    %c0_85 = arith.constant 0 : index
    %162 = vector.load %arg3[%c5, %c0_84, %c0_85] : memref<9x128x128xbf16, #tpu.memory_space<vmem>>, vector<1x128x128xbf16>
    %163 = vector.shape_cast %162 : vector<1x128x128xbf16> to vector<128x128xbf16>
    %cst_86 = arith.constant dense<0.000000e+00> : vector<16x128xf32>
    %164 = tpu.matmul %161, %163, %cst_86 {dimension_numbers = #tpu.dot_dimension_numbers<[1], [0], [0], [1], [0, 0, 1, 1], [], []>} : vector<16x128xbf16>, vector<128x128xbf16>, vector<16x128xf32> -> vector<16x128xf32>
    %cst_87 = arith.constant dense<0.000000e+00> : vector<128xf32>
    %165 = vector.multi_reduction <add>, %164, %cst_87 [0] : vector<16x128xf32> to vector<128xf32>
    %166 = vector.shape_cast %165 : vector<128xf32> to vector<1x128xf32>
    %cst_88 = arith.constant 1.600000e+01 : f32
    %167 = vector.broadcast %cst_88 : f32 to vector<1x128xf32>
    %168 = arith.divf %166, %167 : vector<1x128xf32>
    %169 = arith.mulf %164, %164 : vector<16x128xf32>
    %cst_89 = arith.constant dense<0.000000e+00> : vector<128xf32>
    %170 = vector.multi_reduction <add>, %169, %cst_89 [0] : vector<16x128xf32> to vector<128xf32>
    %171 = vector.shape_cast %170 : vector<128xf32> to vector<1x128xf32>
    %cst_90 = arith.constant 1.600000e+01 : f32
    %172 = vector.broadcast %cst_90 : f32 to vector<1x128xf32>
    %173 = arith.divf %171, %172 : vector<1x128xf32>
    %174 = arith.mulf %168, %168 : vector<1x128xf32>
    %175 = arith.subf %173, %174 : vector<1x128xf32>
    %cst_91 = arith.constant 0.000000e+00 : f32
    %176 = vector.broadcast %cst_91 : f32 to vector<1x128xf32>
    %177 = arith.maximumf %175, %176 : vector<1x128xf32>
    %c5_92 = arith.constant 5 : index
    %c0_93 = arith.constant 0 : index
    %c0_94 = arith.constant 0 : index
    %178 = vector.load %arg5[%c5_92, %c0_93, %c0_94] : memref<9x1x128xf32, #tpu.memory_space<vmem>>, vector<1x1x128xf32>
    %179 = vector.shape_cast %178 : vector<1x1x128xf32> to vector<1x128xf32>
    %cst_95 = arith.constant 9.99999974E-6 : f32
    %180 = vector.broadcast %cst_95 : f32 to vector<1x128xf32>
    %181 = arith.addf %177, %180 : vector<1x128xf32>
    %182 = math.rsqrt %181 : vector<1x128xf32>
    %183 = arith.mulf %179, %182 : vector<1x128xf32>
    %c5_96 = arith.constant 5 : index
    %c0_97 = arith.constant 0 : index
    %c0_98 = arith.constant 0 : index
    %184 = vector.load %arg6[%c5_96, %c0_97, %c0_98] : memref<9x1x128xf32, #tpu.memory_space<vmem>>, vector<1x1x128xf32>
    %185 = vector.shape_cast %184 : vector<1x1x128xf32> to vector<1x128xf32>
    %186 = arith.mulf %168, %183 : vector<1x128xf32>
    %187 = arith.subf %185, %186 : vector<1x128xf32>
    %188 = vector.broadcast %183 : vector<1x128xf32> to vector<16x128xf32>
    %189 = arith.mulf %164, %188 : vector<16x128xf32>
    %190 = vector.broadcast %187 : vector<1x128xf32> to vector<16x128xf32>
    %191 = arith.addf %189, %190 : vector<16x128xf32>
    %192 = arith.addf %159, %191 : vector<16x128xf32>
    %cst_99 = arith.constant dense<0.000000e+00> : vector<16x128xf32>
    %193 = tpu.matmul %1, %192, %cst_99 {dimension_numbers = #tpu.dot_dimension_numbers<[1], [0], [0], [1], [0, 0, 1, 1], [], []>} : vector<16x16xf32>, vector<16x128xf32>, vector<16x128xf32> -> vector<16x128xf32>
    %194 = arith.truncf %193 : vector<16x128xf32> to vector<16x128xbf16>
    %c6 = arith.constant 6 : index
    %c0_100 = arith.constant 0 : index
    %c0_101 = arith.constant 0 : index
    %195 = vector.load %arg3[%c6, %c0_100, %c0_101] : memref<9x128x128xbf16, #tpu.memory_space<vmem>>, vector<1x128x128xbf16>
    %196 = vector.shape_cast %195 : vector<1x128x128xbf16> to vector<128x128xbf16>
    %cst_102 = arith.constant dense<0.000000e+00> : vector<16x128xf32>
    %197 = tpu.matmul %194, %196, %cst_102 {dimension_numbers = #tpu.dot_dimension_numbers<[1], [0], [0], [1], [0, 0, 1, 1], [], []>} : vector<16x128xbf16>, vector<128x128xbf16>, vector<16x128xf32> -> vector<16x128xf32>
    %cst_103 = arith.constant dense<0.000000e+00> : vector<128xf32>
    %198 = vector.multi_reduction <add>, %197, %cst_103 [0] : vector<16x128xf32> to vector<128xf32>
    %199 = vector.shape_cast %198 : vector<128xf32> to vector<1x128xf32>
    %cst_104 = arith.constant 1.600000e+01 : f32
    %200 = vector.broadcast %cst_104 : f32 to vector<1x128xf32>
    %201 = arith.divf %199, %200 : vector<1x128xf32>
    %202 = arith.mulf %197, %197 : vector<16x128xf32>
    %cst_105 = arith.constant dense<0.000000e+00> : vector<128xf32>
    %203 = vector.multi_reduction <add>, %202, %cst_105 [0] : vector<16x128xf32> to vector<128xf32>
    %204 = vector.shape_cast %203 : vector<128xf32> to vector<1x128xf32>
    %cst_106 = arith.constant 1.600000e+01 : f32
    %205 = vector.broadcast %cst_106 : f32 to vector<1x128xf32>
    %206 = arith.divf %204, %205 : vector<1x128xf32>
    %207 = arith.mulf %201, %201 : vector<1x128xf32>
    %208 = arith.subf %206, %207 : vector<1x128xf32>
    %cst_107 = arith.constant 0.000000e+00 : f32
    %209 = vector.broadcast %cst_107 : f32 to vector<1x128xf32>
    %210 = arith.maximumf %208, %209 : vector<1x128xf32>
    %c6_108 = arith.constant 6 : index
    %c0_109 = arith.constant 0 : index
    %c0_110 = arith.constant 0 : index
    %211 = vector.load %arg5[%c6_108, %c0_109, %c0_110] : memref<9x1x128xf32, #tpu.memory_space<vmem>>, vector<1x1x128xf32>
    %212 = vector.shape_cast %211 : vector<1x1x128xf32> to vector<1x128xf32>
    %cst_111 = arith.constant 9.99999974E-6 : f32
    %213 = vector.broadcast %cst_111 : f32 to vector<1x128xf32>
    %214 = arith.addf %210, %213 : vector<1x128xf32>
    %215 = math.rsqrt %214 : vector<1x128xf32>
    %216 = arith.mulf %212, %215 : vector<1x128xf32>
    %c6_112 = arith.constant 6 : index
    %c0_113 = arith.constant 0 : index
    %c0_114 = arith.constant 0 : index
    %217 = vector.load %arg6[%c6_112, %c0_113, %c0_114] : memref<9x1x128xf32, #tpu.memory_space<vmem>>, vector<1x1x128xf32>
    %218 = vector.shape_cast %217 : vector<1x1x128xf32> to vector<1x128xf32>
    %219 = arith.mulf %201, %216 : vector<1x128xf32>
    %220 = arith.subf %218, %219 : vector<1x128xf32>
    %221 = vector.broadcast %216 : vector<1x128xf32> to vector<16x128xf32>
    %222 = arith.mulf %197, %221 : vector<16x128xf32>
    %223 = vector.broadcast %220 : vector<1x128xf32> to vector<16x128xf32>
    %224 = arith.addf %222, %223 : vector<16x128xf32>
    %cst_115 = arith.constant 0.000000e+00 : f32
    %225 = vector.broadcast %cst_115 : f32 to vector<16x128xf32>
    %226 = arith.maximumf %224, %225 : vector<16x128xf32>
    %cst_116 = arith.constant dense<0.000000e+00> : vector<16x128xf32>
    %227 = tpu.matmul %1, %226, %cst_116 {dimension_numbers = #tpu.dot_dimension_numbers<[1], [0], [0], [1], [0, 0, 1, 1], [], []>} : vector<16x16xf32>, vector<16x128xf32>, vector<16x128xf32> -> vector<16x128xf32>
    %228 = arith.truncf %227 : vector<16x128xf32> to vector<16x128xbf16>
    %c7 = arith.constant 7 : index
    %c0_117 = arith.constant 0 : index
    %c0_118 = arith.constant 0 : index
    %229 = vector.load %arg3[%c7, %c0_117, %c0_118] : memref<9x128x128xbf16, #tpu.memory_space<vmem>>, vector<1x128x128xbf16>
    %230 = vector.shape_cast %229 : vector<1x128x128xbf16> to vector<128x128xbf16>
    %cst_119 = arith.constant dense<0.000000e+00> : vector<16x128xf32>
    %231 = tpu.matmul %228, %230, %cst_119 {dimension_numbers = #tpu.dot_dimension_numbers<[1], [0], [0], [1], [0, 0, 1, 1], [], []>} : vector<16x128xbf16>, vector<128x128xbf16>, vector<16x128xf32> -> vector<16x128xf32>
    %cst_120 = arith.constant dense<0.000000e+00> : vector<128xf32>
    %232 = vector.multi_reduction <add>, %231, %cst_120 [0] : vector<16x128xf32> to vector<128xf32>
    %233 = vector.shape_cast %232 : vector<128xf32> to vector<1x128xf32>
    %cst_121 = arith.constant 1.600000e+01 : f32
    %234 = vector.broadcast %cst_121 : f32 to vector<1x128xf32>
    %235 = arith.divf %233, %234 : vector<1x128xf32>
    %236 = arith.mulf %231, %231 : vector<16x128xf32>
    %cst_122 = arith.constant dense<0.000000e+00> : vector<128xf32>
    %237 = vector.multi_reduction <add>, %236, %cst_122 [0] : vector<16x128xf32> to vector<128xf32>
    %238 = vector.shape_cast %237 : vector<128xf32> to vector<1x128xf32>
    %cst_123 = arith.constant 1.600000e+01 : f32
    %239 = vector.broadcast %cst_123 : f32 to vector<1x128xf32>
    %240 = arith.divf %238, %239 : vector<1x128xf32>
    %241 = arith.mulf %235, %235 : vector<1x128xf32>
    %242 = arith.subf %240, %241 : vector<1x128xf32>
    %cst_124 = arith.constant 0.000000e+00 : f32
    %243 = vector.broadcast %cst_124 : f32 to vector<1x128xf32>
    %244 = arith.maximumf %242, %243 : vector<1x128xf32>
    %c7_125 = arith.constant 7 : index
    %c0_126 = arith.constant 0 : index
    %c0_127 = arith.constant 0 : index
    %245 = vector.load %arg5[%c7_125, %c0_126, %c0_127] : memref<9x1x128xf32, #tpu.memory_space<vmem>>, vector<1x1x128xf32>
    %246 = vector.shape_cast %245 : vector<1x1x128xf32> to vector<1x128xf32>
    %cst_128 = arith.constant 9.99999974E-6 : f32
    %247 = vector.broadcast %cst_128 : f32 to vector<1x128xf32>
    %248 = arith.addf %244, %247 : vector<1x128xf32>
    %249 = math.rsqrt %248 : vector<1x128xf32>
    %250 = arith.mulf %246, %249 : vector<1x128xf32>
    %c7_129 = arith.constant 7 : index
    %c0_130 = arith.constant 0 : index
    %c0_131 = arith.constant 0 : index
    %251 = vector.load %arg6[%c7_129, %c0_130, %c0_131] : memref<9x1x128xf32, #tpu.memory_space<vmem>>, vector<1x1x128xf32>
    %252 = vector.shape_cast %251 : vector<1x1x128xf32> to vector<1x128xf32>
    %253 = arith.mulf %235, %250 : vector<1x128xf32>
    %254 = arith.subf %252, %253 : vector<1x128xf32>
    %255 = vector.broadcast %250 : vector<1x128xf32> to vector<16x128xf32>
    %256 = arith.mulf %231, %255 : vector<16x128xf32>
    %257 = vector.broadcast %254 : vector<1x128xf32> to vector<16x128xf32>
    %258 = arith.addf %256, %257 : vector<16x128xf32>
    %cst_132 = arith.constant 0.000000e+00 : f32
    %259 = vector.broadcast %cst_132 : f32 to vector<16x128xf32>
    %260 = arith.maximumf %258, %259 : vector<16x128xf32>
    %261 = arith.addf %260, %192 : vector<16x128xf32>
    %cst_133 = arith.constant dense<0.000000e+00> : vector<16x128xf32>
    %262 = tpu.matmul %1, %261, %cst_133 {dimension_numbers = #tpu.dot_dimension_numbers<[1], [0], [0], [1], [0, 0, 1, 1], [], []>} : vector<16x16xf32>, vector<16x128xf32>, vector<16x128xf32> -> vector<16x128xf32>
    %263 = arith.truncf %262 : vector<16x128xf32> to vector<16x128xbf16>
    %c8 = arith.constant 8 : index
    %c0_134 = arith.constant 0 : index
    %c0_135 = arith.constant 0 : index
    %264 = vector.load %arg3[%c8, %c0_134, %c0_135] : memref<9x128x128xbf16, #tpu.memory_space<vmem>>, vector<1x128x128xbf16>
    %265 = vector.shape_cast %264 : vector<1x128x128xbf16> to vector<128x128xbf16>
    %cst_136 = arith.constant dense<0.000000e+00> : vector<16x128xf32>
    %266 = tpu.matmul %263, %265, %cst_136 {dimension_numbers = #tpu.dot_dimension_numbers<[1], [0], [0], [1], [0, 0, 1, 1], [], []>} : vector<16x128xbf16>, vector<128x128xbf16>, vector<16x128xf32> -> vector<16x128xf32>
    %c8_137 = arith.constant 8 : index
    %c0_138 = arith.constant 0 : index
    %c0_139 = arith.constant 0 : index
    %267 = vector.load %arg4[%c8_137, %c0_138, %c0_139] : memref<9x1x128xf32, #tpu.memory_space<vmem>>, vector<1x1x128xf32>
    %268 = vector.shape_cast %267 : vector<1x1x128xf32> to vector<1x128xf32>
    %269 = vector.broadcast %268 : vector<1x128xf32> to vector<16x128xf32>
    %270 = arith.addf %266, %269 : vector<16x128xf32>
    %cst_140 = arith.constant dense<0.000000e+00> : vector<128xf32>
    %271 = vector.multi_reduction <add>, %270, %cst_140 [0] : vector<16x128xf32> to vector<128xf32>
    %272 = vector.shape_cast %271 : vector<128xf32> to vector<1x128xf32>
    %cst_141 = arith.constant 1.600000e+01 : f32
    %273 = vector.broadcast %cst_141 : f32 to vector<1x128xf32>
    %274 = arith.divf %272, %273 : vector<1x128xf32>
    %c1_142 = arith.constant 1 : index
    %c0_143 = arith.constant 0 : index
    %c0_144 = arith.constant 0 : index
    %275 = vector.load %arg1[%c1_142, %c0_143, %c0_144] : memref<4x16x16xf32, #tpu.memory_space<vmem>>, vector<1x16x16xf32>
    %276 = vector.shape_cast %275 : vector<1x16x16xf32> to vector<16x16xf32>
    %c1_145 = arith.constant 1 : index
    %c0_146 = arith.constant 0 : index
    %c0_147 = arith.constant 0 : index
    %277 = vector.load %arg2[%c1_145, %c0_146, %c0_147] : memref<4x16x128xf32, #tpu.memory_space<vmem>>, vector<1x16x128xf32>
    %278 = vector.shape_cast %277 : vector<1x16x128xf32> to vector<16x128xf32>
    %279 = arith.mulf %278, %278 : vector<16x128xf32>
    %cst_148 = arith.constant dense<0.000000e+00> : vector<128xf32>
    %280 = vector.multi_reduction <add>, %279, %cst_148 [0] : vector<16x128xf32> to vector<128xf32>
    %281 = vector.shape_cast %280 : vector<128xf32> to vector<1x128xf32>
    %282 = math.sqrt %281 : vector<1x128xf32>
    %cst_149 = arith.constant 9.99999996E-13 : f32
    %283 = vector.broadcast %cst_149 : f32 to vector<1x128xf32>
    %284 = arith.maximumf %282, %283 : vector<1x128xf32>
    %285 = vector.broadcast %284 : vector<1x128xf32> to vector<16x128xf32>
    %286 = arith.divf %278, %285 : vector<16x128xf32>
    %cst_150 = arith.constant dense<0.000000e+00> : vector<16x128xf32>
    %287 = tpu.matmul %276, %286, %cst_150 {dimension_numbers = #tpu.dot_dimension_numbers<[1], [0], [0], [1], [0, 0, 1, 1], [], []>} : vector<16x16xf32>, vector<16x128xf32>, vector<16x128xf32> -> vector<16x128xf32>
    %288 = arith.truncf %287 : vector<16x128xf32> to vector<16x128xbf16>
    %c0_151 = arith.constant 0 : index
    %c0_152 = arith.constant 0 : index
    %c0_153 = arith.constant 0 : index
    %289 = vector.load %arg3[%c0_151, %c0_152, %c0_153] : memref<9x128x128xbf16, #tpu.memory_space<vmem>>, vector<1x128x128xbf16>
    %290 = vector.shape_cast %289 : vector<1x128x128xbf16> to vector<128x128xbf16>
    %cst_154 = arith.constant dense<0.000000e+00> : vector<16x128xf32>
    %291 = tpu.matmul %288, %290, %cst_154 {dimension_numbers = #tpu.dot_dimension_numbers<[1], [0], [0], [1], [0, 0, 1, 1], [], []>} : vector<16x128xbf16>, vector<128x128xbf16>, vector<16x128xf32> -> vector<16x128xf32>
    %c0_155 = arith.constant 0 : index
    %c0_156 = arith.constant 0 : index
    %c0_157 = arith.constant 0 : index
    %292 = vector.load %arg4[%c0_155, %c0_156, %c0_157] : memref<9x1x128xf32, #tpu.memory_space<vmem>>, vector<1x1x128xf32>
    %293 = vector.shape_cast %292 : vector<1x1x128xf32> to vector<1x128xf32>
    %294 = vector.broadcast %293 : vector<1x128xf32> to vector<16x128xf32>
    %295 = arith.addf %291, %294 : vector<16x128xf32>
    %cst_158 = arith.constant 0.000000e+00 : f32
    %296 = vector.broadcast %cst_158 : f32 to vector<16x128xf32>
    %297 = arith.maximumf %295, %296 : vector<16x128xf32>
    %cst_159 = arith.constant dense<0.000000e+00> : vector<16x128xf32>
    %298 = tpu.matmul %276, %297, %cst_159 {dimension_numbers = #tpu.dot_dimension_numbers<[1], [0], [0], [1], [0, 0, 1, 1], [], []>} : vector<16x16xf32>, vector<16x128xf32>, vector<16x128xf32> -> vector<16x128xf32>
    %299 = arith.truncf %298 : vector<16x128xf32> to vector<16x128xbf16>
    %c1_160 = arith.constant 1 : index
    %c0_161 = arith.constant 0 : index
    %c0_162 = arith.constant 0 : index
    %300 = vector.load %arg3[%c1_160, %c0_161, %c0_162] : memref<9x128x128xbf16, #tpu.memory_space<vmem>>, vector<1x128x128xbf16>
    %301 = vector.shape_cast %300 : vector<1x128x128xbf16> to vector<128x128xbf16>
    %cst_163 = arith.constant dense<0.000000e+00> : vector<16x128xf32>
    %302 = tpu.matmul %299, %301, %cst_163 {dimension_numbers = #tpu.dot_dimension_numbers<[1], [0], [0], [1], [0, 0, 1, 1], [], []>} : vector<16x128xbf16>, vector<128x128xbf16>, vector<16x128xf32> -> vector<16x128xf32>
    %cst_164 = arith.constant dense<0.000000e+00> : vector<128xf32>
    %303 = vector.multi_reduction <add>, %302, %cst_164 [0] : vector<16x128xf32> to vector<128xf32>
    %304 = vector.shape_cast %303 : vector<128xf32> to vector<1x128xf32>
    %cst_165 = arith.constant 1.600000e+01 : f32
    %305 = vector.broadcast %cst_165 : f32 to vector<1x128xf32>
    %306 = arith.divf %304, %305 : vector<1x128xf32>
    %307 = arith.mulf %302, %302 : vector<16x128xf32>
    %cst_166 = arith.constant dense<0.000000e+00> : vector<128xf32>
    %308 = vector.multi_reduction <add>, %307, %cst_166 [0] : vector<16x128xf32> to vector<128xf32>
    %309 = vector.shape_cast %308 : vector<128xf32> to vector<1x128xf32>
    %cst_167 = arith.constant 1.600000e+01 : f32
    %310 = vector.broadcast %cst_167 : f32 to vector<1x128xf32>
    %311 = arith.divf %309, %310 : vector<1x128xf32>
    %312 = arith.mulf %306, %306 : vector<1x128xf32>
    %313 = arith.subf %311, %312 : vector<1x128xf32>
    %cst_168 = arith.constant 0.000000e+00 : f32
    %314 = vector.broadcast %cst_168 : f32 to vector<1x128xf32>
    %315 = arith.maximumf %313, %314 : vector<1x128xf32>
    %c1_169 = arith.constant 1 : index
    %c0_170 = arith.constant 0 : index
    %c0_171 = arith.constant 0 : index
    %316 = vector.load %arg5[%c1_169, %c0_170, %c0_171] : memref<9x1x128xf32, #tpu.memory_space<vmem>>, vector<1x1x128xf32>
    %317 = vector.shape_cast %316 : vector<1x1x128xf32> to vector<1x128xf32>
    %cst_172 = arith.constant 9.99999974E-6 : f32
    %318 = vector.broadcast %cst_172 : f32 to vector<1x128xf32>
    %319 = arith.addf %315, %318 : vector<1x128xf32>
    %320 = math.rsqrt %319 : vector<1x128xf32>
    %321 = arith.mulf %317, %320 : vector<1x128xf32>
    %c1_173 = arith.constant 1 : index
    %c0_174 = arith.constant 0 : index
    %c0_175 = arith.constant 0 : index
    %322 = vector.load %arg6[%c1_173, %c0_174, %c0_175] : memref<9x1x128xf32, #tpu.memory_space<vmem>>, vector<1x1x128xf32>
    %323 = vector.shape_cast %322 : vector<1x1x128xf32> to vector<1x128xf32>
    %324 = arith.mulf %306, %321 : vector<1x128xf32>
    %325 = arith.subf %323, %324 : vector<1x128xf32>
    %326 = vector.broadcast %321 : vector<1x128xf32> to vector<16x128xf32>
    %327 = arith.mulf %302, %326 : vector<16x128xf32>
    %328 = vector.broadcast %325 : vector<1x128xf32> to vector<16x128xf32>
    %329 = arith.addf %327, %328 : vector<16x128xf32>
    %cst_176 = arith.constant 0.000000e+00 : f32
    %330 = vector.broadcast %cst_176 : f32 to vector<16x128xf32>
    %331 = arith.maximumf %329, %330 : vector<16x128xf32>
    %cst_177 = arith.constant dense<0.000000e+00> : vector<16x128xf32>
    %332 = tpu.matmul %276, %331, %cst_177 {dimension_numbers = #tpu.dot_dimension_numbers<[1], [0], [0], [1], [0, 0, 1, 1], [], []>} : vector<16x16xf32>, vector<16x128xf32>, vector<16x128xf32> -> vector<16x128xf32>
    %333 = arith.truncf %332 : vector<16x128xf32> to vector<16x128xbf16>
    %c2_178 = arith.constant 2 : index
    %c0_179 = arith.constant 0 : index
    %c0_180 = arith.constant 0 : index
    %334 = vector.load %arg3[%c2_178, %c0_179, %c0_180] : memref<9x128x128xbf16, #tpu.memory_space<vmem>>, vector<1x128x128xbf16>
    %335 = vector.shape_cast %334 : vector<1x128x128xbf16> to vector<128x128xbf16>
    %cst_181 = arith.constant dense<0.000000e+00> : vector<16x128xf32>
    %336 = tpu.matmul %333, %335, %cst_181 {dimension_numbers = #tpu.dot_dimension_numbers<[1], [0], [0], [1], [0, 0, 1, 1], [], []>} : vector<16x128xbf16>, vector<128x128xbf16>, vector<16x128xf32> -> vector<16x128xf32>
    %cst_182 = arith.constant dense<0.000000e+00> : vector<128xf32>
    %337 = vector.multi_reduction <add>, %336, %cst_182 [0] : vector<16x128xf32> to vector<128xf32>
    %338 = vector.shape_cast %337 : vector<128xf32> to vector<1x128xf32>
    %cst_183 = arith.constant 1.600000e+01 : f32
    %339 = vector.broadcast %cst_183 : f32 to vector<1x128xf32>
    %340 = arith.divf %338, %339 : vector<1x128xf32>
    %341 = arith.mulf %336, %336 : vector<16x128xf32>
    %cst_184 = arith.constant dense<0.000000e+00> : vector<128xf32>
    %342 = vector.multi_reduction <add>, %341, %cst_184 [0] : vector<16x128xf32> to vector<128xf32>
    %343 = vector.shape_cast %342 : vector<128xf32> to vector<1x128xf32>
    %cst_185 = arith.constant 1.600000e+01 : f32
    %344 = vector.broadcast %cst_185 : f32 to vector<1x128xf32>
    %345 = arith.divf %343, %344 : vector<1x128xf32>
    %346 = arith.mulf %340, %340 : vector<1x128xf32>
    %347 = arith.subf %345, %346 : vector<1x128xf32>
    %cst_186 = arith.constant 0.000000e+00 : f32
    %348 = vector.broadcast %cst_186 : f32 to vector<1x128xf32>
    %349 = arith.maximumf %347, %348 : vector<1x128xf32>
    %c2_187 = arith.constant 2 : index
    %c0_188 = arith.constant 0 : index
    %c0_189 = arith.constant 0 : index
    %350 = vector.load %arg5[%c2_187, %c0_188, %c0_189] : memref<9x1x128xf32, #tpu.memory_space<vmem>>, vector<1x1x128xf32>
    %351 = vector.shape_cast %350 : vector<1x1x128xf32> to vector<1x128xf32>
    %cst_190 = arith.constant 9.99999974E-6 : f32
    %352 = vector.broadcast %cst_190 : f32 to vector<1x128xf32>
    %353 = arith.addf %349, %352 : vector<1x128xf32>
    %354 = math.rsqrt %353 : vector<1x128xf32>
    %355 = arith.mulf %351, %354 : vector<1x128xf32>
    %c2_191 = arith.constant 2 : index
    %c0_192 = arith.constant 0 : index
    %c0_193 = arith.constant 0 : index
    %356 = vector.load %arg6[%c2_191, %c0_192, %c0_193] : memref<9x1x128xf32, #tpu.memory_space<vmem>>, vector<1x1x128xf32>
    %357 = vector.shape_cast %356 : vector<1x1x128xf32> to vector<1x128xf32>
    %358 = arith.mulf %340, %355 : vector<1x128xf32>
    %359 = arith.subf %357, %358 : vector<1x128xf32>
    %360 = vector.broadcast %355 : vector<1x128xf32> to vector<16x128xf32>
    %361 = arith.mulf %336, %360 : vector<16x128xf32>
    %362 = vector.broadcast %359 : vector<1x128xf32> to vector<16x128xf32>
    %363 = arith.addf %361, %362 : vector<16x128xf32>
    %cst_194 = arith.constant 0.000000e+00 : f32
    %364 = vector.broadcast %cst_194 : f32 to vector<16x128xf32>
    %365 = arith.maximumf %363, %364 : vector<16x128xf32>
    %366 = arith.addf %365, %297 : vector<16x128xf32>
    %cst_195 = arith.constant dense<0.000000e+00> : vector<16x128xf32>
    %367 = tpu.matmul %276, %366, %cst_195 {dimension_numbers = #tpu.dot_dimension_numbers<[1], [0], [0], [1], [0, 0, 1, 1], [], []>} : vector<16x16xf32>, vector<16x128xf32>, vector<16x128xf32> -> vector<16x128xf32>
    %368 = arith.truncf %367 : vector<16x128xf32> to vector<16x128xbf16>
    %c3_196 = arith.constant 3 : index
    %c0_197 = arith.constant 0 : index
    %c0_198 = arith.constant 0 : index
    %369 = vector.load %arg3[%c3_196, %c0_197, %c0_198] : memref<9x128x128xbf16, #tpu.memory_space<vmem>>, vector<1x128x128xbf16>
    %370 = vector.shape_cast %369 : vector<1x128x128xbf16> to vector<128x128xbf16>
    %cst_199 = arith.constant dense<0.000000e+00> : vector<16x128xf32>
    %371 = tpu.matmul %368, %370, %cst_199 {dimension_numbers = #tpu.dot_dimension_numbers<[1], [0], [0], [1], [0, 0, 1, 1], [], []>} : vector<16x128xbf16>, vector<128x128xbf16>, vector<16x128xf32> -> vector<16x128xf32>
    %cst_200 = arith.constant dense<0.000000e+00> : vector<128xf32>
    %372 = vector.multi_reduction <add>, %371, %cst_200 [0] : vector<16x128xf32> to vector<128xf32>
    %373 = vector.shape_cast %372 : vector<128xf32> to vector<1x128xf32>
    %cst_201 = arith.constant 1.600000e+01 : f32
    %374 = vector.broadcast %cst_201 : f32 to vector<1x128xf32>
    %375 = arith.divf %373, %374 : vector<1x128xf32>
    %376 = arith.mulf %371, %371 : vector<16x128xf32>
    %cst_202 = arith.constant dense<0.000000e+00> : vector<128xf32>
    %377 = vector.multi_reduction <add>, %376, %cst_202 [0] : vector<16x128xf32> to vector<128xf32>
    %378 = vector.shape_cast %377 : vector<128xf32> to vector<1x128xf32>
    %cst_203 = arith.constant 1.600000e+01 : f32
    %379 = vector.broadcast %cst_203 : f32 to vector<1x128xf32>
    %380 = arith.divf %378, %379 : vector<1x128xf32>
    %381 = arith.mulf %375, %375 : vector<1x128xf32>
    %382 = arith.subf %380, %381 : vector<1x128xf32>
    %cst_204 = arith.constant 0.000000e+00 : f32
    %383 = vector.broadcast %cst_204 : f32 to vector<1x128xf32>
    %384 = arith.maximumf %382, %383 : vector<1x128xf32>
    %c3_205 = arith.constant 3 : index
    %c0_206 = arith.constant 0 : index
    %c0_207 = arith.constant 0 : index
    %385 = vector.load %arg5[%c3_205, %c0_206, %c0_207] : memref<9x1x128xf32, #tpu.memory_space<vmem>>, vector<1x1x128xf32>
    %386 = vector.shape_cast %385 : vector<1x1x128xf32> to vector<1x128xf32>
    %cst_208 = arith.constant 9.99999974E-6 : f32
    %387 = vector.broadcast %cst_208 : f32 to vector<1x128xf32>
    %388 = arith.addf %384, %387 : vector<1x128xf32>
    %389 = math.rsqrt %388 : vector<1x128xf32>
    %390 = arith.mulf %386, %389 : vector<1x128xf32>
    %c3_209 = arith.constant 3 : index
    %c0_210 = arith.constant 0 : index
    %c0_211 = arith.constant 0 : index
    %391 = vector.load %arg6[%c3_209, %c0_210, %c0_211] : memref<9x1x128xf32, #tpu.memory_space<vmem>>, vector<1x1x128xf32>
    %392 = vector.shape_cast %391 : vector<1x1x128xf32> to vector<1x128xf32>
    %393 = arith.mulf %375, %390 : vector<1x128xf32>
    %394 = arith.subf %392, %393 : vector<1x128xf32>
    %395 = vector.broadcast %390 : vector<1x128xf32> to vector<16x128xf32>
    %396 = arith.mulf %371, %395 : vector<16x128xf32>
    %397 = vector.broadcast %394 : vector<1x128xf32> to vector<16x128xf32>
    %398 = arith.addf %396, %397 : vector<16x128xf32>
    %cst_212 = arith.constant 0.000000e+00 : f32
    %399 = vector.broadcast %cst_212 : f32 to vector<16x128xf32>
    %400 = arith.maximumf %398, %399 : vector<16x128xf32>
    %cst_213 = arith.constant dense<0.000000e+00> : vector<16x128xf32>
    %401 = tpu.matmul %276, %400, %cst_213 {dimension_numbers = #tpu.dot_dimension_numbers<[1], [0], [0], [1], [0, 0, 1, 1], [], []>} : vector<16x16xf32>, vector<16x128xf32>, vector<16x128xf32> -> vector<16x128xf32>
    %402 = arith.truncf %401 : vector<16x128xf32> to vector<16x128xbf16>
    %c4_214 = arith.constant 4 : index
    %c0_215 = arith.constant 0 : index
    %c0_216 = arith.constant 0 : index
    %403 = vector.load %arg3[%c4_214, %c0_215, %c0_216] : memref<9x128x128xbf16, #tpu.memory_space<vmem>>, vector<1x128x128xbf16>
    %404 = vector.shape_cast %403 : vector<1x128x128xbf16> to vector<128x128xbf16>
    %cst_217 = arith.constant dense<0.000000e+00> : vector<16x128xf32>
    %405 = tpu.matmul %402, %404, %cst_217 {dimension_numbers = #tpu.dot_dimension_numbers<[1], [0], [0], [1], [0, 0, 1, 1], [], []>} : vector<16x128xbf16>, vector<128x128xbf16>, vector<16x128xf32> -> vector<16x128xf32>
    %cst_218 = arith.constant dense<0.000000e+00> : vector<128xf32>
    %406 = vector.multi_reduction <add>, %405, %cst_218 [0] : vector<16x128xf32> to vector<128xf32>
    %407 = vector.shape_cast %406 : vector<128xf32> to vector<1x128xf32>
    %cst_219 = arith.constant 1.600000e+01 : f32
    %408 = vector.broadcast %cst_219 : f32 to vector<1x128xf32>
    %409 = arith.divf %407, %408 : vector<1x128xf32>
    %410 = arith.mulf %405, %405 : vector<16x128xf32>
    %cst_220 = arith.constant dense<0.000000e+00> : vector<128xf32>
    %411 = vector.multi_reduction <add>, %410, %cst_220 [0] : vector<16x128xf32> to vector<128xf32>
    %412 = vector.shape_cast %411 : vector<128xf32> to vector<1x128xf32>
    %cst_221 = arith.constant 1.600000e+01 : f32
    %413 = vector.broadcast %cst_221 : f32 to vector<1x128xf32>
    %414 = arith.divf %412, %413 : vector<1x128xf32>
    %415 = arith.mulf %409, %409 : vector<1x128xf32>
    %416 = arith.subf %414, %415 : vector<1x128xf32>
    %cst_222 = arith.constant 0.000000e+00 : f32
    %417 = vector.broadcast %cst_222 : f32 to vector<1x128xf32>
    %418 = arith.maximumf %416, %417 : vector<1x128xf32>
    %c4_223 = arith.constant 4 : index
    %c0_224 = arith.constant 0 : index
    %c0_225 = arith.constant 0 : index
    %419 = vector.load %arg5[%c4_223, %c0_224, %c0_225] : memref<9x1x128xf32, #tpu.memory_space<vmem>>, vector<1x1x128xf32>
    %420 = vector.shape_cast %419 : vector<1x1x128xf32> to vector<1x128xf32>
    %cst_226 = arith.constant 9.99999974E-6 : f32
    %421 = vector.broadcast %cst_226 : f32 to vector<1x128xf32>
    %422 = arith.addf %418, %421 : vector<1x128xf32>
    %423 = math.rsqrt %422 : vector<1x128xf32>
    %424 = arith.mulf %420, %423 : vector<1x128xf32>
    %c4_227 = arith.constant 4 : index
    %c0_228 = arith.constant 0 : index
    %c0_229 = arith.constant 0 : index
    %425 = vector.load %arg6[%c4_227, %c0_228, %c0_229] : memref<9x1x128xf32, #tpu.memory_space<vmem>>, vector<1x1x128xf32>
    %426 = vector.shape_cast %425 : vector<1x1x128xf32> to vector<1x128xf32>
    %427 = arith.mulf %409, %424 : vector<1x128xf32>
    %428 = arith.subf %426, %427 : vector<1x128xf32>
    %429 = vector.broadcast %424 : vector<1x128xf32> to vector<16x128xf32>
    %430 = arith.mulf %405, %429 : vector<16x128xf32>
    %431 = vector.broadcast %428 : vector<1x128xf32> to vector<16x128xf32>
    %432 = arith.addf %430, %431 : vector<16x128xf32>
    %cst_230 = arith.constant 0.000000e+00 : f32
    %433 = vector.broadcast %cst_230 : f32 to vector<16x128xf32>
    %434 = arith.maximumf %432, %433 : vector<16x128xf32>
    %cst_231 = arith.constant dense<0.000000e+00> : vector<16x128xf32>
    %435 = tpu.matmul %276, %366, %cst_231 {dimension_numbers = #tpu.dot_dimension_numbers<[1], [0], [0], [1], [0, 0, 1, 1], [], []>} : vector<16x16xf32>, vector<16x128xf32>, vector<16x128xf32> -> vector<16x128xf32>
    %436 = arith.truncf %435 : vector<16x128xf32> to vector<16x128xbf16>
    %c5_232 = arith.constant 5 : index
    %c0_233 = arith.constant 0 : index
    %c0_234 = arith.constant 0 : index
    %437 = vector.load %arg3[%c5_232, %c0_233, %c0_234] : memref<9x128x128xbf16, #tpu.memory_space<vmem>>, vector<1x128x128xbf16>
    %438 = vector.shape_cast %437 : vector<1x128x128xbf16> to vector<128x128xbf16>
    %cst_235 = arith.constant dense<0.000000e+00> : vector<16x128xf32>
    %439 = tpu.matmul %436, %438, %cst_235 {dimension_numbers = #tpu.dot_dimension_numbers<[1], [0], [0], [1], [0, 0, 1, 1], [], []>} : vector<16x128xbf16>, vector<128x128xbf16>, vector<16x128xf32> -> vector<16x128xf32>
    %cst_236 = arith.constant dense<0.000000e+00> : vector<128xf32>
    %440 = vector.multi_reduction <add>, %439, %cst_236 [0] : vector<16x128xf32> to vector<128xf32>
    %441 = vector.shape_cast %440 : vector<128xf32> to vector<1x128xf32>
    %cst_237 = arith.constant 1.600000e+01 : f32
    %442 = vector.broadcast %cst_237 : f32 to vector<1x128xf32>
    %443 = arith.divf %441, %442 : vector<1x128xf32>
    %444 = arith.mulf %439, %439 : vector<16x128xf32>
    %cst_238 = arith.constant dense<0.000000e+00> : vector<128xf32>
    %445 = vector.multi_reduction <add>, %444, %cst_238 [0] : vector<16x128xf32> to vector<128xf32>
    %446 = vector.shape_cast %445 : vector<128xf32> to vector<1x128xf32>
    %cst_239 = arith.constant 1.600000e+01 : f32
    %447 = vector.broadcast %cst_239 : f32 to vector<1x128xf32>
    %448 = arith.divf %446, %447 : vector<1x128xf32>
    %449 = arith.mulf %443, %443 : vector<1x128xf32>
    %450 = arith.subf %448, %449 : vector<1x128xf32>
    %cst_240 = arith.constant 0.000000e+00 : f32
    %451 = vector.broadcast %cst_240 : f32 to vector<1x128xf32>
    %452 = arith.maximumf %450, %451 : vector<1x128xf32>
    %c5_241 = arith.constant 5 : index
    %c0_242 = arith.constant 0 : index
    %c0_243 = arith.constant 0 : index
    %453 = vector.load %arg5[%c5_241, %c0_242, %c0_243] : memref<9x1x128xf32, #tpu.memory_space<vmem>>, vector<1x1x128xf32>
    %454 = vector.shape_cast %453 : vector<1x1x128xf32> to vector<1x128xf32>
    %cst_244 = arith.constant 9.99999974E-6 : f32
    %455 = vector.broadcast %cst_244 : f32 to vector<1x128xf32>
    %456 = arith.addf %452, %455 : vector<1x128xf32>
    %457 = math.rsqrt %456 : vector<1x128xf32>
    %458 = arith.mulf %454, %457 : vector<1x128xf32>
    %c5_245 = arith.constant 5 : index
    %c0_246 = arith.constant 0 : index
    %c0_247 = arith.constant 0 : index
    %459 = vector.load %arg6[%c5_245, %c0_246, %c0_247] : memref<9x1x128xf32, #tpu.memory_space<vmem>>, vector<1x1x128xf32>
    %460 = vector.shape_cast %459 : vector<1x1x128xf32> to vector<1x128xf32>
    %461 = arith.mulf %443, %458 : vector<1x128xf32>
    %462 = arith.subf %460, %461 : vector<1x128xf32>
    %463 = vector.broadcast %458 : vector<1x128xf32> to vector<16x128xf32>
    %464 = arith.mulf %439, %463 : vector<16x128xf32>
    %465 = vector.broadcast %462 : vector<1x128xf32> to vector<16x128xf32>
    %466 = arith.addf %464, %465 : vector<16x128xf32>
    %467 = arith.addf %434, %466 : vector<16x128xf32>
    %cst_248 = arith.constant dense<0.000000e+00> : vector<16x128xf32>
    %468 = tpu.matmul %276, %467, %cst_248 {dimension_numbers = #tpu.dot_dimension_numbers<[1], [0], [0], [1], [0, 0, 1, 1], [], []>} : vector<16x16xf32>, vector<16x128xf32>, vector<16x128xf32> -> vector<16x128xf32>
    %469 = arith.truncf %468 : vector<16x128xf32> to vector<16x128xbf16>
    %c6_249 = arith.constant 6 : index
    %c0_250 = arith.constant 0 : index
    %c0_251 = arith.constant 0 : index
    %470 = vector.load %arg3[%c6_249, %c0_250, %c0_251] : memref<9x128x128xbf16, #tpu.memory_space<vmem>>, vector<1x128x128xbf16>
    %471 = vector.shape_cast %470 : vector<1x128x128xbf16> to vector<128x128xbf16>
    %cst_252 = arith.constant dense<0.000000e+00> : vector<16x128xf32>
    %472 = tpu.matmul %469, %471, %cst_252 {dimension_numbers = #tpu.dot_dimension_numbers<[1], [0], [0], [1], [0, 0, 1, 1], [], []>} : vector<16x128xbf16>, vector<128x128xbf16>, vector<16x128xf32> -> vector<16x128xf32>
    %cst_253 = arith.constant dense<0.000000e+00> : vector<128xf32>
    %473 = vector.multi_reduction <add>, %472, %cst_253 [0] : vector<16x128xf32> to vector<128xf32>
    %474 = vector.shape_cast %473 : vector<128xf32> to vector<1x128xf32>
    %cst_254 = arith.constant 1.600000e+01 : f32
    %475 = vector.broadcast %cst_254 : f32 to vector<1x128xf32>
    %476 = arith.divf %474, %475 : vector<1x128xf32>
    %477 = arith.mulf %472, %472 : vector<16x128xf32>
    %cst_255 = arith.constant dense<0.000000e+00> : vector<128xf32>
    %478 = vector.multi_reduction <add>, %477, %cst_255 [0] : vector<16x128xf32> to vector<128xf32>
    %479 = vector.shape_cast %478 : vector<128xf32> to vector<1x128xf32>
    %cst_256 = arith.constant 1.600000e+01 : f32
    %480 = vector.broadcast %cst_256 : f32 to vector<1x128xf32>
    %481 = arith.divf %479, %480 : vector<1x128xf32>
    %482 = arith.mulf %476, %476 : vector<1x128xf32>
    %483 = arith.subf %481, %482 : vector<1x128xf32>
    %cst_257 = arith.constant 0.000000e+00 : f32
    %484 = vector.broadcast %cst_257 : f32 to vector<1x128xf32>
    %485 = arith.maximumf %483, %484 : vector<1x128xf32>
    %c6_258 = arith.constant 6 : index
    %c0_259 = arith.constant 0 : index
    %c0_260 = arith.constant 0 : index
    %486 = vector.load %arg5[%c6_258, %c0_259, %c0_260] : memref<9x1x128xf32, #tpu.memory_space<vmem>>, vector<1x1x128xf32>
    %487 = vector.shape_cast %486 : vector<1x1x128xf32> to vector<1x128xf32>
    %cst_261 = arith.constant 9.99999974E-6 : f32
    %488 = vector.broadcast %cst_261 : f32 to vector<1x128xf32>
    %489 = arith.addf %485, %488 : vector<1x128xf32>
    %490 = math.rsqrt %489 : vector<1x128xf32>
    %491 = arith.mulf %487, %490 : vector<1x128xf32>
    %c6_262 = arith.constant 6 : index
    %c0_263 = arith.constant 0 : index
    %c0_264 = arith.constant 0 : index
    %492 = vector.load %arg6[%c6_262, %c0_263, %c0_264] : memref<9x1x128xf32, #tpu.memory_space<vmem>>, vector<1x1x128xf32>
    %493 = vector.shape_cast %492 : vector<1x1x128xf32> to vector<1x128xf32>
    %494 = arith.mulf %476, %491 : vector<1x128xf32>
    %495 = arith.subf %493, %494 : vector<1x128xf32>
    %496 = vector.broadcast %491 : vector<1x128xf32> to vector<16x128xf32>
    %497 = arith.mulf %472, %496 : vector<16x128xf32>
    %498 = vector.broadcast %495 : vector<1x128xf32> to vector<16x128xf32>
    %499 = arith.addf %497, %498 : vector<16x128xf32>
    %cst_265 = arith.constant 0.000000e+00 : f32
    %500 = vector.broadcast %cst_265 : f32 to vector<16x128xf32>
    %501 = arith.maximumf %499, %500 : vector<16x128xf32>
    %cst_266 = arith.constant dense<0.000000e+00> : vector<16x128xf32>
    %502 = tpu.matmul %276, %501, %cst_266 {dimension_numbers = #tpu.dot_dimension_numbers<[1], [0], [0], [1], [0, 0, 1, 1], [], []>} : vector<16x16xf32>, vector<16x128xf32>, vector<16x128xf32> -> vector<16x128xf32>
    %503 = arith.truncf %502 : vector<16x128xf32> to vector<16x128xbf16>
    %c7_267 = arith.constant 7 : index
    %c0_268 = arith.constant 0 : index
    %c0_269 = arith.constant 0 : index
    %504 = vector.load %arg3[%c7_267, %c0_268, %c0_269] : memref<9x128x128xbf16, #tpu.memory_space<vmem>>, vector<1x128x128xbf16>
    %505 = vector.shape_cast %504 : vector<1x128x128xbf16> to vector<128x128xbf16>
    %cst_270 = arith.constant dense<0.000000e+00> : vector<16x128xf32>
    %506 = tpu.matmul %503, %505, %cst_270 {dimension_numbers = #tpu.dot_dimension_numbers<[1], [0], [0], [1], [0, 0, 1, 1], [], []>} : vector<16x128xbf16>, vector<128x128xbf16>, vector<16x128xf32> -> vector<16x128xf32>
    %cst_271 = arith.constant dense<0.000000e+00> : vector<128xf32>
    %507 = vector.multi_reduction <add>, %506, %cst_271 [0] : vector<16x128xf32> to vector<128xf32>
    %508 = vector.shape_cast %507 : vector<128xf32> to vector<1x128xf32>
    %cst_272 = arith.constant 1.600000e+01 : f32
    %509 = vector.broadcast %cst_272 : f32 to vector<1x128xf32>
    %510 = arith.divf %508, %509 : vector<1x128xf32>
    %511 = arith.mulf %506, %506 : vector<16x128xf32>
    %cst_273 = arith.constant dense<0.000000e+00> : vector<128xf32>
    %512 = vector.multi_reduction <add>, %511, %cst_273 [0] : vector<16x128xf32> to vector<128xf32>
    %513 = vector.shape_cast %512 : vector<128xf32> to vector<1x128xf32>
    %cst_274 = arith.constant 1.600000e+01 : f32
    %514 = vector.broadcast %cst_274 : f32 to vector<1x128xf32>
    %515 = arith.divf %513, %514 : vector<1x128xf32>
    %516 = arith.mulf %510, %510 : vector<1x128xf32>
    %517 = arith.subf %515, %516 : vector<1x128xf32>
    %cst_275 = arith.constant 0.000000e+00 : f32
    %518 = vector.broadcast %cst_275 : f32 to vector<1x128xf32>
    %519 = arith.maximumf %517, %518 : vector<1x128xf32>
    %c7_276 = arith.constant 7 : index
    %c0_277 = arith.constant 0 : index
    %c0_278 = arith.constant 0 : index
    %520 = vector.load %arg5[%c7_276, %c0_277, %c0_278] : memref<9x1x128xf32, #tpu.memory_space<vmem>>, vector<1x1x128xf32>
    %521 = vector.shape_cast %520 : vector<1x1x128xf32> to vector<1x128xf32>
    %cst_279 = arith.constant 9.99999974E-6 : f32
    %522 = vector.broadcast %cst_279 : f32 to vector<1x128xf32>
    %523 = arith.addf %519, %522 : vector<1x128xf32>
    %524 = math.rsqrt %523 : vector<1x128xf32>
    %525 = arith.mulf %521, %524 : vector<1x128xf32>
    %c7_280 = arith.constant 7 : index
    %c0_281 = arith.constant 0 : index
    %c0_282 = arith.constant 0 : index
    %526 = vector.load %arg6[%c7_280, %c0_281, %c0_282] : memref<9x1x128xf32, #tpu.memory_space<vmem>>, vector<1x1x128xf32>
    %527 = vector.shape_cast %526 : vector<1x1x128xf32> to vector<1x128xf32>
    %528 = arith.mulf %510, %525 : vector<1x128xf32>
    %529 = arith.subf %527, %528 : vector<1x128xf32>
    %530 = vector.broadcast %525 : vector<1x128xf32> to vector<16x128xf32>
    %531 = arith.mulf %506, %530 : vector<16x128xf32>
    %532 = vector.broadcast %529 : vector<1x128xf32> to vector<16x128xf32>
    %533 = arith.addf %531, %532 : vector<16x128xf32>
    %cst_283 = arith.constant 0.000000e+00 : f32
    %534 = vector.broadcast %cst_283 : f32 to vector<16x128xf32>
    %535 = arith.maximumf %533, %534 : vector<16x128xf32>
    %536 = arith.addf %535, %467 : vector<16x128xf32>
    %cst_284 = arith.constant dense<0.000000e+00> : vector<16x128xf32>
    %537 = tpu.matmul %276, %536, %cst_284 {dimension_numbers = #tpu.dot_dimension_numbers<[1], [0], [0], [1], [0, 0, 1, 1], [], []>} : vector<16x16xf32>, vector<16x128xf32>, vector<16x128xf32> -> vector<16x128xf32>
    %538 = arith.truncf %537 : vector<16x128xf32> to vector<16x128xbf16>
    %c8_285 = arith.constant 8 : index
    %c0_286 = arith.constant 0 : index
    %c0_287 = arith.constant 0 : index
    %539 = vector.load %arg3[%c8_285, %c0_286, %c0_287] : memref<9x128x128xbf16, #tpu.memory_space<vmem>>, vector<1x128x128xbf16>
    %540 = vector.shape_cast %539 : vector<1x128x128xbf16> to vector<128x128xbf16>
    %cst_288 = arith.constant dense<0.000000e+00> : vector<16x128xf32>
    %541 = tpu.matmul %538, %540, %cst_288 {dimension_numbers = #tpu.dot_dimension_numbers<[1], [0], [0], [1], [0, 0, 1, 1], [], []>} : vector<16x128xbf16>, vector<128x128xbf16>, vector<16x128xf32> -> vector<16x128xf32>
    %c8_289 = arith.constant 8 : index
    %c0_290 = arith.constant 0 : index
    %c0_291 = arith.constant 0 : index
    %542 = vector.load %arg4[%c8_289, %c0_290, %c0_291] : memref<9x1x128xf32, #tpu.memory_space<vmem>>, vector<1x1x128xf32>
    %543 = vector.shape_cast %542 : vector<1x1x128xf32> to vector<1x128xf32>
    %544 = vector.broadcast %543 : vector<1x128xf32> to vector<16x128xf32>
    %545 = arith.addf %541, %544 : vector<16x128xf32>
    %cst_292 = arith.constant dense<0.000000e+00> : vector<128xf32>
    %546 = vector.multi_reduction <add>, %545, %cst_292 [0] : vector<16x128xf32> to vector<128xf32>
    %547 = vector.shape_cast %546 : vector<128xf32> to vector<1x128xf32>
    %cst_293 = arith.constant 1.600000e+01 : f32
    %548 = vector.broadcast %cst_293 : f32 to vector<1x128xf32>
    %549 = arith.divf %547, %548 : vector<1x128xf32>
    %c2_294 = arith.constant 2 : index
    %c0_295 = arith.constant 0 : index
    %c0_296 = arith.constant 0 : index
    %550 = vector.load %arg1[%c2_294, %c0_295, %c0_296] : memref<4x16x16xf32, #tpu.memory_space<vmem>>, vector<1x16x16xf32>
    %551 = vector.shape_cast %550 : vector<1x16x16xf32> to vector<16x16xf32>
    %c2_297 = arith.constant 2 : index
    %c0_298 = arith.constant 0 : index
    %c0_299 = arith.constant 0 : index
    %552 = vector.load %arg2[%c2_297, %c0_298, %c0_299] : memref<4x16x128xf32, #tpu.memory_space<vmem>>, vector<1x16x128xf32>
    %553 = vector.shape_cast %552 : vector<1x16x128xf32> to vector<16x128xf32>
    %554 = arith.mulf %553, %553 : vector<16x128xf32>
    %cst_300 = arith.constant dense<0.000000e+00> : vector<128xf32>
    %555 = vector.multi_reduction <add>, %554, %cst_300 [0] : vector<16x128xf32> to vector<128xf32>
    %556 = vector.shape_cast %555 : vector<128xf32> to vector<1x128xf32>
    %557 = math.sqrt %556 : vector<1x128xf32>
    %cst_301 = arith.constant 9.99999996E-13 : f32
    %558 = vector.broadcast %cst_301 : f32 to vector<1x128xf32>
    %559 = arith.maximumf %557, %558 : vector<1x128xf32>
    %560 = vector.broadcast %559 : vector<1x128xf32> to vector<16x128xf32>
    %561 = arith.divf %553, %560 : vector<16x128xf32>
    %cst_302 = arith.constant dense<0.000000e+00> : vector<16x128xf32>
    %562 = tpu.matmul %551, %561, %cst_302 {dimension_numbers = #tpu.dot_dimension_numbers<[1], [0], [0], [1], [0, 0, 1, 1], [], []>} : vector<16x16xf32>, vector<16x128xf32>, vector<16x128xf32> -> vector<16x128xf32>
    %563 = arith.truncf %562 : vector<16x128xf32> to vector<16x128xbf16>
    %c0_303 = arith.constant 0 : index
    %c0_304 = arith.constant 0 : index
    %c0_305 = arith.constant 0 : index
    %564 = vector.load %arg3[%c0_303, %c0_304, %c0_305] : memref<9x128x128xbf16, #tpu.memory_space<vmem>>, vector<1x128x128xbf16>
    %565 = vector.shape_cast %564 : vector<1x128x128xbf16> to vector<128x128xbf16>
    %cst_306 = arith.constant dense<0.000000e+00> : vector<16x128xf32>
    %566 = tpu.matmul %563, %565, %cst_306 {dimension_numbers = #tpu.dot_dimension_numbers<[1], [0], [0], [1], [0, 0, 1, 1], [], []>} : vector<16x128xbf16>, vector<128x128xbf16>, vector<16x128xf32> -> vector<16x128xf32>
    %c0_307 = arith.constant 0 : index
    %c0_308 = arith.constant 0 : index
    %c0_309 = arith.constant 0 : index
    %567 = vector.load %arg4[%c0_307, %c0_308, %c0_309] : memref<9x1x128xf32, #tpu.memory_space<vmem>>, vector<1x1x128xf32>
    %568 = vector.shape_cast %567 : vector<1x1x128xf32> to vector<1x128xf32>
    %569 = vector.broadcast %568 : vector<1x128xf32> to vector<16x128xf32>
    %570 = arith.addf %566, %569 : vector<16x128xf32>
    %cst_310 = arith.constant 0.000000e+00 : f32
    %571 = vector.broadcast %cst_310 : f32 to vector<16x128xf32>
    %572 = arith.maximumf %570, %571 : vector<16x128xf32>
    %cst_311 = arith.constant dense<0.000000e+00> : vector<16x128xf32>
    %573 = tpu.matmul %551, %572, %cst_311 {dimension_numbers = #tpu.dot_dimension_numbers<[1], [0], [0], [1], [0, 0, 1, 1], [], []>} : vector<16x16xf32>, vector<16x128xf32>, vector<16x128xf32> -> vector<16x128xf32>
    %574 = arith.truncf %573 : vector<16x128xf32> to vector<16x128xbf16>
    %c1_312 = arith.constant 1 : index
    %c0_313 = arith.constant 0 : index
    %c0_314 = arith.constant 0 : index
    %575 = vector.load %arg3[%c1_312, %c0_313, %c0_314] : memref<9x128x128xbf16, #tpu.memory_space<vmem>>, vector<1x128x128xbf16>
    %576 = vector.shape_cast %575 : vector<1x128x128xbf16> to vector<128x128xbf16>
    %cst_315 = arith.constant dense<0.000000e+00> : vector<16x128xf32>
    %577 = tpu.matmul %574, %576, %cst_315 {dimension_numbers = #tpu.dot_dimension_numbers<[1], [0], [0], [1], [0, 0, 1, 1], [], []>} : vector<16x128xbf16>, vector<128x128xbf16>, vector<16x128xf32> -> vector<16x128xf32>
    %cst_316 = arith.constant dense<0.000000e+00> : vector<128xf32>
    %578 = vector.multi_reduction <add>, %577, %cst_316 [0] : vector<16x128xf32> to vector<128xf32>
    %579 = vector.shape_cast %578 : vector<128xf32> to vector<1x128xf32>
    %cst_317 = arith.constant 1.600000e+01 : f32
    %580 = vector.broadcast %cst_317 : f32 to vector<1x128xf32>
    %581 = arith.divf %579, %580 : vector<1x128xf32>
    %582 = arith.mulf %577, %577 : vector<16x128xf32>
    %cst_318 = arith.constant dense<0.000000e+00> : vector<128xf32>
    %583 = vector.multi_reduction <add>, %582, %cst_318 [0] : vector<16x128xf32> to vector<128xf32>
    %584 = vector.shape_cast %583 : vector<128xf32> to vector<1x128xf32>
    %cst_319 = arith.constant 1.600000e+01 : f32
    %585 = vector.broadcast %cst_319 : f32 to vector<1x128xf32>
    %586 = arith.divf %584, %585 : vector<1x128xf32>
    %587 = arith.mulf %581, %581 : vector<1x128xf32>
    %588 = arith.subf %586, %587 : vector<1x128xf32>
    %cst_320 = arith.constant 0.000000e+00 : f32
    %589 = vector.broadcast %cst_320 : f32 to vector<1x128xf32>
    %590 = arith.maximumf %588, %589 : vector<1x128xf32>
    %c1_321 = arith.constant 1 : index
    %c0_322 = arith.constant 0 : index
    %c0_323 = arith.constant 0 : index
    %591 = vector.load %arg5[%c1_321, %c0_322, %c0_323] : memref<9x1x128xf32, #tpu.memory_space<vmem>>, vector<1x1x128xf32>
    %592 = vector.shape_cast %591 : vector<1x1x128xf32> to vector<1x128xf32>
    %cst_324 = arith.constant 9.99999974E-6 : f32
    %593 = vector.broadcast %cst_324 : f32 to vector<1x128xf32>
    %594 = arith.addf %590, %593 : vector<1x128xf32>
    %595 = math.rsqrt %594 : vector<1x128xf32>
    %596 = arith.mulf %592, %595 : vector<1x128xf32>
    %c1_325 = arith.constant 1 : index
    %c0_326 = arith.constant 0 : index
    %c0_327 = arith.constant 0 : index
    %597 = vector.load %arg6[%c1_325, %c0_326, %c0_327] : memref<9x1x128xf32, #tpu.memory_space<vmem>>, vector<1x1x128xf32>
    %598 = vector.shape_cast %597 : vector<1x1x128xf32> to vector<1x128xf32>
    %599 = arith.mulf %581, %596 : vector<1x128xf32>
    %600 = arith.subf %598, %599 : vector<1x128xf32>
    %601 = vector.broadcast %596 : vector<1x128xf32> to vector<16x128xf32>
    %602 = arith.mulf %577, %601 : vector<16x128xf32>
    %603 = vector.broadcast %600 : vector<1x128xf32> to vector<16x128xf32>
    %604 = arith.addf %602, %603 : vector<16x128xf32>
    %cst_328 = arith.constant 0.000000e+00 : f32
    %605 = vector.broadcast %cst_328 : f32 to vector<16x128xf32>
    %606 = arith.maximumf %604, %605 : vector<16x128xf32>
    %cst_329 = arith.constant dense<0.000000e+00> : vector<16x128xf32>
    %607 = tpu.matmul %551, %606, %cst_329 {dimension_numbers = #tpu.dot_dimension_numbers<[1], [0], [0], [1], [0, 0, 1, 1], [], []>} : vector<16x16xf32>, vector<16x128xf32>, vector<16x128xf32> -> vector<16x128xf32>
    %608 = arith.truncf %607 : vector<16x128xf32> to vector<16x128xbf16>
    %c2_330 = arith.constant 2 : index
    %c0_331 = arith.constant 0 : index
    %c0_332 = arith.constant 0 : index
    %609 = vector.load %arg3[%c2_330, %c0_331, %c0_332] : memref<9x128x128xbf16, #tpu.memory_space<vmem>>, vector<1x128x128xbf16>
    %610 = vector.shape_cast %609 : vector<1x128x128xbf16> to vector<128x128xbf16>
    %cst_333 = arith.constant dense<0.000000e+00> : vector<16x128xf32>
    %611 = tpu.matmul %608, %610, %cst_333 {dimension_numbers = #tpu.dot_dimension_numbers<[1], [0], [0], [1], [0, 0, 1, 1], [], []>} : vector<16x128xbf16>, vector<128x128xbf16>, vector<16x128xf32> -> vector<16x128xf32>
    %cst_334 = arith.constant dense<0.000000e+00> : vector<128xf32>
    %612 = vector.multi_reduction <add>, %611, %cst_334 [0] : vector<16x128xf32> to vector<128xf32>
    %613 = vector.shape_cast %612 : vector<128xf32> to vector<1x128xf32>
    %cst_335 = arith.constant 1.600000e+01 : f32
    %614 = vector.broadcast %cst_335 : f32 to vector<1x128xf32>
    %615 = arith.divf %613, %614 : vector<1x128xf32>
    %616 = arith.mulf %611, %611 : vector<16x128xf32>
    %cst_336 = arith.constant dense<0.000000e+00> : vector<128xf32>
    %617 = vector.multi_reduction <add>, %616, %cst_336 [0] : vector<16x128xf32> to vector<128xf32>
    %618 = vector.shape_cast %617 : vector<128xf32> to vector<1x128xf32>
    %cst_337 = arith.constant 1.600000e+01 : f32
    %619 = vector.broadcast %cst_337 : f32 to vector<1x128xf32>
    %620 = arith.divf %618, %619 : vector<1x128xf32>
    %621 = arith.mulf %615, %615 : vector<1x128xf32>
    %622 = arith.subf %620, %621 : vector<1x128xf32>
    %cst_338 = arith.constant 0.000000e+00 : f32
    %623 = vector.broadcast %cst_338 : f32 to vector<1x128xf32>
    %624 = arith.maximumf %622, %623 : vector<1x128xf32>
    %c2_339 = arith.constant 2 : index
    %c0_340 = arith.constant 0 : index
    %c0_341 = arith.constant 0 : index
    %625 = vector.load %arg5[%c2_339, %c0_340, %c0_341] : memref<9x1x128xf32, #tpu.memory_space<vmem>>, vector<1x1x128xf32>
    %626 = vector.shape_cast %625 : vector<1x1x128xf32> to vector<1x128xf32>
    %cst_342 = arith.constant 9.99999974E-6 : f32
    %627 = vector.broadcast %cst_342 : f32 to vector<1x128xf32>
    %628 = arith.addf %624, %627 : vector<1x128xf32>
    %629 = math.rsqrt %628 : vector<1x128xf32>
    %630 = arith.mulf %626, %629 : vector<1x128xf32>
    %c2_343 = arith.constant 2 : index
    %c0_344 = arith.constant 0 : index
    %c0_345 = arith.constant 0 : index
    %631 = vector.load %arg6[%c2_343, %c0_344, %c0_345] : memref<9x1x128xf32, #tpu.memory_space<vmem>>, vector<1x1x128xf32>
    %632 = vector.shape_cast %631 : vector<1x1x128xf32> to vector<1x128xf32>
    %633 = arith.mulf %615, %630 : vector<1x128xf32>
    %634 = arith.subf %632, %633 : vector<1x128xf32>
    %635 = vector.broadcast %630 : vector<1x128xf32> to vector<16x128xf32>
    %636 = arith.mulf %611, %635 : vector<16x128xf32>
    %637 = vector.broadcast %634 : vector<1x128xf32> to vector<16x128xf32>
    %638 = arith.addf %636, %637 : vector<16x128xf32>
    %cst_346 = arith.constant 0.000000e+00 : f32
    %639 = vector.broadcast %cst_346 : f32 to vector<16x128xf32>
    %640 = arith.maximumf %638, %639 : vector<16x128xf32>
    %641 = arith.addf %640, %572 : vector<16x128xf32>
    %cst_347 = arith.constant dense<0.000000e+00> : vector<16x128xf32>
    %642 = tpu.matmul %551, %641, %cst_347 {dimension_numbers = #tpu.dot_dimension_numbers<[1], [0], [0], [1], [0, 0, 1, 1], [], []>} : vector<16x16xf32>, vector<16x128xf32>, vector<16x128xf32> -> vector<16x128xf32>
    %643 = arith.truncf %642 : vector<16x128xf32> to vector<16x128xbf16>
    %c3_348 = arith.constant 3 : index
    %c0_349 = arith.constant 0 : index
    %c0_350 = arith.constant 0 : index
    %644 = vector.load %arg3[%c3_348, %c0_349, %c0_350] : memref<9x128x128xbf16, #tpu.memory_space<vmem>>, vector<1x128x128xbf16>
    %645 = vector.shape_cast %644 : vector<1x128x128xbf16> to vector<128x128xbf16>
    %cst_351 = arith.constant dense<0.000000e+00> : vector<16x128xf32>
    %646 = tpu.matmul %643, %645, %cst_351 {dimension_numbers = #tpu.dot_dimension_numbers<[1], [0], [0], [1], [0, 0, 1, 1], [], []>} : vector<16x128xbf16>, vector<128x128xbf16>, vector<16x128xf32> -> vector<16x128xf32>
    %cst_352 = arith.constant dense<0.000000e+00> : vector<128xf32>
    %647 = vector.multi_reduction <add>, %646, %cst_352 [0] : vector<16x128xf32> to vector<128xf32>
    %648 = vector.shape_cast %647 : vector<128xf32> to vector<1x128xf32>
    %cst_353 = arith.constant 1.600000e+01 : f32
    %649 = vector.broadcast %cst_353 : f32 to vector<1x128xf32>
    %650 = arith.divf %648, %649 : vector<1x128xf32>
    %651 = arith.mulf %646, %646 : vector<16x128xf32>
    %cst_354 = arith.constant dense<0.000000e+00> : vector<128xf32>
    %652 = vector.multi_reduction <add>, %651, %cst_354 [0] : vector<16x128xf32> to vector<128xf32>
    %653 = vector.shape_cast %652 : vector<128xf32> to vector<1x128xf32>
    %cst_355 = arith.constant 1.600000e+01 : f32
    %654 = vector.broadcast %cst_355 : f32 to vector<1x128xf32>
    %655 = arith.divf %653, %654 : vector<1x128xf32>
    %656 = arith.mulf %650, %650 : vector<1x128xf32>
    %657 = arith.subf %655, %656 : vector<1x128xf32>
    %cst_356 = arith.constant 0.000000e+00 : f32
    %658 = vector.broadcast %cst_356 : f32 to vector<1x128xf32>
    %659 = arith.maximumf %657, %658 : vector<1x128xf32>
    %c3_357 = arith.constant 3 : index
    %c0_358 = arith.constant 0 : index
    %c0_359 = arith.constant 0 : index
    %660 = vector.load %arg5[%c3_357, %c0_358, %c0_359] : memref<9x1x128xf32, #tpu.memory_space<vmem>>, vector<1x1x128xf32>
    %661 = vector.shape_cast %660 : vector<1x1x128xf32> to vector<1x128xf32>
    %cst_360 = arith.constant 9.99999974E-6 : f32
    %662 = vector.broadcast %cst_360 : f32 to vector<1x128xf32>
    %663 = arith.addf %659, %662 : vector<1x128xf32>
    %664 = math.rsqrt %663 : vector<1x128xf32>
    %665 = arith.mulf %661, %664 : vector<1x128xf32>
    %c3_361 = arith.constant 3 : index
    %c0_362 = arith.constant 0 : index
    %c0_363 = arith.constant 0 : index
    %666 = vector.load %arg6[%c3_361, %c0_362, %c0_363] : memref<9x1x128xf32, #tpu.memory_space<vmem>>, vector<1x1x128xf32>
    %667 = vector.shape_cast %666 : vector<1x1x128xf32> to vector<1x128xf32>
    %668 = arith.mulf %650, %665 : vector<1x128xf32>
    %669 = arith.subf %667, %668 : vector<1x128xf32>
    %670 = vector.broadcast %665 : vector<1x128xf32> to vector<16x128xf32>
    %671 = arith.mulf %646, %670 : vector<16x128xf32>
    %672 = vector.broadcast %669 : vector<1x128xf32> to vector<16x128xf32>
    %673 = arith.addf %671, %672 : vector<16x128xf32>
    %cst_364 = arith.constant 0.000000e+00 : f32
    %674 = vector.broadcast %cst_364 : f32 to vector<16x128xf32>
    %675 = arith.maximumf %673, %674 : vector<16x128xf32>
    %cst_365 = arith.constant dense<0.000000e+00> : vector<16x128xf32>
    %676 = tpu.matmul %551, %675, %cst_365 {dimension_numbers = #tpu.dot_dimension_numbers<[1], [0], [0], [1], [0, 0, 1, 1], [], []>} : vector<16x16xf32>, vector<16x128xf32>, vector<16x128xf32> -> vector<16x128xf32>
    %677 = arith.truncf %676 : vector<16x128xf32> to vector<16x128xbf16>
    %c4_366 = arith.constant 4 : index
    %c0_367 = arith.constant 0 : index
    %c0_368 = arith.constant 0 : index
    %678 = vector.load %arg3[%c4_366, %c0_367, %c0_368] : memref<9x128x128xbf16, #tpu.memory_space<vmem>>, vector<1x128x128xbf16>
    %679 = vector.shape_cast %678 : vector<1x128x128xbf16> to vector<128x128xbf16>
    %cst_369 = arith.constant dense<0.000000e+00> : vector<16x128xf32>
    %680 = tpu.matmul %677, %679, %cst_369 {dimension_numbers = #tpu.dot_dimension_numbers<[1], [0], [0], [1], [0, 0, 1, 1], [], []>} : vector<16x128xbf16>, vector<128x128xbf16>, vector<16x128xf32> -> vector<16x128xf32>
    %cst_370 = arith.constant dense<0.000000e+00> : vector<128xf32>
    %681 = vector.multi_reduction <add>, %680, %cst_370 [0] : vector<16x128xf32> to vector<128xf32>
    %682 = vector.shape_cast %681 : vector<128xf32> to vector<1x128xf32>
    %cst_371 = arith.constant 1.600000e+01 : f32
    %683 = vector.broadcast %cst_371 : f32 to vector<1x128xf32>
    %684 = arith.divf %682, %683 : vector<1x128xf32>
    %685 = arith.mulf %680, %680 : vector<16x128xf32>
    %cst_372 = arith.constant dense<0.000000e+00> : vector<128xf32>
    %686 = vector.multi_reduction <add>, %685, %cst_372 [0] : vector<16x128xf32> to vector<128xf32>
    %687 = vector.shape_cast %686 : vector<128xf32> to vector<1x128xf32>
    %cst_373 = arith.constant 1.600000e+01 : f32
    %688 = vector.broadcast %cst_373 : f32 to vector<1x128xf32>
    %689 = arith.divf %687, %688 : vector<1x128xf32>
    %690 = arith.mulf %684, %684 : vector<1x128xf32>
    %691 = arith.subf %689, %690 : vector<1x128xf32>
    %cst_374 = arith.constant 0.000000e+00 : f32
    %692 = vector.broadcast %cst_374 : f32 to vector<1x128xf32>
    %693 = arith.maximumf %691, %692 : vector<1x128xf32>
    %c4_375 = arith.constant 4 : index
    %c0_376 = arith.constant 0 : index
    %c0_377 = arith.constant 0 : index
    %694 = vector.load %arg5[%c4_375, %c0_376, %c0_377] : memref<9x1x128xf32, #tpu.memory_space<vmem>>, vector<1x1x128xf32>
    %695 = vector.shape_cast %694 : vector<1x1x128xf32> to vector<1x128xf32>
    %cst_378 = arith.constant 9.99999974E-6 : f32
    %696 = vector.broadcast %cst_378 : f32 to vector<1x128xf32>
    %697 = arith.addf %693, %696 : vector<1x128xf32>
    %698 = math.rsqrt %697 : vector<1x128xf32>
    %699 = arith.mulf %695, %698 : vector<1x128xf32>
    %c4_379 = arith.constant 4 : index
    %c0_380 = arith.constant 0 : index
    %c0_381 = arith.constant 0 : index
    %700 = vector.load %arg6[%c4_379, %c0_380, %c0_381] : memref<9x1x128xf32, #tpu.memory_space<vmem>>, vector<1x1x128xf32>
    %701 = vector.shape_cast %700 : vector<1x1x128xf32> to vector<1x128xf32>
    %702 = arith.mulf %684, %699 : vector<1x128xf32>
    %703 = arith.subf %701, %702 : vector<1x128xf32>
    %704 = vector.broadcast %699 : vector<1x128xf32> to vector<16x128xf32>
    %705 = arith.mulf %680, %704 : vector<16x128xf32>
    %706 = vector.broadcast %703 : vector<1x128xf32> to vector<16x128xf32>
    %707 = arith.addf %705, %706 : vector<16x128xf32>
    %cst_382 = arith.constant 0.000000e+00 : f32
    %708 = vector.broadcast %cst_382 : f32 to vector<16x128xf32>
    %709 = arith.maximumf %707, %708 : vector<16x128xf32>
    %cst_383 = arith.constant dense<0.000000e+00> : vector<16x128xf32>
    %710 = tpu.matmul %551, %641, %cst_383 {dimension_numbers = #tpu.dot_dimension_numbers<[1], [0], [0], [1], [0, 0, 1, 1], [], []>} : vector<16x16xf32>, vector<16x128xf32>, vector<16x128xf32> -> vector<16x128xf32>
    %711 = arith.truncf %710 : vector<16x128xf32> to vector<16x128xbf16>
    %c5_384 = arith.constant 5 : index
    %c0_385 = arith.constant 0 : index
    %c0_386 = arith.constant 0 : index
    %712 = vector.load %arg3[%c5_384, %c0_385, %c0_386] : memref<9x128x128xbf16, #tpu.memory_space<vmem>>, vector<1x128x128xbf16>
    %713 = vector.shape_cast %712 : vector<1x128x128xbf16> to vector<128x128xbf16>
    %cst_387 = arith.constant dense<0.000000e+00> : vector<16x128xf32>
    %714 = tpu.matmul %711, %713, %cst_387 {dimension_numbers = #tpu.dot_dimension_numbers<[1], [0], [0], [1], [0, 0, 1, 1], [], []>} : vector<16x128xbf16>, vector<128x128xbf16>, vector<16x128xf32> -> vector<16x128xf32>
    %cst_388 = arith.constant dense<0.000000e+00> : vector<128xf32>
    %715 = vector.multi_reduction <add>, %714, %cst_388 [0] : vector<16x128xf32> to vector<128xf32>
    %716 = vector.shape_cast %715 : vector<128xf32> to vector<1x128xf32>
    %cst_389 = arith.constant 1.600000e+01 : f32
    %717 = vector.broadcast %cst_389 : f32 to vector<1x128xf32>
    %718 = arith.divf %716, %717 : vector<1x128xf32>
    %719 = arith.mulf %714, %714 : vector<16x128xf32>
    %cst_390 = arith.constant dense<0.000000e+00> : vector<128xf32>
    %720 = vector.multi_reduction <add>, %719, %cst_390 [0] : vector<16x128xf32> to vector<128xf32>
    %721 = vector.shape_cast %720 : vector<128xf32> to vector<1x128xf32>
    %cst_391 = arith.constant 1.600000e+01 : f32
    %722 = vector.broadcast %cst_391 : f32 to vector<1x128xf32>
    %723 = arith.divf %721, %722 : vector<1x128xf32>
    %724 = arith.mulf %718, %718 : vector<1x128xf32>
    %725 = arith.subf %723, %724 : vector<1x128xf32>
    %cst_392 = arith.constant 0.000000e+00 : f32
    %726 = vector.broadcast %cst_392 : f32 to vector<1x128xf32>
    %727 = arith.maximumf %725, %726 : vector<1x128xf32>
    %c5_393 = arith.constant 5 : index
    %c0_394 = arith.constant 0 : index
    %c0_395 = arith.constant 0 : index
    %728 = vector.load %arg5[%c5_393, %c0_394, %c0_395] : memref<9x1x128xf32, #tpu.memory_space<vmem>>, vector<1x1x128xf32>
    %729 = vector.shape_cast %728 : vector<1x1x128xf32> to vector<1x128xf32>
    %cst_396 = arith.constant 9.99999974E-6 : f32
    %730 = vector.broadcast %cst_396 : f32 to vector<1x128xf32>
    %731 = arith.addf %727, %730 : vector<1x128xf32>
    %732 = math.rsqrt %731 : vector<1x128xf32>
    %733 = arith.mulf %729, %732 : vector<1x128xf32>
    %c5_397 = arith.constant 5 : index
    %c0_398 = arith.constant 0 : index
    %c0_399 = arith.constant 0 : index
    %734 = vector.load %arg6[%c5_397, %c0_398, %c0_399] : memref<9x1x128xf32, #tpu.memory_space<vmem>>, vector<1x1x128xf32>
    %735 = vector.shape_cast %734 : vector<1x1x128xf32> to vector<1x128xf32>
    %736 = arith.mulf %718, %733 : vector<1x128xf32>
    %737 = arith.subf %735, %736 : vector<1x128xf32>
    %738 = vector.broadcast %733 : vector<1x128xf32> to vector<16x128xf32>
    %739 = arith.mulf %714, %738 : vector<16x128xf32>
    %740 = vector.broadcast %737 : vector<1x128xf32> to vector<16x128xf32>
    %741 = arith.addf %739, %740 : vector<16x128xf32>
    %742 = arith.addf %709, %741 : vector<16x128xf32>
    %cst_400 = arith.constant dense<0.000000e+00> : vector<16x128xf32>
    %743 = tpu.matmul %551, %742, %cst_400 {dimension_numbers = #tpu.dot_dimension_numbers<[1], [0], [0], [1], [0, 0, 1, 1], [], []>} : vector<16x16xf32>, vector<16x128xf32>, vector<16x128xf32> -> vector<16x128xf32>
    %744 = arith.truncf %743 : vector<16x128xf32> to vector<16x128xbf16>
    %c6_401 = arith.constant 6 : index
    %c0_402 = arith.constant 0 : index
    %c0_403 = arith.constant 0 : index
    %745 = vector.load %arg3[%c6_401, %c0_402, %c0_403] : memref<9x128x128xbf16, #tpu.memory_space<vmem>>, vector<1x128x128xbf16>
    %746 = vector.shape_cast %745 : vector<1x128x128xbf16> to vector<128x128xbf16>
    %cst_404 = arith.constant dense<0.000000e+00> : vector<16x128xf32>
    %747 = tpu.matmul %744, %746, %cst_404 {dimension_numbers = #tpu.dot_dimension_numbers<[1], [0], [0], [1], [0, 0, 1, 1], [], []>} : vector<16x128xbf16>, vector<128x128xbf16>, vector<16x128xf32> -> vector<16x128xf32>
    %cst_405 = arith.constant dense<0.000000e+00> : vector<128xf32>
    %748 = vector.multi_reduction <add>, %747, %cst_405 [0] : vector<16x128xf32> to vector<128xf32>
    %749 = vector.shape_cast %748 : vector<128xf32> to vector<1x128xf32>
    %cst_406 = arith.constant 1.600000e+01 : f32
    %750 = vector.broadcast %cst_406 : f32 to vector<1x128xf32>
    %751 = arith.divf %749, %750 : vector<1x128xf32>
    %752 = arith.mulf %747, %747 : vector<16x128xf32>
    %cst_407 = arith.constant dense<0.000000e+00> : vector<128xf32>
    %753 = vector.multi_reduction <add>, %752, %cst_407 [0] : vector<16x128xf32> to vector<128xf32>
    %754 = vector.shape_cast %753 : vector<128xf32> to vector<1x128xf32>
    %cst_408 = arith.constant 1.600000e+01 : f32
    %755 = vector.broadcast %cst_408 : f32 to vector<1x128xf32>
    %756 = arith.divf %754, %755 : vector<1x128xf32>
    %757 = arith.mulf %751, %751 : vector<1x128xf32>
    %758 = arith.subf %756, %757 : vector<1x128xf32>
    %cst_409 = arith.constant 0.000000e+00 : f32
    %759 = vector.broadcast %cst_409 : f32 to vector<1x128xf32>
    %760 = arith.maximumf %758, %759 : vector<1x128xf32>
    %c6_410 = arith.constant 6 : index
    %c0_411 = arith.constant 0 : index
    %c0_412 = arith.constant 0 : index
    %761 = vector.load %arg5[%c6_410, %c0_411, %c0_412] : memref<9x1x128xf32, #tpu.memory_space<vmem>>, vector<1x1x128xf32>
    %762 = vector.shape_cast %761 : vector<1x1x128xf32> to vector<1x128xf32>
    %cst_413 = arith.constant 9.99999974E-6 : f32
    %763 = vector.broadcast %cst_413 : f32 to vector<1x128xf32>
    %764 = arith.addf %760, %763 : vector<1x128xf32>
    %765 = math.rsqrt %764 : vector<1x128xf32>
    %766 = arith.mulf %762, %765 : vector<1x128xf32>
    %c6_414 = arith.constant 6 : index
    %c0_415 = arith.constant 0 : index
    %c0_416 = arith.constant 0 : index
    %767 = vector.load %arg6[%c6_414, %c0_415, %c0_416] : memref<9x1x128xf32, #tpu.memory_space<vmem>>, vector<1x1x128xf32>
    %768 = vector.shape_cast %767 : vector<1x1x128xf32> to vector<1x128xf32>
    %769 = arith.mulf %751, %766 : vector<1x128xf32>
    %770 = arith.subf %768, %769 : vector<1x128xf32>
    %771 = vector.broadcast %766 : vector<1x128xf32> to vector<16x128xf32>
    %772 = arith.mulf %747, %771 : vector<16x128xf32>
    %773 = vector.broadcast %770 : vector<1x128xf32> to vector<16x128xf32>
    %774 = arith.addf %772, %773 : vector<16x128xf32>
    %cst_417 = arith.constant 0.000000e+00 : f32
    %775 = vector.broadcast %cst_417 : f32 to vector<16x128xf32>
    %776 = arith.maximumf %774, %775 : vector<16x128xf32>
    %cst_418 = arith.constant dense<0.000000e+00> : vector<16x128xf32>
    %777 = tpu.matmul %551, %776, %cst_418 {dimension_numbers = #tpu.dot_dimension_numbers<[1], [0], [0], [1], [0, 0, 1, 1], [], []>} : vector<16x16xf32>, vector<16x128xf32>, vector<16x128xf32> -> vector<16x128xf32>
    %778 = arith.truncf %777 : vector<16x128xf32> to vector<16x128xbf16>
    %c7_419 = arith.constant 7 : index
    %c0_420 = arith.constant 0 : index
    %c0_421 = arith.constant 0 : index
    %779 = vector.load %arg3[%c7_419, %c0_420, %c0_421] : memref<9x128x128xbf16, #tpu.memory_space<vmem>>, vector<1x128x128xbf16>
    %780 = vector.shape_cast %779 : vector<1x128x128xbf16> to vector<128x128xbf16>
    %cst_422 = arith.constant dense<0.000000e+00> : vector<16x128xf32>
    %781 = tpu.matmul %778, %780, %cst_422 {dimension_numbers = #tpu.dot_dimension_numbers<[1], [0], [0], [1], [0, 0, 1, 1], [], []>} : vector<16x128xbf16>, vector<128x128xbf16>, vector<16x128xf32> -> vector<16x128xf32>
    %cst_423 = arith.constant dense<0.000000e+00> : vector<128xf32>
    %782 = vector.multi_reduction <add>, %781, %cst_423 [0] : vector<16x128xf32> to vector<128xf32>
    %783 = vector.shape_cast %782 : vector<128xf32> to vector<1x128xf32>
    %cst_424 = arith.constant 1.600000e+01 : f32
    %784 = vector.broadcast %cst_424 : f32 to vector<1x128xf32>
    %785 = arith.divf %783, %784 : vector<1x128xf32>
    %786 = arith.mulf %781, %781 : vector<16x128xf32>
    %cst_425 = arith.constant dense<0.000000e+00> : vector<128xf32>
    %787 = vector.multi_reduction <add>, %786, %cst_425 [0] : vector<16x128xf32> to vector<128xf32>
    %788 = vector.shape_cast %787 : vector<128xf32> to vector<1x128xf32>
    %cst_426 = arith.constant 1.600000e+01 : f32
    %789 = vector.broadcast %cst_426 : f32 to vector<1x128xf32>
    %790 = arith.divf %788, %789 : vector<1x128xf32>
    %791 = arith.mulf %785, %785 : vector<1x128xf32>
    %792 = arith.subf %790, %791 : vector<1x128xf32>
    %cst_427 = arith.constant 0.000000e+00 : f32
    %793 = vector.broadcast %cst_427 : f32 to vector<1x128xf32>
    %794 = arith.maximumf %792, %793 : vector<1x128xf32>
    %c7_428 = arith.constant 7 : index
    %c0_429 = arith.constant 0 : index
    %c0_430 = arith.constant 0 : index
    %795 = vector.load %arg5[%c7_428, %c0_429, %c0_430] : memref<9x1x128xf32, #tpu.memory_space<vmem>>, vector<1x1x128xf32>
    %796 = vector.shape_cast %795 : vector<1x1x128xf32> to vector<1x128xf32>
    %cst_431 = arith.constant 9.99999974E-6 : f32
    %797 = vector.broadcast %cst_431 : f32 to vector<1x128xf32>
    %798 = arith.addf %794, %797 : vector<1x128xf32>
    %799 = math.rsqrt %798 : vector<1x128xf32>
    %800 = arith.mulf %796, %799 : vector<1x128xf32>
    %c7_432 = arith.constant 7 : index
    %c0_433 = arith.constant 0 : index
    %c0_434 = arith.constant 0 : index
    %801 = vector.load %arg6[%c7_432, %c0_433, %c0_434] : memref<9x1x128xf32, #tpu.memory_space<vmem>>, vector<1x1x128xf32>
    %802 = vector.shape_cast %801 : vector<1x1x128xf32> to vector<1x128xf32>
    %803 = arith.mulf %785, %800 : vector<1x128xf32>
    %804 = arith.subf %802, %803 : vector<1x128xf32>
    %805 = vector.broadcast %800 : vector<1x128xf32> to vector<16x128xf32>
    %806 = arith.mulf %781, %805 : vector<16x128xf32>
    %807 = vector.broadcast %804 : vector<1x128xf32> to vector<16x128xf32>
    %808 = arith.addf %806, %807 : vector<16x128xf32>
    %cst_435 = arith.constant 0.000000e+00 : f32
    %809 = vector.broadcast %cst_435 : f32 to vector<16x128xf32>
    %810 = arith.maximumf %808, %809 : vector<16x128xf32>
    %811 = arith.addf %810, %742 : vector<16x128xf32>
    %cst_436 = arith.constant dense<0.000000e+00> : vector<16x128xf32>
    %812 = tpu.matmul %551, %811, %cst_436 {dimension_numbers = #tpu.dot_dimension_numbers<[1], [0], [0], [1], [0, 0, 1, 1], [], []>} : vector<16x16xf32>, vector<16x128xf32>, vector<16x128xf32> -> vector<16x128xf32>
    %813 = arith.truncf %812 : vector<16x128xf32> to vector<16x128xbf16>
    %c8_437 = arith.constant 8 : index
    %c0_438 = arith.constant 0 : index
    %c0_439 = arith.constant 0 : index
    %814 = vector.load %arg3[%c8_437, %c0_438, %c0_439] : memref<9x128x128xbf16, #tpu.memory_space<vmem>>, vector<1x128x128xbf16>
    %815 = vector.shape_cast %814 : vector<1x128x128xbf16> to vector<128x128xbf16>
    %cst_440 = arith.constant dense<0.000000e+00> : vector<16x128xf32>
    %816 = tpu.matmul %813, %815, %cst_440 {dimension_numbers = #tpu.dot_dimension_numbers<[1], [0], [0], [1], [0, 0, 1, 1], [], []>} : vector<16x128xbf16>, vector<128x128xbf16>, vector<16x128xf32> -> vector<16x128xf32>
    %c8_441 = arith.constant 8 : index
    %c0_442 = arith.constant 0 : index
    %c0_443 = arith.constant 0 : index
    %817 = vector.load %arg4[%c8_441, %c0_442, %c0_443] : memref<9x1x128xf32, #tpu.memory_space<vmem>>, vector<1x1x128xf32>
    %818 = vector.shape_cast %817 : vector<1x1x128xf32> to vector<1x128xf32>
    %819 = vector.broadcast %818 : vector<1x128xf32> to vector<16x128xf32>
    %820 = arith.addf %816, %819 : vector<16x128xf32>
    %cst_444 = arith.constant dense<0.000000e+00> : vector<128xf32>
    %821 = vector.multi_reduction <add>, %820, %cst_444 [0] : vector<16x128xf32> to vector<128xf32>
    %822 = vector.shape_cast %821 : vector<128xf32> to vector<1x128xf32>
    %cst_445 = arith.constant 1.600000e+01 : f32
    %823 = vector.broadcast %cst_445 : f32 to vector<1x128xf32>
    %824 = arith.divf %822, %823 : vector<1x128xf32>
    %c3_446 = arith.constant 3 : index
    %c0_447 = arith.constant 0 : index
    %c0_448 = arith.constant 0 : index
    %825 = vector.load %arg1[%c3_446, %c0_447, %c0_448] : memref<4x16x16xf32, #tpu.memory_space<vmem>>, vector<1x16x16xf32>
    %826 = vector.shape_cast %825 : vector<1x16x16xf32> to vector<16x16xf32>
    %c3_449 = arith.constant 3 : index
    %c0_450 = arith.constant 0 : index
    %c0_451 = arith.constant 0 : index
    %827 = vector.load %arg2[%c3_449, %c0_450, %c0_451] : memref<4x16x128xf32, #tpu.memory_space<vmem>>, vector<1x16x128xf32>
    %828 = vector.shape_cast %827 : vector<1x16x128xf32> to vector<16x128xf32>
    %829 = arith.mulf %828, %828 : vector<16x128xf32>
    %cst_452 = arith.constant dense<0.000000e+00> : vector<128xf32>
    %830 = vector.multi_reduction <add>, %829, %cst_452 [0] : vector<16x128xf32> to vector<128xf32>
    %831 = vector.shape_cast %830 : vector<128xf32> to vector<1x128xf32>
    %832 = math.sqrt %831 : vector<1x128xf32>
    %cst_453 = arith.constant 9.99999996E-13 : f32
    %833 = vector.broadcast %cst_453 : f32 to vector<1x128xf32>
    %834 = arith.maximumf %832, %833 : vector<1x128xf32>
    %835 = vector.broadcast %834 : vector<1x128xf32> to vector<16x128xf32>
    %836 = arith.divf %828, %835 : vector<16x128xf32>
    %cst_454 = arith.constant dense<0.000000e+00> : vector<16x128xf32>
    %837 = tpu.matmul %826, %836, %cst_454 {dimension_numbers = #tpu.dot_dimension_numbers<[1], [0], [0], [1], [0, 0, 1, 1], [], []>} : vector<16x16xf32>, vector<16x128xf32>, vector<16x128xf32> -> vector<16x128xf32>
    %838 = arith.truncf %837 : vector<16x128xf32> to vector<16x128xbf16>
    %c0_455 = arith.constant 0 : index
    %c0_456 = arith.constant 0 : index
    %c0_457 = arith.constant 0 : index
    %839 = vector.load %arg3[%c0_455, %c0_456, %c0_457] : memref<9x128x128xbf16, #tpu.memory_space<vmem>>, vector<1x128x128xbf16>
    %840 = vector.shape_cast %839 : vector<1x128x128xbf16> to vector<128x128xbf16>
    %cst_458 = arith.constant dense<0.000000e+00> : vector<16x128xf32>
    %841 = tpu.matmul %838, %840, %cst_458 {dimension_numbers = #tpu.dot_dimension_numbers<[1], [0], [0], [1], [0, 0, 1, 1], [], []>} : vector<16x128xbf16>, vector<128x128xbf16>, vector<16x128xf32> -> vector<16x128xf32>
    %c0_459 = arith.constant 0 : index
    %c0_460 = arith.constant 0 : index
    %c0_461 = arith.constant 0 : index
    %842 = vector.load %arg4[%c0_459, %c0_460, %c0_461] : memref<9x1x128xf32, #tpu.memory_space<vmem>>, vector<1x1x128xf32>
    %843 = vector.shape_cast %842 : vector<1x1x128xf32> to vector<1x128xf32>
    %844 = vector.broadcast %843 : vector<1x128xf32> to vector<16x128xf32>
    %845 = arith.addf %841, %844 : vector<16x128xf32>
    %cst_462 = arith.constant 0.000000e+00 : f32
    %846 = vector.broadcast %cst_462 : f32 to vector<16x128xf32>
    %847 = arith.maximumf %845, %846 : vector<16x128xf32>
    %cst_463 = arith.constant dense<0.000000e+00> : vector<16x128xf32>
    %848 = tpu.matmul %826, %847, %cst_463 {dimension_numbers = #tpu.dot_dimension_numbers<[1], [0], [0], [1], [0, 0, 1, 1], [], []>} : vector<16x16xf32>, vector<16x128xf32>, vector<16x128xf32> -> vector<16x128xf32>
    %849 = arith.truncf %848 : vector<16x128xf32> to vector<16x128xbf16>
    %c1_464 = arith.constant 1 : index
    %c0_465 = arith.constant 0 : index
    %c0_466 = arith.constant 0 : index
    %850 = vector.load %arg3[%c1_464, %c0_465, %c0_466] : memref<9x128x128xbf16, #tpu.memory_space<vmem>>, vector<1x128x128xbf16>
    %851 = vector.shape_cast %850 : vector<1x128x128xbf16> to vector<128x128xbf16>
    %cst_467 = arith.constant dense<0.000000e+00> : vector<16x128xf32>
    %852 = tpu.matmul %849, %851, %cst_467 {dimension_numbers = #tpu.dot_dimension_numbers<[1], [0], [0], [1], [0, 0, 1, 1], [], []>} : vector<16x128xbf16>, vector<128x128xbf16>, vector<16x128xf32> -> vector<16x128xf32>
    %cst_468 = arith.constant dense<0.000000e+00> : vector<128xf32>
    %853 = vector.multi_reduction <add>, %852, %cst_468 [0] : vector<16x128xf32> to vector<128xf32>
    %854 = vector.shape_cast %853 : vector<128xf32> to vector<1x128xf32>
    %cst_469 = arith.constant 1.600000e+01 : f32
    %855 = vector.broadcast %cst_469 : f32 to vector<1x128xf32>
    %856 = arith.divf %854, %855 : vector<1x128xf32>
    %857 = arith.mulf %852, %852 : vector<16x128xf32>
    %cst_470 = arith.constant dense<0.000000e+00> : vector<128xf32>
    %858 = vector.multi_reduction <add>, %857, %cst_470 [0] : vector<16x128xf32> to vector<128xf32>
    %859 = vector.shape_cast %858 : vector<128xf32> to vector<1x128xf32>
    %cst_471 = arith.constant 1.600000e+01 : f32
    %860 = vector.broadcast %cst_471 : f32 to vector<1x128xf32>
    %861 = arith.divf %859, %860 : vector<1x128xf32>
    %862 = arith.mulf %856, %856 : vector<1x128xf32>
    %863 = arith.subf %861, %862 : vector<1x128xf32>
    %cst_472 = arith.constant 0.000000e+00 : f32
    %864 = vector.broadcast %cst_472 : f32 to vector<1x128xf32>
    %865 = arith.maximumf %863, %864 : vector<1x128xf32>
    %c1_473 = arith.constant 1 : index
    %c0_474 = arith.constant 0 : index
    %c0_475 = arith.constant 0 : index
    %866 = vector.load %arg5[%c1_473, %c0_474, %c0_475] : memref<9x1x128xf32, #tpu.memory_space<vmem>>, vector<1x1x128xf32>
    %867 = vector.shape_cast %866 : vector<1x1x128xf32> to vector<1x128xf32>
    %cst_476 = arith.constant 9.99999974E-6 : f32
    %868 = vector.broadcast %cst_476 : f32 to vector<1x128xf32>
    %869 = arith.addf %865, %868 : vector<1x128xf32>
    %870 = math.rsqrt %869 : vector<1x128xf32>
    %871 = arith.mulf %867, %870 : vector<1x128xf32>
    %c1_477 = arith.constant 1 : index
    %c0_478 = arith.constant 0 : index
    %c0_479 = arith.constant 0 : index
    %872 = vector.load %arg6[%c1_477, %c0_478, %c0_479] : memref<9x1x128xf32, #tpu.memory_space<vmem>>, vector<1x1x128xf32>
    %873 = vector.shape_cast %872 : vector<1x1x128xf32> to vector<1x128xf32>
    %874 = arith.mulf %856, %871 : vector<1x128xf32>
    %875 = arith.subf %873, %874 : vector<1x128xf32>
    %876 = vector.broadcast %871 : vector<1x128xf32> to vector<16x128xf32>
    %877 = arith.mulf %852, %876 : vector<16x128xf32>
    %878 = vector.broadcast %875 : vector<1x128xf32> to vector<16x128xf32>
    %879 = arith.addf %877, %878 : vector<16x128xf32>
    %cst_480 = arith.constant 0.000000e+00 : f32
    %880 = vector.broadcast %cst_480 : f32 to vector<16x128xf32>
    %881 = arith.maximumf %879, %880 : vector<16x128xf32>
    %cst_481 = arith.constant dense<0.000000e+00> : vector<16x128xf32>
    %882 = tpu.matmul %826, %881, %cst_481 {dimension_numbers = #tpu.dot_dimension_numbers<[1], [0], [0], [1], [0, 0, 1, 1], [], []>} : vector<16x16xf32>, vector<16x128xf32>, vector<16x128xf32> -> vector<16x128xf32>
    %883 = arith.truncf %882 : vector<16x128xf32> to vector<16x128xbf16>
    %c2_482 = arith.constant 2 : index
    %c0_483 = arith.constant 0 : index
    %c0_484 = arith.constant 0 : index
    %884 = vector.load %arg3[%c2_482, %c0_483, %c0_484] : memref<9x128x128xbf16, #tpu.memory_space<vmem>>, vector<1x128x128xbf16>
    %885 = vector.shape_cast %884 : vector<1x128x128xbf16> to vector<128x128xbf16>
    %cst_485 = arith.constant dense<0.000000e+00> : vector<16x128xf32>
    %886 = tpu.matmul %883, %885, %cst_485 {dimension_numbers = #tpu.dot_dimension_numbers<[1], [0], [0], [1], [0, 0, 1, 1], [], []>} : vector<16x128xbf16>, vector<128x128xbf16>, vector<16x128xf32> -> vector<16x128xf32>
    %cst_486 = arith.constant dense<0.000000e+00> : vector<128xf32>
    %887 = vector.multi_reduction <add>, %886, %cst_486 [0] : vector<16x128xf32> to vector<128xf32>
    %888 = vector.shape_cast %887 : vector<128xf32> to vector<1x128xf32>
    %cst_487 = arith.constant 1.600000e+01 : f32
    %889 = vector.broadcast %cst_487 : f32 to vector<1x128xf32>
    %890 = arith.divf %888, %889 : vector<1x128xf32>
    %891 = arith.mulf %886, %886 : vector<16x128xf32>
    %cst_488 = arith.constant dense<0.000000e+00> : vector<128xf32>
    %892 = vector.multi_reduction <add>, %891, %cst_488 [0] : vector<16x128xf32> to vector<128xf32>
    %893 = vector.shape_cast %892 : vector<128xf32> to vector<1x128xf32>
    %cst_489 = arith.constant 1.600000e+01 : f32
    %894 = vector.broadcast %cst_489 : f32 to vector<1x128xf32>
    %895 = arith.divf %893, %894 : vector<1x128xf32>
    %896 = arith.mulf %890, %890 : vector<1x128xf32>
    %897 = arith.subf %895, %896 : vector<1x128xf32>
    %cst_490 = arith.constant 0.000000e+00 : f32
    %898 = vector.broadcast %cst_490 : f32 to vector<1x128xf32>
    %899 = arith.maximumf %897, %898 : vector<1x128xf32>
    %c2_491 = arith.constant 2 : index
    %c0_492 = arith.constant 0 : index
    %c0_493 = arith.constant 0 : index
    %900 = vector.load %arg5[%c2_491, %c0_492, %c0_493] : memref<9x1x128xf32, #tpu.memory_space<vmem>>, vector<1x1x128xf32>
    %901 = vector.shape_cast %900 : vector<1x1x128xf32> to vector<1x128xf32>
    %cst_494 = arith.constant 9.99999974E-6 : f32
    %902 = vector.broadcast %cst_494 : f32 to vector<1x128xf32>
    %903 = arith.addf %899, %902 : vector<1x128xf32>
    %904 = math.rsqrt %903 : vector<1x128xf32>
    %905 = arith.mulf %901, %904 : vector<1x128xf32>
    %c2_495 = arith.constant 2 : index
    %c0_496 = arith.constant 0 : index
    %c0_497 = arith.constant 0 : index
    %906 = vector.load %arg6[%c2_495, %c0_496, %c0_497] : memref<9x1x128xf32, #tpu.memory_space<vmem>>, vector<1x1x128xf32>
    %907 = vector.shape_cast %906 : vector<1x1x128xf32> to vector<1x128xf32>
    %908 = arith.mulf %890, %905 : vector<1x128xf32>
    %909 = arith.subf %907, %908 : vector<1x128xf32>
    %910 = vector.broadcast %905 : vector<1x128xf32> to vector<16x128xf32>
    %911 = arith.mulf %886, %910 : vector<16x128xf32>
    %912 = vector.broadcast %909 : vector<1x128xf32> to vector<16x128xf32>
    %913 = arith.addf %911, %912 : vector<16x128xf32>
    %cst_498 = arith.constant 0.000000e+00 : f32
    %914 = vector.broadcast %cst_498 : f32 to vector<16x128xf32>
    %915 = arith.maximumf %913, %914 : vector<16x128xf32>
    %916 = arith.addf %915, %847 : vector<16x128xf32>
    %cst_499 = arith.constant dense<0.000000e+00> : vector<16x128xf32>
    %917 = tpu.matmul %826, %916, %cst_499 {dimension_numbers = #tpu.dot_dimension_numbers<[1], [0], [0], [1], [0, 0, 1, 1], [], []>} : vector<16x16xf32>, vector<16x128xf32>, vector<16x128xf32> -> vector<16x128xf32>
    %918 = arith.truncf %917 : vector<16x128xf32> to vector<16x128xbf16>
    %c3_500 = arith.constant 3 : index
    %c0_501 = arith.constant 0 : index
    %c0_502 = arith.constant 0 : index
    %919 = vector.load %arg3[%c3_500, %c0_501, %c0_502] : memref<9x128x128xbf16, #tpu.memory_space<vmem>>, vector<1x128x128xbf16>
    %920 = vector.shape_cast %919 : vector<1x128x128xbf16> to vector<128x128xbf16>
    %cst_503 = arith.constant dense<0.000000e+00> : vector<16x128xf32>
    %921 = tpu.matmul %918, %920, %cst_503 {dimension_numbers = #tpu.dot_dimension_numbers<[1], [0], [0], [1], [0, 0, 1, 1], [], []>} : vector<16x128xbf16>, vector<128x128xbf16>, vector<16x128xf32> -> vector<16x128xf32>
    %cst_504 = arith.constant dense<0.000000e+00> : vector<128xf32>
    %922 = vector.multi_reduction <add>, %921, %cst_504 [0] : vector<16x128xf32> to vector<128xf32>
    %923 = vector.shape_cast %922 : vector<128xf32> to vector<1x128xf32>
    %cst_505 = arith.constant 1.600000e+01 : f32
    %924 = vector.broadcast %cst_505 : f32 to vector<1x128xf32>
    %925 = arith.divf %923, %924 : vector<1x128xf32>
    %926 = arith.mulf %921, %921 : vector<16x128xf32>
    %cst_506 = arith.constant dense<0.000000e+00> : vector<128xf32>
    %927 = vector.multi_reduction <add>, %926, %cst_506 [0] : vector<16x128xf32> to vector<128xf32>
    %928 = vector.shape_cast %927 : vector<128xf32> to vector<1x128xf32>
    %cst_507 = arith.constant 1.600000e+01 : f32
    %929 = vector.broadcast %cst_507 : f32 to vector<1x128xf32>
    %930 = arith.divf %928, %929 : vector<1x128xf32>
    %931 = arith.mulf %925, %925 : vector<1x128xf32>
    %932 = arith.subf %930, %931 : vector<1x128xf32>
    %cst_508 = arith.constant 0.000000e+00 : f32
    %933 = vector.broadcast %cst_508 : f32 to vector<1x128xf32>
    %934 = arith.maximumf %932, %933 : vector<1x128xf32>
    %c3_509 = arith.constant 3 : index
    %c0_510 = arith.constant 0 : index
    %c0_511 = arith.constant 0 : index
    %935 = vector.load %arg5[%c3_509, %c0_510, %c0_511] : memref<9x1x128xf32, #tpu.memory_space<vmem>>, vector<1x1x128xf32>
    %936 = vector.shape_cast %935 : vector<1x1x128xf32> to vector<1x128xf32>
    %cst_512 = arith.constant 9.99999974E-6 : f32
    %937 = vector.broadcast %cst_512 : f32 to vector<1x128xf32>
    %938 = arith.addf %934, %937 : vector<1x128xf32>
    %939 = math.rsqrt %938 : vector<1x128xf32>
    %940 = arith.mulf %936, %939 : vector<1x128xf32>
    %c3_513 = arith.constant 3 : index
    %c0_514 = arith.constant 0 : index
    %c0_515 = arith.constant 0 : index
    %941 = vector.load %arg6[%c3_513, %c0_514, %c0_515] : memref<9x1x128xf32, #tpu.memory_space<vmem>>, vector<1x1x128xf32>
    %942 = vector.shape_cast %941 : vector<1x1x128xf32> to vector<1x128xf32>
    %943 = arith.mulf %925, %940 : vector<1x128xf32>
    %944 = arith.subf %942, %943 : vector<1x128xf32>
    %945 = vector.broadcast %940 : vector<1x128xf32> to vector<16x128xf32>
    %946 = arith.mulf %921, %945 : vector<16x128xf32>
    %947 = vector.broadcast %944 : vector<1x128xf32> to vector<16x128xf32>
    %948 = arith.addf %946, %947 : vector<16x128xf32>
    %cst_516 = arith.constant 0.000000e+00 : f32
    %949 = vector.broadcast %cst_516 : f32 to vector<16x128xf32>
    %950 = arith.maximumf %948, %949 : vector<16x128xf32>
    %cst_517 = arith.constant dense<0.000000e+00> : vector<16x128xf32>
    %951 = tpu.matmul %826, %950, %cst_517 {dimension_numbers = #tpu.dot_dimension_numbers<[1], [0], [0], [1], [0, 0, 1, 1], [], []>} : vector<16x16xf32>, vector<16x128xf32>, vector<16x128xf32> -> vector<16x128xf32>
    %952 = arith.truncf %951 : vector<16x128xf32> to vector<16x128xbf16>
    %c4_518 = arith.constant 4 : index
    %c0_519 = arith.constant 0 : index
    %c0_520 = arith.constant 0 : index
    %953 = vector.load %arg3[%c4_518, %c0_519, %c0_520] : memref<9x128x128xbf16, #tpu.memory_space<vmem>>, vector<1x128x128xbf16>
    %954 = vector.shape_cast %953 : vector<1x128x128xbf16> to vector<128x128xbf16>
    %cst_521 = arith.constant dense<0.000000e+00> : vector<16x128xf32>
    %955 = tpu.matmul %952, %954, %cst_521 {dimension_numbers = #tpu.dot_dimension_numbers<[1], [0], [0], [1], [0, 0, 1, 1], [], []>} : vector<16x128xbf16>, vector<128x128xbf16>, vector<16x128xf32> -> vector<16x128xf32>
    %cst_522 = arith.constant dense<0.000000e+00> : vector<128xf32>
    %956 = vector.multi_reduction <add>, %955, %cst_522 [0] : vector<16x128xf32> to vector<128xf32>
    %957 = vector.shape_cast %956 : vector<128xf32> to vector<1x128xf32>
    %cst_523 = arith.constant 1.600000e+01 : f32
    %958 = vector.broadcast %cst_523 : f32 to vector<1x128xf32>
    %959 = arith.divf %957, %958 : vector<1x128xf32>
    %960 = arith.mulf %955, %955 : vector<16x128xf32>
    %cst_524 = arith.constant dense<0.000000e+00> : vector<128xf32>
    %961 = vector.multi_reduction <add>, %960, %cst_524 [0] : vector<16x128xf32> to vector<128xf32>
    %962 = vector.shape_cast %961 : vector<128xf32> to vector<1x128xf32>
    %cst_525 = arith.constant 1.600000e+01 : f32
    %963 = vector.broadcast %cst_525 : f32 to vector<1x128xf32>
    %964 = arith.divf %962, %963 : vector<1x128xf32>
    %965 = arith.mulf %959, %959 : vector<1x128xf32>
    %966 = arith.subf %964, %965 : vector<1x128xf32>
    %cst_526 = arith.constant 0.000000e+00 : f32
    %967 = vector.broadcast %cst_526 : f32 to vector<1x128xf32>
    %968 = arith.maximumf %966, %967 : vector<1x128xf32>
    %c4_527 = arith.constant 4 : index
    %c0_528 = arith.constant 0 : index
    %c0_529 = arith.constant 0 : index
    %969 = vector.load %arg5[%c4_527, %c0_528, %c0_529] : memref<9x1x128xf32, #tpu.memory_space<vmem>>, vector<1x1x128xf32>
    %970 = vector.shape_cast %969 : vector<1x1x128xf32> to vector<1x128xf32>
    %cst_530 = arith.constant 9.99999974E-6 : f32
    %971 = vector.broadcast %cst_530 : f32 to vector<1x128xf32>
    %972 = arith.addf %968, %971 : vector<1x128xf32>
    %973 = math.rsqrt %972 : vector<1x128xf32>
    %974 = arith.mulf %970, %973 : vector<1x128xf32>
    %c4_531 = arith.constant 4 : index
    %c0_532 = arith.constant 0 : index
    %c0_533 = arith.constant 0 : index
    %975 = vector.load %arg6[%c4_531, %c0_532, %c0_533] : memref<9x1x128xf32, #tpu.memory_space<vmem>>, vector<1x1x128xf32>
    %976 = vector.shape_cast %975 : vector<1x1x128xf32> to vector<1x128xf32>
    %977 = arith.mulf %959, %974 : vector<1x128xf32>
    %978 = arith.subf %976, %977 : vector<1x128xf32>
    %979 = vector.broadcast %974 : vector<1x128xf32> to vector<16x128xf32>
    %980 = arith.mulf %955, %979 : vector<16x128xf32>
    %981 = vector.broadcast %978 : vector<1x128xf32> to vector<16x128xf32>
    %982 = arith.addf %980, %981 : vector<16x128xf32>
    %cst_534 = arith.constant 0.000000e+00 : f32
    %983 = vector.broadcast %cst_534 : f32 to vector<16x128xf32>
    %984 = arith.maximumf %982, %983 : vector<16x128xf32>
    %cst_535 = arith.constant dense<0.000000e+00> : vector<16x128xf32>
    %985 = tpu.matmul %826, %916, %cst_535 {dimension_numbers = #tpu.dot_dimension_numbers<[1], [0], [0], [1], [0, 0, 1, 1], [], []>} : vector<16x16xf32>, vector<16x128xf32>, vector<16x128xf32> -> vector<16x128xf32>
    %986 = arith.truncf %985 : vector<16x128xf32> to vector<16x128xbf16>
    %c5_536 = arith.constant 5 : index
    %c0_537 = arith.constant 0 : index
    %c0_538 = arith.constant 0 : index
    %987 = vector.load %arg3[%c5_536, %c0_537, %c0_538] : memref<9x128x128xbf16, #tpu.memory_space<vmem>>, vector<1x128x128xbf16>
    %988 = vector.shape_cast %987 : vector<1x128x128xbf16> to vector<128x128xbf16>
    %cst_539 = arith.constant dense<0.000000e+00> : vector<16x128xf32>
    %989 = tpu.matmul %986, %988, %cst_539 {dimension_numbers = #tpu.dot_dimension_numbers<[1], [0], [0], [1], [0, 0, 1, 1], [], []>} : vector<16x128xbf16>, vector<128x128xbf16>, vector<16x128xf32> -> vector<16x128xf32>
    %cst_540 = arith.constant dense<0.000000e+00> : vector<128xf32>
    %990 = vector.multi_reduction <add>, %989, %cst_540 [0] : vector<16x128xf32> to vector<128xf32>
    %991 = vector.shape_cast %990 : vector<128xf32> to vector<1x128xf32>
    %cst_541 = arith.constant 1.600000e+01 : f32
    %992 = vector.broadcast %cst_541 : f32 to vector<1x128xf32>
    %993 = arith.divf %991, %992 : vector<1x128xf32>
    %994 = arith.mulf %989, %989 : vector<16x128xf32>
    %cst_542 = arith.constant dense<0.000000e+00> : vector<128xf32>
    %995 = vector.multi_reduction <add>, %994, %cst_542 [0] : vector<16x128xf32> to vector<128xf32>
    %996 = vector.shape_cast %995 : vector<128xf32> to vector<1x128xf32>
    %cst_543 = arith.constant 1.600000e+01 : f32
    %997 = vector.broadcast %cst_543 : f32 to vector<1x128xf32>
    %998 = arith.divf %996, %997 : vector<1x128xf32>
    %999 = arith.mulf %993, %993 : vector<1x128xf32>
    %1000 = arith.subf %998, %999 : vector<1x128xf32>
    %cst_544 = arith.constant 0.000000e+00 : f32
    %1001 = vector.broadcast %cst_544 : f32 to vector<1x128xf32>
    %1002 = arith.maximumf %1000, %1001 : vector<1x128xf32>
    %c5_545 = arith.constant 5 : index
    %c0_546 = arith.constant 0 : index
    %c0_547 = arith.constant 0 : index
    %1003 = vector.load %arg5[%c5_545, %c0_546, %c0_547] : memref<9x1x128xf32, #tpu.memory_space<vmem>>, vector<1x1x128xf32>
    %1004 = vector.shape_cast %1003 : vector<1x1x128xf32> to vector<1x128xf32>
    %cst_548 = arith.constant 9.99999974E-6 : f32
    %1005 = vector.broadcast %cst_548 : f32 to vector<1x128xf32>
    %1006 = arith.addf %1002, %1005 : vector<1x128xf32>
    %1007 = math.rsqrt %1006 : vector<1x128xf32>
    %1008 = arith.mulf %1004, %1007 : vector<1x128xf32>
    %c5_549 = arith.constant 5 : index
    %c0_550 = arith.constant 0 : index
    %c0_551 = arith.constant 0 : index
    %1009 = vector.load %arg6[%c5_549, %c0_550, %c0_551] : memref<9x1x128xf32, #tpu.memory_space<vmem>>, vector<1x1x128xf32>
    %1010 = vector.shape_cast %1009 : vector<1x1x128xf32> to vector<1x128xf32>
    %1011 = arith.mulf %993, %1008 : vector<1x128xf32>
    %1012 = arith.subf %1010, %1011 : vector<1x128xf32>
    %1013 = vector.broadcast %1008 : vector<1x128xf32> to vector<16x128xf32>
    %1014 = arith.mulf %989, %1013 : vector<16x128xf32>
    %1015 = vector.broadcast %1012 : vector<1x128xf32> to vector<16x128xf32>
    %1016 = arith.addf %1014, %1015 : vector<16x128xf32>
    %1017 = arith.addf %984, %1016 : vector<16x128xf32>
    %cst_552 = arith.constant dense<0.000000e+00> : vector<16x128xf32>
    %1018 = tpu.matmul %826, %1017, %cst_552 {dimension_numbers = #tpu.dot_dimension_numbers<[1], [0], [0], [1], [0, 0, 1, 1], [], []>} : vector<16x16xf32>, vector<16x128xf32>, vector<16x128xf32> -> vector<16x128xf32>
    %1019 = arith.truncf %1018 : vector<16x128xf32> to vector<16x128xbf16>
    %c6_553 = arith.constant 6 : index
    %c0_554 = arith.constant 0 : index
    %c0_555 = arith.constant 0 : index
    %1020 = vector.load %arg3[%c6_553, %c0_554, %c0_555] : memref<9x128x128xbf16, #tpu.memory_space<vmem>>, vector<1x128x128xbf16>
    %1021 = vector.shape_cast %1020 : vector<1x128x128xbf16> to vector<128x128xbf16>
    %cst_556 = arith.constant dense<0.000000e+00> : vector<16x128xf32>
    %1022 = tpu.matmul %1019, %1021, %cst_556 {dimension_numbers = #tpu.dot_dimension_numbers<[1], [0], [0], [1], [0, 0, 1, 1], [], []>} : vector<16x128xbf16>, vector<128x128xbf16>, vector<16x128xf32> -> vector<16x128xf32>
    %cst_557 = arith.constant dense<0.000000e+00> : vector<128xf32>
    %1023 = vector.multi_reduction <add>, %1022, %cst_557 [0] : vector<16x128xf32> to vector<128xf32>
    %1024 = vector.shape_cast %1023 : vector<128xf32> to vector<1x128xf32>
    %cst_558 = arith.constant 1.600000e+01 : f32
    %1025 = vector.broadcast %cst_558 : f32 to vector<1x128xf32>
    %1026 = arith.divf %1024, %1025 : vector<1x128xf32>
    %1027 = arith.mulf %1022, %1022 : vector<16x128xf32>
    %cst_559 = arith.constant dense<0.000000e+00> : vector<128xf32>
    %1028 = vector.multi_reduction <add>, %1027, %cst_559 [0] : vector<16x128xf32> to vector<128xf32>
    %1029 = vector.shape_cast %1028 : vector<128xf32> to vector<1x128xf32>
    %cst_560 = arith.constant 1.600000e+01 : f32
    %1030 = vector.broadcast %cst_560 : f32 to vector<1x128xf32>
    %1031 = arith.divf %1029, %1030 : vector<1x128xf32>
    %1032 = arith.mulf %1026, %1026 : vector<1x128xf32>
    %1033 = arith.subf %1031, %1032 : vector<1x128xf32>
    %cst_561 = arith.constant 0.000000e+00 : f32
    %1034 = vector.broadcast %cst_561 : f32 to vector<1x128xf32>
    %1035 = arith.maximumf %1033, %1034 : vector<1x128xf32>
    %c6_562 = arith.constant 6 : index
    %c0_563 = arith.constant 0 : index
    %c0_564 = arith.constant 0 : index
    %1036 = vector.load %arg5[%c6_562, %c0_563, %c0_564] : memref<9x1x128xf32, #tpu.memory_space<vmem>>, vector<1x1x128xf32>
    %1037 = vector.shape_cast %1036 : vector<1x1x128xf32> to vector<1x128xf32>
    %cst_565 = arith.constant 9.99999974E-6 : f32
    %1038 = vector.broadcast %cst_565 : f32 to vector<1x128xf32>
    %1039 = arith.addf %1035, %1038 : vector<1x128xf32>
    %1040 = math.rsqrt %1039 : vector<1x128xf32>
    %1041 = arith.mulf %1037, %1040 : vector<1x128xf32>
    %c6_566 = arith.constant 6 : index
    %c0_567 = arith.constant 0 : index
    %c0_568 = arith.constant 0 : index
    %1042 = vector.load %arg6[%c6_566, %c0_567, %c0_568] : memref<9x1x128xf32, #tpu.memory_space<vmem>>, vector<1x1x128xf32>
    %1043 = vector.shape_cast %1042 : vector<1x1x128xf32> to vector<1x128xf32>
    %1044 = arith.mulf %1026, %1041 : vector<1x128xf32>
    %1045 = arith.subf %1043, %1044 : vector<1x128xf32>
    %1046 = vector.broadcast %1041 : vector<1x128xf32> to vector<16x128xf32>
    %1047 = arith.mulf %1022, %1046 : vector<16x128xf32>
    %1048 = vector.broadcast %1045 : vector<1x128xf32> to vector<16x128xf32>
    %1049 = arith.addf %1047, %1048 : vector<16x128xf32>
    %cst_569 = arith.constant 0.000000e+00 : f32
    %1050 = vector.broadcast %cst_569 : f32 to vector<16x128xf32>
    %1051 = arith.maximumf %1049, %1050 : vector<16x128xf32>
    %cst_570 = arith.constant dense<0.000000e+00> : vector<16x128xf32>
    %1052 = tpu.matmul %826, %1051, %cst_570 {dimension_numbers = #tpu.dot_dimension_numbers<[1], [0], [0], [1], [0, 0, 1, 1], [], []>} : vector<16x16xf32>, vector<16x128xf32>, vector<16x128xf32> -> vector<16x128xf32>
    %1053 = arith.truncf %1052 : vector<16x128xf32> to vector<16x128xbf16>
    %c7_571 = arith.constant 7 : index
    %c0_572 = arith.constant 0 : index
    %c0_573 = arith.constant 0 : index
    %1054 = vector.load %arg3[%c7_571, %c0_572, %c0_573] : memref<9x128x128xbf16, #tpu.memory_space<vmem>>, vector<1x128x128xbf16>
    %1055 = vector.shape_cast %1054 : vector<1x128x128xbf16> to vector<128x128xbf16>
    %cst_574 = arith.constant dense<0.000000e+00> : vector<16x128xf32>
    %1056 = tpu.matmul %1053, %1055, %cst_574 {dimension_numbers = #tpu.dot_dimension_numbers<[1], [0], [0], [1], [0, 0, 1, 1], [], []>} : vector<16x128xbf16>, vector<128x128xbf16>, vector<16x128xf32> -> vector<16x128xf32>
    %cst_575 = arith.constant dense<0.000000e+00> : vector<128xf32>
    %1057 = vector.multi_reduction <add>, %1056, %cst_575 [0] : vector<16x128xf32> to vector<128xf32>
    %1058 = vector.shape_cast %1057 : vector<128xf32> to vector<1x128xf32>
    %cst_576 = arith.constant 1.600000e+01 : f32
    %1059 = vector.broadcast %cst_576 : f32 to vector<1x128xf32>
    %1060 = arith.divf %1058, %1059 : vector<1x128xf32>
    %1061 = arith.mulf %1056, %1056 : vector<16x128xf32>
    %cst_577 = arith.constant dense<0.000000e+00> : vector<128xf32>
    %1062 = vector.multi_reduction <add>, %1061, %cst_577 [0] : vector<16x128xf32> to vector<128xf32>
    %1063 = vector.shape_cast %1062 : vector<128xf32> to vector<1x128xf32>
    %cst_578 = arith.constant 1.600000e+01 : f32
    %1064 = vector.broadcast %cst_578 : f32 to vector<1x128xf32>
    %1065 = arith.divf %1063, %1064 : vector<1x128xf32>
    %1066 = arith.mulf %1060, %1060 : vector<1x128xf32>
    %1067 = arith.subf %1065, %1066 : vector<1x128xf32>
    %cst_579 = arith.constant 0.000000e+00 : f32
    %1068 = vector.broadcast %cst_579 : f32 to vector<1x128xf32>
    %1069 = arith.maximumf %1067, %1068 : vector<1x128xf32>
    %c7_580 = arith.constant 7 : index
    %c0_581 = arith.constant 0 : index
    %c0_582 = arith.constant 0 : index
    %1070 = vector.load %arg5[%c7_580, %c0_581, %c0_582] : memref<9x1x128xf32, #tpu.memory_space<vmem>>, vector<1x1x128xf32>
    %1071 = vector.shape_cast %1070 : vector<1x1x128xf32> to vector<1x128xf32>
    %cst_583 = arith.constant 9.99999974E-6 : f32
    %1072 = vector.broadcast %cst_583 : f32 to vector<1x128xf32>
    %1073 = arith.addf %1069, %1072 : vector<1x128xf32>
    %1074 = math.rsqrt %1073 : vector<1x128xf32>
    %1075 = arith.mulf %1071, %1074 : vector<1x128xf32>
    %c7_584 = arith.constant 7 : index
    %c0_585 = arith.constant 0 : index
    %c0_586 = arith.constant 0 : index
    %1076 = vector.load %arg6[%c7_584, %c0_585, %c0_586] : memref<9x1x128xf32, #tpu.memory_space<vmem>>, vector<1x1x128xf32>
    %1077 = vector.shape_cast %1076 : vector<1x1x128xf32> to vector<1x128xf32>
    %1078 = arith.mulf %1060, %1075 : vector<1x128xf32>
    %1079 = arith.subf %1077, %1078 : vector<1x128xf32>
    %1080 = vector.broadcast %1075 : vector<1x128xf32> to vector<16x128xf32>
    %1081 = arith.mulf %1056, %1080 : vector<16x128xf32>
    %1082 = vector.broadcast %1079 : vector<1x128xf32> to vector<16x128xf32>
    %1083 = arith.addf %1081, %1082 : vector<16x128xf32>
    %cst_587 = arith.constant 0.000000e+00 : f32
    %1084 = vector.broadcast %cst_587 : f32 to vector<16x128xf32>
    %1085 = arith.maximumf %1083, %1084 : vector<16x128xf32>
    %1086 = arith.addf %1085, %1017 : vector<16x128xf32>
    %cst_588 = arith.constant dense<0.000000e+00> : vector<16x128xf32>
    %1087 = tpu.matmul %826, %1086, %cst_588 {dimension_numbers = #tpu.dot_dimension_numbers<[1], [0], [0], [1], [0, 0, 1, 1], [], []>} : vector<16x16xf32>, vector<16x128xf32>, vector<16x128xf32> -> vector<16x128xf32>
    %1088 = arith.truncf %1087 : vector<16x128xf32> to vector<16x128xbf16>
    %c8_589 = arith.constant 8 : index
    %c0_590 = arith.constant 0 : index
    %c0_591 = arith.constant 0 : index
    %1089 = vector.load %arg3[%c8_589, %c0_590, %c0_591] : memref<9x128x128xbf16, #tpu.memory_space<vmem>>, vector<1x128x128xbf16>
    %1090 = vector.shape_cast %1089 : vector<1x128x128xbf16> to vector<128x128xbf16>
    %cst_592 = arith.constant dense<0.000000e+00> : vector<16x128xf32>
    %1091 = tpu.matmul %1088, %1090, %cst_592 {dimension_numbers = #tpu.dot_dimension_numbers<[1], [0], [0], [1], [0, 0, 1, 1], [], []>} : vector<16x128xbf16>, vector<128x128xbf16>, vector<16x128xf32> -> vector<16x128xf32>
    %c8_593 = arith.constant 8 : index
    %c0_594 = arith.constant 0 : index
    %c0_595 = arith.constant 0 : index
    %1092 = vector.load %arg4[%c8_593, %c0_594, %c0_595] : memref<9x1x128xf32, #tpu.memory_space<vmem>>, vector<1x1x128xf32>
    %1093 = vector.shape_cast %1092 : vector<1x1x128xf32> to vector<1x128xf32>
    %1094 = vector.broadcast %1093 : vector<1x128xf32> to vector<16x128xf32>
    %1095 = arith.addf %1091, %1094 : vector<16x128xf32>
    %cst_596 = arith.constant dense<0.000000e+00> : vector<128xf32>
    %1096 = vector.multi_reduction <add>, %1095, %cst_596 [0] : vector<16x128xf32> to vector<128xf32>
    %1097 = vector.shape_cast %1096 : vector<128xf32> to vector<1x128xf32>
    %cst_597 = arith.constant 1.600000e+01 : f32
    %1098 = vector.broadcast %cst_597 : f32 to vector<1x128xf32>
    %1099 = arith.divf %1097, %1098 : vector<1x128xf32>
    %1100 = tpu.concatenate %274, %549, %824, %1099 in 0 : vector<1x128xf32>, vector<1x128xf32>, vector<1x128xf32>, vector<1x128xf32> -> vector<4x128xf32>
    %c0_598 = arith.constant 0 : index
    %c0_599 = arith.constant 0 : index
    %c0_600 = arith.constant 0 : index
    %1101 = vector.load %arg7[%c0_598, %c0_599, %c0_600] : memref<1x4x128xf32, #tpu.memory_space<vmem>>, vector<1x4x128xf32>
    %1102 = vector.shape_cast %1101 : vector<1x4x128xf32> to vector<4x128xf32>
    %1103 = vector.shape_cast %1100 : vector<4x128xf32> to vector<1x4x128xf32>
    tpu.vector_store %arg7[%c0_598, %c0_599, %c0_600], %1103 {strides = array<i32>} : memref<1x4x128xf32, #tpu.memory_space<vmem>>, vector<1x4x128xf32>,
    return
  }
  func.func @transform_0(%arg0: i32) -> (i32, i32, i32) {
    %c0_i32 = arith.constant 0 : i32
    %c0_i32_0 = arith.constant 0 : i32
    %c0_i32_1 = arith.constant 0 : i32
    return %arg0, %c0_i32, %c0_i32_0 : i32, i32, i32
  }
  func.func @transform_1(%arg0: i32) -> (i32, i32, i32) {
    %c0_i32 = arith.constant 0 : i32
    %c0_i32_0 = arith.constant 0 : i32
    %c0_i32_1 = arith.constant 0 : i32
    return %arg0, %c0_i32, %c0_i32_0 : i32, i32, i32
  }
  func.func @transform_2(%arg0: i32) -> (i32, i32, i32) {
    %c0_i32 = arith.constant 0 : i32
    %c0_i32_0 = arith.constant 0 : i32
    %c0_i32_1 = arith.constant 0 : i32
    %c0_i32_2 = arith.constant 0 : i32
    return %c0_i32, %c0_i32_0, %c0_i32_1 : i32, i32, i32
  }
  func.func @transform_3(%arg0: i32) -> (i32, i32, i32) {
    %c0_i32 = arith.constant 0 : i32
    %c0_i32_0 = arith.constant 0 : i32
    %c0_i32_1 = arith.constant 0 : i32
    %c0_i32_2 = arith.constant 0 : i32
    return %c0_i32, %c0_i32_0, %c0_i32_1 : i32, i32, i32
  }
  func.func @transform_4(%arg0: i32) -> (i32, i32, i32) {
    %c0_i32 = arith.constant 0 : i32
    %c0_i32_0 = arith.constant 0 : i32
    %c0_i32_1 = arith.constant 0 : i32
    %c0_i32_2 = arith.constant 0 : i32
    return %c0_i32, %c0_i32_0, %c0_i32_1 : i32, i32, i32
  }
  func.func @transform_5(%arg0: i32) -> (i32, i32, i32) {
    %c0_i32 = arith.constant 0 : i32
    %c0_i32_0 = arith.constant 0 : i32
    %c0_i32_1 = arith.constant 0 : i32
    %c0_i32_2 = arith.constant 0 : i32
    return %c0_i32, %c0_i32_0, %c0_i32_1 : i32, i32, i32
  }
  func.func @transform_6(%arg0: i32) -> (i32, i32, i32) {
    %c0_i32 = arith.constant 0 : i32
    %c0_i32_0 = arith.constant 0 : i32
    %c0_i32_1 = arith.constant 0 : i32
    return %arg0, %c0_i32, %c0_i32_0 : i32, i32, i32
  }
}

</mosaic_0001>

<llo_original>
// kernel: resnet_gcn_forward.1
$region0: #{resnet_gcn_forward.1}
  #allocation0 [shape = 'u32[]', space=smem, size = 0x4, offset = 0x4, fixed_abs, tag = 'smem constant byte address 0x4 - core index']
  #allocation1 [shape = 'u32[144,128]{1,0:T(1,128)}', space=vmem, size = 0x12000, scoped, tag = 'internal scratch']
  %s0 = inlined_call_operand.hbm [shape: f32[8,16,16], index: 0, kind: input, shape index: {}]
  %s1 = inlined_call_operand.hbm [shape: f32[8,16,128], index: 1, kind: input, shape index: {}]
  %s2 = inlined_call_operand.hbm [shape: bf16[9,128,128], index: 2, kind: input, shape index: {}]
  %s3 = inlined_call_operand.vmem [shape: f32[9,1,128], index: 3, kind: input, shape index: {}]
  %s4 = inlined_call_operand.hbm [shape: f32[9,1,128], index: 4, kind: input, shape index: {}]
  %s5 = inlined_call_operand.vmem [shape: f32[9,1,128], index: 5, kind: input, shape index: {}]
  %s6 = inlined_call_operand.hbm [shape: f32[2,4,128], index: 6, kind: output, shape index: {}]
  %s7 = sld [smem:[#allocation0]]
  $region73: #{resnet_gcn_forward.1} parent=0
    _
  %s9 = ssub.s32 1, %s7
  %s10 = scalar_select 0, %s9, %s7
  $region1: #{resnet_gcn_forward.1} parent=0
    #allocation2 [shape = 'u8[65536]{0}', space=vmem, size = 0x10000, scoped, tag = 'input window, operand 0']
    #allocation3 [shape = 's32[2]{0}', space=sflag, size = 0x8, scoped, tag = 'scoped memory for resnet_gcn_forward.1']
    #allocation4 [shape = 's32[2]{0}', space=sflag, size = 0x8, scoped, tag = 'scoped memory for resnet_gcn_forward.1']
    #allocation5 [shape = 'u8[65536]{0}', space=vmem, size = 0x10000, scoped, tag = 'input window, operand 1']
    #allocation6 [shape = 's32[2]{0}', space=sflag, size = 0x8, scoped, tag = 'scoped memory for resnet_gcn_forward.1']
    #allocation7 [shape = 'u8[294912]{0}', space=vmem, size = 0x48000, scoped, tag = 'input window, operand 2, single buffered']
    #allocation8 [shape = 'u8[4608]{0}', space=vmem, size = 0x1400, scoped, tag = 'input window, operand 4, single buffered']
    #allocation9 [shape = 's32[1]{0}', space=sflag, size = 0x4, scoped, tag = 'scoped memory for resnet_gcn_forward.1']
    #allocation10 [shape = 'u8[4096]{0}', space=vmem, size = 0x1000, scoped, tag = 'output window, operand 0']
    %11 = vsyncpa [#allocation3], 0
    %s12 = scalar_lea.sflag [#allocation3], 1
    %13 = vsyncpa %s12, 0
    %14 = vsyncpa [#allocation6], 0
    %s15 = scalar_lea.sflag [#allocation6], 1
    %16 = vsyncpa %s15, 0
    %17 = vsyncpa [#allocation9], 0
    %18 = vsyncpa [#allocation4], 0
    %s19 = scalar_lea.sflag [#allocation4], 1
    %20 = vsyncpa %s19, 0
    loop: start=0, step=1, limit=4
    $region2: #{resnet_gcn_forward.1} parent=1 // loop_pre_header
      _
    $region3: #{resnet_gcn_forward.1} parent=1 // loop_header
      %s22 = sphi 0, %s26
      %p23 = scmp.ge.s32.totalorder %s22, 4
      %s32 = sphi 0, %s34
      %s35 = sphi 0, %s32
      %s36 = sphi 0, %s35
      %s52 = sphi 0, %s36
      %s58 = sphi 0, %s60
      %s61 = sphi 0, %s58
      %s62 = sphi 0, %s61
      %s78 = sphi 0, %s62
      %s82 = sphi 0, %s82
      %s84 = sphi 0, %s82
      %s85 = sphi 0, %s84
      %s99 = sphi 0, %s85
      %s103 = sphi 0, %s103
      %s105 = sphi 0, %s103
      %s106 = sphi 0, %s105
      %s120 = sphi 0, %s106
      %s124 = sphi 0, %s124
      %s126 = sphi 0, %s124
      %s127 = sphi 0, %s126
      %s141 = sphi 0, %s127
      %s145 = sphi 0, %s145
      %s147 = sphi 0, %s145
      %s148 = sphi 0, %s147
      %s162 = sphi 0, %s148
      %s168 = sphi 0, %s170
      %s171 = sphi 0, %s168
      %s172 = sphi 0, %s171
      %s188 = sphi 0, %s172
    $region4: #{resnet_gcn_forward.1} parent=1 // loop_header_branch
      %25 = sbr.rel (%p23) target = $region8
    $region5: #{resnet_gcn_forward.1} parent=1 // loop_body
      %s27 = ssub.s32 %s22, 1
      %s28 = ssub.s32 %s22, 2
      %s29 = sadd.s32 %s22, 1
      %s30 = ssub.s32 %s22, %s29
      %p31 = scmp.eq.s32.totalorder %s30, 0
      %s33 = sadd.s32 %s32, 1
      %s34 = scalar_select %p31, %s32, %s33
      %p37 = pneg %p31
      %p38 = scmp.eq.s32.totalorder %s22, 1
      %p39 = por %p37, %p38
      %p40 = scmp.ne.s32.totalorder %s32, %s35
      %p41 = scmp.eq.s32.totalorder %s22, 0
      %p42 = por %p40, %p41
      %p43 = scmp.ne.s32.totalorder %s32, %s35
      %p44 = scmp.eq.s32.totalorder %s27, 1
      %p45 = por %p43, %p44
      %p46 = scmp.ne.s32.totalorder %s35, %s36
      %p47 = scmp.eq.s32.totalorder %s27, 0
      %p48 = por %p46, %p47
      %p49 = scmp.ne.s32.totalorder %s35, %s36
      %p50 = scmp.eq.s32.totalorder %s28, 1
      %p51 = por %p49, %p50
      %p53 = scmp.ne.s32.totalorder %s36, %s52
      %p54 = scmp.eq.s32.totalorder %s28, 0
      %p55 = por %p53, %p54
      %s56 = ssub.s32 %s22, %s29
      %p57 = scmp.eq.s32.totalorder %s56, 0
      %s59 = sadd.s32 %s58, 1
      %s60 = scalar_select %p57, %s58, %s59
      %p63 = pneg %p57
      %p64 = scmp.eq.s32.totalorder %s22, 1
      %p65 = por %p63, %p64
      %p66 = scmp.ne.s32.totalorder %s58, %s61
      %p67 = scmp.eq.s32.totalorder %s22, 0
      %p68 = por %p66, %p67
      %p69 = scmp.ne.s32.totalorder %s58, %s61
      %p70 = scmp.eq.s32.totalorder %s27, 1
      %p71 = por %p69, %p70
      %p72 = scmp.ne.s32.totalorder %s61, %s62
      %p73 = scmp.eq.s32.totalorder %s27, 0
      %p74 = por %p72, %p73
      %p75 = scmp.ne.s32.totalorder %s61, %s62
      %p76 = scmp.eq.s32.totalorder %s28, 1
      %p77 = por %p75, %p76
      %p79 = scmp.ne.s32.totalorder %s62, %s78
      %p80 = scmp.eq.s32.totalorder %s28, 0
      %p81 = por %p79, %p80
      %s83 = sadd.s32 %s82, 1
      %p86 = scmp.eq.s32.totalorder %s22, 1
      %p87 = scmp.ne.s32.totalorder %s82, %s84
      %p88 = scmp.eq.s32.totalorder %s22, 0
      %p89 = por %p87, %p88
      %p90 = scmp.ne.s32.totalorder %s82, %s84
      %p91 = scmp.eq.s32.totalorder %s27, 1
      %p92 = por %p90, %p91
      %p93 = scmp.ne.s32.totalorder %s84, %s85
      %p94 = scmp.eq.s32.totalorder %s27, 0
      %p95 = por %p93, %p94
      %p96 = scmp.ne.s32.totalorder %s84, %s85
      %p97 = scmp.eq.s32.totalorder %s28, 1
      %p98 = por %p96, %p97
      %p100 = scmp.ne.s32.totalorder %s85, %s99
      %p101 = scmp.eq.s32.totalorder %s28, 0
      %p102 = por %p100, %p101
      %s104 = sadd.s32 %s103, 1
      %p107 = scmp.eq.s32.totalorder %s22, 1
      %p108 = scmp.ne.s32.totalorder %s103, %s105
      %p109 = scmp.eq.s32.totalorder %s22, 0
      %p110 = por %p108, %p109
      %p111 = scmp.ne.s32.totalorder %s103, %s105
      %p112 = scmp.eq.s32.totalorder %s27, 1
      %p113 = por %p111, %p112
      %p114 = scmp.ne.s32.totalorder %s105, %s106
      %p115 = scmp.eq.s32.totalorder %s27, 0
      %p116 = por %p114, %p115
      %p117 = scmp.ne.s32.totalorder %s105, %s106
      %p118 = scmp.eq.s32.totalorder %s28, 1
      %p119 = por %p117, %p118
      %p121 = scmp.ne.s32.totalorder %s106, %s120
      %p122 = scmp.eq.s32.totalorder %s28, 0
      %p123 = por %p121, %p122
      %s125 = sadd.s32 %s124, 1
      %p128 = scmp.eq.s32.totalorder %s22, 1
      %p129 = scmp.ne.s32.totalorder %s124, %s126
      %p130 = scmp.eq.s32.totalorder %s22, 0
      %p131 = por %p129, %p130
      %p132 = scmp.ne.s32.totalorder %s124, %s126
      %p133 = scmp.eq.s32.totalorder %s27, 1
      %p134 = por %p132, %p133
      %p135 = scmp.ne.s32.totalorder %s126, %s127
      %p136 = scmp.eq.s32.totalorder %s27, 0
      %p137 = por %p135, %p136
      %p138 = scmp.ne.s32.totalorder %s126, %s127
      %p139 = scmp.eq.s32.totalorder %s28, 1
      %p140 = por %p138, %p139
      %p142 = scmp.ne.s32.totalorder %s127, %s141
      %p143 = scmp.eq.s32.totalorder %s28, 0
      %p144 = por %p142, %p143
      %s146 = sadd.s32 %s145, 1
      %p149 = scmp.eq.s32.totalorder %s22, 1
      %p150 = scmp.ne.s32.totalorder %s145, %s147
      %p151 = scmp.eq.s32.totalorder %s22, 0
      %p152 = por %p150, %p151
      %p153 = scmp.ne.s32.totalorder %s145, %s147
      %p154 = scmp.eq.s32.totalorder %s27, 1
      %p155 = por %p153, %p154
      %p156 = scmp.ne.s32.totalorder %s147, %s148
      %p157 = scmp.eq.s32.totalorder %s27, 0
      %p158 = por %p156, %p157
      %p159 = scmp.ne.s32.totalorder %s147, %s148
      %p160 = scmp.eq.s32.totalorder %s28, 1
      %p161 = por %p159, %p160
      %p163 = scmp.ne.s32.totalorder %s148, %s162
      %p164 = scmp.eq.s32.totalorder %s28, 0
      %p165 = por %p163, %p164
      %s166 = ssub.s32 %s22, %s29
      %p167 = scmp.eq.s32.totalorder %s166, 0
      %s169 = sadd.s32 %s168, 1
      %s170 = scalar_select %p167, %s168, %s169
      %p173 = pneg %p167
      %p174 = scmp.eq.s32.totalorder %s22, 1
      %p175 = por %p173, %p174
      %p176 = scmp.ne.s32.totalorder %s168, %s171
      %p177 = scmp.eq.s32.totalorder %s22, 0
      %p178 = por %p176, %p177
      %p179 = scmp.ne.s32.totalorder %s168, %s171
      %p180 = scmp.eq.s32.totalorder %s27, 1
      %p181 = por %p179, %p180
      %p182 = scmp.ne.s32.totalorder %s171, %s172
      %p183 = scmp.eq.s32.totalorder %s27, 0
      %p184 = por %p182, %p183
      %p185 = scmp.ne.s32.totalorder %s171, %s172
      %p186 = scmp.eq.s32.totalorder %s28, 1
      %p187 = por %p185, %p186
      %p189 = scmp.ne.s32.totalorder %s172, %s188
      %p190 = scmp.eq.s32.totalorder %s28, 0
      %p191 = por %p189, %p190
      %p192 = scmp.le.s32.totalorder 1, %s22
      %p193 = scmp.lt.s32.totalorder %s22, 3
      %p194 = pnand %p192, %p193
      %p195 = pneg %p194
      // Predicated region
      $region9: #{resnet_gcn_forward.1} parent=5 // pred_check
        _
      $region10: #{resnet_gcn_forward.1} parent=5 // pred_check_branch
        %197 = sbr.rel (%p194) target = $region12
      $region11: #{resnet_gcn_forward.1} parent=5 // pred_region
        %s198 = ssub.s32 %s22, 1
        // Predicated region
        $region13: #{resnet_gcn_forward.1} parent=11 // pred_check
          %p199 = pneg %p95
        $region14: #{resnet_gcn_forward.1} parent=11 // pred_check_branch
          %201 = sbr.rel (%p199) target = $region16
        $region15: #{resnet_gcn_forward.1} parent=11 // pred_region
          %s203 = ssub.s32 9216, 9216
          %204 = vsyncadd [#allocation6], %s203
          %s205 = sshll.u32 [#allocation7], 4
          %s206 = int_to_ptr.vmem [resolvable:$true] %s205
          %211 = dma.hbm_to_vmem [thread:$0]  %s2, 9216, %s206, [#allocation6], 64, 64, 4
        $region16: #{resnet_gcn_forward.1} parent=11 // pred_fallthru
          _
        // Predicated region
        $region17: #{resnet_gcn_forward.1} parent=11 // pred_check
          %p212 = pneg %p116
        $region18: #{resnet_gcn_forward.1} parent=11 // pred_check_branch
          %214 = sbr.rel (%p212) target = $region20
        $region19: #{resnet_gcn_forward.1} parent=11 // pred_region
          _
        $region20: #{resnet_gcn_forward.1} parent=11 // pred_fallthru
          _
        // Predicated region
        $region21: #{resnet_gcn_forward.1} parent=11 // pred_check
          %p215 = pneg %p137
        $region22: #{resnet_gcn_forward.1} parent=11 // pred_check_branch
          %217 = sbr.rel (%p215) target = $region24
        $region23: #{resnet_gcn_forward.1} parent=11 // pred_region
          %s219 = ssub.s32 144, 144
          %220 = vsyncadd [#allocation9], %s219
          %s221 = sshll.u32 [#allocation8], 4
          %s222 = int_to_ptr.vmem [resolvable:$true] %s221
          %227 = dma.hbm_to_vmem [thread:$0]  %s4, 144, %s222, [#allocation9], 16, 16, 1
        $region24: #{resnet_gcn_forward.1} parent=11 // pred_fallthru
          _
        // Predicated region
        $region25: #{resnet_gcn_forward.1} parent=11 // pred_check
          %p228 = pneg %p158
        $region26: #{resnet_gcn_forward.1} parent=11 // pred_check_branch
          %230 = sbr.rel (%p228) target = $region28
        $region27: #{resnet_gcn_forward.1} parent=11 // pred_region
          _
        $region28: #{resnet_gcn_forward.1} parent=11 // pred_fallthru
          _
      $region12: #{resnet_gcn_forward.1} parent=5 // pred_fallthru
        _
      %p231 = scmp.lt.s32.totalorder %s22, 2
      // Predicated region
      $region29: #{resnet_gcn_forward.1} parent=5 // pred_check
        %p232 = pneg %p231
      $region30: #{resnet_gcn_forward.1} parent=5 // pred_check_branch
        %234 = sbr.rel (%p232) target = $region32
      $region31: #{resnet_gcn_forward.1} parent=5 // pred_region
        // Predicated region
        $region33: #{resnet_gcn_forward.1} parent=31 // pred_check
          %p235 = pneg %p42
        $region34: #{resnet_gcn_forward.1} parent=31 // pred_check_branch
          %237 = sbr.rel (%p235) target = $region36
        $region35: #{resnet_gcn_forward.1} parent=31 // pred_region
          %s238 = sand.u32 %s32, 1
          %s239 = scalar_lea.sflag [#allocation3], %s238
          %s240 = sand.u32 %s32, 1
          %s241 = smul.addr %s240, 64
          %s242 = scalar_lea.vmem [#allocation2], %s241
          %s243 = smul.u32 4, %s22
          %s245 = ssub.s32 1024, 1024
          %246 = vsyncadd %s239, %s245
          %s247 = smul.addr %s243, 2
          %s248 = smul.addr %s247, 128
          %s249 = scalar_lea.hbm %s0, %s248
          %s250 = sshll.u32 %s242, 4
          %s251 = int_to_ptr.vmem [resolvable:$true] %s250
          %256 = dma.hbm_to_vmem [thread:$0]  %s249, 1024, %s251, %s239, 128, 128, 8
        $region36: #{resnet_gcn_forward.1} parent=31 // pred_fallthru
          _
        // Predicated region
        $region37: #{resnet_gcn_forward.1} parent=31 // pred_check
          %p257 = pneg %p68
        $region38: #{resnet_gcn_forward.1} parent=31 // pred_check_branch
          %259 = sbr.rel (%p257) target = $region40
        $region39: #{resnet_gcn_forward.1} parent=31 // pred_region
          %s260 = sand.u32 %s22, 1
          %s261 = scalar_lea.sflag [#allocation6], %s260
          %s262 = sand.u32 %s58, 1
          %s263 = smul.addr %s262, 64
          %s264 = scalar_lea.vmem [#allocation5], %s263
          %s265 = smul.u32 4, %s22
          %s267 = ssub.s32 1024, 1024
          %268 = vsyncadd %s261, %s267
          %s269 = smul.addr %s265, 2
          %s270 = smul.addr %s269, 128
          %s271 = scalar_lea.hbm %s1, %s270
          %s272 = sshll.u32 %s264, 4
          %s273 = int_to_ptr.vmem [resolvable:$true] %s272
          %278 = dma.hbm_to_vmem [thread:$0]  %s271, 1024, %s273, %s261, 128, 128, 8
        $region40: #{resnet_gcn_forward.1} parent=31 // pred_fallthru
          _
      $region32: #{resnet_gcn_forward.1} parent=5 // pred_fallthru
        _
      %p279 = scmp.le.s32.totalorder 1, %s22
      %p280 = scmp.lt.s32.totalorder %s22, 3
      %p281 = pnand %p279, %p280
      %p282 = pneg %p281
      // Predicated region
      $region41: #{resnet_gcn_forward.1} parent=5 // pred_check
        _
      $region42: #{resnet_gcn_forward.1} parent=5 // pred_check_branch
        %284 = sbr.rel (%p281) target = $region44
      $region43: #{resnet_gcn_forward.1} parent=5 // pred_region
        %s285 = ssub.s32 %s22, 1
        %s286 = sand.u32 %s35, 1
        %s287 = scalar_lea.sflag [#allocation3], %s286
        %s288 = sand.u32 %s35, 1
        %s289 = smul.addr %s288, 64
        %s290 = scalar_lea.vmem [#allocation2], %s289
        // Predicated region
        $region45: #{resnet_gcn_forward.1} parent=43 // pred_check
          %p291 = pneg %p48
        $region46: #{resnet_gcn_forward.1} parent=43 // pred_check_branch
          %293 = sbr.rel (%p291) target = $region48
        $region47: #{resnet_gcn_forward.1} parent=43 // pred_region
          %294 = dma.done %s287, 1024
        $region48: #{resnet_gcn_forward.1} parent=43 // pred_fallthru
          _
        %s295 = sand.u32 %s27, 1
        %s296 = scalar_lea.sflag [#allocation6], %s295
        %s297 = sand.u32 %s61, 1
        %s298 = smul.addr %s297, 64
        %s299 = scalar_lea.vmem [#allocation5], %s298
        // Predicated region
        $region49: #{resnet_gcn_forward.1} parent=43 // pred_check
          %p300 = pneg %p74
        $region50: #{resnet_gcn_forward.1} parent=43 // pred_check_branch
          %302 = sbr.rel (%p300) target = $region52
        $region51: #{resnet_gcn_forward.1} parent=43 // pred_region
          %303 = dma.done %s296, 1024
        $region52: #{resnet_gcn_forward.1} parent=43 // pred_fallthru
          _
        // Predicated region
        $region53: #{resnet_gcn_forward.1} parent=43 // pred_check
          %p304 = pneg %p95
        $region54: #{resnet_gcn_forward.1} parent=43 // pred_check_branch
          %306 = sbr.rel (%p304) target = $region56
        $region55: #{resnet_gcn_forward.1} parent=43 // pred_region
          %307 = dma.done [#allocation6], 9216
        $region56: #{resnet_gcn_forward.1} parent=43 // pred_fallthru
          _
        // Predicated region
        $region57: #{resnet_gcn_forward.1} parent=43 // pred_check
          %p308 = pneg %p137
        $region58: #{resnet_gcn_forward.1} parent=43 // pred_check_branch
          %310 = sbr.rel (%p308) target = $region60
        $region59: #{resnet_gcn_forward.1} parent=43 // pred_region
          %311 = dma.done [#allocation9], 144
        $region60: #{resnet_gcn_forward.1} parent=43 // pred_fallthru
          _
        %s312 = sand.u32 %s35, 1
        %s313 = scalar_lea.sflag [#allocation3], %s312
        %s314 = sand.u32 %s35, 1
        %s315 = smul.addr %s314, 64
        %s316 = scalar_lea.vmem [#allocation2], %s315
        %p317 = pneg %p48
        %p318 = pneg %p45
        %s319 = sand.u32 %s27, 1
        %s320 = scalar_lea.sflag [#allocation6], %s319
        %s321 = sand.u32 %s61, 1
        %s322 = smul.addr %s321, 64
        %s323 = scalar_lea.vmem [#allocation5], %s322
        %p324 = pneg %p74
        %p325 = pneg %p71
        %p326 = pneg %p95
        %p327 = pneg %p92
        %p328 = pneg %p116
        %p329 = pneg %p113
        %p330 = pneg %p137
        %p331 = pneg %p134
        %p332 = pneg %p158
        %p333 = pneg %p155
        %p334 = pneg %p184
        %p335 = pneg %p181
        %s336 = sand.u32 %s171, 1
        %s337 = scalar_lea.sflag [#allocation4], %s336
        %s338 = sand.u32 %s171, 1
        %s339 = smul.addr %s338, 4
        %s340 = scalar_lea.vmem [#allocation10], %s339
        %s341 = smul.u32 4, %s27
        %s342 = smul.u32 4, %s27
        %v344 = vld [vmem:[%s290] sm:$0xff]
        %v345 = vld [vmem:[%s290 + $0x8] sm:$0xff]
        %v346 = vld [vmem:[%s299] sm:$0xff]
        %v347 = vld [vmem:[%s299 + $0x8] sm:$0xff]
        %v348 = vmul.f32 %v346, %v346
        %v349 = vmul.f32 %v347, %v347
        %v350 = vadd.f32 %v348, %v349
        %v351 = vrot.slane %v350, 4
        %v352 = vadd.f32 %v350, %v351
        %v353 = vrot.slane %v352, 2
        %v354 = vadd.f32 %v352, %v353
        %v355 = vrot.slane %v354, 1
        %v356 = vadd.f32 %v354, %v355
        %v357 = vrsqrt.pop %v356
        %v358 = vmul.f32 %v356, %v357
        %vm359 = vcmp.eq.f32.partialorder %v356, inf
        %v360 = vsel %vm359, %v356, %v358
        %vm361 = vcmp.eq.f32.partialorder %v356, 0.0
        %v362 = vand.u32 %v356, 2147483648
        %v363 = vsel %vm361, %v362, %v360
        %v364 = vmax.f32 %v363, 1e-12
        %v365 = vrcp.pop %v364
        %v366 = vmul.f32 %v346, %v365
        %v367 = vmul.f32 %v347, %v365
        %vm368 = vcmask 130048
        %v370 = vsel %vm368, %v344, 0
        %v373 = vsel %vm368, %v345, 0
        %375 = vmatprep.subr.mxu0 0.0
        %376 = vmatpush1.msra.mxu0 %v366
        %377 = vmatprep.subr.mxu0 0.0
        %378 = vmatpush1.msra.mxu0 %v367
        %379 = vmatprep.subr.mxu0 0.0
        %380 = vmatpush1.msra.mxu0 0.0
        %381 = vmatprep.subr.mxu0 0.0
        %382 = vmatpush1.msra.mxu0 0.0
        %383 = vmatprep.subr.mxu0 0.0
        %384 = vmatpush1.msra.mxu0 0.0
        %385 = vmatprep.subr.mxu0 0.0
        %386 = vmatpush1.msra.mxu0 0.0
        %387 = vmatprep.subr.mxu0 0.0
        %388 = vmatpush1.msra.mxu0 0.0
        %389 = vmatprep.subr.mxu0 0.0
        %390 = vmatpush1.msra.mxu0 0.0
        %391 = vmatprep.subr.mxu0 0.0
        %392 = vmatpush1.msra.mxu0 0.0
        %393 = vmatprep.subr.mxu0 0.0
        %394 = vmatpush1.msra.mxu0 0.0
        %395 = vmatprep.subr.mxu0 0.0
        %396 = vmatpush1.msra.mxu0 0.0
        %397 = vmatprep.subr.mxu0 0.0
        %398 = vmatpush1.msra.mxu0 0.0
        %399 = vmatprep.subr.mxu0 0.0
        %400 = vmatpush1.msra.mxu0 0.0
        %401 = vmatprep.subr.mxu0 0.0
        %402 = vmatpush1.msra.mxu0 0.0
        %403 = vmatprep.subr.mxu0 0.0
        %404 = vmatpush1.msra.mxu0 0.0
        %405 = vmatprep.subr.mxu0 0.0
        %406 = vmatpush1.msra.mxu0 0.0
        %407 = vmatprep.subr.mxu0 0.0
        %408 = vmatpush1.msra.mxu0 0.0
        %409 = vmatprep.subr.mxu0 0.0
        %410 = vmatpush1.msra.mxu0 0.0
        %411 = vmatprep.subr.mxu0 0.0
        %412 = vmatpush1.msra.mxu0 0.0
        %413 = vmatprep.subr.mxu0 0.0
        %414 = vmatpush1.msra.mxu0 0.0
        %415 = vmatprep.subr.mxu0 0.0
        %416 = vmatpush1.msra.mxu0 0.0
        %417 = vmatprep.subr.mxu0 0.0
        %418 = vmatpush1.msra.mxu0 0.0
        %419 = vmatprep.subr.mxu0 0.0
        %420 = vmatpush1.msra.mxu0 0.0
        %421 = vmatprep.subr.mxu0 0.0
        %422 = vmatpush1.msra.mxu0 0.0
        %423 = vmatprep.subr.mxu0 0.0
        %424 = vmatpush1.msra.mxu0 0.0
        %425 = vmatprep.subr.mxu0 0.0
        %426 = vmatpush1.msra.mxu0 0.0
        %427 = vmatprep.subr.mxu0 0.0
        %428 = vmatpush1.msra.mxu0 0.0
        %429 = vmatprep.subr.mxu0 0.0
        %430 = vmatpush1.msra.mxu0 0.0
        %431 = vmatprep.subr.mxu0 0.0
        %432 = vmatpush1.msra.mxu0 0.0
        %433 = vmatprep.subr.mxu0 0.0
        %434 = vmatpush1.msra.mxu0 0.0
        %435 = vmatprep.subr.mxu0 0.0
        %436 = vmatpush1.msra.mxu0 0.0
        %437 = vmatprep.subr.mxu0 0.0
        %438 = vmatpush1.msra.mxu0 0.0
        %439 = vmatprep.mubr.f32.mxu0 0.0
        %440 = vmatmul.mubr.f32.gmra.mrb[0].mxu0 %v370
        %v441 = vpop.f32.mrb[0].mxu0
        %v442 = vadd.f32 0.0, %v441
        %v443 = vpop.f32.mrb[0].mxu0
        %444 = vmatprep.mubr.f32.mxu0 0.0
        %445 = vmatmul.mubr.f32.gmra.mrb[0].mxu0 %v373
        %v446 = vpop.f32.mrb[0].mxu0
        %v447 = vadd.f32 0.0, %v446
        %v448 = vpop.f32.mrb[0].mxu0
        %449 = vdwg.mxu0
        %v450 = vpack.c.bf16 %v447, %v442
        %v451 = vld [vmem:[#allocation7] sm:$0xf]
        %v452 = vld [vmem:[#allocation7 + $0x4] sm:$0xf]
        %v453 = vld [vmem:[#allocation7 + $0x8] sm:$0xf]
        %v454 = vld [vmem:[#allocation7 + $0xc] sm:$0xf]
        %v455 = vld [vmem:[#allocation7 + $0x10] sm:$0xf]
        %v456 = vld [vmem:[#allocation7 + $0x14] sm:$0xf]
        %v457 = vld [vmem:[#allocation7 + $0x18] sm:$0xf]
        %v458 = vld [vmem:[#allocation7 + $0x1c] sm:$0xf]
        %v459 = vld [vmem:[#allocation7 + $0x20] sm:$0xf]
        %v460 = vld [vmem:[#allocation7 + $0x24] sm:$0xf]
        %v461 = vld [vmem:[#allocation7 + $0x28] sm:$0xf]
        %v462 = vld [vmem:[#allocation7 + $0x2c] sm:$0xf]
        %v463 = vld [vmem:[#allocation7 + $0x30] sm:$0xf]
        %v464 = vld [vmem:[#allocation7 + $0x34] sm:$0xf]
        %v465 = vld [vmem:[#allocation7 + $0x38] sm:$0xf]
        %v466 = vld [vmem:[#allocation7 + $0x3c] sm:$0xf]
        %v467 = vld [vmem:[%s3] sm:$0x1]
        %v469 = vlaneseq
        %v470 = vshrl.u32 %v469, 7
        %v471 = vsub.s32 0, %v470
        %v472 = vrot.slane %v467, %v471
        %v490 = vunpack.c.l.b16 %v451
        %v491 = vunpack.c.l.b16 %v452
        %v492 = vunpack.c.l.b16 %v453
        %v493 = vunpack.c.l.b16 %v454
        %v494 = vunpack.c.l.b16 %v455
        %v495 = vunpack.c.l.b16 %v456
        %v496 = vunpack.c.l.b16 %v457
        %v497 = vunpack.c.l.b16 %v458
        %v498 = vunpack.c.l.b16 %v459
        %v499 = vunpack.c.l.b16 %v460
        %v500 = vunpack.c.l.b16 %v461
        %v501 = vunpack.c.l.b16 %v462
        %v502 = vunpack.c.l.b16 %v463
        %v503 = vunpack.c.l.b16 %v464
        %v504 = vunpack.c.l.b16 %v465
        %v505 = vunpack.c.l.b16 %v466
        %v506 = vpack.c.b16 %v491, %v490
        %v507 = vpack.c.b16 %v493, %v492
        %v508 = vpack.c.b16 %v495, %v494
        %v509 = vpack.c.b16 %v497, %v496
        %v510 = vpack.c.b16 %v499, %v498
        %v511 = vpack.c.b16 %v501, %v500
        %v512 = vpack.c.b16 %v503, %v502
        %v513 = vpack.c.b16 %v505, %v504
        %522 = vmatprep.subr.bf16.mxu0 0
        %523 = vmatpush1.bf16.msra.mxu0 %v506
        %524 = vmatprep.subr.bf16.mxu0 0
        %525 = vmatpush1.bf16.msra.mxu0 %v507
        %526 = vmatprep.subr.bf16.mxu0 0
        %527 = vmatpush1.bf16.msra.mxu0 %v508
        %528 = vmatprep.subr.bf16.mxu0 0
        %529 = vmatpush1.bf16.msra.mxu0 %v509
        %530 = vmatprep.subr.bf16.mxu0 0
        %531 = vmatpush1.bf16.msra.mxu0 %v510
        %532 = vmatprep.subr.bf16.mxu0 0
        %533 = vmatpush1.bf16.msra.mxu0 %v511
        %534 = vmatprep.subr.bf16.mxu0 0
        %535 = vmatpush1.bf16.msra.mxu0 %v512
        %536 = vmatprep.subr.bf16.mxu0 0
        %537 = vmatpush1.bf16.msra.mxu0 %v513
        %538 = vmatprep.subr.bf16.mxu0 0
        %539 = vmatpush1.bf16.msra.mxu0 0
        %540 = vmatprep.subr.bf16.mxu0 0
        %541 = vmatpush1.bf16.msra.mxu0 0
        %542 = vmatprep.subr.bf16.mxu0 0
        %543 = vmatpush1.bf16.msra.mxu0 0
        %544 = vmatprep.subr.bf16.mxu0 0
        %545 = vmatpush1.bf16.msra.mxu0 0
        %546 = vmatprep.subr.bf16.mxu0 0
        %547 = vmatpush1.bf16.msra.mxu0 0
        %548 = vmatprep.subr.bf16.mxu0 0
        %549 = vmatpush1.bf16.msra.mxu0 0
        %550 = vmatprep.subr.bf16.mxu0 0
        %551 = vmatpush1.bf16.msra.mxu0 0
        %552 = vmatprep.subr.bf16.mxu0 0
        %553 = vmatpush1.bf16.msra.mxu0 0
        %554 = vmatprep.mubr.bf16.mxu0 0
        %555 = vmatmul.mubr.bf16.gmra.mrb[0].mxu0 %v450
        %v556 = vpop.f32.mrb[0].mxu0
        %v557 = vadd.f32 %v472, %v556
        %v558 = vpop.f32.mrb[0].mxu0
        %v559 = vpop.f32.mrb[0].mxu0
        %v560 = vadd.f32 %v472, %v559
        %v561 = vpop.f32.mrb[0].mxu0
        %562 = vdwg.mxu0
        %v563 = vmax.f32 %v557, 0.0
        %v564 = vmax.f32 %v560, 0.0
        %565 = vmatprep.subr.mxu0 0.0
        %566 = vmatpush1.msra.mxu0 %v563
        %567 = vmatprep.subr.mxu0 0.0
        %568 = vmatpush1.msra.mxu0 %v564
        %569 = vmatprep.subr.mxu0 0.0
        %570 = vmatpush1.msra.mxu0 0.0
        %571 = vmatprep.subr.mxu0 0.0
        %572 = vmatpush1.msra.mxu0 0.0
        %573 = vmatprep.subr.mxu0 0.0
        %574 = vmatpush1.msra.mxu0 0.0
        %575 = vmatprep.subr.mxu0 0.0
        %576 = vmatpush1.msra.mxu0 0.0
        %577 = vmatprep.subr.mxu0 0.0
        %578 = vmatpush1.msra.mxu0 0.0
        %579 = vmatprep.subr.mxu0 0.0
        %580 = vmatpush1.msra.mxu0 0.0
        %581 = vmatprep.subr.mxu0 0.0
        %582 = vmatpush1.msra.mxu0 0.0
        %583 = vmatprep.subr.mxu0 0.0
        %584 = vmatpush1.msra.mxu0 0.0
        %585 = vmatprep.subr.mxu0 0.0
        %586 = vmatpush1.msra.mxu0 0.0
        %587 = vmatprep.subr.mxu0 0.0
        %588 = vmatpush1.msra.mxu0 0.0
        %589 = vmatprep.subr.mxu0 0.0
        %590 = vmatpush1.msra.mxu0 0.0
        %591 = vmatprep.subr.mxu0 0.0
        %592 = vmatpush1.msra.mxu0 0.0
        %593 = vmatprep.subr.mxu0 0.0
        %594 = vmatpush1.msra.mxu0 0.0
        %595 = vmatprep.subr.mxu0 0.0
        %596 = vmatpush1.msra.mxu0 0.0
        %597 = vmatprep.subr.mxu0 0.0
        %598 = vmatpush1.msra.mxu0 0.0
        %599 = vmatprep.subr.mxu0 0.0
        %600 = vmatpush1.msra.mxu0 0.0
        %601 = vmatprep.subr.mxu0 0.0
        %602 = vmatpush1.msra.mxu0 0.0
        %603 = vmatprep.subr.mxu0 0.0
        %604 = vmatpush1.msra.mxu0 0.0
        %605 = vmatprep.subr.mxu0 0.0
        %606 = vmatpush1.msra.mxu0 0.0
        %607 = vmatprep.subr.mxu0 0.0
        %608 = vmatpush1.msra.mxu0 0.0
        %609 = vmatprep.subr.mxu0 0.0
        %610 = vmatpush1.msra.mxu0 0.0
        %611 = vmatprep.subr.mxu0 0.0
        %612 = vmatpush1.msra.mxu0 0.0
        %613 = vmatprep.subr.mxu0 0.0
        %614 = vmatpush1.msra.mxu0 0.0
        %615 = vmatprep.subr.mxu0 0.0
        %616 = vmatpush1.msra.mxu0 0.0
        %617 = vmatprep.subr.mxu0 0.0
        %618 = vmatpush1.msra.mxu0 0.0
        %619 = vmatprep.subr.mxu0 0.0
        %620 = vmatpush1.msra.mxu0 0.0
        %621 = vmatprep.subr.mxu0 0.0
        %622 = vmatpush1.msra.mxu0 0.0
        %623 = vmatprep.subr.mxu0 0.0
        %624 = vmatpush1.msra.mxu0 0.0
        %625 = vmatprep.subr.mxu0 0.0
        %626 = vmatpush1.msra.mxu0 0.0
        %627 = vmatprep.subr.mxu0 0.0
        %628 = vmatpush1.msra.mxu0 0.0
        %629 = vmatprep.mubr.f32.mxu0 0.0
        %630 = vmatmul.mubr.f32.gmra.mrb[0].mxu0 %v370
        %v631 = vpop.f32.mrb[0].mxu0
        %v632 = vadd.f32 0.0, %v631
        %v633 = vpop.f32.mrb[0].mxu0
        %634 = vmatprep.mubr.f32.mxu0 0.0
        %635 = vmatmul.mubr.f32.gmra.mrb[0].mxu0 %v373
        %v636 = vpop.f32.mrb[0].mxu0
        %v637 = vadd.f32 0.0, %v636
        %v638 = vpop.f32.mrb[0].mxu0
        %639 = vdwg.mxu0
        %v640 = vpack.c.bf16 %v637, %v632
        %s641 = scalar_lea.vmem [#allocation7], 64
        %v642 = vld [vmem:[%s641] sm:$0xf]
        %v643 = vld [vmem:[%s641 + $0x4] sm:$0xf]
        %v644 = vld [vmem:[%s641 + $0x8] sm:$0xf]
        %v645 = vld [vmem:[%s641 + $0xc] sm:$0xf]
        %v646 = vld [vmem:[%s641 + $0x10] sm:$0xf]
        %v647 = vld [vmem:[%s641 + $0x14] sm:$0xf]
        %v648 = vld [vmem:[%s641 + $0x18] sm:$0xf]
        %v649 = vld [vmem:[%s641 + $0x1c] sm:$0xf]
        %v650 = vld [vmem:[%s641 + $0x20] sm:$0xf]
        %v651 = vld [vmem:[%s641 + $0x24] sm:$0xf]
        %v652 = vld [vmem:[%s641 + $0x28] sm:$0xf]
        %v653 = vld [vmem:[%s641 + $0x2c] sm:$0xf]
        %v654 = vld [vmem:[%s641 + $0x30] sm:$0xf]
        %v655 = vld [vmem:[%s641 + $0x34] sm:$0xf]
        %v656 = vld [vmem:[%s641 + $0x38] sm:$0xf]
        %v657 = vld [vmem:[%s641 + $0x3c] sm:$0xf]
        %v674 = vunpack.c.l.b16 %v642
        %v675 = vunpack.c.l.b16 %v643
        %v676 = vunpack.c.l.b16 %v644
        %v677 = vunpack.c.l.b16 %v645
        %v678 = vunpack.c.l.b16 %v646
        %v679 = vunpack.c.l.b16 %v647
        %v680 = vunpack.c.l.b16 %v648
        %v681 = vunpack.c.l.b16 %v649
        %v682 = vunpack.c.l.b16 %v650
        %v683 = vunpack.c.l.b16 %v651
        %v684 = vunpack.c.l.b16 %v652
        %v685 = vunpack.c.l.b16 %v653
        %v686 = vunpack.c.l.b16 %v654
        %v687 = vunpack.c.l.b16 %v655
        %v688 = vunpack.c.l.b16 %v656
        %v689 = vunpack.c.l.b16 %v657
        %v690 = vpack.c.b16 %v675, %v674
        %v691 = vpack.c.b16 %v677, %v676
        %v692 = vpack.c.b16 %v679, %v678
        %v693 = vpack.c.b16 %v681, %v680
        %v694 = vpack.c.b16 %v683, %v682
        %v695 = vpack.c.b16 %v685, %v684
        %v696 = vpack.c.b16 %v687, %v686
        %v697 = vpack.c.b16 %v689, %v688
        %706 = vmatprep.subr.bf16.mxu0 0
        %707 = vmatpush1.bf16.msra.mxu0 %v690
        %708 = vmatprep.subr.bf16.mxu0 0
        %709 = vmatpush1.bf16.msra.mxu0 %v691
        %710 = vmatprep.subr.bf16.mxu0 0
        %711 = vmatpush1.bf16.msra.mxu0 %v692
        %712 = vmatprep.subr.bf16.mxu0 0
        %713 = vmatpush1.bf16.msra.mxu0 %v693
        %714 = vmatprep.subr.bf16.mxu0 0
        %715 = vmatpush1.bf16.msra.mxu0 %v694
        %716 = vmatprep.subr.bf16.mxu0 0
        %717 = vmatpush1.bf16.msra.mxu0 %v695
        %718 = vmatprep.subr.bf16.mxu0 0
        %719 = vmatpush1.bf16.msra.mxu0 %v696
        %720 = vmatprep.subr.bf16.mxu0 0
        %721 = vmatpush1.bf16.msra.mxu0 %v697
        %722 = vmatprep.subr.bf16.mxu0 0
        %723 = vmatpush1.bf16.msra.mxu0 0
        %724 = vmatprep.subr.bf16.mxu0 0
        %725 = vmatpush1.bf16.msra.mxu0 0
        %726 = vmatprep.subr.bf16.mxu0 0
        %727 = vmatpush1.bf16.msra.mxu0 0
        %728 = vmatprep.subr.bf16.mxu0 0
        %729 = vmatpush1.bf16.msra.mxu0 0
        %730 = vmatprep.subr.bf16.mxu0 0
        %731 = vmatpush1.bf16.msra.mxu0 0
        %732 = vmatprep.subr.bf16.mxu0 0
        %733 = vmatpush1.bf16.msra.mxu0 0
        %734 = vmatprep.subr.bf16.mxu0 0
        %735 = vmatpush1.bf16.msra.mxu0 0
        %736 = vmatprep.subr.bf16.mxu0 0
        %737 = vmatpush1.bf16.msra.mxu0 0
        %738 = vmatprep.mubr.bf16.mxu0 0
        %739 = vmatmul.mubr.bf16.gmra.mrb[0].mxu0 %v640
        %v740 = vpop.f32.mrb[0].mxu0
        %v741 = vadd.f32 0.0, %v740
        %v742 = vpop.f32.mrb[0].mxu0
        %v743 = vpop.f32.mrb[0].mxu0
        %v744 = vadd.f32 0.0, %v743
        %v745 = vpop.f32.mrb[0].mxu0
        %746 = vdwg.mxu0
        %v747 = vadd.f32 %v741, %v744
        %v748 = vrot.slane %v747, 4
        %v749 = vadd.f32 %v747, %v748
        %v750 = vrot.slane %v749, 2
        %v751 = vadd.f32 %v749, %v750
        %v752 = vrot.slane %v751, 1
        %v753 = vadd.f32 %v751, %v752
        %v754 = vrcp.pop 16.0
        %v755 = vmul.f32 %v753, %v754
        %v756 = vmul.f32 %v741, %v741
        %v757 = vmul.f32 %v744, %v744
        %v758 = vadd.f32 %v756, %v757
        %v759 = vrot.slane %v758, 4
        %v760 = vadd.f32 %v758, %v759
        %v761 = vrot.slane %v760, 2
        %v762 = vadd.f32 %v760, %v761
        %v763 = vrot.slane %v762, 1
        %v764 = vadd.f32 %v762, %v763
        %v765 = vmul.f32 %v764, %v754
        %v766 = vmul.f32 %v755, %v755
        %v767 = vsub.f32 %v765, %v766
        %v768 = vmax.f32 %v767, 0.0
        %s769 = scalar_lea.vmem [#allocation8], 1
        %v770 = vld [vmem:[%s769] sm:$0x1]
        %v771 = vadd.f32 %v768, 1e-05
        %v772 = vrsqrt.pop %v771
        %v773 = vmul.f32 %v770, %v772
        %s774 = scalar_lea.vmem %s5, 1
        %v775 = vld [vmem:[%s774] sm:$0x1]
        %v776 = vmul.f32 %v755, %v773
        %v777 = vsub.f32 %v775, %v776
        %v779 = vlaneseq
        %v780 = vshrl.u32 %v779, 7
        %v781 = vsub.s32 0, %v780
        %v782 = vrot.slane %v773, %v781
        %v784 = vmul.f32 %v741, %v782
        %v785 = vmul.f32 %v744, %v782
        %v787 = vlaneseq
        %v788 = vshrl.u32 %v787, 7
        %v789 = vsub.s32 0, %v788
        %v790 = vrot.slane %v777, %v789
        %v792 = vadd.f32 %v784, %v790
        %v793 = vadd.f32 %v785, %v790
        %v794 = vmax.f32 %v792, 0.0
        %v795 = vmax.f32 %v793, 0.0
        %796 = vmatprep.subr.mxu0 0.0
        %797 = vmatpush1.msra.mxu0 %v794
        %798 = vmatprep.subr.mxu0 0.0
        %799 = vmatpush1.msra.mxu0 %v795
        %800 = vmatprep.subr.mxu0 0.0
        %801 = vmatpush1.msra.mxu0 0.0
        %802 = vmatprep.subr.mxu0 0.0
        %803 = vmatpush1.msra.mxu0 0.0
        %804 = vmatprep.subr.mxu0 0.0
        %805 = vmatpush1.msra.mxu0 0.0
        %806 = vmatprep.subr.mxu0 0.0
        %807 = vmatpush1.msra.mxu0 0.0
        %808 = vmatprep.subr.mxu0 0.0
        %809 = vmatpush1.msra.mxu0 0.0
        %810 = vmatprep.subr.mxu0 0.0
        %811 = vmatpush1.msra.mxu0 0.0
        %812 = vmatprep.subr.mxu0 0.0
        %813 = vmatpush1.msra.mxu0 0.0
        %814 = vmatprep.subr.mxu0 0.0
        %815 = vmatpush1.msra.mxu0 0.0
        %816 = vmatprep.subr.mxu0 0.0
        %817 = vmatpush1.msra.mxu0 0.0
        %818 = vmatprep.subr.mxu0 0.0
        %819 = vmatpush1.msra.mxu0 0.0
        %820 = vmatprep.subr.mxu0 0.0
        %821 = vmatpush1.msra.mxu0 0.0
        %822 = vmatprep.subr.mxu0 0.0
        %823 = vmatpush1.msra.mxu0 0.0
        %824 = vmatprep.subr.mxu0 0.0
        %825 = vmatpush1.msra.mxu0 0.0
        %826 = vmatprep.subr.mxu0 0.0
        %827 = vmatpush1.msra.mxu0 0.0
        %828 = vmatprep.subr.mxu0 0.0
        %829 = vmatpush1.msra.mxu0 0.0
        %830 = vmatprep.subr.mxu0 0.0
        %831 = vmatpush1.msra.mxu0 0.0
        %832 = vmatprep.subr.mxu0 0.0
        %833 = vmatpush1.msra.mxu0 0.0
        %834 = vmatprep.subr.mxu0 0.0
        %835 = vmatpush1.msra.mxu0 0.0
        %836 = vmatprep.subr.mxu0 0.0
        %837 = vmatpush1.msra.mxu0 0.0
        %838 = vmatprep.subr.mxu0 0.0
        %839 = vmatpush1.msra.mxu0 0.0
        %840 = vmatprep.subr.mxu0 0.0
        %841 = vmatpush1.msra.mxu0 0.0
        %842 = vmatprep.subr.mxu0 0.0
        %843 = vmatpush1.msra.mxu0 0.0
        %844 = vmatprep.subr.mxu0 0.0
        %845 = vmatpush1.msra.mxu0 0.0
        %846 = vmatprep.subr.mxu0 0.0
        %847 = vmatpush1.msra.mxu0 0.0
        %848 = vmatprep.subr.mxu0 0.0
        %849 = vmatpush1.msra.mxu0 0.0
        %850 = vmatprep.subr.mxu0 0.0
        %851 = vmatpush1.msra.mxu0 0.0
        %852 = vmatprep.subr.mxu0 0.0
        %853 = vmatpush1.msra.mxu0 0.0
        %854 = vmatprep.subr.mxu0 0.0
        %855 = vmatpush1.msra.mxu0 0.0
        %856 = vmatprep.subr.mxu0 0.0
        %857 = vmatpush1.msra.mxu0 0.0
        %858 = vmatprep.subr.mxu0 0.0
        %859 = vmatpush1.msra.mxu0 0.0
        %860 = vmatprep.mubr.f32.mxu0 0.0
        %861 = vmatmul.mubr.f32.gmra.mrb[0].mxu0 %v370
        %v862 = vpop.f32.mrb[0].mxu0
        %v863 = vadd.f32 0.0, %v862
        %v864 = vpop.f32.mrb[0].mxu0
        %865 = vmatprep.mubr.f32.mxu0 0.0
        %866 = vmatmul.mubr.f32.gmra.mrb[0].mxu0 %v373
        %v867 = vpop.f32.mrb[0].mxu0
        %v868 = vadd.f32 0.0, %v867
        %v869 = vpop.f32.mrb[0].mxu0
        %870 = vdwg.mxu0
        %v871 = vpack.c.bf16 %v868, %v863
        %s872 = scalar_lea.vmem [#allocation7], 128
        %v873 = vld [vmem:[%s872] sm:$0xf]
        %v874 = vld [vmem:[%s872 + $0x4] sm:$0xf]
        %v875 = vld [vmem:[%s872 + $0x8] sm:$0xf]
        %v876 = vld [vmem:[%s872 + $0xc] sm:$0xf]
        %v877 = vld [vmem:[%s872 + $0x10] sm:$0xf]
        %v878 = vld [vmem:[%s872 + $0x14] sm:$0xf]
        %v879 = vld [vmem:[%s872 + $0x18] sm:$0xf]
        %v880 = vld [vmem:[%s872 + $0x1c] sm:$0xf]
        %v881 = vld [vmem:[%s872 + $0x20] sm:$0xf]
        %v882 = vld [vmem:[%s872 + $0x24] sm:$0xf]
        %v883 = vld [vmem:[%s872 + $0x28] sm:$0xf]
        %v884 = vld [vmem:[%s872 + $0x2c] sm:$0xf]
        %v885 = vld [vmem:[%s872 + $0x30] sm:$0xf]
        %v886 = vld [vmem:[%s872 + $0x34] sm:$0xf]
        %v887 = vld [vmem:[%s872 + $0x38] sm:$0xf]
        %v888 = vld [vmem:[%s872 + $0x3c] sm:$0xf]
        %v905 = vunpack.c.l.b16 %v873
        %v906 = vunpack.c.l.b16 %v874
        %v907 = vunpack.c.l.b16 %v875
        %v908 = vunpack.c.l.b16 %v876
        %v909 = vunpack.c.l.b16 %v877
        %v910 = vunpack.c.l.b16 %v878
        %v911 = vunpack.c.l.b16 %v879
        %v912 = vunpack.c.l.b16 %v880
        %v913 = vunpack.c.l.b16 %v881
        %v914 = vunpack.c.l.b16 %v882
        %v915 = vunpack.c.l.b16 %v883
        %v916 = vunpack.c.l.b16 %v884
        %v917 = vunpack.c.l.b16 %v885
        %v918 = vunpack.c.l.b16 %v886
        %v919 = vunpack.c.l.b16 %v887
        %v920 = vunpack.c.l.b16 %v888
        %v921 = vpack.c.b16 %v906, %v905
        %v922 = vpack.c.b16 %v908, %v907
        %v923 = vpack.c.b16 %v910, %v909
        %v924 = vpack.c.b16 %v912, %v911
        %v925 = vpack.c.b16 %v914, %v913
        %v926 = vpack.c.b16 %v916, %v915
        %v927 = vpack.c.b16 %v918, %v917
        %v928 = vpack.c.b16 %v920, %v919
        %937 = vmatprep.subr.bf16.mxu0 0
        %938 = vmatpush1.bf16.msra.mxu0 %v921
        %939 = vmatprep.subr.bf16.mxu0 0
        %940 = vmatpush1.bf16.msra.mxu0 %v922
        %941 = vmatprep.subr.bf16.mxu0 0
        %942 = vmatpush1.bf16.msra.mxu0 %v923
        %943 = vmatprep.subr.bf16.mxu0 0
        %944 = vmatpush1.bf16.msra.mxu0 %v924
        %945 = vmatprep.subr.bf16.mxu0 0
        %946 = vmatpush1.bf16.msra.mxu0 %v925
        %947 = vmatprep.subr.bf16.mxu0 0
        %948 = vmatpush1.bf16.msra.mxu0 %v926
        %949 = vmatprep.subr.bf16.mxu0 0
        %950 = vmatpush1.bf16.msra.mxu0 %v927
        %951 = vmatprep.subr.bf16.mxu0 0
        %952 = vmatpush1.bf16.msra.mxu0 %v928
        %953 = vmatprep.subr.bf16.mxu0 0
        %954 = vmatpush1.bf16.msra.mxu0 0
        %955 = vmatprep.subr.bf16.mxu0 0
        %956 = vmatpush1.bf16.msra.mxu0 0
        %957 = vmatprep.subr.bf16.mxu0 0
        %958 = vmatpush1.bf16.msra.mxu0 0
        %959 = vmatprep.subr.bf16.mxu0 0
        %960 = vmatpush1.bf16.msra.mxu0 0
        %961 = vmatprep.subr.bf16.mxu0 0
        %962 = vmatpush1.bf16.msra.mxu0 0
        %963 = vmatprep.subr.bf16.mxu0 0
        %964 = vmatpush1.bf16.msra.mxu0 0
        %965 = vmatprep.subr.bf16.mxu0 0
        %966 = vmatpush1.bf16.msra.mxu0 0
        %967 = vmatprep.subr.bf16.mxu0 0
        %968 = vmatpush1.bf16.msra.mxu0 0
        %969 = vmatprep.mubr.bf16.mxu0 0
        %970 = vmatmul.mubr.bf16.gmra.mrb[0].mxu0 %v871
        %v971 = vpop.f32.mrb[0].mxu0
        %v972 = vadd.f32 0.0, %v971
        %v973 = vpop.f32.mrb[0].mxu0
        %v974 = vpop.f32.mrb[0].mxu0
        %v975 = vadd.f32 0.0, %v974
        %v976 = vpop.f32.mrb[0].mxu0
        %977 = vdwg.mxu0
        %v978 = vadd.f32 %v972, %v975
        %v979 = vrot.slane %v978, 4
        %v980 = vadd.f32 %v978, %v979
        %v981 = vrot.slane %v980, 2
        %v982 = vadd.f32 %v980, %v981
        %v983 = vrot.slane %v982, 1
        %v984 = vadd.f32 %v982, %v983
        %v985 = vmul.f32 %v984, %v754
        %v986 = vmul.f32 %v972, %v972
        %v987 = vmul.f32 %v975, %v975
        %v988 = vadd.f32 %v986, %v987
        %v989 = vrot.slane %v988, 4
        %v990 = vadd.f32 %v988, %v989
        %v991 = vrot.slane %v990, 2
        %v992 = vadd.f32 %v990, %v991
        %v993 = vrot.slane %v992, 1
        %v994 = vadd.f32 %v992, %v993
        %v995 = vmul.f32 %v994, %v754
        %v996 = vmul.f32 %v985, %v985
        %v997 = vsub.f32 %v995, %v996
        %v998 = vmax.f32 %v997, 0.0
        %s999 = scalar_lea.vmem [#allocation8], 2
        %v1000 = vld [vmem:[%s999] sm:$0x1]
        %v1001 = vadd.f32 %v998, 1e-05
        %v1002 = vrsqrt.pop %v1001
        %v1003 = vmul.f32 %v1000, %v1002
        %s1004 = scalar_lea.vmem %s5, 2
        %v1005 = vld [vmem:[%s1004] sm:$0x1]
        %v1006 = vmul.f32 %v985, %v1003
        %v1007 = vsub.f32 %v1005, %v1006
        %v1009 = vlaneseq
        %v1010 = vshrl.u32 %v1009, 7
        %v1011 = vsub.s32 0, %v1010
        %v1012 = vrot.slane %v1003, %v1011
        %v1014 = vmul.f32 %v972, %v1012
        %v1015 = vmul.f32 %v975, %v1012
        %v1017 = vlaneseq
        %v1018 = vshrl.u32 %v1017, 7
        %v1019 = vsub.s32 0, %v1018
        %v1020 = vrot.slane %v1007, %v1019
        %v1022 = vadd.f32 %v1014, %v1020
        %v1023 = vadd.f32 %v1015, %v1020
        %v1024 = vmax.f32 %v1022, 0.0
        %v1025 = vmax.f32 %v1023, 0.0
        %v1026 = vadd.f32 %v1024, %v563
        %v1027 = vadd.f32 %v1025, %v564
        %1028 = vmatprep.subr.mxu0 0.0
        %1029 = vmatpush1.msra.mxu0 %v1026
        %1030 = vmatprep.subr.mxu0 0.0
        %1031 = vmatpush1.msra.mxu0 %v1027
        %1032 = vmatprep.subr.mxu0 0.0
        %1033 = vmatpush1.msra.mxu0 0.0
        %1034 = vmatprep.subr.mxu0 0.0
        %1035 = vmatpush1.msra.mxu0 0.0
        %1036 = vmatprep.subr.mxu0 0.0
        %1037 = vmatpush1.msra.mxu0 0.0
        %1038 = vmatprep.subr.mxu0 0.0
        %1039 = vmatpush1.msra.mxu0 0.0
        %1040 = vmatprep.subr.mxu0 0.0
        %1041 = vmatpush1.msra.mxu0 0.0
        %1042 = vmatprep.subr.mxu0 0.0
        %1043 = vmatpush1.msra.mxu0 0.0
        %1044 = vmatprep.subr.mxu0 0.0
        %1045 = vmatpush1.msra.mxu0 0.0
        %1046 = vmatprep.subr.mxu0 0.0
        %1047 = vmatpush1.msra.mxu0 0.0
        %1048 = vmatprep.subr.mxu0 0.0
        %1049 = vmatpush1.msra.mxu0 0.0
        %1050 = vmatprep.subr.mxu0 0.0
        %1051 = vmatpush1.msra.mxu0 0.0
        %1052 = vmatprep.subr.mxu0 0.0
        %1053 = vmatpush1.msra.mxu0 0.0
        %1054 = vmatprep.subr.mxu0 0.0
        %1055 = vmatpush1.msra.mxu0 0.0
        %1056 = vmatprep.subr.mxu0 0.0
        %1057 = vmatpush1.msra.mxu0 0.0
        %1058 = vmatprep.subr.mxu0 0.0
        %1059 = vmatpush1.msra.mxu0 0.0
        %1060 = vmatprep.subr.mxu0 0.0
        %1061 = vmatpush1.msra.mxu0 0.0
        %1062 = vmatprep.subr.mxu0 0.0
        %1063 = vmatpush1.msra.mxu0 0.0
        %1064 = vmatprep.subr.mxu0 0.0
        %1065 = vmatpush1.msra.mxu0 0.0
        %1066 = vmatprep.subr.mxu0 0.0
        %1067 = vmatpush1.msra.mxu0 0.0
        %1068 = vmatprep.subr.mxu0 0.0
        %1069 = vmatpush1.msra.mxu0 0.0
        %1070 = vmatprep.subr.mxu0 0.0
        %1071 = vmatpush1.msra.mxu0 0.0
        %1072 = vmatprep.subr.mxu0 0.0
        %1073 = vmatpush1.msra.mxu0 0.0
        %1074 = vmatprep.subr.mxu0 0.0
        %1075 = vmatpush1.msra.mxu0 0.0
        %1076 = vmatprep.subr.mxu0 0.0
        %1077 = vmatpush1.msra.mxu0 0.0
        %1078 = vmatprep.subr.mxu0 0.0
        %1079 = vmatpush1.msra.mxu0 0.0
        %1080 = vmatprep.subr.mxu0 0.0
        %1081 = vmatpush1.msra.mxu0 0.0
        %1082 = vmatprep.subr.mxu0 0.0
        %1083 = vmatpush1.msra.mxu0 0.0
        %1084 = vmatprep.subr.mxu0 0.0
        %1085 = vmatpush1.msra.mxu0 0.0
        %1086 = vmatprep.subr.mxu0 0.0
        %1087 = vmatpush1.msra.mxu0 0.0
        %1088 = vmatprep.subr.mxu0 0.0
        %1089 = vmatpush1.msra.mxu0 0.0
        %1090 = vmatprep.subr.mxu0 0.0
        %1091 = vmatpush1.msra.mxu0 0.0
        %1092 = vmatprep.mubr.f32.mxu0 0.0
        %1093 = vmatmul.mubr.f32.gmra.mrb[0].mxu0 %v370
        %v1094 = vpop.f32.mrb[0].mxu0
        %v1095 = vadd.f32 0.0, %v1094
        %v1096 = vpop.f32.mrb[0].mxu0
        %1097 = vmatprep.mubr.f32.mxu0 0.0
        %1098 = vmatmul.mubr.f32.gmra.mrb[0].mxu0 %v373
        %v1099 = vpop.f32.mrb[0].mxu0
        %v1100 = vadd.f32 0.0, %v1099
        %v1101 = vpop.f32.mrb[0].mxu0
        %1102 = vdwg.mxu0
        %v1103 = vpack.c.bf16 %v1100, %v1095
        %s1104 = scalar_lea.vmem [#allocation7], 192
        %v1105 = vld [vmem:[%s1104] sm:$0xf]
        %v1106 = vld [vmem:[%s1104 + $0x4] sm:$0xf]
        %v1107 = vld [vmem:[%s1104 + $0x8] sm:$0xf]
        %v1108 = vld [vmem:[%s1104 + $0xc] sm:$0xf]
        %v1109 = vld [vmem:[%s1104 + $0x10] sm:$0xf]
        %v1110 = vld [vmem:[%s1104 + $0x14] sm:$0xf]
        %v1111 = vld [vmem:[%s1104 + $0x18] sm:$0xf]
        %v1112 = vld [vmem:[%s1104 + $0x1c] sm:$0xf]
        %v1113 = vld [vmem:[%s1104 + $0x20] sm:$0xf]
        %v1114 = vld [vmem:[%s1104 + $0x24] sm:$0xf]
        %v1115 = vld [vmem:[%s1104 + $0x28] sm:$0xf]
        %v1116 = vld [vmem:[%s1104 + $0x2c] sm:$0xf]
        %v1117 = vld [vmem:[%s1104 + $0x30] sm:$0xf]
        %v1118 = vld [vmem:[%s1104 + $0x34] sm:$0xf]
        %v1119 = vld [vmem:[%s1104 + $0x38] sm:$0xf]
        %v1120 = vld [vmem:[%s1104 + $0x3c] sm:$0xf]
        %v1137 = vunpack.c.l.b16 %v1105
        %v1138 = vunpack.c.l.b16 %v1106
        %v1139 = vunpack.c.l.b16 %v1107
        %v1140 = vunpack.c.l.b16 %v1108
        %v1141 = vunpack.c.l.b16 %v1109
        %v1142 = vunpack.c.l.b16 %v1110
        %v1143 = vunpack.c.l.b16 %v1111
        %v1144 = vunpack.c.l.b16 %v1112
        %v1145 = vunpack.c.l.b16 %v1113
        %v1146 = vunpack.c.l.b16 %v1114
        %v1147 = vunpack.c.l.b16 %v1115
        %v1148 = vunpack.c.l.b16 %v1116
        %v1149 = vunpack.c.l.b16 %v1117
        %v1150 = vunpack.c.l.b16 %v1118
        %v1151 = vunpack.c.l.b16 %v1119
        %v1152 = vunpack.c.l.b16 %v1120
        %v1153 = vpack.c.b16 %v1138, %v1137
        %v1154 = vpack.c.b16 %v1140, %v1139
        %v1155 = vpack.c.b16 %v1142, %v1141
        %v1156 = vpack.c.b16 %v1144, %v1143
        %v1157 = vpack.c.b16 %v1146, %v1145
        %v1158 = vpack.c.b16 %v1148, %v1147
        %v1159 = vpack.c.b16 %v1150, %v1149
        %v1160 = vpack.c.b16 %v1152, %v1151
        %1169 = vmatprep.subr.bf16.mxu0 0
        %1170 = vmatpush1.bf16.msra.mxu0 %v1153
        %1171 = vmatprep.subr.bf16.mxu0 0
        %1172 = vmatpush1.bf16.msra.mxu0 %v1154
        %1173 = vmatprep.subr.bf16.mxu0 0
        %1174 = vmatpush1.bf16.msra.mxu0 %v1155
        %1175 = vmatprep.subr.bf16.mxu0 0
        %1176 = vmatpush1.bf16.msra.mxu0 %v1156
        %1177 = vmatprep.subr.bf16.mxu0 0
        %1178 = vmatpush1.bf16.msra.mxu0 %v1157
        %1179 = vmatprep.subr.bf16.mxu0 0
        %1180 = vmatpush1.bf16.msra.mxu0 %v1158
        %1181 = vmatprep.subr.bf16.mxu0 0
        %1182 = vmatpush1.bf16.msra.mxu0 %v1159
        %1183 = vmatprep.subr.bf16.mxu0 0
        %1184 = vmatpush1.bf16.msra.mxu0 %v1160
        %1185 = vmatprep.subr.bf16.mxu0 0
        %1186 = vmatpush1.bf16.msra.mxu0 0
        %1187 = vmatprep.subr.bf16.mxu0 0
        %1188 = vmatpush1.bf16.msra.mxu0 0
        %1189 = vmatprep.subr.bf16.mxu0 0
        %1190 = vmatpush1.bf16.msra.mxu0 0
        %1191 = vmatprep.subr.bf16.mxu0 0
        %1192 = vmatpush1.bf16.msra.mxu0 0
        %1193 = vmatprep.subr.bf16.mxu0 0
        %1194 = vmatpush1.bf16.msra.mxu0 0
        %1195 = vmatprep.subr.bf16.mxu0 0
        %1196 = vmatpush1.bf16.msra.mxu0 0
        %1197 = vmatprep.subr.bf16.mxu0 0
        %1198 = vmatpush1.bf16.msra.mxu0 0
        %1199 = vmatprep.subr.bf16.mxu0 0
        %1200 = vmatpush1.bf16.msra.mxu0 0
        %1201 = vmatprep.mubr.bf16.mxu0 0
        %1202 = vmatmul.mubr.bf16.gmra.mrb[0].mxu0 %v1103
        %v1203 = vpop.f32.mrb[0].mxu0
        %v1204 = vadd.f32 0.0, %v1203
        %v1205 = vpop.f32.mrb[0].mxu0
        %v1206 = vpop.f32.mrb[0].mxu0
        %v1207 = vadd.f32 0.0, %v1206
        %v1208 = vpop.f32.mrb[0].mxu0
        %1209 = vdwg.mxu0
        %v1210 = vadd.f32 %v1204, %v1207
        %v1211 = vrot.slane %v1210, 4
        %v1212 = vadd.f32 %v1210, %v1211
        %v1213 = vrot.slane %v1212, 2
        %v1214 = vadd.f32 %v1212, %v1213
        %v1215 = vrot.slane %v1214, 1
        %v1216 = vadd.f32 %v1214, %v1215
        %v1217 = vmul.f32 %v1216, %v754
        %v1218 = vmul.f32 %v1204, %v1204
        %v1219 = vmul.f32 %v1207, %v1207
        %v1220 = vadd.f32 %v1218, %v1219
        %v1221 = vrot.slane %v1220, 4
        %v1222 = vadd.f32 %v1220, %v1221
        %v1223 = vrot.slane %v1222, 2
        %v1224 = vadd.f32 %v1222, %v1223
        %v1225 = vrot.slane %v1224, 1
        %v1226 = vadd.f32 %v1224, %v1225
        %v1227 = vmul.f32 %v1226, %v754
        %v1228 = vmul.f32 %v1217, %v1217
        %v1229 = vsub.f32 %v1227, %v1228
        %v1230 = vmax.f32 %v1229, 0.0
        %s1231 = scalar_lea.vmem [#allocation8], 3
        %v1232 = vld [vmem:[%s1231] sm:$0x1]
        %v1233 = vadd.f32 %v1230, 1e-05
        %v1234 = vrsqrt.pop %v1233
        %v1235 = vmul.f32 %v1232, %v1234
        %s1236 = scalar_lea.vmem %s5, 3
        %v1237 = vld [vmem:[%s1236] sm:$0x1]
        %v1238 = vmul.f32 %v1217, %v1235
        %v1239 = vsub.f32 %v1237, %v1238
        %v1241 = vlaneseq
        %v1242 = vshrl.u32 %v1241, 7
        %v1243 = vsub.s32 0, %v1242
        %v1244 = vrot.slane %v1235, %v1243
        %v1246 = vmul.f32 %v1204, %v1244
        %v1247 = vmul.f32 %v1207, %v1244
        %v1249 = vlaneseq
        %v1250 = vshrl.u32 %v1249, 7
        %v1251 = vsub.s32 0, %v1250
        %v1252 = vrot.slane %v1239, %v1251
        %v1254 = vadd.f32 %v1246, %v1252
        %v1255 = vadd.f32 %v1247, %v1252
        %v1256 = vmax.f32 %v1254, 0.0
        %v1257 = vmax.f32 %v1255, 0.0
        %1258 = vmatprep.subr.mxu0 0.0
        %1259 = vmatpush1.msra.mxu0 %v1256
        %1260 = vmatprep.subr.mxu0 0.0
        %1261 = vmatpush1.msra.mxu0 %v1257
        %1262 = vmatprep.subr.mxu0 0.0
        %1263 = vmatpush1.msra.mxu0 0.0
        %1264 = vmatprep.subr.mxu0 0.0
        %1265 = vmatpush1.msra.mxu0 0.0
        %1266 = vmatprep.subr.mxu0 0.0
        %1267 = vmatpush1.msra.mxu0 0.0
        %1268 = vmatprep.subr.mxu0 0.0
        %1269 = vmatpush1.msra.mxu0 0.0
        %1270 = vmatprep.subr.mxu0 0.0
        %1271 = vmatpush1.msra.mxu0 0.0
        %1272 = vmatprep.subr.mxu0 0.0
        %1273 = vmatpush1.msra.mxu0 0.0
        %1274 = vmatprep.subr.mxu0 0.0
        %1275 = vmatpush1.msra.mxu0 0.0
        %1276 = vmatprep.subr.mxu0 0.0
        %1277 = vmatpush1.msra.mxu0 0.0
        %1278 = vmatprep.subr.mxu0 0.0
        %1279 = vmatpush1.msra.mxu0 0.0
        %1280 = vmatprep.subr.mxu0 0.0
        %1281 = vmatpush1.msra.mxu0 0.0
        %1282 = vmatprep.subr.mxu0 0.0
        %1283 = vmatpush1.msra.mxu0 0.0
        %1284 = vmatprep.subr.mxu0 0.0
        %1285 = vmatpush1.msra.mxu0 0.0
        %1286 = vmatprep.subr.mxu0 0.0
        %1287 = vmatpush1.msra.mxu0 0.0
        %1288 = vmatprep.subr.mxu0 0.0
        %1289 = vmatpush1.msra.mxu0 0.0
        %1290 = vmatprep.subr.mxu0 0.0
        %1291 = vmatpush1.msra.mxu0 0.0
        %1292 = vmatprep.subr.mxu0 0.0
        %1293 = vmatpush1.msra.mxu0 0.0
        %1294 = vmatprep.subr.mxu0 0.0
        %1295 = vmatpush1.msra.mxu0 0.0
        %1296 = vmatprep.subr.mxu0 0.0
        %1297 = vmatpush1.msra.mxu0 0.0
        %1298 = vmatprep.subr.mxu0 0.0
        %1299 = vmatpush1.msra.mxu0 0.0
        %1300 = vmatprep.subr.mxu0 0.0
        %1301 = vmatpush1.msra.mxu0 0.0
        %1302 = vmatprep.subr.mxu0 0.0
        %1303 = vmatpush1.msra.mxu0 0.0
        %1304 = vmatprep.subr.mxu0 0.0
        %1305 = vmatpush1.msra.mxu0 0.0
        %1306 = vmatprep.subr.mxu0 0.0
        %1307 = vmatpush1.msra.mxu0 0.0
        %1308 = vmatprep.subr.mxu0 0.0
        %1309 = vmatpush1.msra.mxu0 0.0
        %1310 = vmatprep.subr.mxu0 0.0
        %1311 = vmatpush1.msra.mxu0 0.0
        %1312 = vmatprep.subr.mxu0 0.0
        %1313 = vmatpush1.msra.mxu0 0.0
        %1314 = vmatprep.subr.mxu0 0.0
        %1315 = vmatpush1.msra.mxu0 0.0
        %1316 = vmatprep.subr.mxu0 0.0
        %1317 = vmatpush1.msra.mxu0 0.0
        %1318 = vmatprep.subr.mxu0 0.0
        %1319 = vmatpush1.msra.mxu0 0.0
        %1320 = vmatprep.subr.mxu0 0.0
        %1321 = vmatpush1.msra.mxu0 0.0
        %1322 = vmatprep.mubr.f32.mxu0 0.0
        %1323 = vmatmul.mubr.f32.gmra.mrb[0].mxu0 %v370
        %v1324 = vpop.f32.mrb[0].mxu0
        %v1325 = vadd.f32 0.0, %v1324
        %v1326 = vpop.f32.mrb[0].mxu0
        %1327 = vmatprep.mubr.f32.mxu0 0.0
        %1328 = vmatmul.mubr.f32.gmra.mrb[0].mxu0 %v373
        %v1329 = vpop.f32.mrb[0].mxu0
        %v1330 = vadd.f32 0.0, %v1329
        %v1331 = vpop.f32.mrb[0].mxu0
        %1332 = vdwg.mxu0
        %v1333 = vpack.c.bf16 %v1330, %v1325
        %s1334 = scalar_lea.vmem [#allocation7], 256
        %v1335 = vld [vmem:[%s1334] sm:$0xf]
        %v1336 = vld [vmem:[%s1334 + $0x4] sm:$0xf]
        %v1337 = vld [vmem:[%s1334 + $0x8] sm:$0xf]
        %v1338 = vld [vmem:[%s1334 + $0xc] sm:$0xf]
        %v1339 = vld [vmem:[%s1334 + $0x10] sm:$0xf]
        %v1340 = vld [vmem:[%s1334 + $0x14] sm:$0xf]
        %v1341 = vld [vmem:[%s1334 + $0x18] sm:$0xf]
        %v1342 = vld [vmem:[%s1334 + $0x1c] sm:$0xf]
        %v1343 = vld [vmem:[%s1334 + $0x20] sm:$0xf]
        %v1344 = vld [vmem:[%s1334 + $0x24] sm:$0xf]
        %v1345 = vld [vmem:[%s1334 + $0x28] sm:$0xf]
        %v1346 = vld [vmem:[%s1334 + $0x2c] sm:$0xf]
        %v1347 = vld [vmem:[%s1334 + $0x30] sm:$0xf]
        %v1348 = vld [vmem:[%s1334 + $0x34] sm:$0xf]
        %v1349 = vld [vmem:[%s1334 + $0x38] sm:$0xf]
        %v1350 = vld [vmem:[%s1334 + $0x3c] sm:$0xf]
        %v1367 = vunpack.c.l.b16 %v1335
        %v1368 = vunpack.c.l.b16 %v1336
        %v1369 = vunpack.c.l.b16 %v1337
        %v1370 = vunpack.c.l.b16 %v1338
        %v1371 = vunpack.c.l.b16 %v1339
        %v1372 = vunpack.c.l.b16 %v1340
        %v1373 = vunpack.c.l.b16 %v1341
        %v1374 = vunpack.c.l.b16 %v1342
        %v1375 = vunpack.c.l.b16 %v1343
        %v1376 = vunpack.c.l.b16 %v1344
        %v1377 = vunpack.c.l.b16 %v1345
        %v1378 = vunpack.c.l.b16 %v1346
        %v1379 = vunpack.c.l.b16 %v1347
        %v1380 = vunpack.c.l.b16 %v1348
        %v1381 = vunpack.c.l.b16 %v1349
        %v1382 = vunpack.c.l.b16 %v1350
        %v1383 = vpack.c.b16 %v1368, %v1367
        %v1384 = vpack.c.b16 %v1370, %v1369
        %v1385 = vpack.c.b16 %v1372, %v1371
        %v1386 = vpack.c.b16 %v1374, %v1373
        %v1387 = vpack.c.b16 %v1376, %v1375
        %v1388 = vpack.c.b16 %v1378, %v1377
        %v1389 = vpack.c.b16 %v1380, %v1379
        %v1390 = vpack.c.b16 %v1382, %v1381
        %1399 = vmatprep.subr.bf16.mxu0 0
        %1400 = vmatpush1.bf16.msra.mxu0 %v1383
        %1401 = vmatprep.subr.bf16.mxu0 0
        %1402 = vmatpush1.bf16.msra.mxu0 %v1384
        %1403 = vmatprep.subr.bf16.mxu0 0
        %1404 = vmatpush1.bf16.msra.mxu0 %v1385
        %1405 = vmatprep.subr.bf16.mxu0 0
        %1406 = vmatpush1.bf16.msra.mxu0 %v1386
        %1407 = vmatprep.subr.bf16.mxu0 0
        %1408 = vmatpush1.bf16.msra.mxu0 %v1387
        %1409 = vmatprep.subr.bf16.mxu0 0
        %1410 = vmatpush1.bf16.msra.mxu0 %v1388
        %1411 = vmatprep.subr.bf16.mxu0 0
        %1412 = vmatpush1.bf16.msra.mxu0 %v1389
        %1413 = vmatprep.subr.bf16.mxu0 0
        %1414 = vmatpush1.bf16.msra.mxu0 %v1390
        %1415 = vmatprep.subr.bf16.mxu0 0
        %1416 = vmatpush1.bf16.msra.mxu0 0
        %1417 = vmatprep.subr.bf16.mxu0 0
        %1418 = vmatpush1.bf16.msra.mxu0 0
        %1419 = vmatprep.subr.bf16.mxu0 0
        %1420 = vmatpush1.bf16.msra.mxu0 0
        %1421 = vmatprep.subr.bf16.mxu0 0
        %1422 = vmatpush1.bf16.msra.mxu0 0
        %1423 = vmatprep.subr.bf16.mxu0 0
        %1424 = vmatpush1.bf16.msra.mxu0 0
        %1425 = vmatprep.subr.bf16.mxu0 0
        %1426 = vmatpush1.bf16.msra.mxu0 0
        %1427 = vmatprep.subr.bf16.mxu0 0
        %1428 = vmatpush1.bf16.msra.mxu0 0
        %1429 = vmatprep.subr.bf16.mxu0 0
        %1430 = vmatpush1.bf16.msra.mxu0 0
        %1431 = vmatprep.mubr.bf16.mxu0 0
        %1432 = vmatmul.mubr.bf16.gmra.mrb[0].mxu0 %v1333
        %v1433 = vpop.f32.mrb[0].mxu0
        %v1434 = vadd.f32 0.0, %v1433
        %v1435 = vpop.f32.mrb[0].mxu0
        %v1436 = vpop.f32.mrb[0].mxu0
        %v1437 = vadd.f32 0.0, %v1436
        %v1438 = vpop.f32.mrb[0].mxu0
        %1439 = vdwg.mxu0
        %v1440 = vadd.f32 %v1434, %v1437
        %v1441 = vrot.slane %v1440, 4
        %v1442 = vadd.f32 %v1440, %v1441
        %v1443 = vrot.slane %v1442, 2
        %v1444 = vadd.f32 %v1442, %v1443
        %v1445 = vrot.slane %v1444, 1
        %v1446 = vadd.f32 %v1444, %v1445
        %v1447 = vmul.f32 %v1446, %v754
        %v1448 = vmul.f32 %v1434, %v1434
        %v1449 = vmul.f32 %v1437, %v1437
        %v1450 = vadd.f32 %v1448, %v1449
        %v1451 = vrot.slane %v1450, 4
        %v1452 = vadd.f32 %v1450, %v1451
        %v1453 = vrot.slane %v1452, 2
        %v1454 = vadd.f32 %v1452, %v1453
        %v1455 = vrot.slane %v1454, 1
        %v1456 = vadd.f32 %v1454, %v1455
        %v1457 = vmul.f32 %v1456, %v754
        %v1458 = vmul.f32 %v1447, %v1447
        %v1459 = vsub.f32 %v1457, %v1458
        %v1460 = vmax.f32 %v1459, 0.0
        %s1461 = scalar_lea.vmem [#allocation8], 4
        %v1462 = vld [vmem:[%s1461] sm:$0x1]
        %v1463 = vadd.f32 %v1460, 1e-05
        %v1464 = vrsqrt.pop %v1463
        %v1465 = vmul.f32 %v1462, %v1464
        %s1466 = scalar_lea.vmem %s5, 4
        %v1467 = vld [vmem:[%s1466] sm:$0x1]
        %v1468 = vmul.f32 %v1447, %v1465
        %v1469 = vsub.f32 %v1467, %v1468
        %v1471 = vlaneseq
        %v1472 = vshrl.u32 %v1471, 7
        %v1473 = vsub.s32 0, %v1472
        %v1474 = vrot.slane %v1465, %v1473
        %v1476 = vmul.f32 %v1434, %v1474
        %v1477 = vmul.f32 %v1437, %v1474
        %v1479 = vlaneseq
        %v1480 = vshrl.u32 %v1479, 7
        %v1481 = vsub.s32 0, %v1480
        %v1482 = vrot.slane %v1469, %v1481
        %v1484 = vadd.f32 %v1476, %v1482
        %v1485 = vadd.f32 %v1477, %v1482
        %v1486 = vmax.f32 %v1484, 0.0
        %v1487 = vmax.f32 %v1485, 0.0
        %s1488 = scalar_lea.vmem [#allocation7], 320
        %v1489 = vld [vmem:[%s1488] sm:$0xf]
        %v1490 = vld [vmem:[%s1488 + $0x4] sm:$0xf]
        %v1491 = vld [vmem:[%s1488 + $0x8] sm:$0xf]
        %v1492 = vld [vmem:[%s1488 + $0xc] sm:$0xf]
        %v1493 = vld [vmem:[%s1488 + $0x10] sm:$0xf]
        %v1494 = vld [vmem:[%s1488 + $0x14] sm:$0xf]
        %v1495 = vld [vmem:[%s1488 + $0x18] sm:$0xf]
        %v1496 = vld [vmem:[%s1488 + $0x1c] sm:$0xf]
        %v1497 = vld [vmem:[%s1488 + $0x20] sm:$0xf]
        %v1498 = vld [vmem:[%s1488 + $0x24] sm:$0xf]
        %v1499 = vld [vmem:[%s1488 + $0x28] sm:$0xf]
        %v1500 = vld [vmem:[%s1488 + $0x2c] sm:$0xf]
        %v1501 = vld [vmem:[%s1488 + $0x30] sm:$0xf]
        %v1502 = vld [vmem:[%s1488 + $0x34] sm:$0xf]
        %v1503 = vld [vmem:[%s1488 + $0x38] sm:$0xf]
        %v1504 = vld [vmem:[%s1488 + $0x3c] sm:$0xf]
        %v1521 = vunpack.c.l.b16 %v1489
        %v1522 = vunpack.c.l.b16 %v1490
        %v1523 = vunpack.c.l.b16 %v1491
        %v1524 = vunpack.c.l.b16 %v1492
        %v1525 = vunpack.c.l.b16 %v1493
        %v1526 = vunpack.c.l.b16 %v1494
        %v1527 = vunpack.c.l.b16 %v1495
        %v1528 = vunpack.c.l.b16 %v1496
        %v1529 = vunpack.c.l.b16 %v1497
        %v1530 = vunpack.c.l.b16 %v1498
        %v1531 = vunpack.c.l.b16 %v1499
        %v1532 = vunpack.c.l.b16 %v1500
        %v1533 = vunpack.c.l.b16 %v1501
        %v1534 = vunpack.c.l.b16 %v1502
        %v1535 = vunpack.c.l.b16 %v1503
        %v1536 = vunpack.c.l.b16 %v1504
        %v1537 = vpack.c.b16 %v1522, %v1521
        %v1538 = vpack.c.b16 %v1524, %v1523
        %v1539 = vpack.c.b16 %v1526, %v1525
        %v1540 = vpack.c.b16 %v1528, %v1527
        %v1541 = vpack.c.b16 %v1530, %v1529
        %v1542 = vpack.c.b16 %v1532, %v1531
        %v1543 = vpack.c.b16 %v1534, %v1533
        %v1544 = vpack.c.b16 %v1536, %v1535
        %1553 = vmatprep.subr.bf16.mxu0 0
        %1554 = vmatpush1.bf16.msra.mxu0 %v1537
        %1555 = vmatprep.subr.bf16.mxu0 0
        %1556 = vmatpush1.bf16.msra.mxu0 %v1538
        %1557 = vmatprep.subr.bf16.mxu0 0
        %1558 = vmatpush1.bf16.msra.mxu0 %v1539
        %1559 = vmatprep.subr.bf16.mxu0 0
        %1560 = vmatpush1.bf16.msra.mxu0 %v1540
        %1561 = vmatprep.subr.bf16.mxu0 0
        %1562 = vmatpush1.bf16.msra.mxu0 %v1541
        %1563 = vmatprep.subr.bf16.mxu0 0
        %1564 = vmatpush1.bf16.msra.mxu0 %v1542
        %1565 = vmatprep.subr.bf16.mxu0 0
        %1566 = vmatpush1.bf16.msra.mxu0 %v1543
        %1567 = vmatprep.subr.bf16.mxu0 0
        %1568 = vmatpush1.bf16.msra.mxu0 %v1544
        %1569 = vmatprep.subr.bf16.mxu0 0
        %1570 = vmatpush1.bf16.msra.mxu0 0
        %1571 = vmatprep.subr.bf16.mxu0 0
        %1572 = vmatpush1.bf16.msra.mxu0 0
        %1573 = vmatprep.subr.bf16.mxu0 0
        %1574 = vmatpush1.bf16.msra.mxu0 0
        %1575 = vmatprep.subr.bf16.mxu0 0
        %1576 = vmatpush1.bf16.msra.mxu0 0
        %1577 = vmatprep.subr.bf16.mxu0 0
        %1578 = vmatpush1.bf16.msra.mxu0 0
        %1579 = vmatprep.subr.bf16.mxu0 0
        %1580 = vmatpush1.bf16.msra.mxu0 0
        %1581 = vmatprep.subr.bf16.mxu0 0
        %1582 = vmatpush1.bf16.msra.mxu0 0
        %1583 = vmatprep.subr.bf16.mxu0 0
        %1584 = vmatpush1.bf16.msra.mxu0 0
        %1585 = vmatprep.mubr.bf16.mxu0 0
        %1586 = vmatmul.mubr.bf16.gmra.mrb[0].mxu0 %v1103
        %v1587 = vpop.f32.mrb[0].mxu0
        %v1588 = vadd.f32 0.0, %v1587
        %v1589 = vpop.f32.mrb[0].mxu0
        %v1590 = vpop.f32.mrb[0].mxu0
        %v1591 = vadd.f32 0.0, %v1590
        %v1592 = vpop.f32.mrb[0].mxu0
        %1593 = vdwg.mxu0
        %v1594 = vadd.f32 %v1588, %v1591
        %v1595 = vrot.slane %v1594, 4
        %v1596 = vadd.f32 %v1594, %v1595
        %v1597 = vrot.slane %v1596, 2
        %v1598 = vadd.f32 %v1596, %v1597
        %v1599 = vrot.slane %v1598, 1
        %v1600 = vadd.f32 %v1598, %v1599
        %v1601 = vmul.f32 %v1600, %v754
        %v1602 = vmul.f32 %v1588, %v1588
        %v1603 = vmul.f32 %v1591, %v1591
        %v1604 = vadd.f32 %v1602, %v1603
        %v1605 = vrot.slane %v1604, 4
        %v1606 = vadd.f32 %v1604, %v1605
        %v1607 = vrot.slane %v1606, 2
        %v1608 = vadd.f32 %v1606, %v1607
        %v1609 = vrot.slane %v1608, 1
        %v1610 = vadd.f32 %v1608, %v1609
        %v1611 = vmul.f32 %v1610, %v754
        %v1612 = vmul.f32 %v1601, %v1601
        %v1613 = vsub.f32 %v1611, %v1612
        %v1614 = vmax.f32 %v1613, 0.0
        %s1615 = scalar_lea.vmem [#allocation8], 5
        %v1616 = vld [vmem:[%s1615] sm:$0x1]
        %v1617 = vadd.f32 %v1614, 1e-05
        %v1618 = vrsqrt.pop %v1617
        %v1619 = vmul.f32 %v1616, %v1618
        %s1620 = scalar_lea.vmem %s5, 5
        %v1621 = vld [vmem:[%s1620] sm:$0x1]
        %v1622 = vmul.f32 %v1601, %v1619
        %v1623 = vsub.f32 %v1621, %v1622
        %v1625 = vlaneseq
        %v1626 = vshrl.u32 %v1625, 7
        %v1627 = vsub.s32 0, %v1626
        %v1628 = vrot.slane %v1619, %v1627
        %v1630 = vmul.f32 %v1588, %v1628
        %v1631 = vmul.f32 %v1591, %v1628
        %v1633 = vlaneseq
        %v1634 = vshrl.u32 %v1633, 7
        %v1635 = vsub.s32 0, %v1634
        %v1636 = vrot.slane %v1623, %v1635
        %v1638 = vadd.f32 %v1630, %v1636
        %v1639 = vadd.f32 %v1631, %v1636
        %v1640 = vadd.f32 %v1486, %v1638
        %v1641 = vadd.f32 %v1487, %v1639
        %1642 = vmatprep.subr.mxu0 0.0
        %1643 = vmatpush1.msra.mxu0 %v1640
        %1644 = vmatprep.subr.mxu0 0.0
        %1645 = vmatpush1.msra.mxu0 %v1641
        %1646 = vmatprep.subr.mxu0 0.0
        %1647 = vmatpush1.msra.mxu0 0.0
        %1648 = vmatprep.subr.mxu0 0.0
        %1649 = vmatpush1.msra.mxu0 0.0
        %1650 = vmatprep.subr.mxu0 0.0
        %1651 = vmatpush1.msra.mxu0 0.0
        %1652 = vmatprep.subr.mxu0 0.0
        %1653 = vmatpush1.msra.mxu0 0.0
        %1654 = vmatprep.subr.mxu0 0.0
        %1655 = vmatpush1.msra.mxu0 0.0
        %1656 = vmatprep.subr.mxu0 0.0
        %1657 = vmatpush1.msra.mxu0 0.0
        %1658 = vmatprep.subr.mxu0 0.0
        %1659 = vmatpush1.msra.mxu0 0.0
        %1660 = vmatprep.subr.mxu0 0.0
        %1661 = vmatpush1.msra.mxu0 0.0
        %1662 = vmatprep.subr.mxu0 0.0
        %1663 = vmatpush1.msra.mxu0 0.0
        %1664 = vmatprep.subr.mxu0 0.0
        %1665 = vmatpush1.msra.mxu0 0.0
        %1666 = vmatprep.subr.mxu0 0.0
        %1667 = vmatpush1.msra.mxu0 0.0
        %1668 = vmatprep.subr.mxu0 0.0
        %1669 = vmatpush1.msra.mxu0 0.0
        %1670 = vmatprep.subr.mxu0 0.0
        %1671 = vmatpush1.msra.mxu0 0.0
        %1672 = vmatprep.subr.mxu0 0.0
        %1673 = vmatpush1.msra.mxu0 0.0
        %1674 = vmatprep.subr.mxu0 0.0
        %1675 = vmatpush1.msra.mxu0 0.0
        %1676 = vmatprep.subr.mxu0 0.0
        %1677 = vmatpush1.msra.mxu0 0.0
        %1678 = vmatprep.subr.mxu0 0.0
        %1679 = vmatpush1.msra.mxu0 0.0
        %1680 = vmatprep.subr.mxu0 0.0
        %1681 = vmatpush1.msra.mxu0 0.0
        %1682 = vmatprep.subr.mxu0 0.0
        %1683 = vmatpush1.msra.mxu0 0.0
        %1684 = vmatprep.subr.mxu0 0.0
        %1685 = vmatpush1.msra.mxu0 0.0
        %1686 = vmatprep.subr.mxu0 0.0
        %1687 = vmatpush1.msra.mxu0 0.0
        %1688 = vmatprep.subr.mxu0 0.0
        %1689 = vmatpush1.msra.mxu0 0.0
        %1690 = vmatprep.subr.mxu0 0.0
        %1691 = vmatpush1.msra.mxu0 0.0
        %1692 = vmatprep.subr.mxu0 0.0
        %1693 = vmatpush1.msra.mxu0 0.0
        %1694 = vmatprep.subr.mxu0 0.0
        %1695 = vmatpush1.msra.mxu0 0.0
        %1696 = vmatprep.subr.mxu0 0.0
        %1697 = vmatpush1.msra.mxu0 0.0
        %1698 = vmatprep.subr.mxu0 0.0
        %1699 = vmatpush1.msra.mxu0 0.0
        %1700 = vmatprep.subr.mxu0 0.0
        %1701 = vmatpush1.msra.mxu0 0.0
        %1702 = vmatprep.subr.mxu0 0.0
        %1703 = vmatpush1.msra.mxu0 0.0
        %1704 = vmatprep.subr.mxu0 0.0
        %1705 = vmatpush1.msra.mxu0 0.0
        %1706 = vmatprep.mubr.f32.mxu0 0.0
        %1707 = vmatmul.mubr.f32.gmra.mrb[0].mxu0 %v370
        %v1708 = vpop.f32.mrb[0].mxu0
        %v1709 = vadd.f32 0.0, %v1708
        %v1710 = vpop.f32.mrb[0].mxu0
        %1711 = vmatprep.mubr.f32.mxu0 0.0
        %1712 = vmatmul.mubr.f32.gmra.mrb[0].mxu0 %v373
        %v1713 = vpop.f32.mrb[0].mxu0
        %v1714 = vadd.f32 0.0, %v1713
        %v1715 = vpop.f32.mrb[0].mxu0
        %1716 = vdwg.mxu0
        %v1717 = vpack.c.bf16 %v1714, %v1709
        %s1718 = scalar_lea.vmem [#allocation7], 384
        %v1719 = vld [vmem:[%s1718] sm:$0xf]
        %v1720 = vld [vmem:[%s1718 + $0x4] sm:$0xf]
        %v1721 = vld [vmem:[%s1718 + $0x8] sm:$0xf]
        %v1722 = vld [vmem:[%s1718 + $0xc] sm:$0xf]
        %v1723 = vld [vmem:[%s1718 + $0x10] sm:$0xf]
        %v1724 = vld [vmem:[%s1718 + $0x14] sm:$0xf]
        %v1725 = vld [vmem:[%s1718 + $0x18] sm:$0xf]
        %v1726 = vld [vmem:[%s1718 + $0x1c] sm:$0xf]
        %v1727 = vld [vmem:[%s1718 + $0x20] sm:$0xf]
        %v1728 = vld [vmem:[%s1718 + $0x24] sm:$0xf]
        %v1729 = vld [vmem:[%s1718 + $0x28] sm:$0xf]
        %v1730 = vld [vmem:[%s1718 + $0x2c] sm:$0xf]
        %v1731 = vld [vmem:[%s1718 + $0x30] sm:$0xf]
        %v1732 = vld [vmem:[%s1718 + $0x34] sm:$0xf]
        %v1733 = vld [vmem:[%s1718 + $0x38] sm:$0xf]
        %v1734 = vld [vmem:[%s1718 + $0x3c] sm:$0xf]
        %v1751 = vunpack.c.l.b16 %v1719
        %v1752 = vunpack.c.l.b16 %v1720
        %v1753 = vunpack.c.l.b16 %v1721
        %v1754 = vunpack.c.l.b16 %v1722
        %v1755 = vunpack.c.l.b16 %v1723
        %v1756 = vunpack.c.l.b16 %v1724
        %v1757 = vunpack.c.l.b16 %v1725
        %v1758 = vunpack.c.l.b16 %v1726
        %v1759 = vunpack.c.l.b16 %v1727
        %v1760 = vunpack.c.l.b16 %v1728
        %v1761 = vunpack.c.l.b16 %v1729
        %v1762 = vunpack.c.l.b16 %v1730
        %v1763 = vunpack.c.l.b16 %v1731
        %v1764 = vunpack.c.l.b16 %v1732
        %v1765 = vunpack.c.l.b16 %v1733
        %v1766 = vunpack.c.l.b16 %v1734
        %v1767 = vpack.c.b16 %v1752, %v1751
        %v1768 = vpack.c.b16 %v1754, %v1753
        %v1769 = vpack.c.b16 %v1756, %v1755
        %v1770 = vpack.c.b16 %v1758, %v1757
        %v1771 = vpack.c.b16 %v1760, %v1759
        %v1772 = vpack.c.b16 %v1762, %v1761
        %v1773 = vpack.c.b16 %v1764, %v1763
        %v1774 = vpack.c.b16 %v1766, %v1765
        %1783 = vmatprep.subr.bf16.mxu0 0
        %1784 = vmatpush1.bf16.msra.mxu0 %v1767
        %1785 = vmatprep.subr.bf16.mxu0 0
        %1786 = vmatpush1.bf16.msra.mxu0 %v1768
        %1787 = vmatprep.subr.bf16.mxu0 0
        %1788 = vmatpush1.bf16.msra.mxu0 %v1769
        %1789 = vmatprep.subr.bf16.mxu0 0
        %1790 = vmatpush1.bf16.msra.mxu0 %v1770
        %1791 = vmatprep.subr.bf16.mxu0 0
        %1792 = vmatpush1.bf16.msra.mxu0 %v1771
        %1793 = vmatprep.subr.bf16.mxu0 0
        %1794 = vmatpush1.bf16.msra.mxu0 %v1772
        %1795 = vmatprep.subr.bf16.mxu0 0
        %1796 = vmatpush1.bf16.msra.mxu0 %v1773
        %1797 = vmatprep.subr.bf16.mxu0 0
        %1798 = vmatpush1.bf16.msra.mxu0 %v1774
        %1799 = vmatprep.subr.bf16.mxu0 0
        %1800 = vmatpush1.bf16.msra.mxu0 0
        %1801 = vmatprep.subr.bf16.mxu0 0
        %1802 = vmatpush1.bf16.msra.mxu0 0
        %1803 = vmatprep.subr.bf16.mxu0 0
        %1804 = vmatpush1.bf16.msra.mxu0 0
        %1805 = vmatprep.subr.bf16.mxu0 0
        %1806 = vmatpush1.bf16.msra.mxu0 0
        %1807 = vmatprep.subr.bf16.mxu0 0
        %1808 = vmatpush1.bf16.msra.mxu0 0
        %1809 = vmatprep.subr.bf16.mxu0 0
        %1810 = vmatpush1.bf16.msra.mxu0 0
        %1811 = vmatprep.subr.bf16.mxu0 0
        %1812 = vmatpush1.bf16.msra.mxu0 0
        %1813 = vmatprep.subr.bf16.mxu0 0
        %1814 = vmatpush1.bf16.msra.mxu0 0
        %1815 = vmatprep.mubr.bf16.mxu0 0
        %1816 = vmatmul.mubr.bf16.gmra.mrb[0].mxu0 %v1717
        %v1817 = vpop.f32.mrb[0].mxu0
        %v1818 = vadd.f32 0.0, %v1817
        %v1819 = vpop.f32.mrb[0].mxu0
        %v1820 = vpop.f32.mrb[0].mxu0
        %v1821 = vadd.f32 0.0, %v1820
        %v1822 = vpop.f32.mrb[0].mxu0
        %1823 = vdwg.mxu0
        %v1824 = vadd.f32 %v1818, %v1821
        %v1825 = vrot.slane %v1824, 4
        %v1826 = vadd.f32 %v1824, %v1825
        %v1827 = vrot.slane %v1826, 2
        %v1828 = vadd.f32 %v1826, %v1827
        %v1829 = vrot.slane %v1828, 1
        %v1830 = vadd.f32 %v1828, %v1829
        %v1831 = vmul.f32 %v1830, %v754
        %v1832 = vmul.f32 %v1818, %v1818
        %v1833 = vmul.f32 %v1821, %v1821
        %v1834 = vadd.f32 %v1832, %v1833
        %v1835 = vrot.slane %v1834, 4
        %v1836 = vadd.f32 %v1834, %v1835
        %v1837 = vrot.slane %v1836, 2
        %v1838 = vadd.f32 %v1836, %v1837
        %v1839 = vrot.slane %v1838, 1
        %v1840 = vadd.f32 %v1838, %v1839
        %v1841 = vmul.f32 %v1840, %v754
        %v1842 = vmul.f32 %v1831, %v1831
        %v1843 = vsub.f32 %v1841, %v1842
        %v1844 = vmax.f32 %v1843, 0.0
        %s1845 = scalar_lea.vmem [#allocation8], 6
        %v1846 = vld [vmem:[%s1845] sm:$0x1]
        %v1847 = vadd.f32 %v1844, 1e-05
        %v1848 = vrsqrt.pop %v1847
        %v1849 = vmul.f32 %v1846, %v1848
        %s1850 = scalar_lea.vmem %s5, 6
        %v1851 = vld [vmem:[%s1850] sm:$0x1]
        %v1852 = vmul.f32 %v1831, %v1849
        %v1853 = vsub.f32 %v1851, %v1852
        %v1855 = vlaneseq
        %v1856 = vshrl.u32 %v1855, 7
        %v1857 = vsub.s32 0, %v1856
        %v1858 = vrot.slane %v1849, %v1857
        %v1860 = vmul.f32 %v1818, %v1858
        %v1861 = vmul.f32 %v1821, %v1858
        %v1863 = vlaneseq
        %v1864 = vshrl.u32 %v1863, 7
        %v1865 = vsub.s32 0, %v1864
        %v1866 = vrot.slane %v1853, %v1865
        %v1868 = vadd.f32 %v1860, %v1866
        %v1869 = vadd.f32 %v1861, %v1866
        %v1870 = vmax.f32 %v1868, 0.0
        %v1871 = vmax.f32 %v1869, 0.0
        %1872 = vmatprep.subr.mxu0 0.0
        %1873 = vmatpush1.msra.mxu0 %v1870
        %1874 = vmatprep.subr.mxu0 0.0
        %1875 = vmatpush1.msra.mxu0 %v1871
        %1876 = vmatprep.subr.mxu0 0.0
        %1877 = vmatpush1.msra.mxu0 0.0
        %1878 = vmatprep.subr.mxu0 0.0
        %1879 = vmatpush1.msra.mxu0 0.0
        %1880 = vmatprep.subr.mxu0 0.0
        %1881 = vmatpush1.msra.mxu0 0.0
        %1882 = vmatprep.subr.mxu0 0.0
        %1883 = vmatpush1.msra.mxu0 0.0
        %1884 = vmatprep.subr.mxu0 0.0
        %1885 = vmatpush1.msra.mxu0 0.0
        %1886 = vmatprep.subr.mxu0 0.0
        %1887 = vmatpush1.msra.mxu0 0.0
        %1888 = vmatprep.subr.mxu0 0.0
        %1889 = vmatpush1.msra.mxu0 0.0
        %1890 = vmatprep.subr.mxu0 0.0
        %1891 = vmatpush1.msra.mxu0 0.0
        %1892 = vmatprep.subr.mxu0 0.0
        %1893 = vmatpush1.msra.mxu0 0.0
        %1894 = vmatprep.subr.mxu0 0.0
        %1895 = vmatpush1.msra.mxu0 0.0
        %1896 = vmatprep.subr.mxu0 0.0
        %1897 = vmatpush1.msra.mxu0 0.0
        %1898 = vmatprep.subr.mxu0 0.0
        %1899 = vmatpush1.msra.mxu0 0.0
        %1900 = vmatprep.subr.mxu0 0.0
        %1901 = vmatpush1.msra.mxu0 0.0
        %1902 = vmatprep.subr.mxu0 0.0
        %1903 = vmatpush1.msra.mxu0 0.0
        %1904 = vmatprep.subr.mxu0 0.0
        %1905 = vmatpush1.msra.mxu0 0.0
        %1906 = vmatprep.subr.mxu0 0.0
        %1907 = vmatpush1.msra.mxu0 0.0
        %1908 = vmatprep.subr.mxu0 0.0
        %1909 = vmatpush1.msra.mxu0 0.0
        %1910 = vmatprep.subr.mxu0 0.0
        %1911 = vmatpush1.msra.mxu0 0.0
        %1912 = vmatprep.subr.mxu0 0.0
        %1913 = vmatpush1.msra.mxu0 0.0
        %1914 = vmatprep.subr.mxu0 0.0
        %1915 = vmatpush1.msra.mxu0 0.0
        %1916 = vmatprep.subr.mxu0 0.0
        %1917 = vmatpush1.msra.mxu0 0.0
        %1918 = vmatprep.subr.mxu0 0.0
        %1919 = vmatpush1.msra.mxu0 0.0
        %1920 = vmatprep.subr.mxu0 0.0
        %1921 = vmatpush1.msra.mxu0 0.0
        %1922 = vmatprep.subr.mxu0 0.0
        %1923 = vmatpush1.msra.mxu0 0.0
        %1924 = vmatprep.subr.mxu0 0.0
        %1925 = vmatpush1.msra.mxu0 0.0
        %1926 = vmatprep.subr.mxu0 0.0
        %1927 = vmatpush1.msra.mxu0 0.0
        %1928 = vmatprep.subr.mxu0 0.0
        %1929 = vmatpush1.msra.mxu0 0.0
        %1930 = vmatprep.subr.mxu0 0.0
        %1931 = vmatpush1.msra.mxu0 0.0
        %1932 = vmatprep.subr.mxu0 0.0
        %1933 = vmatpush1.msra.mxu0 0.0
        %1934 = vmatprep.subr.mxu0 0.0
        %1935 = vmatpush1.msra.mxu0 0.0
        %1936 = vmatprep.mubr.f32.mxu0 0.0
        %1937 = vmatmul.mubr.f32.gmra.mrb[0].mxu0 %v370
        %v1938 = vpop.f32.mrb[0].mxu0
        %v1939 = vadd.f32 0.0, %v1938
        %v1940 = vpop.f32.mrb[0].mxu0
        %1941 = vmatprep.mubr.f32.mxu0 0.0
        %1942 = vmatmul.mubr.f32.gmra.mrb[0].mxu0 %v373
        %v1943 = vpop.f32.mrb[0].mxu0
        %v1944 = vadd.f32 0.0, %v1943
        %v1945 = vpop.f32.mrb[0].mxu0
        %1946 = vdwg.mxu0
        %v1947 = vpack.c.bf16 %v1944, %v1939
        %s1948 = scalar_lea.vmem [#allocation7], 448
        %v1949 = vld [vmem:[%s1948] sm:$0xf]
        %v1950 = vld [vmem:[%s1948 + $0x4] sm:$0xf]
        %v1951 = vld [vmem:[%s1948 + $0x8] sm:$0xf]
        %v1952 = vld [vmem:[%s1948 + $0xc] sm:$0xf]
        %v1953 = vld [vmem:[%s1948 + $0x10] sm:$0xf]
        %v1954 = vld [vmem:[%s1948 + $0x14] sm:$0xf]
        %v1955 = vld [vmem:[%s1948 + $0x18] sm:$0xf]
        %v1956 = vld [vmem:[%s1948 + $0x1c] sm:$0xf]
        %v1957 = vld [vmem:[%s1948 + $0x20] sm:$0xf]
        %v1958 = vld [vmem:[%s1948 + $0x24] sm:$0xf]
        %v1959 = vld [vmem:[%s1948 + $0x28] sm:$0xf]
        %v1960 = vld [vmem:[%s1948 + $0x2c] sm:$0xf]
        %v1961 = vld [vmem:[%s1948 + $0x30] sm:$0xf]
        %v1962 = vld [vmem:[%s1948 + $0x34] sm:$0xf]
        %v1963 = vld [vmem:[%s1948 + $0x38] sm:$0xf]
        %v1964 = vld [vmem:[%s1948 + $0x3c] sm:$0xf]
        %v1981 = vunpack.c.l.b16 %v1949
        %v1982 = vunpack.c.l.b16 %v1950
        %v1983 = vunpack.c.l.b16 %v1951
        %v1984 = vunpack.c.l.b16 %v1952
        %v1985 = vunpack.c.l.b16 %v1953
        %v1986 = vunpack.c.l.b16 %v1954
        %v1987 = vunpack.c.l.b16 %v1955
        %v1988 = vunpack.c.l.b16 %v1956
        %v1989 = vunpack.c.l.b16 %v1957
        %v1990 = vunpack.c.l.b16 %v1958
        %v1991 = vunpack.c.l.b16 %v1959
        %v1992 = vunpack.c.l.b16 %v1960
        %v1993 = vunpack.c.l.b16 %v1961
        %v1994 = vunpack.c.l.b16 %v1962
        %v1995 = vunpack.c.l.b16 %v1963
        %v1996 = vunpack.c.l.b16 %v1964
        %v1997 = vpack.c.b16 %v1982, %v1981
        %v1998 = vpack.c.b16 %v1984, %v1983
        %v1999 = vpack.c.b16 %v1986, %v1985
        %v2000 = vpack.c.b16 %v1988, %v1987
        %v2001 = vpack.c.b16 %v1990, %v1989
        %v2002 = vpack.c.b16 %v1992, %v1991
        %v2003 = vpack.c.b16 %v1994, %v1993
        %v2004 = vpack.c.b16 %v1996, %v1995
        %2013 = vmatprep.subr.bf16.mxu0 0
        %2014 = vmatpush1.bf16.msra.mxu0 %v1997
        %2015 = vmatprep.subr.bf16.mxu0 0
        %2016 = vmatpush1.bf16.msra.mxu0 %v1998
        %2017 = vmatprep.subr.bf16.mxu0 0
        %2018 = vmatpush1.bf16.msra.mxu0 %v1999
        %2019 = vmatprep.subr.bf16.mxu0 0
        %2020 = vmatpush1.bf16.msra.mxu0 %v2000
        %2021 = vmatprep.subr.bf16.mxu0 0
        %2022 = vmatpush1.bf16.msra.mxu0 %v2001
        %2023 = vmatprep.subr.bf16.mxu0 0
        %2024 = vmatpush1.bf16.msra.mxu0 %v2002
        %2025 = vmatprep.subr.bf16.mxu0 0
        %2026 = vmatpush1.bf16.msra.mxu0 %v2003
        %2027 = vmatprep.subr.bf16.mxu0 0
        %2028 = vmatpush1.bf16.msra.mxu0 %v2004
        %2029 = vmatprep.subr.bf16.mxu0 0
        %2030 = vmatpush1.bf16.msra.mxu0 0
        %2031 = vmatprep.subr.bf16.mxu0 0
        %2032 = vmatpush1.bf16.msra.mxu0 0
        %2033 = vmatprep.subr.bf16.mxu0 0
        %2034 = vmatpush1.bf16.msra.mxu0 0
        %2035 = vmatprep.subr.bf16.mxu0 0
        %2036 = vmatpush1.bf16.msra.mxu0 0
        %2037 = vmatprep.subr.bf16.mxu0 0
        %2038 = vmatpush1.bf16.msra.mxu0 0
        %2039 = vmatprep.subr.bf16.mxu0 0
        %2040 = vmatpush1.bf16.msra.mxu0 0
        %2041 = vmatprep.subr.bf16.mxu0 0
        %2042 = vmatpush1.bf16.msra.mxu0 0
        %2043 = vmatprep.subr.bf16.mxu0 0
        %2044 = vmatpush1.bf16.msra.mxu0 0
        %2045 = vmatprep.mubr.bf16.mxu0 0
        %2046 = vmatmul.mubr.bf16.gmra.mrb[0].mxu0 %v1947
        %v2047 = vpop.f32.mrb[0].mxu0
        %v2048 = vadd.f32 0.0, %v2047
        %v2049 = vpop.f32.mrb[0].mxu0
        %v2050 = vpop.f32.mrb[0].mxu0
        %v2051 = vadd.f32 0.0, %v2050
        %v2052 = vpop.f32.mrb[0].mxu0
        %2053 = vdwg.mxu0
        %v2054 = vadd.f32 %v2048, %v2051
        %v2055 = vrot.slane %v2054, 4
        %v2056 = vadd.f32 %v2054, %v2055
        %v2057 = vrot.slane %v2056, 2
        %v2058 = vadd.f32 %v2056, %v2057
        %v2059 = vrot.slane %v2058, 1
        %v2060 = vadd.f32 %v2058, %v2059
        %v2061 = vmul.f32 %v2060, %v754
        %v2062 = vmul.f32 %v2048, %v2048
        %v2063 = vmul.f32 %v2051, %v2051
        %v2064 = vadd.f32 %v2062, %v2063
        %v2065 = vrot.slane %v2064, 4
        %v2066 = vadd.f32 %v2064, %v2065
        %v2067 = vrot.slane %v2066, 2
        %v2068 = vadd.f32 %v2066, %v2067
        %v2069 = vrot.slane %v2068, 1
        %v2070 = vadd.f32 %v2068, %v2069
        %v2071 = vmul.f32 %v2070, %v754
        %v2072 = vmul.f32 %v2061, %v2061
        %v2073 = vsub.f32 %v2071, %v2072
        %v2074 = vmax.f32 %v2073, 0.0
        %s2075 = scalar_lea.vmem [#allocation8], 7
        %v2076 = vld [vmem:[%s2075] sm:$0x1]
        %v2077 = vadd.f32 %v2074, 1e-05
        %v2078 = vrsqrt.pop %v2077
        %v2079 = vmul.f32 %v2076, %v2078
        %s2080 = scalar_lea.vmem %s5, 7
        %v2081 = vld [vmem:[%s2080] sm:$0x1]
        %v2082 = vmul.f32 %v2061, %v2079
        %v2083 = vsub.f32 %v2081, %v2082
        %v2085 = vlaneseq
        %v2086 = vshrl.u32 %v2085, 7
        %v2087 = vsub.s32 0, %v2086
        %v2088 = vrot.slane %v2079, %v2087
        %v2090 = vmul.f32 %v2048, %v2088
        %v2091 = vmul.f32 %v2051, %v2088
        %v2093 = vlaneseq
        %v2094 = vshrl.u32 %v2093, 7
        %v2095 = vsub.s32 0, %v2094
        %v2096 = vrot.slane %v2083, %v2095
        %v2098 = vadd.f32 %v2090, %v2096
        %v2099 = vadd.f32 %v2091, %v2096
        %v2100 = vmax.f32 %v2098, 0.0
        %v2101 = vmax.f32 %v2099, 0.0
        %v2102 = vadd.f32 %v2100, %v1640
        %v2103 = vadd.f32 %v2101, %v1641
        %2104 = vmatprep.subr.mxu0 0.0
        %2105 = vmatpush1.msra.mxu0 %v2102
        %2106 = vmatprep.subr.mxu0 0.0
        %2107 = vmatpush1.msra.mxu0 %v2103
        %2108 = vmatprep.subr.mxu0 0.0
        %2109 = vmatpush1.msra.mxu0 0.0
        %2110 = vmatprep.subr.mxu0 0.0
        %2111 = vmatpush1.msra.mxu0 0.0
        %2112 = vmatprep.subr.mxu0 0.0
        %2113 = vmatpush1.msra.mxu0 0.0
        %2114 = vmatprep.subr.mxu0 0.0
        %2115 = vmatpush1.msra.mxu0 0.0
        %2116 = vmatprep.subr.mxu0 0.0
        %2117 = vmatpush1.msra.mxu0 0.0
        %2118 = vmatprep.subr.mxu0 0.0
        %2119 = vmatpush1.msra.mxu0 0.0
        %2120 = vmatprep.subr.mxu0 0.0
        %2121 = vmatpush1.msra.mxu0 0.0
        %2122 = vmatprep.subr.mxu0 0.0
        %2123 = vmatpush1.msra.mxu0 0.0
        %2124 = vmatprep.subr.mxu0 0.0
        %2125 = vmatpush1.msra.mxu0 0.0
        %2126 = vmatprep.subr.mxu0 0.0
        %2127 = vmatpush1.msra.mxu0 0.0
        %2128 = vmatprep.subr.mxu0 0.0
        %2129 = vmatpush1.msra.mxu0 0.0
        %2130 = vmatprep.subr.mxu0 0.0
        %2131 = vmatpush1.msra.mxu0 0.0
        %2132 = vmatprep.subr.mxu0 0.0
        %2133 = vmatpush1.msra.mxu0 0.0
        %2134 = vmatprep.subr.mxu0 0.0
        %2135 = vmatpush1.msra.mxu0 0.0
        %2136 = vmatprep.subr.mxu0 0.0
        %2137 = vmatpush1.msra.mxu0 0.0
        %2138 = vmatprep.subr.mxu0 0.0
        %2139 = vmatpush1.msra.mxu0 0.0
        %2140 = vmatprep.subr.mxu0 0.0
        %2141 = vmatpush1.msra.mxu0 0.0
        %2142 = vmatprep.subr.mxu0 0.0
        %2143 = vmatpush1.msra.mxu0 0.0
        %2144 = vmatprep.subr.mxu0 0.0
        %2145 = vmatpush1.msra.mxu0 0.0
        %2146 = vmatprep.subr.mxu0 0.0
        %2147 = vmatpush1.msra.mxu0 0.0
        %2148 = vmatprep.subr.mxu0 0.0
        %2149 = vmatpush1.msra.mxu0 0.0
        %2150 = vmatprep.subr.mxu0 0.0
        %2151 = vmatpush1.msra.mxu0 0.0
        %2152 = vmatprep.subr.mxu0 0.0
        %2153 = vmatpush1.msra.mxu0 0.0
        %2154 = vmatprep.subr.mxu0 0.0
        %2155 = vmatpush1.msra.mxu0 0.0
        %2156 = vmatprep.subr.mxu0 0.0
        %2157 = vmatpush1.msra.mxu0 0.0
        %2158 = vmatprep.subr.mxu0 0.0
        %2159 = vmatpush1.msra.mxu0 0.0
        %2160 = vmatprep.subr.mxu0 0.0
        %2161 = vmatpush1.msra.mxu0 0.0
        %2162 = vmatprep.subr.mxu0 0.0
        %2163 = vmatpush1.msra.mxu0 0.0
        %2164 = vmatprep.subr.mxu0 0.0
        %2165 = vmatpush1.msra.mxu0 0.0
        %2166 = vmatprep.subr.mxu0 0.0
        %2167 = vmatpush1.msra.mxu0 0.0
        %2168 = vmatprep.mubr.f32.mxu0 0.0
        %2169 = vmatmul.mubr.f32.gmra.mrb[0].mxu0 %v370
        %v2170 = vpop.f32.mrb[0].mxu0
        %v2171 = vadd.f32 0.0, %v2170
        %v2172 = vpop.f32.mrb[0].mxu0
        %2173 = vmatprep.mubr.f32.mxu0 0.0
        %2174 = vmatmul.mubr.f32.gmra.mrb[0].mxu0 %v373
        %v2175 = vpop.f32.mrb[0].mxu0
        %v2176 = vadd.f32 0.0, %v2175
        %v2177 = vpop.f32.mrb[0].mxu0
        %2178 = vdwg.mxu0
        %v2179 = vpack.c.bf16 %v2176, %v2171
        %s2180 = scalar_lea.vmem [#allocation7], 512
        %v2181 = vld [vmem:[%s2180] sm:$0xf]
        %v2182 = vld [vmem:[%s2180 + $0x4] sm:$0xf]
        %v2183 = vld [vmem:[%s2180 + $0x8] sm:$0xf]
        %v2184 = vld [vmem:[%s2180 + $0xc] sm:$0xf]
        %v2185 = vld [vmem:[%s2180 + $0x10] sm:$0xf]
        %v2186 = vld [vmem:[%s2180 + $0x14] sm:$0xf]
        %v2187 = vld [vmem:[%s2180 + $0x18] sm:$0xf]
        %v2188 = vld [vmem:[%s2180 + $0x1c] sm:$0xf]
        %v2189 = vld [vmem:[%s2180 + $0x20] sm:$0xf]
        %v2190 = vld [vmem:[%s2180 + $0x24] sm:$0xf]
        %v2191 = vld [vmem:[%s2180 + $0x28] sm:$0xf]
        %v2192 = vld [vmem:[%s2180 + $0x2c] sm:$0xf]
        %v2193 = vld [vmem:[%s2180 + $0x30] sm:$0xf]
        %v2194 = vld [vmem:[%s2180 + $0x34] sm:$0xf]
        %v2195 = vld [vmem:[%s2180 + $0x38] sm:$0xf]
        %v2196 = vld [vmem:[%s2180 + $0x3c] sm:$0xf]
        %s2197 = scalar_lea.vmem %s3, 8
        %v2198 = vld [vmem:[%s2197] sm:$0x1]
        %v2200 = vlaneseq
        %v2201 = vshrl.u32 %v2200, 7
        %v2202 = vsub.s32 0, %v2201
        %v2203 = vrot.slane %v2198, %v2202
        %v2221 = vunpack.c.l.b16 %v2181
        %v2222 = vunpack.c.l.b16 %v2182
        %v2223 = vunpack.c.l.b16 %v2183
        %v2224 = vunpack.c.l.b16 %v2184
        %v2225 = vunpack.c.l.b16 %v2185
        %v2226 = vunpack.c.l.b16 %v2186
        %v2227 = vunpack.c.l.b16 %v2187
        %v2228 = vunpack.c.l.b16 %v2188
        %v2229 = vunpack.c.l.b16 %v2189
        %v2230 = vunpack.c.l.b16 %v2190
        %v2231 = vunpack.c.l.b16 %v2191
        %v2232 = vunpack.c.l.b16 %v2192
        %v2233 = vunpack.c.l.b16 %v2193
        %v2234 = vunpack.c.l.b16 %v2194
        %v2235 = vunpack.c.l.b16 %v2195
        %v2236 = vunpack.c.l.b16 %v2196
        %v2237 = vpack.c.b16 %v2222, %v2221
        %v2238 = vpack.c.b16 %v2224, %v2223
        %v2239 = vpack.c.b16 %v2226, %v2225
        %v2240 = vpack.c.b16 %v2228, %v2227
        %v2241 = vpack.c.b16 %v2230, %v2229
        %v2242 = vpack.c.b16 %v2232, %v2231
        %v2243 = vpack.c.b16 %v2234, %v2233
        %v2244 = vpack.c.b16 %v2236, %v2235
        %2253 = vmatprep.subr.bf16.mxu0 0
        %2254 = vmatpush1.bf16.msra.mxu0 %v2237
        %2255 = vmatprep.subr.bf16.mxu0 0
        %2256 = vmatpush1.bf16.msra.mxu0 %v2238
        %2257 = vmatprep.subr.bf16.mxu0 0
        %2258 = vmatpush1.bf16.msra.mxu0 %v2239
        %2259 = vmatprep.subr.bf16.mxu0 0
        %2260 = vmatpush1.bf16.msra.mxu0 %v2240
        %2261 = vmatprep.subr.bf16.mxu0 0
        %2262 = vmatpush1.bf16.msra.mxu0 %v2241
        %2263 = vmatprep.subr.bf16.mxu0 0
        %2264 = vmatpush1.bf16.msra.mxu0 %v2242
        %2265 = vmatprep.subr.bf16.mxu0 0
        %2266 = vmatpush1.bf16.msra.mxu0 %v2243
        %2267 = vmatprep.subr.bf16.mxu0 0
        %2268 = vmatpush1.bf16.msra.mxu0 %v2244
        %2269 = vmatprep.subr.bf16.mxu0 0
        %2270 = vmatpush1.bf16.msra.mxu0 0
        %2271 = vmatprep.subr.bf16.mxu0 0
        %2272 = vmatpush1.bf16.msra.mxu0 0
        %2273 = vmatprep.subr.bf16.mxu0 0
        %2274 = vmatpush1.bf16.msra.mxu0 0
        %2275 = vmatprep.subr.bf16.mxu0 0
        %2276 = vmatpush1.bf16.msra.mxu0 0
        %2277 = vmatprep.subr.bf16.mxu0 0
        %2278 = vmatpush1.bf16.msra.mxu0 0
        %2279 = vmatprep.subr.bf16.mxu0 0
        %2280 = vmatpush1.bf16.msra.mxu0 0
        %2281 = vmatprep.subr.bf16.mxu0 0
        %2282 = vmatpush1.bf16.msra.mxu0 0
        %2283 = vmatprep.subr.bf16.mxu0 0
        %2284 = vmatpush1.bf16.msra.mxu0 0
        %2285 = vmatprep.mubr.bf16.mxu0 0
        %2286 = vmatmul.mubr.bf16.gmra.mrb[0].mxu0 %v2179
        %v2287 = vpop.f32.mrb[0].mxu0
        %v2288 = vadd.f32 %v2203, %v2287
        %v2289 = vpop.f32.mrb[0].mxu0
        %v2290 = vpop.f32.mrb[0].mxu0
        %v2291 = vadd.f32 %v2203, %v2290
        %v2292 = vpop.f32.mrb[0].mxu0
        %2293 = vdwg.mxu0
        %v2294 = vadd.f32 %v2288, %v2291
        %v2295 = vrot.slane %v2294, 4
        %v2296 = vadd.f32 %v2294, %v2295
        %v2297 = vrot.slane %v2296, 2
        %v2298 = vadd.f32 %v2296, %v2297
        %v2299 = vrot.slane %v2298, 1
        %v2300 = vadd.f32 %v2298, %v2299
        %v2301 = vmul.f32 %v2300, %v754
        %s2302 = scalar_lea.vmem %s290, 16 [#allocation2]
        %v2303 = vld [vmem:[%s2302] sm:$0xff]
        %v2304 = vld [vmem:[%s2302 + $0x8] sm:$0xff]
        %s2305 = scalar_lea.vmem %s299, 16 [#allocation5]
        %v2306 = vld [vmem:[%s2305] sm:$0xff]
        %v2307 = vld [vmem:[%s2305 + $0x8] sm:$0xff]
        %v2308 = vmul.f32 %v2306, %v2306
        %v2309 = vmul.f32 %v2307, %v2307
        %v2310 = vadd.f32 %v2308, %v2309
        %v2311 = vrot.slane %v2310, 4
        %v2312 = vadd.f32 %v2310, %v2311
        %v2313 = vrot.slane %v2312, 2
        %v2314 = vadd.f32 %v2312, %v2313
        %v2315 = vrot.slane %v2314, 1
        %v2316 = vadd.f32 %v2314, %v2315
        %v2317 = vrsqrt.pop %v2316
        %v2318 = vmul.f32 %v2316, %v2317
        %vm2319 = vcmp.eq.f32.partialorder %v2316, inf
        %v2320 = vsel %vm2319, %v2316, %v2318
        %vm2321 = vcmp.eq.f32.partialorder %v2316, 0.0
        %v2322 = vand.u32 %v2316, 2147483648
        %v2323 = vsel %vm2321, %v2322, %v2320
        %v2324 = vmax.f32 %v2323, 1e-12
        %v2325 = vrcp.pop %v2324
        %v2326 = vmul.f32 %v2306, %v2325
        %v2327 = vmul.f32 %v2307, %v2325
        %v2329 = vsel %vm368, %v2303, 0
        %v2332 = vsel %vm368, %v2304, 0
        %2334 = vmatprep.subr.mxu0 0.0
        %2335 = vmatpush1.msra.mxu0 %v2326
        %2336 = vmatprep.subr.mxu0 0.0
        %2337 = vmatpush1.msra.mxu0 %v2327
        %2338 = vmatprep.subr.mxu0 0.0
        %2339 = vmatpush1.msra.mxu0 0.0
        %2340 = vmatprep.subr.mxu0 0.0
        %2341 = vmatpush1.msra.mxu0 0.0
        %2342 = vmatprep.subr.mxu0 0.0
        %2343 = vmatpush1.msra.mxu0 0.0
        %2344 = vmatprep.subr.mxu0 0.0
        %2345 = vmatpush1.msra.mxu0 0.0
        %2346 = vmatprep.subr.mxu0 0.0
        %2347 = vmatpush1.msra.mxu0 0.0
        %2348 = vmatprep.subr.mxu0 0.0
        %2349 = vmatpush1.msra.mxu0 0.0
        %2350 = vmatprep.subr.mxu0 0.0
        %2351 = vmatpush1.msra.mxu0 0.0
        %2352 = vmatprep.subr.mxu0 0.0
        %2353 = vmatpush1.msra.mxu0 0.0
        %2354 = vmatprep.subr.mxu0 0.0
        %2355 = vmatpush1.msra.mxu0 0.0
        %2356 = vmatprep.subr.mxu0 0.0
        %2357 = vmatpush1.msra.mxu0 0.0
        %2358 = vmatprep.subr.mxu0 0.0
        %2359 = vmatpush1.msra.mxu0 0.0
        %2360 = vmatprep.subr.mxu0 0.0
        %2361 = vmatpush1.msra.mxu0 0.0
        %2362 = vmatprep.subr.mxu0 0.0
        %2363 = vmatpush1.msra.mxu0 0.0
        %2364 = vmatprep.subr.mxu0 0.0
        %2365 = vmatpush1.msra.mxu0 0.0
        %2366 = vmatprep.subr.mxu0 0.0
        %2367 = vmatpush1.msra.mxu0 0.0
        %2368 = vmatprep.subr.mxu0 0.0
        %2369 = vmatpush1.msra.mxu0 0.0
        %2370 = vmatprep.subr.mxu0 0.0
        %2371 = vmatpush1.msra.mxu0 0.0
        %2372 = vmatprep.subr.mxu0 0.0
        %2373 = vmatpush1.msra.mxu0 0.0
        %2374 = vmatprep.subr.mxu0 0.0
        %2375 = vmatpush1.msra.mxu0 0.0
        %2376 = vmatprep.subr.mxu0 0.0
        %2377 = vmatpush1.msra.mxu0 0.0
        %2378 = vmatprep.subr.mxu0 0.0
        %2379 = vmatpush1.msra.mxu0 0.0
        %2380 = vmatprep.subr.mxu0 0.0
        %2381 = vmatpush1.msra.mxu0 0.0
        %2382 = vmatprep.subr.mxu0 0.0
        %2383 = vmatpush1.msra.mxu0 0.0
        %2384 = vmatprep.subr.mxu0 0.0
        %2385 = vmatpush1.msra.mxu0 0.0
        %2386 = vmatprep.subr.mxu0 0.0
        %2387 = vmatpush1.msra.mxu0 0.0
        %2388 = vmatprep.subr.mxu0 0.0
        %2389 = vmatpush1.msra.mxu0 0.0
        %2390 = vmatprep.subr.mxu0 0.0
        %2391 = vmatpush1.msra.mxu0 0.0
        %2392 = vmatprep.subr.mxu0 0.0
        %2393 = vmatpush1.msra.mxu0 0.0
        %2394 = vmatprep.subr.mxu0 0.0
        %2395 = vmatpush1.msra.mxu0 0.0
        %2396 = vmatprep.subr.mxu0 0.0
        %2397 = vmatpush1.msra.mxu0 0.0
        %2398 = vmatprep.mubr.f32.mxu0 0.0
        %2399 = vmatmul.mubr.f32.gmra.mrb[0].mxu0 %v2329
        %v2400 = vpop.f32.mrb[0].mxu0
        %v2401 = vadd.f32 0.0, %v2400
        %v2402 = vpop.f32.mrb[0].mxu0
        %2403 = vmatprep.mubr.f32.mxu0 0.0
        %2404 = vmatmul.mubr.f32.gmra.mrb[0].mxu0 %v2332
        %v2405 = vpop.f32.mrb[0].mxu0
        %v2406 = vadd.f32 0.0, %v2405
        %v2407 = vpop.f32.mrb[0].mxu0
        %2408 = vdwg.mxu0
        %v2409 = vpack.c.bf16 %v2406, %v2401
        %2410 = vmatprep.subr.bf16.mxu0 0
        %2411 = vmatpush1.bf16.msra.mxu0 %v506
        %2412 = vmatprep.subr.bf16.mxu0 0
        %2413 = vmatpush1.bf16.msra.mxu0 %v507
        %2414 = vmatprep.subr.bf16.mxu0 0
        %2415 = vmatpush1.bf16.msra.mxu0 %v508
        %2416 = vmatprep.subr.bf16.mxu0 0
        %2417 = vmatpush1.bf16.msra.mxu0 %v509
        %2418 = vmatprep.subr.bf16.mxu0 0
        %2419 = vmatpush1.bf16.msra.mxu0 %v510
        %2420 = vmatprep.subr.bf16.mxu0 0
        %2421 = vmatpush1.bf16.msra.mxu0 %v511
        %2422 = vmatprep.subr.bf16.mxu0 0
        %2423 = vmatpush1.bf16.msra.mxu0 %v512
        %2424 = vmatprep.subr.bf16.mxu0 0
        %2425 = vmatpush1.bf16.msra.mxu0 %v513
        %2426 = vmatprep.subr.bf16.mxu0 0
        %2427 = vmatpush1.bf16.msra.mxu0 0
        %2428 = vmatprep.subr.bf16.mxu0 0
        %2429 = vmatpush1.bf16.msra.mxu0 0
        %2430 = vmatprep.subr.bf16.mxu0 0
        %2431 = vmatpush1.bf16.msra.mxu0 0
        %2432 = vmatprep.subr.bf16.mxu0 0
        %2433 = vmatpush1.bf16.msra.mxu0 0
        %2434 = vmatprep.subr.bf16.mxu0 0
        %2435 = vmatpush1.bf16.msra.mxu0 0
        %2436 = vmatprep.subr.bf16.mxu0 0
        %2437 = vmatpush1.bf16.msra.mxu0 0
        %2438 = vmatprep.subr.bf16.mxu0 0
        %2439 = vmatpush1.bf16.msra.mxu0 0
        %2440 = vmatprep.subr.bf16.mxu0 0
        %2441 = vmatpush1.bf16.msra.mxu0 0
        %2442 = vmatprep.mubr.bf16.mxu0 0
        %2443 = vmatmul.mubr.bf16.gmra.mrb[0].mxu0 %v2409
        %v2444 = vpop.f32.mrb[0].mxu0
        %v2445 = vadd.f32 %v472, %v2444
        %v2446 = vpop.f32.mrb[0].mxu0
        %v2447 = vpop.f32.mrb[0].mxu0
        %v2448 = vadd.f32 %v472, %v2447
        %v2449 = vpop.f32.mrb[0].mxu0
        %2450 = vdwg.mxu0
        %v2451 = vmax.f32 %v2445, 0.0
        %v2452 = vmax.f32 %v2448, 0.0
        %2453 = vmatprep.subr.mxu0 0.0
        %2454 = vmatpush1.msra.mxu0 %v2451
        %2455 = vmatprep.subr.mxu0 0.0
        %2456 = vmatpush1.msra.mxu0 %v2452
        %2457 = vmatprep.subr.mxu0 0.0
        %2458 = vmatpush1.msra.mxu0 0.0
        %2459 = vmatprep.subr.mxu0 0.0
        %2460 = vmatpush1.msra.mxu0 0.0
        %2461 = vmatprep.subr.mxu0 0.0
        %2462 = vmatpush1.msra.mxu0 0.0
        %2463 = vmatprep.subr.mxu0 0.0
        %2464 = vmatpush1.msra.mxu0 0.0
        %2465 = vmatprep.subr.mxu0 0.0
        %2466 = vmatpush1.msra.mxu0 0.0
        %2467 = vmatprep.subr.mxu0 0.0
        %2468 = vmatpush1.msra.mxu0 0.0
        %2469 = vmatprep.subr.mxu0 0.0
        %2470 = vmatpush1.msra.mxu0 0.0
        %2471 = vmatprep.subr.mxu0 0.0
        %2472 = vmatpush1.msra.mxu0 0.0
        %2473 = vmatprep.subr.mxu0 0.0
        %2474 = vmatpush1.msra.mxu0 0.0
        %2475 = vmatprep.subr.mxu0 0.0
        %2476 = vmatpush1.msra.mxu0 0.0
        %2477 = vmatprep.subr.mxu0 0.0
        %2478 = vmatpush1.msra.mxu0 0.0
        %2479 = vmatprep.subr.mxu0 0.0
        %2480 = vmatpush1.msra.mxu0 0.0
        %2481 = vmatprep.subr.mxu0 0.0
        %2482 = vmatpush1.msra.mxu0 0.0
        %2483 = vmatprep.subr.mxu0 0.0
        %2484 = vmatpush1.msra.mxu0 0.0
        %2485 = vmatprep.subr.mxu0 0.0
        %2486 = vmatpush1.msra.mxu0 0.0
        %2487 = vmatprep.subr.mxu0 0.0
        %2488 = vmatpush1.msra.mxu0 0.0
        %2489 = vmatprep.subr.mxu0 0.0
        %2490 = vmatpush1.msra.mxu0 0.0
        %2491 = vmatprep.subr.mxu0 0.0
        %2492 = vmatpush1.msra.mxu0 0.0
        %2493 = vmatprep.subr.mxu0 0.0
        %2494 = vmatpush1.msra.mxu0 0.0
        %2495 = vmatprep.subr.mxu0 0.0
        %2496 = vmatpush1.msra.mxu0 0.0
        %2497 = vmatprep.subr.mxu0 0.0
        %2498 = vmatpush1.msra.mxu0 0.0
        %2499 = vmatprep.subr.mxu0 0.0
        %2500 = vmatpush1.msra.mxu0 0.0
        %2501 = vmatprep.subr.mxu0 0.0
        %2502 = vmatpush1.msra.mxu0 0.0
        %2503 = vmatprep.subr.mxu0 0.0
        %2504 = vmatpush1.msra.mxu0 0.0
        %2505 = vmatprep.subr.mxu0 0.0
        %2506 = vmatpush1.msra.mxu0 0.0
        %2507 = vmatprep.subr.mxu0 0.0
        %2508 = vmatpush1.msra.mxu0 0.0
        %2509 = vmatprep.subr.mxu0 0.0
        %2510 = vmatpush1.msra.mxu0 0.0
        %2511 = vmatprep.subr.mxu0 0.0
        %2512 = vmatpush1.msra.mxu0 0.0
        %2513 = vmatprep.subr.mxu0 0.0
        %2514 = vmatpush1.msra.mxu0 0.0
        %2515 = vmatprep.subr.mxu0 0.0
        %2516 = vmatpush1.msra.mxu0 0.0
        %2517 = vmatprep.mubr.f32.mxu0 0.0
        %2518 = vmatmul.mubr.f32.gmra.mrb[0].mxu0 %v2329
        %v2519 = vpop.f32.mrb[0].mxu0
        %v2520 = vadd.f32 0.0, %v2519
        %v2521 = vpop.f32.mrb[0].mxu0
        %2522 = vmatprep.mubr.f32.mxu0 0.0
        %2523 = vmatmul.mubr.f32.gmra.mrb[0].mxu0 %v2332
        %v2524 = vpop.f32.mrb[0].mxu0
        %v2525 = vadd.f32 0.0, %v2524
        %v2526 = vpop.f32.mrb[0].mxu0
        %2527 = vdwg.mxu0
        %v2528 = vpack.c.bf16 %v2525, %v2520
        %2529 = vmatprep.subr.bf16.mxu0 0
        %2530 = vmatpush1.bf16.msra.mxu0 %v690
        %2531 = vmatprep.subr.bf16.mxu0 0
        %2532 = vmatpush1.bf16.msra.mxu0 %v691
        %2533 = vmatprep.subr.bf16.mxu0 0
        %2534 = vmatpush1.bf16.msra.mxu0 %v692
        %2535 = vmatprep.subr.bf16.mxu0 0
        %2536 = vmatpush1.bf16.msra.mxu0 %v693
        %2537 = vmatprep.subr.bf16.mxu0 0
        %2538 = vmatpush1.bf16.msra.mxu0 %v694
        %2539 = vmatprep.subr.bf16.mxu0 0
        %2540 = vmatpush1.bf16.msra.mxu0 %v695
        %2541 = vmatprep.subr.bf16.mxu0 0
        %2542 = vmatpush1.bf16.msra.mxu0 %v696
        %2543 = vmatprep.subr.bf16.mxu0 0
        %2544 = vmatpush1.bf16.msra.mxu0 %v697
        %2545 = vmatprep.subr.bf16.mxu0 0
        %2546 = vmatpush1.bf16.msra.mxu0 0
        %2547 = vmatprep.subr.bf16.mxu0 0
        %2548 = vmatpush1.bf16.msra.mxu0 0
        %2549 = vmatprep.subr.bf16.mxu0 0
        %2550 = vmatpush1.bf16.msra.mxu0 0
        %2551 = vmatprep.subr.bf16.mxu0 0
        %2552 = vmatpush1.bf16.msra.mxu0 0
        %2553 = vmatprep.subr.bf16.mxu0 0
        %2554 = vmatpush1.bf16.msra.mxu0 0
        %2555 = vmatprep.subr.bf16.mxu0 0
        %2556 = vmatpush1.bf16.msra.mxu0 0
        %2557 = vmatprep.subr.bf16.mxu0 0
        %2558 = vmatpush1.bf16.msra.mxu0 0
        %2559 = vmatprep.subr.bf16.mxu0 0
        %2560 = vmatpush1.bf16.msra.mxu0 0
        %2561 = vmatprep.mubr.bf16.mxu0 0
        %2562 = vmatmul.mubr.bf16.gmra.mrb[0].mxu0 %v2528
        %v2563 = vpop.f32.mrb[0].mxu0
        %v2564 = vadd.f32 0.0, %v2563
        %v2565 = vpop.f32.mrb[0].mxu0
        %v2566 = vpop.f32.mrb[0].mxu0
        %v2567 = vadd.f32 0.0, %v2566
        %v2568 = vpop.f32.mrb[0].mxu0
        %2569 = vdwg.mxu0
        %v2570 = vadd.f32 %v2564, %v2567
        %v2571 = vrot.slane %v2570, 4
        %v2572 = vadd.f32 %v2570, %v2571
        %v2573 = vrot.slane %v2572, 2
        %v2574 = vadd.f32 %v2572, %v2573
        %v2575 = vrot.slane %v2574, 1
        %v2576 = vadd.f32 %v2574, %v2575
        %v2577 = vmul.f32 %v2576, %v754
        %v2578 = vmul.f32 %v2564, %v2564
        %v2579 = vmul.f32 %v2567, %v2567
        %v2580 = vadd.f32 %v2578, %v2579
        %v2581 = vrot.slane %v2580, 4
        %v2582 = vadd.f32 %v2580, %v2581
        %v2583 = vrot.slane %v2582, 2
        %v2584 = vadd.f32 %v2582, %v2583
        %v2585 = vrot.slane %v2584, 1
        %v2586 = vadd.f32 %v2584, %v2585
        %v2587 = vmul.f32 %v2586, %v754
        %v2588 = vmul.f32 %v2577, %v2577
        %v2589 = vsub.f32 %v2587, %v2588
        %v2590 = vmax.f32 %v2589, 0.0
        %v2591 = vadd.f32 %v2590, 1e-05
        %v2592 = vrsqrt.pop %v2591
        %v2593 = vmul.f32 %v770, %v2592
        %v2594 = vmul.f32 %v2577, %v2593
        %v2595 = vsub.f32 %v775, %v2594
        %v2597 = vlaneseq
        %v2598 = vshrl.u32 %v2597, 7
        %v2599 = vsub.s32 0, %v2598
        %v2600 = vrot.slane %v2593, %v2599
        %v2602 = vmul.f32 %v2564, %v2600
        %v2603 = vmul.f32 %v2567, %v2600
        %v2605 = vlaneseq
        %v2606 = vshrl.u32 %v2605, 7
        %v2607 = vsub.s32 0, %v2606
        %v2608 = vrot.slane %v2595, %v2607
        %v2610 = vadd.f32 %v2602, %v2608
        %v2611 = vadd.f32 %v2603, %v2608
        %v2612 = vmax.f32 %v2610, 0.0
        %v2613 = vmax.f32 %v2611, 0.0
        %2614 = vmatprep.subr.mxu0 0.0
        %2615 = vmatpush1.msra.mxu0 %v2612
        %2616 = vmatprep.subr.mxu0 0.0
        %2617 = vmatpush1.msra.mxu0 %v2613
        %2618 = vmatprep.subr.mxu0 0.0
        %2619 = vmatpush1.msra.mxu0 0.0
        %2620 = vmatprep.subr.mxu0 0.0
        %2621 = vmatpush1.msra.mxu0 0.0
        %2622 = vmatprep.subr.mxu0 0.0
        %2623 = vmatpush1.msra.mxu0 0.0
        %2624 = vmatprep.subr.mxu0 0.0
        %2625 = vmatpush1.msra.mxu0 0.0
        %2626 = vmatprep.subr.mxu0 0.0
        %2627 = vmatpush1.msra.mxu0 0.0
        %2628 = vmatprep.subr.mxu0 0.0
        %2629 = vmatpush1.msra.mxu0 0.0
        %2630 = vmatprep.subr.mxu0 0.0
        %2631 = vmatpush1.msra.mxu0 0.0
        %2632 = vmatprep.subr.mxu0 0.0
        %2633 = vmatpush1.msra.mxu0 0.0
        %2634 = vmatprep.subr.mxu0 0.0
        %2635 = vmatpush1.msra.mxu0 0.0
        %2636 = vmatprep.subr.mxu0 0.0
        %2637 = vmatpush1.msra.mxu0 0.0
        %2638 = vmatprep.subr.mxu0 0.0
        %2639 = vmatpush1.msra.mxu0 0.0
        %2640 = vmatprep.subr.mxu0 0.0
        %2641 = vmatpush1.msra.mxu0 0.0
        %2642 = vmatprep.subr.mxu0 0.0
        %2643 = vmatpush1.msra.mxu0 0.0
        %2644 = vmatprep.subr.mxu0 0.0
        %2645 = vmatpush1.msra.mxu0 0.0
        %2646 = vmatprep.subr.mxu0 0.0
        %2647 = vmatpush1.msra.mxu0 0.0
        %2648 = vmatprep.subr.mxu0 0.0
        %2649 = vmatpush1.msra.mxu0 0.0
        %2650 = vmatprep.subr.mxu0 0.0
        %2651 = vmatpush1.msra.mxu0 0.0
        %2652 = vmatprep.subr.mxu0 0.0
        %2653 = vmatpush1.msra.mxu0 0.0
        %2654 = vmatprep.subr.mxu0 0.0
        %2655 = vmatpush1.msra.mxu0 0.0
        %2656 = vmatprep.subr.mxu0 0.0
        %2657 = vmatpush1.msra.mxu0 0.0
        %2658 = vmatprep.subr.mxu0 0.0
        %2659 = vmatpush1.msra.mxu0 0.0
        %2660 = vmatprep.subr.mxu0 0.0
        %2661 = vmatpush1.msra.mxu0 0.0
        %2662 = vmatprep.subr.mxu0 0.0
        %2663 = vmatpush1.msra.mxu0 0.0
        %2664 = vmatprep.subr.mxu0 0.0
        %2665 = vmatpush1.msra.mxu0 0.0
        %2666 = vmatprep.subr.mxu0 0.0
        %2667 = vmatpush1.msra.mxu0 0.0
        %2668 = vmatprep.subr.mxu0 0.0
        %2669 = vmatpush1.msra.mxu0 0.0
        %2670 = vmatprep.subr.mxu0 0.0
        %2671 = vmatpush1.msra.mxu0 0.0
        %2672 = vmatprep.subr.mxu0 0.0
        %2673 = vmatpush1.msra.mxu0 0.0
        %2674 = vmatprep.subr.mxu0 0.0
        %2675 = vmatpush1.msra.mxu0 0.0
        %2676 = vmatprep.subr.mxu0 0.0
        %2677 = vmatpush1.msra.mxu0 0.0
        %2678 = vmatprep.mubr.f32.mxu0 0.0
        %2679 = vmatmul.mubr.f32.gmra.mrb[0].mxu0 %v2329
        %v2680 = vpop.f32.mrb[0].mxu0
        %v2681 = vadd.f32 0.0, %v2680
        %v2682 = vpop.f32.mrb[0].mxu0
        %2683 = vmatprep.mubr.f32.mxu0 0.0
        %2684 = vmatmul.mubr.f32.gmra.mrb[0].mxu0 %v2332
        %v2685 = vpop.f32.mrb[0].mxu0
        %v2686 = vadd.f32 0.0, %v2685
        %v2687 = vpop.f32.mrb[0].mxu0
        %2688 = vdwg.mxu0
        %v2689 = vpack.c.bf16 %v2686, %v2681
        %2690 = vmatprep.subr.bf16.mxu0 0
        %2691 = vmatpush1.bf16.msra.mxu0 %v921
        %2692 = vmatprep.subr.bf16.mxu0 0
        %2693 = vmatpush1.bf16.msra.mxu0 %v922
        %2694 = vmatprep.subr.bf16.mxu0 0
        %2695 = vmatpush1.bf16.msra.mxu0 %v923
        %2696 = vmatprep.subr.bf16.mxu0 0
        %2697 = vmatpush1.bf16.msra.mxu0 %v924
        %2698 = vmatprep.subr.bf16.mxu0 0
        %2699 = vmatpush1.bf16.msra.mxu0 %v925
        %2700 = vmatprep.subr.bf16.mxu0 0
        %2701 = vmatpush1.bf16.msra.mxu0 %v926
        %2702 = vmatprep.subr.bf16.mxu0 0
        %2703 = vmatpush1.bf16.msra.mxu0 %v927
        %2704 = vmatprep.subr.bf16.mxu0 0
        %2705 = vmatpush1.bf16.msra.mxu0 %v928
        %2706 = vmatprep.subr.bf16.mxu0 0
        %2707 = vmatpush1.bf16.msra.mxu0 0
        %2708 = vmatprep.subr.bf16.mxu0 0
        %2709 = vmatpush1.bf16.msra.mxu0 0
        %2710 = vmatprep.subr.bf16.mxu0 0
        %2711 = vmatpush1.bf16.msra.mxu0 0
        %2712 = vmatprep.subr.bf16.mxu0 0
        %2713 = vmatpush1.bf16.msra.mxu0 0
        %2714 = vmatprep.subr.bf16.mxu0 0
        %2715 = vmatpush1.bf16.msra.mxu0 0
        %2716 = vmatprep.subr.bf16.mxu0 0
        %2717 = vmatpush1.bf16.msra.mxu0 0
        %2718 = vmatprep.subr.bf16.mxu0 0
        %2719 = vmatpush1.bf16.msra.mxu0 0
        %2720 = vmatprep.subr.bf16.mxu0 0
        %2721 = vmatpush1.bf16.msra.mxu0 0
        %2722 = vmatprep.mubr.bf16.mxu0 0
        %2723 = vmatmul.mubr.bf16.gmra.mrb[0].mxu0 %v2689
        %v2724 = vpop.f32.mrb[0].mxu0
        %v2725 = vadd.f32 0.0, %v2724
        %v2726 = vpop.f32.mrb[0].mxu0
        %v2727 = vpop.f32.mrb[0].mxu0
        %v2728 = vadd.f32 0.0, %v2727
        %v2729 = vpop.f32.mrb[0].mxu0
        %2730 = vdwg.mxu0
        %v2731 = vadd.f32 %v2725, %v2728
        %v2732 = vrot.slane %v2731, 4
        %v2733 = vadd.f32 %v2731, %v2732
        %v2734 = vrot.slane %v2733, 2
        %v2735 = vadd.f32 %v2733, %v2734
        %v2736 = vrot.slane %v2735, 1
        %v2737 = vadd.f32 %v2735, %v2736
        %v2738 = vmul.f32 %v2737, %v754
        %v2739 = vmul.f32 %v2725, %v2725
        %v2740 = vmul.f32 %v2728, %v2728
        %v2741 = vadd.f32 %v2739, %v2740
        %v2742 = vrot.slane %v2741, 4
        %v2743 = vadd.f32 %v2741, %v2742
        %v2744 = vrot.slane %v2743, 2
        %v2745 = vadd.f32 %v2743, %v2744
        %v2746 = vrot.slane %v2745, 1
        %v2747 = vadd.f32 %v2745, %v2746
        %v2748 = vmul.f32 %v2747, %v754
        %v2749 = vmul.f32 %v2738, %v2738
        %v2750 = vsub.f32 %v2748, %v2749
        %v2751 = vmax.f32 %v2750, 0.0
        %v2752 = vadd.f32 %v2751, 1e-05
        %v2753 = vrsqrt.pop %v2752
        %v2754 = vmul.f32 %v1000, %v2753
        %v2755 = vmul.f32 %v2738, %v2754
        %v2756 = vsub.f32 %v1005, %v2755
        %v2758 = vlaneseq
        %v2759 = vshrl.u32 %v2758, 7
        %v2760 = vsub.s32 0, %v2759
        %v2761 = vrot.slane %v2754, %v2760
        %v2763 = vmul.f32 %v2725, %v2761
        %v2764 = vmul.f32 %v2728, %v2761
        %v2766 = vlaneseq
        %v2767 = vshrl.u32 %v2766, 7
        %v2768 = vsub.s32 0, %v2767
        %v2769 = vrot.slane %v2756, %v2768
        %v2771 = vadd.f32 %v2763, %v2769
        %v2772 = vadd.f32 %v2764, %v2769
        %v2773 = vmax.f32 %v2771, 0.0
        %v2774 = vmax.f32 %v2772, 0.0
        %v2775 = vadd.f32 %v2773, %v2451
        %v2776 = vadd.f32 %v2774, %v2452
        %2777 = vmatprep.subr.mxu0 0.0
        %2778 = vmatpush1.msra.mxu0 %v2775
        %2779 = vmatprep.subr.mxu0 0.0
        %2780 = vmatpush1.msra.mxu0 %v2776
        %2781 = vmatprep.subr.mxu0 0.0
        %2782 = vmatpush1.msra.mxu0 0.0
        %2783 = vmatprep.subr.mxu0 0.0
        %2784 = vmatpush1.msra.mxu0 0.0
        %2785 = vmatprep.subr.mxu0 0.0
        %2786 = vmatpush1.msra.mxu0 0.0
        %2787 = vmatprep.subr.mxu0 0.0
        %2788 = vmatpush1.msra.mxu0 0.0
        %2789 = vmatprep.subr.mxu0 0.0
        %2790 = vmatpush1.msra.mxu0 0.0
        %2791 = vmatprep.subr.mxu0 0.0
        %2792 = vmatpush1.msra.mxu0 0.0
        %2793 = vmatprep.subr.mxu0 0.0
        %2794 = vmatpush1.msra.mxu0 0.0
        %2795 = vmatprep.subr.mxu0 0.0
        %2796 = vmatpush1.msra.mxu0 0.0
        %2797 = vmatprep.subr.mxu0 0.0
        %2798 = vmatpush1.msra.mxu0 0.0
        %2799 = vmatprep.subr.mxu0 0.0
        %2800 = vmatpush1.msra.mxu0 0.0
        %2801 = vmatprep.subr.mxu0 0.0
        %2802 = vmatpush1.msra.mxu0 0.0
        %2803 = vmatprep.subr.mxu0 0.0
        %2804 = vmatpush1.msra.mxu0 0.0
        %2805 = vmatprep.subr.mxu0 0.0
        %2806 = vmatpush1.msra.mxu0 0.0
        %2807 = vmatprep.subr.mxu0 0.0
        %2808 = vmatpush1.msra.mxu0 0.0
        %2809 = vmatprep.subr.mxu0 0.0
        %2810 = vmatpush1.msra.mxu0 0.0
        %2811 = vmatprep.subr.mxu0 0.0
        %2812 = vmatpush1.msra.mxu0 0.0
        %2813 = vmatprep.subr.mxu0 0.0
        %2814 = vmatpush1.msra.mxu0 0.0
        %2815 = vmatprep.subr.mxu0 0.0
        %2816 = vmatpush1.msra.mxu0 0.0
        %2817 = vmatprep.subr.mxu0 0.0
        %2818 = vmatpush1.msra.mxu0 0.0
        %2819 = vmatprep.subr.mxu0 0.0
        %2820 = vmatpush1.msra.mxu0 0.0
        %2821 = vmatprep.subr.mxu0 0.0
        %2822 = vmatpush1.msra.mxu0 0.0
        %2823 = vmatprep.subr.mxu0 0.0
        %2824 = vmatpush1.msra.mxu0 0.0
        %2825 = vmatprep.subr.mxu0 0.0
        %2826 = vmatpush1.msra.mxu0 0.0
        %2827 = vmatprep.subr.mxu0 0.0
        %2828 = vmatpush1.msra.mxu0 0.0
        %2829 = vmatprep.subr.mxu0 0.0
        %2830 = vmatpush1.msra.mxu0 0.0
        %2831 = vmatprep.subr.mxu0 0.0
        %2832 = vmatpush1.msra.mxu0 0.0
        %2833 = vmatprep.subr.mxu0 0.0
        %2834 = vmatpush1.msra.mxu0 0.0
        %2835 = vmatprep.subr.mxu0 0.0
        %2836 = vmatpush1.msra.mxu0 0.0
        %2837 = vmatprep.subr.mxu0 0.0
        %2838 = vmatpush1.msra.mxu0 0.0
        %2839 = vmatprep.subr.mxu0 0.0
        %2840 = vmatpush1.msra.mxu0 0.0
        %2841 = vmatprep.mubr.f32.mxu0 0.0
        %2842 = vmatmul.mubr.f32.gmra.mrb[0].mxu0 %v2329
        %v2843 = vpop.f32.mrb[0].mxu0
        %v2844 = vadd.f32 0.0, %v2843
        %v2845 = vpop.f32.mrb[0].mxu0
        %2846 = vmatprep.mubr.f32.mxu0 0.0
        %2847 = vmatmul.mubr.f32.gmra.mrb[0].mxu0 %v2332
        %v2848 = vpop.f32.mrb[0].mxu0
        %v2849 = vadd.f32 0.0, %v2848
        %v2850 = vpop.f32.mrb[0].mxu0
        %2851 = vdwg.mxu0
        %v2852 = vpack.c.bf16 %v2849, %v2844
        %2853 = vmatprep.subr.bf16.mxu0 0
        %2854 = vmatpush1.bf16.msra.mxu0 %v1153
        %2855 = vmatprep.subr.bf16.mxu0 0
        %2856 = vmatpush1.bf16.msra.mxu0 %v1154
        %2857 = vmatprep.subr.bf16.mxu0 0
        %2858 = vmatpush1.bf16.msra.mxu0 %v1155
        %2859 = vmatprep.subr.bf16.mxu0 0
        %2860 = vmatpush1.bf16.msra.mxu0 %v1156
        %2861 = vmatprep.subr.bf16.mxu0 0
        %2862 = vmatpush1.bf16.msra.mxu0 %v1157
        %2863 = vmatprep.subr.bf16.mxu0 0
        %2864 = vmatpush1.bf16.msra.mxu0 %v1158
        %2865 = vmatprep.subr.bf16.mxu0 0
        %2866 = vmatpush1.bf16.msra.mxu0 %v1159
        %2867 = vmatprep.subr.bf16.mxu0 0
        %2868 = vmatpush1.bf16.msra.mxu0 %v1160
        %2869 = vmatprep.subr.bf16.mxu0 0
        %2870 = vmatpush1.bf16.msra.mxu0 0
        %2871 = vmatprep.subr.bf16.mxu0 0
        %2872 = vmatpush1.bf16.msra.mxu0 0
        %2873 = vmatprep.subr.bf16.mxu0 0
        %2874 = vmatpush1.bf16.msra.mxu0 0
        %2875 = vmatprep.subr.bf16.mxu0 0
        %2876 = vmatpush1.bf16.msra.mxu0 0
        %2877 = vmatprep.subr.bf16.mxu0 0
        %2878 = vmatpush1.bf16.msra.mxu0 0
        %2879 = vmatprep.subr.bf16.mxu0 0
        %2880 = vmatpush1.bf16.msra.mxu0 0
        %2881 = vmatprep.subr.bf16.mxu0 0
        %2882 = vmatpush1.bf16.msra.mxu0 0
        %2883 = vmatprep.subr.bf16.mxu0 0
        %2884 = vmatpush1.bf16.msra.mxu0 0
        %2885 = vmatprep.mubr.bf16.mxu0 0
        %2886 = vmatmul.mubr.bf16.gmra.mrb[0].mxu0 %v2852
        %v2887 = vpop.f32.mrb[0].mxu0
        %v2888 = vadd.f32 0.0, %v2887
        %v2889 = vpop.f32.mrb[0].mxu0
        %v2890 = vpop.f32.mrb[0].mxu0
        %v2891 = vadd.f32 0.0, %v2890
        %v2892 = vpop.f32.mrb[0].mxu0
        %2893 = vdwg.mxu0
        %v2894 = vadd.f32 %v2888, %v2891
        %v2895 = vrot.slane %v2894, 4
        %v2896 = vadd.f32 %v2894, %v2895
        %v2897 = vrot.slane %v2896, 2
        %v2898 = vadd.f32 %v2896, %v2897
        %v2899 = vrot.slane %v2898, 1
        %v2900 = vadd.f32 %v2898, %v2899
        %v2901 = vmul.f32 %v2900, %v754
        %v2902 = vmul.f32 %v2888, %v2888
        %v2903 = vmul.f32 %v2891, %v2891
        %v2904 = vadd.f32 %v2902, %v2903
        %v2905 = vrot.slane %v2904, 4
        %v2906 = vadd.f32 %v2904, %v2905
        %v2907 = vrot.slane %v2906, 2
        %v2908 = vadd.f32 %v2906, %v2907
        %v2909 = vrot.slane %v2908, 1
        %v2910 = vadd.f32 %v2908, %v2909
        %v2911 = vmul.f32 %v2910, %v754
        %v2912 = vmul.f32 %v2901, %v2901
        %v2913 = vsub.f32 %v2911, %v2912
        %v2914 = vmax.f32 %v2913, 0.0
        %v2915 = vadd.f32 %v2914, 1e-05
        %v2916 = vrsqrt.pop %v2915
        %v2917 = vmul.f32 %v1232, %v2916
        %v2918 = vmul.f32 %v2901, %v2917
        %v2919 = vsub.f32 %v1237, %v2918
        %v2921 = vlaneseq
        %v2922 = vshrl.u32 %v2921, 7
        %v2923 = vsub.s32 0, %v2922
        %v2924 = vrot.slane %v2917, %v2923
        %v2926 = vmul.f32 %v2888, %v2924
        %v2927 = vmul.f32 %v2891, %v2924
        %v2929 = vlaneseq
        %v2930 = vshrl.u32 %v2929, 7
        %v2931 = vsub.s32 0, %v2930
        %v2932 = vrot.slane %v2919, %v2931
        %v2934 = vadd.f32 %v2926, %v2932
        %v2935 = vadd.f32 %v2927, %v2932
        %v2936 = vmax.f32 %v2934, 0.0
        %v2937 = vmax.f32 %v2935, 0.0
        %2938 = vmatprep.subr.mxu0 0.0
        %2939 = vmatpush1.msra.mxu0 %v2936
        %2940 = vmatprep.subr.mxu0 0.0
        %2941 = vmatpush1.msra.mxu0 %v2937
        %2942 = vmatprep.subr.mxu0 0.0
        %2943 = vmatpush1.msra.mxu0 0.0
        %2944 = vmatprep.subr.mxu0 0.0
        %2945 = vmatpush1.msra.mxu0 0.0
        %2946 = vmatprep.subr.mxu0 0.0
        %2947 = vmatpush1.msra.mxu0 0.0
        %2948 = vmatprep.subr.mxu0 0.0
        %2949 = vmatpush1.msra.mxu0 0.0
        %2950 = vmatprep.subr.mxu0 0.0
        %2951 = vmatpush1.msra.mxu0 0.0
        %2952 = vmatprep.subr.mxu0 0.0
        %2953 = vmatpush1.msra.mxu0 0.0
        %2954 = vmatprep.subr.mxu0 0.0
        %2955 = vmatpush1.msra.mxu0 0.0
        %2956 = vmatprep.subr.mxu0 0.0
        %2957 = vmatpush1.msra.mxu0 0.0
        %2958 = vmatprep.subr.mxu0 0.0
        %2959 = vmatpush1.msra.mxu0 0.0
        %2960 = vmatprep.subr.mxu0 0.0
        %2961 = vmatpush1.msra.mxu0 0.0
        %2962 = vmatprep.subr.mxu0 0.0
        %2963 = vmatpush1.msra.mxu0 0.0
        %2964 = vmatprep.subr.mxu0 0.0
        %2965 = vmatpush1.msra.mxu0 0.0
        %2966 = vmatprep.subr.mxu0 0.0
        %2967 = vmatpush1.msra.mxu0 0.0
        %2968 = vmatprep.subr.mxu0 0.0
        %2969 = vmatpush1.msra.mxu0 0.0
        %2970 = vmatprep.subr.mxu0 0.0
        %2971 = vmatpush1.msra.mxu0 0.0
        %2972 = vmatprep.subr.mxu0 0.0
        %2973 = vmatpush1.msra.mxu0 0.0
        %2974 = vmatprep.subr.mxu0 0.0
        %2975 = vmatpush1.msra.mxu0 0.0
        %2976 = vmatprep.subr.mxu0 0.0
        %2977 = vmatpush1.msra.mxu0 0.0
        %2978 = vmatprep.subr.mxu0 0.0
        %2979 = vmatpush1.msra.mxu0 0.0
        %2980 = vmatprep.subr.mxu0 0.0
        %2981 = vmatpush1.msra.mxu0 0.0
        %2982 = vmatprep.subr.mxu0 0.0
        %2983 = vmatpush1.msra.mxu0 0.0
        %2984 = vmatprep.subr.mxu0 0.0
        %2985 = vmatpush1.msra.mxu0 0.0
        %2986 = vmatprep.subr.mxu0 0.0
        %2987 = vmatpush1.msra.mxu0 0.0
        %2988 = vmatprep.subr.mxu0 0.0
        %2989 = vmatpush1.msra.mxu0 0.0
        %2990 = vmatprep.subr.mxu0 0.0
        %2991 = vmatpush1.msra.mxu0 0.0
        %2992 = vmatprep.subr.mxu0 0.0
        %2993 = vmatpush1.msra.mxu0 0.0
        %2994 = vmatprep.subr.mxu0 0.0
        %2995 = vmatpush1.msra.mxu0 0.0
        %2996 = vmatprep.subr.mxu0 0.0
        %2997 = vmatpush1.msra.mxu0 0.0
        %2998 = vmatprep.subr.mxu0 0.0
        %2999 = vmatpush1.msra.mxu0 0.0
        %3000 = vmatprep.subr.mxu0 0.0
        %3001 = vmatpush1.msra.mxu0 0.0
        %3002 = vmatprep.mubr.f32.mxu0 0.0
        %3003 = vmatmul.mubr.f32.gmra.mrb[0].mxu0 %v2329
        %v3004 = vpop.f32.mrb[0].mxu0
        %v3005 = vadd.f32 0.0, %v3004
        %v3006 = vpop.f32.mrb[0].mxu0
        %3007 = vmatprep.mubr.f32.mxu0 0.0
        %3008 = vmatmul.mubr.f32.gmra.mrb[0].mxu0 %v2332
        %v3009 = vpop.f32.mrb[0].mxu0
        %v3010 = vadd.f32 0.0, %v3009
        %v3011 = vpop.f32.mrb[0].mxu0
        %3012 = vdwg.mxu0
        %v3013 = vpack.c.bf16 %v3010, %v3005
        %3014 = vmatprep.subr.bf16.mxu0 0
        %3015 = vmatpush1.bf16.msra.mxu0 %v1383
        %3016 = vmatprep.subr.bf16.mxu0 0
        %3017 = vmatpush1.bf16.msra.mxu0 %v1384
        %3018 = vmatprep.subr.bf16.mxu0 0
        %3019 = vmatpush1.bf16.msra.mxu0 %v1385
        %3020 = vmatprep.subr.bf16.mxu0 0
        %3021 = vmatpush1.bf16.msra.mxu0 %v1386
        %3022 = vmatprep.subr.bf16.mxu0 0
        %3023 = vmatpush1.bf16.msra.mxu0 %v1387
        %3024 = vmatprep.subr.bf16.mxu0 0
        %3025 = vmatpush1.bf16.msra.mxu0 %v1388
        %3026 = vmatprep.subr.bf16.mxu0 0
        %3027 = vmatpush1.bf16.msra.mxu0 %v1389
        %3028 = vmatprep.subr.bf16.mxu0 0
        %3029 = vmatpush1.bf16.msra.mxu0 %v1390
        %3030 = vmatprep.subr.bf16.mxu0 0
        %3031 = vmatpush1.bf16.msra.mxu0 0
        %3032 = vmatprep.subr.bf16.mxu0 0
        %3033 = vmatpush1.bf16.msra.mxu0 0
        %3034 = vmatprep.subr.bf16.mxu0 0
        %3035 = vmatpush1.bf16.msra.mxu0 0
        %3036 = vmatprep.subr.bf16.mxu0 0
        %3037 = vmatpush1.bf16.msra.mxu0 0
        %3038 = vmatprep.subr.bf16.mxu0 0
        %3039 = vmatpush1.bf16.msra.mxu0 0
        %3040 = vmatprep.subr.bf16.mxu0 0
        %3041 = vmatpush1.bf16.msra.mxu0 0
        %3042 = vmatprep.subr.bf16.mxu0 0
        %3043 = vmatpush1.bf16.msra.mxu0 0
        %3044 = vmatprep.subr.bf16.mxu0 0
        %3045 = vmatpush1.bf16.msra.mxu0 0
        %3046 = vmatprep.mubr.bf16.mxu0 0
        %3047 = vmatmul.mubr.bf16.gmra.mrb[0].mxu0 %v3013
        %v3048 = vpop.f32.mrb[0].mxu0
        %v3049 = vadd.f32 0.0, %v3048
        %v3050 = vpop.f32.mrb[0].mxu0
        %v3051 = vpop.f32.mrb[0].mxu0
        %v3052 = vadd.f32 0.0, %v3051
        %v3053 = vpop.f32.mrb[0].mxu0
        %3054 = vdwg.mxu0
        %v3055 = vadd.f32 %v3049, %v3052
        %v3056 = vrot.slane %v3055, 4
        %v3057 = vadd.f32 %v3055, %v3056
        %v3058 = vrot.slane %v3057, 2
        %v3059 = vadd.f32 %v3057, %v3058
        %v3060 = vrot.slane %v3059, 1
        %v3061 = vadd.f32 %v3059, %v3060
        %v3062 = vmul.f32 %v3061, %v754
        %v3063 = vmul.f32 %v3049, %v3049
        %v3064 = vmul.f32 %v3052, %v3052
        %v3065 = vadd.f32 %v3063, %v3064
        %v3066 = vrot.slane %v3065, 4
        %v3067 = vadd.f32 %v3065, %v3066
        %v3068 = vrot.slane %v3067, 2
        %v3069 = vadd.f32 %v3067, %v3068
        %v3070 = vrot.slane %v3069, 1
        %v3071 = vadd.f32 %v3069, %v3070
        %v3072 = vmul.f32 %v3071, %v754
        %v3073 = vmul.f32 %v3062, %v3062
        %v3074 = vsub.f32 %v3072, %v3073
        %v3075 = vmax.f32 %v3074, 0.0
        %v3076 = vadd.f32 %v3075, 1e-05
        %v3077 = vrsqrt.pop %v3076
        %v3078 = vmul.f32 %v1462, %v3077
        %v3079 = vmul.f32 %v3062, %v3078
        %v3080 = vsub.f32 %v1467, %v3079
        %v3082 = vlaneseq
        %v3083 = vshrl.u32 %v3082, 7
        %v3084 = vsub.s32 0, %v3083
        %v3085 = vrot.slane %v3078, %v3084
        %v3087 = vmul.f32 %v3049, %v3085
        %v3088 = vmul.f32 %v3052, %v3085
        %v3090 = vlaneseq
        %v3091 = vshrl.u32 %v3090, 7
        %v3092 = vsub.s32 0, %v3091
        %v3093 = vrot.slane %v3080, %v3092
        %v3095 = vadd.f32 %v3087, %v3093
        %v3096 = vadd.f32 %v3088, %v3093
        %v3097 = vmax.f32 %v3095, 0.0
        %v3098 = vmax.f32 %v3096, 0.0
        %3099 = vmatprep.subr.bf16.mxu0 0
        %3100 = vmatpush1.bf16.msra.mxu0 %v1537
        %3101 = vmatprep.subr.bf16.mxu0 0
        %3102 = vmatpush1.bf16.msra.mxu0 %v1538
        %3103 = vmatprep.subr.bf16.mxu0 0
        %3104 = vmatpush1.bf16.msra.mxu0 %v1539
        %3105 = vmatprep.subr.bf16.mxu0 0
        %3106 = vmatpush1.bf16.msra.mxu0 %v1540
        %3107 = vmatprep.subr.bf16.mxu0 0
        %3108 = vmatpush1.bf16.msra.mxu0 %v1541
        %3109 = vmatprep.subr.bf16.mxu0 0
        %3110 = vmatpush1.bf16.msra.mxu0 %v1542
        %3111 = vmatprep.subr.bf16.mxu0 0
        %3112 = vmatpush1.bf16.msra.mxu0 %v1543
        %3113 = vmatprep.subr.bf16.mxu0 0
        %3114 = vmatpush1.bf16.msra.mxu0 %v1544
        %3115 = vmatprep.subr.bf16.mxu0 0
        %3116 = vmatpush1.bf16.msra.mxu0 0
        %3117 = vmatprep.subr.bf16.mxu0 0
        %3118 = vmatpush1.bf16.msra.mxu0 0
        %3119 = vmatprep.subr.bf16.mxu0 0
        %3120 = vmatpush1.bf16.msra.mxu0 0
        %3121 = vmatprep.subr.bf16.mxu0 0
        %3122 = vmatpush1.bf16.msra.mxu0 0
        %3123 = vmatprep.subr.bf16.mxu0 0
        %3124 = vmatpush1.bf16.msra.mxu0 0
        %3125 = vmatprep.subr.bf16.mxu0 0
        %3126 = vmatpush1.bf16.msra.mxu0 0
        %3127 = vmatprep.subr.bf16.mxu0 0
        %3128 = vmatpush1.bf16.msra.mxu0 0
        %3129 = vmatprep.subr.bf16.mxu0 0
        %3130 = vmatpush1.bf16.msra.mxu0 0
        %3131 = vmatprep.mubr.bf16.mxu0 0
        %3132 = vmatmul.mubr.bf16.gmra.mrb[0].mxu0 %v2852
        %v3133 = vpop.f32.mrb[0].mxu0
        %v3134 = vadd.f32 0.0, %v3133
        %v3135 = vpop.f32.mrb[0].mxu0
        %v3136 = vpop.f32.mrb[0].mxu0
        %v3137 = vadd.f32 0.0, %v3136
        %v3138 = vpop.f32.mrb[0].mxu0
        %3139 = vdwg.mxu0
        %v3140 = vadd.f32 %v3134, %v3137
        %v3141 = vrot.slane %v3140, 4
        %v3142 = vadd.f32 %v3140, %v3141
        %v3143 = vrot.slane %v3142, 2
        %v3144 = vadd.f32 %v3142, %v3143
        %v3145 = vrot.slane %v3144, 1
        %v3146 = vadd.f32 %v3144, %v3145
        %v3147 = vmul.f32 %v3146, %v754
        %v3148 = vmul.f32 %v3134, %v3134
        %v3149 = vmul.f32 %v3137, %v3137
        %v3150 = vadd.f32 %v3148, %v3149
        %v3151 = vrot.slane %v3150, 4
        %v3152 = vadd.f32 %v3150, %v3151
        %v3153 = vrot.slane %v3152, 2
        %v3154 = vadd.f32 %v3152, %v3153
        %v3155 = vrot.slane %v3154, 1
        %v3156 = vadd.f32 %v3154, %v3155
        %v3157 = vmul.f32 %v3156, %v754
        %v3158 = vmul.f32 %v3147, %v3147
        %v3159 = vsub.f32 %v3157, %v3158
        %v3160 = vmax.f32 %v3159, 0.0
        %v3161 = vadd.f32 %v3160, 1e-05
        %v3162 = vrsqrt.pop %v3161
        %v3163 = vmul.f32 %v1616, %v3162
        %v3164 = vmul.f32 %v3147, %v3163
        %v3165 = vsub.f32 %v1621, %v3164
        %v3167 = vlaneseq
        %v3168 = vshrl.u32 %v3167, 7
        %v3169 = vsub.s32 0, %v3168
        %v3170 = vrot.slane %v3163, %v3169
        %v3172 = vmul.f32 %v3134, %v3170
        %v3173 = vmul.f32 %v3137, %v3170
        %v3175 = vlaneseq
        %v3176 = vshrl.u32 %v3175, 7
        %v3177 = vsub.s32 0, %v3176
        %v3178 = vrot.slane %v3165, %v3177
        %v3180 = vadd.f32 %v3172, %v3178
        %v3181 = vadd.f32 %v3173, %v3178
        %v3182 = vadd.f32 %v3097, %v3180
        %v3183 = vadd.f32 %v3098, %v3181
        %3184 = vmatprep.subr.mxu0 0.0
        %3185 = vmatpush1.msra.mxu0 %v3182
        %3186 = vmatprep.subr.mxu0 0.0
        %3187 = vmatpush1.msra.mxu0 %v3183
        %3188 = vmatprep.subr.mxu0 0.0
        %3189 = vmatpush1.msra.mxu0 0.0
        %3190 = vmatprep.subr.mxu0 0.0
        %3191 = vmatpush1.msra.mxu0 0.0
        %3192 = vmatprep.subr.mxu0 0.0
        %3193 = vmatpush1.msra.mxu0 0.0
        %3194 = vmatprep.subr.mxu0 0.0
        %3195 = vmatpush1.msra.mxu0 0.0
        %3196 = vmatprep.subr.mxu0 0.0
        %3197 = vmatpush1.msra.mxu0 0.0
        %3198 = vmatprep.subr.mxu0 0.0
        %3199 = vmatpush1.msra.mxu0 0.0
        %3200 = vmatprep.subr.mxu0 0.0
        %3201 = vmatpush1.msra.mxu0 0.0
        %3202 = vmatprep.subr.mxu0 0.0
        %3203 = vmatpush1.msra.mxu0 0.0
        %3204 = vmatprep.subr.mxu0 0.0
        %3205 = vmatpush1.msra.mxu0 0.0
        %3206 = vmatprep.subr.mxu0 0.0
        %3207 = vmatpush1.msra.mxu0 0.0
        %3208 = vmatprep.subr.mxu0 0.0
        %3209 = vmatpush1.msra.mxu0 0.0
        %3210 = vmatprep.subr.mxu0 0.0
        %3211 = vmatpush1.msra.mxu0 0.0
        %3212 = vmatprep.subr.mxu0 0.0
        %3213 = vmatpush1.msra.mxu0 0.0
        %3214 = vmatprep.subr.mxu0 0.0
        %3215 = vmatpush1.msra.mxu0 0.0
        %3216 = vmatprep.subr.mxu0 0.0
        %3217 = vmatpush1.msra.mxu0 0.0
        %3218 = vmatprep.subr.mxu0 0.0
        %3219 = vmatpush1.msra.mxu0 0.0
        %3220 = vmatprep.subr.mxu0 0.0
        %3221 = vmatpush1.msra.mxu0 0.0
        %3222 = vmatprep.subr.mxu0 0.0
        %3223 = vmatpush1.msra.mxu0 0.0
        %3224 = vmatprep.subr.mxu0 0.0
        %3225 = vmatpush1.msra.mxu0 0.0
        %3226 = vmatprep.subr.mxu0 0.0
        %3227 = vmatpush1.msra.mxu0 0.0
        %3228 = vmatprep.subr.mxu0 0.0
        %3229 = vmatpush1.msra.mxu0 0.0
        %3230 = vmatprep.subr.mxu0 0.0
        %3231 = vmatpush1.msra.mxu0 0.0
        %3232 = vmatprep.subr.mxu0 0.0
        %3233 = vmatpush1.msra.mxu0 0.0
        %3234 = vmatprep.subr.mxu0 0.0
        %3235 = vmatpush1.msra.mxu0 0.0
        %3236 = vmatprep.subr.mxu0 0.0
        %3237 = vmatpush1.msra.mxu0 0.0
        %3238 = vmatprep.subr.mxu0 0.0
        %3239 = vmatpush1.msra.mxu0 0.0
        %3240 = vmatprep.subr.mxu0 0.0
        %3241 = vmatpush1.msra.mxu0 0.0
        %3242 = vmatprep.subr.mxu0 0.0
        %3243 = vmatpush1.msra.mxu0 0.0
        %3244 = vmatprep.subr.mxu0 0.0
        %3245 = vmatpush1.msra.mxu0 0.0
        %3246 = vmatprep.subr.mxu0 0.0
        %3247 = vmatpush1.msra.mxu0 0.0
        %3248 = vmatprep.mubr.f32.mxu0 0.0
        %3249 = vmatmul.mubr.f32.gmra.mrb[0].mxu0 %v2329
        %v3250 = vpop.f32.mrb[0].mxu0
        %v3251 = vadd.f32 0.0, %v3250
        %v3252 = vpop.f32.mrb[0].mxu0
        %3253 = vmatprep.mubr.f32.mxu0 0.0
        %3254 = vmatmul.mubr.f32.gmra.mrb[0].mxu0 %v2332
        %v3255 = vpop.f32.mrb[0].mxu0
        %v3256 = vadd.f32 0.0, %v3255
        %v3257 = vpop.f32.mrb[0].mxu0
        %3258 = vdwg.mxu0
        %v3259 = vpack.c.bf16 %v3256, %v3251
        %3260 = vmatprep.subr.bf16.mxu0 0
        %3261 = vmatpush1.bf16.msra.mxu0 %v1767
        %3262 = vmatprep.subr.bf16.mxu0 0
        %3263 = vmatpush1.bf16.msra.mxu0 %v1768
        %3264 = vmatprep.subr.bf16.mxu0 0
        %3265 = vmatpush1.bf16.msra.mxu0 %v1769
        %3266 = vmatprep.subr.bf16.mxu0 0
        %3267 = vmatpush1.bf16.msra.mxu0 %v1770
        %3268 = vmatprep.subr.bf16.mxu0 0
        %3269 = vmatpush1.bf16.msra.mxu0 %v1771
        %3270 = vmatprep.subr.bf16.mxu0 0
        %3271 = vmatpush1.bf16.msra.mxu0 %v1772
        %3272 = vmatprep.subr.bf16.mxu0 0
        %3273 = vmatpush1.bf16.msra.mxu0 %v1773
        %3274 = vmatprep.subr.bf16.mxu0 0
        %3275 = vmatpush1.bf16.msra.mxu0 %v1774
        %3276 = vmatprep.subr.bf16.mxu0 0
        %3277 = vmatpush1.bf16.msra.mxu0 0
        %3278 = vmatprep.subr.bf16.mxu0 0
        %3279 = vmatpush1.bf16.msra.mxu0 0
        %3280 = vmatprep.subr.bf16.mxu0 0
        %3281 = vmatpush1.bf16.msra.mxu0 0
        %3282 = vmatprep.subr.bf16.mxu0 0
        %3283 = vmatpush1.bf16.msra.mxu0 0
        %3284 = vmatprep.subr.bf16.mxu0 0
        %3285 = vmatpush1.bf16.msra.mxu0 0
        %3286 = vmatprep.subr.bf16.mxu0 0
        %3287 = vmatpush1.bf16.msra.mxu0 0
        %3288 = vmatprep.subr.bf16.mxu0 0
        %3289 = vmatpush1.bf16.msra.mxu0 0
        %3290 = vmatprep.subr.bf16.mxu0 0
        %3291 = vmatpush1.bf16.msra.mxu0 0
        %3292 = vmatprep.mubr.bf16.mxu0 0
        %3293 = vmatmul.mubr.bf16.gmra.mrb[0].mxu0 %v3259
        %v3294 = vpop.f32.mrb[0].mxu0
        %v3295 = vadd.f32 0.0, %v3294
        %v3296 = vpop.f32.mrb[0].mxu0
        %v3297 = vpop.f32.mrb[0].mxu0
        %v3298 = vadd.f32 0.0, %v3297
        %v3299 = vpop.f32.mrb[0].mxu0
        %3300 = vdwg.mxu0
        %v3301 = vadd.f32 %v3295, %v3298
        %v3302 = vrot.slane %v3301, 4
        %v3303 = vadd.f32 %v3301, %v3302
        %v3304 = vrot.slane %v3303, 2
        %v3305 = vadd.f32 %v3303, %v3304
        %v3306 = vrot.slane %v3305, 1
        %v3307 = vadd.f32 %v3305, %v3306
        %v3308 = vmul.f32 %v3307, %v754
        %v3309 = vmul.f32 %v3295, %v3295
        %v3310 = vmul.f32 %v3298, %v3298
        %v3311 = vadd.f32 %v3309, %v3310
        %v3312 = vrot.slane %v3311, 4
        %v3313 = vadd.f32 %v3311, %v3312
        %v3314 = vrot.slane %v3313, 2
        %v3315 = vadd.f32 %v3313, %v3314
        %v3316 = vrot.slane %v3315, 1
        %v3317 = vadd.f32 %v3315, %v3316
        %v3318 = vmul.f32 %v3317, %v754
        %v3319 = vmul.f32 %v3308, %v3308
        %v3320 = vsub.f32 %v3318, %v3319
        %v3321 = vmax.f32 %v3320, 0.0
        %v3322 = vadd.f32 %v3321, 1e-05
        %v3323 = vrsqrt.pop %v3322
        %v3324 = vmul.f32 %v1846, %v3323
        %v3325 = vmul.f32 %v3308, %v3324
        %v3326 = vsub.f32 %v1851, %v3325
        %v3328 = vlaneseq
        %v3329 = vshrl.u32 %v3328, 7
        %v3330 = vsub.s32 0, %v3329
        %v3331 = vrot.slane %v3324, %v3330
        %v3333 = vmul.f32 %v3295, %v3331
        %v3334 = vmul.f32 %v3298, %v3331
        %v3336 = vlaneseq
        %v3337 = vshrl.u32 %v3336, 7
        %v3338 = vsub.s32 0, %v3337
        %v3339 = vrot.slane %v3326, %v3338
        %v3341 = vadd.f32 %v3333, %v3339
        %v3342 = vadd.f32 %v3334, %v3339
        %v3343 = vmax.f32 %v3341, 0.0
        %v3344 = vmax.f32 %v3342, 0.0
        %3345 = vmatprep.subr.mxu0 0.0
        %3346 = vmatpush1.msra.mxu0 %v3343
        %3347 = vmatprep.subr.mxu0 0.0
        %3348 = vmatpush1.msra.mxu0 %v3344
        %3349 = vmatprep.subr.mxu0 0.0
        %3350 = vmatpush1.msra.mxu0 0.0
        %3351 = vmatprep.subr.mxu0 0.0
        %3352 = vmatpush1.msra.mxu0 0.0
        %3353 = vmatprep.subr.mxu0 0.0
        %3354 = vmatpush1.msra.mxu0 0.0
        %3355 = vmatprep.subr.mxu0 0.0
        %3356 = vmatpush1.msra.mxu0 0.0
        %3357 = vmatprep.subr.mxu0 0.0
        %3358 = vmatpush1.msra.mxu0 0.0
        %3359 = vmatprep.subr.mxu0 0.0
        %3360 = vmatpush1.msra.mxu0 0.0
        %3361 = vmatprep.subr.mxu0 0.0
        %3362 = vmatpush1.msra.mxu0 0.0
        %3363 = vmatprep.subr.mxu0 0.0
        %3364 = vmatpush1.msra.mxu0 0.0
        %3365 = vmatprep.subr.mxu0 0.0
        %3366 = vmatpush1.msra.mxu0 0.0
        %3367 = vmatprep.subr.mxu0 0.0
        %3368 = vmatpush1.msra.mxu0 0.0
        %3369 = vmatprep.subr.mxu0 0.0
        %3370 = vmatpush1.msra.mxu0 0.0
        %3371 = vmatprep.subr.mxu0 0.0
        %3372 = vmatpush1.msra.mxu0 0.0
        %3373 = vmatprep.subr.mxu0 0.0
        %3374 = vmatpush1.msra.mxu0 0.0
        %3375 = vmatprep.subr.mxu0 0.0
        %3376 = vmatpush1.msra.mxu0 0.0
        %3377 = vmatprep.subr.mxu0 0.0
        %3378 = vmatpush1.msra.mxu0 0.0
        %3379 = vmatprep.subr.mxu0 0.0
        %3380 = vmatpush1.msra.mxu0 0.0
        %3381 = vmatprep.subr.mxu0 0.0
        %3382 = vmatpush1.msra.mxu0 0.0
        %3383 = vmatprep.subr.mxu0 0.0
        %3384 = vmatpush1.msra.mxu0 0.0
        %3385 = vmatprep.subr.mxu0 0.0
        %3386 = vmatpush1.msra.mxu0 0.0
        %3387 = vmatprep.subr.mxu0 0.0
        %3388 = vmatpush1.msra.mxu0 0.0
        %3389 = vmatprep.subr.mxu0 0.0
        %3390 = vmatpush1.msra.mxu0 0.0
        %3391 = vmatprep.subr.mxu0 0.0
        %3392 = vmatpush1.msra.mxu0 0.0
        %3393 = vmatprep.subr.mxu0 0.0
        %3394 = vmatpush1.msra.mxu0 0.0
        %3395 = vmatprep.subr.mxu0 0.0
        %3396 = vmatpush1.msra.mxu0 0.0
        %3397 = vmatprep.subr.mxu0 0.0
        %3398 = vmatpush1.msra.mxu0 0.0
        %3399 = vmatprep.subr.mxu0 0.0
        %3400 = vmatpush1.msra.mxu0 0.0
        %3401 = vmatprep.subr.mxu0 0.0
        %3402 = vmatpush1.msra.mxu0 0.0
        %3403 = vmatprep.subr.mxu0 0.0
        %3404 = vmatpush1.msra.mxu0 0.0
        %3405 = vmatprep.subr.mxu0 0.0
        %3406 = vmatpush1.msra.mxu0 0.0
        %3407 = vmatprep.subr.mxu0 0.0
        %3408 = vmatpush1.msra.mxu0 0.0
        %3409 = vmatprep.mubr.f32.mxu0 0.0
        %3410 = vmatmul.mubr.f32.gmra.mrb[0].mxu0 %v2329
        %v3411 = vpop.f32.mrb[0].mxu0
        %v3412 = vadd.f32 0.0, %v3411
        %v3413 = vpop.f32.mrb[0].mxu0
        %3414 = vmatprep.mubr.f32.mxu0 0.0
        %3415 = vmatmul.mubr.f32.gmra.mrb[0].mxu0 %v2332
        %v3416 = vpop.f32.mrb[0].mxu0
        %v3417 = vadd.f32 0.0, %v3416
        %v3418 = vpop.f32.mrb[0].mxu0
        %3419 = vdwg.mxu0
        %v3420 = vpack.c.bf16 %v3417, %v3412
        %3421 = vmatprep.subr.bf16.mxu0 0
        %3422 = vmatpush1.bf16.msra.mxu0 %v1997
        %3423 = vmatprep.subr.bf16.mxu0 0
        %3424 = vmatpush1.bf16.msra.mxu0 %v1998
        %3425 = vmatprep.subr.bf16.mxu0 0
        %3426 = vmatpush1.bf16.msra.mxu0 %v1999
        %3427 = vmatprep.subr.bf16.mxu0 0
        %3428 = vmatpush1.bf16.msra.mxu0 %v2000
        %3429 = vmatprep.subr.bf16.mxu0 0
        %3430 = vmatpush1.bf16.msra.mxu0 %v2001
        %3431 = vmatprep.subr.bf16.mxu0 0
        %3432 = vmatpush1.bf16.msra.mxu0 %v2002
        %3433 = vmatprep.subr.bf16.mxu0 0
        %3434 = vmatpush1.bf16.msra.mxu0 %v2003
        %3435 = vmatprep.subr.bf16.mxu0 0
        %3436 = vmatpush1.bf16.msra.mxu0 %v2004
        %3437 = vmatprep.subr.bf16.mxu0 0
        %3438 = vmatpush1.bf16.msra.mxu0 0
        %3439 = vmatprep.subr.bf16.mxu0 0
        %3440 = vmatpush1.bf16.msra.mxu0 0
        %3441 = vmatprep.subr.bf16.mxu0 0
        %3442 = vmatpush1.bf16.msra.mxu0 0
        %3443 = vmatprep.subr.bf16.mxu0 0
        %3444 = vmatpush1.bf16.msra.mxu0 0
        %3445 = vmatprep.subr.bf16.mxu0 0
        %3446 = vmatpush1.bf16.msra.mxu0 0
        %3447 = vmatprep.subr.bf16.mxu0 0
        %3448 = vmatpush1.bf16.msra.mxu0 0
        %3449 = vmatprep.subr.bf16.mxu0 0
        %3450 = vmatpush1.bf16.msra.mxu0 0
        %3451 = vmatprep.subr.bf16.mxu0 0
        %3452 = vmatpush1.bf16.msra.mxu0 0
        %3453 = vmatprep.mubr.bf16.mxu0 0
        %3454 = vmatmul.mubr.bf16.gmra.mrb[0].mxu0 %v3420
        %v3455 = vpop.f32.mrb[0].mxu0
        %v3456 = vadd.f32 0.0, %v3455
        %v3457 = vpop.f32.mrb[0].mxu0
        %v3458 = vpop.f32.mrb[0].mxu0
        %v3459 = vadd.f32 0.0, %v3458
        %v3460 = vpop.f32.mrb[0].mxu0
        %3461 = vdwg.mxu0
        %v3462 = vadd.f32 %v3456, %v3459
        %v3463 = vrot.slane %v3462, 4
        %v3464 = vadd.f32 %v3462, %v3463
        %v3465 = vrot.slane %v3464, 2
        %v3466 = vadd.f32 %v3464, %v3465
        %v3467 = vrot.slane %v3466, 1
        %v3468 = vadd.f32 %v3466, %v3467
        %v3469 = vmul.f32 %v3468, %v754
        %v3470 = vmul.f32 %v3456, %v3456
        %v3471 = vmul.f32 %v3459, %v3459
        %v3472 = vadd.f32 %v3470, %v3471
        %v3473 = vrot.slane %v3472, 4
        %v3474 = vadd.f32 %v3472, %v3473
        %v3475 = vrot.slane %v3474, 2
        %v3476 = vadd.f32 %v3474, %v3475
        %v3477 = vrot.slane %v3476, 1
        %v3478 = vadd.f32 %v3476, %v3477
        %v3479 = vmul.f32 %v3478, %v754
        %v3480 = vmul.f32 %v3469, %v3469
        %v3481 = vsub.f32 %v3479, %v3480
        %v3482 = vmax.f32 %v3481, 0.0
        %v3483 = vadd.f32 %v3482, 1e-05
        %v3484 = vrsqrt.pop %v3483
        %v3485 = vmul.f32 %v2076, %v3484
        %v3486 = vmul.f32 %v3469, %v3485
        %v3487 = vsub.f32 %v2081, %v3486
        %v3489 = vlaneseq
        %v3490 = vshrl.u32 %v3489, 7
        %v3491 = vsub.s32 0, %v3490
        %v3492 = vrot.slane %v3485, %v3491
        %v3494 = vmul.f32 %v3456, %v3492
        %v3495 = vmul.f32 %v3459, %v3492
        %v3497 = vlaneseq
        %v3498 = vshrl.u32 %v3497, 7
        %v3499 = vsub.s32 0, %v3498
        %v3500 = vrot.slane %v3487, %v3499
        %v3502 = vadd.f32 %v3494, %v3500
        %v3503 = vadd.f32 %v3495, %v3500
        %v3504 = vmax.f32 %v3502, 0.0
        %v3505 = vmax.f32 %v3503, 0.0
        %v3506 = vadd.f32 %v3504, %v3182
        %v3507 = vadd.f32 %v3505, %v3183
        %3508 = vmatprep.subr.mxu0 0.0
        %3509 = vmatpush1.msra.mxu0 %v3506
        %3510 = vmatprep.subr.mxu0 0.0
        %3511 = vmatpush1.msra.mxu0 %v3507
        %3512 = vmatprep.subr.mxu0 0.0
        %3513 = vmatpush1.msra.mxu0 0.0
        %3514 = vmatprep.subr.mxu0 0.0
        %3515 = vmatpush1.msra.mxu0 0.0
        %3516 = vmatprep.subr.mxu0 0.0
        %3517 = vmatpush1.msra.mxu0 0.0
        %3518 = vmatprep.subr.mxu0 0.0
        %3519 = vmatpush1.msra.mxu0 0.0
        %3520 = vmatprep.subr.mxu0 0.0
        %3521 = vmatpush1.msra.mxu0 0.0
        %3522 = vmatprep.subr.mxu0 0.0
        %3523 = vmatpush1.msra.mxu0 0.0
        %3524 = vmatprep.subr.mxu0 0.0
        %3525 = vmatpush1.msra.mxu0 0.0
        %3526 = vmatprep.subr.mxu0 0.0
        %3527 = vmatpush1.msra.mxu0 0.0
        %3528 = vmatprep.subr.mxu0 0.0
        %3529 = vmatpush1.msra.mxu0 0.0
        %3530 = vmatprep.subr.mxu0 0.0
        %3531 = vmatpush1.msra.mxu0 0.0
        %3532 = vmatprep.subr.mxu0 0.0
        %3533 = vmatpush1.msra.mxu0 0.0
        %3534 = vmatprep.subr.mxu0 0.0
        %3535 = vmatpush1.msra.mxu0 0.0
        %3536 = vmatprep.subr.mxu0 0.0
        %3537 = vmatpush1.msra.mxu0 0.0
        %3538 = vmatprep.subr.mxu0 0.0
        %3539 = vmatpush1.msra.mxu0 0.0
        %3540 = vmatprep.subr.mxu0 0.0
        %3541 = vmatpush1.msra.mxu0 0.0
        %3542 = vmatprep.subr.mxu0 0.0
        %3543 = vmatpush1.msra.mxu0 0.0
        %3544 = vmatprep.subr.mxu0 0.0
        %3545 = vmatpush1.msra.mxu0 0.0
        %3546 = vmatprep.subr.mxu0 0.0
        %3547 = vmatpush1.msra.mxu0 0.0
        %3548 = vmatprep.subr.mxu0 0.0
        %3549 = vmatpush1.msra.mxu0 0.0
        %3550 = vmatprep.subr.mxu0 0.0
        %3551 = vmatpush1.msra.mxu0 0.0
        %3552 = vmatprep.subr.mxu0 0.0
        %3553 = vmatpush1.msra.mxu0 0.0
        %3554 = vmatprep.subr.mxu0 0.0
        %3555 = vmatpush1.msra.mxu0 0.0
        %3556 = vmatprep.subr.mxu0 0.0
        %3557 = vmatpush1.msra.mxu0 0.0
        %3558 = vmatprep.subr.mxu0 0.0
        %3559 = vmatpush1.msra.mxu0 0.0
        %3560 = vmatprep.subr.mxu0 0.0
        %3561 = vmatpush1.msra.mxu0 0.0
        %3562 = vmatprep.subr.mxu0 0.0
        %3563 = vmatpush1.msra.mxu0 0.0
        %3564 = vmatprep.subr.mxu0 0.0
        %3565 = vmatpush1.msra.mxu0 0.0
        %3566 = vmatprep.subr.mxu0 0.0
        %3567 = vmatpush1.msra.mxu0 0.0
        %3568 = vmatprep.subr.mxu0 0.0
        %3569 = vmatpush1.msra.mxu0 0.0
        %3570 = vmatprep.subr.mxu0 0.0
        %3571 = vmatpush1.msra.mxu0 0.0
        %3572 = vmatprep.mubr.f32.mxu0 0.0
        %3573 = vmatmul.mubr.f32.gmra.mrb[0].mxu0 %v2329
        %v3574 = vpop.f32.mrb[0].mxu0
        %v3575 = vadd.f32 0.0, %v3574
        %v3576 = vpop.f32.mrb[0].mxu0
        %3577 = vmatprep.mubr.f32.mxu0 0.0
        %3578 = vmatmul.mubr.f32.gmra.mrb[0].mxu0 %v2332
        %v3579 = vpop.f32.mrb[0].mxu0
        %v3580 = vadd.f32 0.0, %v3579
        %v3581 = vpop.f32.mrb[0].mxu0
        %3582 = vdwg.mxu0
        %v3583 = vpack.c.bf16 %v3580, %v3575
        %3584 = vmatprep.subr.bf16.mxu0 0
        %3585 = vmatpush1.bf16.msra.mxu0 %v2237
        %3586 = vmatprep.subr.bf16.mxu0 0
        %3587 = vmatpush1.bf16.msra.mxu0 %v2238
        %3588 = vmatprep.subr.bf16.mxu0 0
        %3589 = vmatpush1.bf16.msra.mxu0 %v2239
        %3590 = vmatprep.subr.bf16.mxu0 0
        %3591 = vmatpush1.bf16.msra.mxu0 %v2240
        %3592 = vmatprep.subr.bf16.mxu0 0
        %3593 = vmatpush1.bf16.msra.mxu0 %v2241
        %3594 = vmatprep.subr.bf16.mxu0 0
        %3595 = vmatpush1.bf16.msra.mxu0 %v2242
        %3596 = vmatprep.subr.bf16.mxu0 0
        %3597 = vmatpush1.bf16.msra.mxu0 %v2243
        %3598 = vmatprep.subr.bf16.mxu0 0
        %3599 = vmatpush1.bf16.msra.mxu0 %v2244
        %3600 = vmatprep.subr.bf16.mxu0 0
        %3601 = vmatpush1.bf16.msra.mxu0 0
        %3602 = vmatprep.subr.bf16.mxu0 0
        %3603 = vmatpush1.bf16.msra.mxu0 0
        %3604 = vmatprep.subr.bf16.mxu0 0
        %3605 = vmatpush1.bf16.msra.mxu0 0
        %3606 = vmatprep.subr.bf16.mxu0 0
        %3607 = vmatpush1.bf16.msra.mxu0 0
        %3608 = vmatprep.subr.bf16.mxu0 0
        %3609 = vmatpush1.bf16.msra.mxu0 0
        %3610 = vmatprep.subr.bf16.mxu0 0
        %3611 = vmatpush1.bf16.msra.mxu0 0
        %3612 = vmatprep.subr.bf16.mxu0 0
        %3613 = vmatpush1.bf16.msra.mxu0 0
        %3614 = vmatprep.subr.bf16.mxu0 0
        %3615 = vmatpush1.bf16.msra.mxu0 0
        %3616 = vmatprep.mubr.bf16.mxu0 0
        %3617 = vmatmul.mubr.bf16.gmra.mrb[0].mxu0 %v3583
        %v3618 = vpop.f32.mrb[0].mxu0
        %v3619 = vadd.f32 %v2203, %v3618
        %v3620 = vpop.f32.mrb[0].mxu0
        %v3621 = vpop.f32.mrb[0].mxu0
        %v3622 = vadd.f32 %v2203, %v3621
        %v3623 = vpop.f32.mrb[0].mxu0
        %3624 = vdwg.mxu0
        %v3625 = vadd.f32 %v3619, %v3622
        %v3626 = vrot.slane %v3625, 4
        %v3627 = vadd.f32 %v3625, %v3626
        %v3628 = vrot.slane %v3627, 2
        %v3629 = vadd.f32 %v3627, %v3628
        %v3630 = vrot.slane %v3629, 1
        %v3631 = vadd.f32 %v3629, %v3630
        %v3632 = vmul.f32 %v3631, %v754
        %s3633 = scalar_lea.vmem %s290, 32 [#allocation2]
        %v3634 = vld [vmem:[%s3633] sm:$0xff]
        %v3635 = vld [vmem:[%s3633 + $0x8] sm:$0xff]
        %s3636 = scalar_lea.vmem %s299, 32 [#allocation5]
        %v3637 = vld [vmem:[%s3636] sm:$0xff]
        %v3638 = vld [vmem:[%s3636 + $0x8] sm:$0xff]
        %v3639 = vmul.f32 %v3637, %v3637
        %v3640 = vmul.f32 %v3638, %v3638
        %v3641 = vadd.f32 %v3639, %v3640
        %v3642 = vrot.slane %v3641, 4
        %v3643 = vadd.f32 %v3641, %v3642
        %v3644 = vrot.slane %v3643, 2
        %v3645 = vadd.f32 %v3643, %v3644
        %v3646 = vrot.slane %v3645, 1
        %v3647 = vadd.f32 %v3645, %v3646
        %v3648 = vrsqrt.pop %v3647
        %v3649 = vmul.f32 %v3647, %v3648
        %vm3650 = vcmp.eq.f32.partialorder %v3647, inf
        %v3651 = vsel %vm3650, %v3647, %v3649
        %vm3652 = vcmp.eq.f32.partialorder %v3647, 0.0
        %v3653 = vand.u32 %v3647, 2147483648
        %v3654 = vsel %vm3652, %v3653, %v3651
        %v3655 = vmax.f32 %v3654, 1e-12
        %v3656 = vrcp.pop %v3655
        %v3657 = vmul.f32 %v3637, %v3656
        %v3658 = vmul.f32 %v3638, %v3656
        %v3660 = vsel %vm368, %v3634, 0
        %v3663 = vsel %vm368, %v3635, 0
        %3665 = vmatprep.subr.mxu0 0.0
        %3666 = vmatpush1.msra.mxu0 %v3657
        %3667 = vmatprep.subr.mxu0 0.0
        %3668 = vmatpush1.msra.mxu0 %v3658
        %3669 = vmatprep.subr.mxu0 0.0
        %3670 = vmatpush1.msra.mxu0 0.0
        %3671 = vmatprep.subr.mxu0 0.0
        %3672 = vmatpush1.msra.mxu0 0.0
        %3673 = vmatprep.subr.mxu0 0.0
        %3674 = vmatpush1.msra.mxu0 0.0
        %3675 = vmatprep.subr.mxu0 0.0
        %3676 = vmatpush1.msra.mxu0 0.0
        %3677 = vmatprep.subr.mxu0 0.0
        %3678 = vmatpush1.msra.mxu0 0.0
        %3679 = vmatprep.subr.mxu0 0.0
        %3680 = vmatpush1.msra.mxu0 0.0
        %3681 = vmatprep.subr.mxu0 0.0
        %3682 = vmatpush1.msra.mxu0 0.0
        %3683 = vmatprep.subr.mxu0 0.0
        %3684 = vmatpush1.msra.mxu0 0.0
        %3685 = vmatprep.subr.mxu0 0.0
        %3686 = vmatpush1.msra.mxu0 0.0
        %3687 = vmatprep.subr.mxu0 0.0
        %3688 = vmatpush1.msra.mxu0 0.0
        %3689 = vmatprep.subr.mxu0 0.0
        %3690 = vmatpush1.msra.mxu0 0.0
        %3691 = vmatprep.subr.mxu0 0.0
        %3692 = vmatpush1.msra.mxu0 0.0
        %3693 = vmatprep.subr.mxu0 0.0
        %3694 = vmatpush1.msra.mxu0 0.0
        %3695 = vmatprep.subr.mxu0 0.0
        %3696 = vmatpush1.msra.mxu0 0.0
        %3697 = vmatprep.subr.mxu0 0.0
        %3698 = vmatpush1.msra.mxu0 0.0
        %3699 = vmatprep.subr.mxu0 0.0
        %3700 = vmatpush1.msra.mxu0 0.0
        %3701 = vmatprep.subr.mxu0 0.0
        %3702 = vmatpush1.msra.mxu0 0.0
        %3703 = vmatprep.subr.mxu0 0.0
        %3704 = vmatpush1.msra.mxu0 0.0
        %3705 = vmatprep.subr.mxu0 0.0
        %3706 = vmatpush1.msra.mxu0 0.0
        %3707 = vmatprep.subr.mxu0 0.0
        %3708 = vmatpush1.msra.mxu0 0.0
        %3709 = vmatprep.subr.mxu0 0.0
        %3710 = vmatpush1.msra.mxu0 0.0
        %3711 = vmatprep.subr.mxu0 0.0
        %3712 = vmatpush1.msra.mxu0 0.0
        %3713 = vmatprep.subr.mxu0 0.0
        %3714 = vmatpush1.msra.mxu0 0.0
        %3715 = vmatprep.subr.mxu0 0.0
        %3716 = vmatpush1.msra.mxu0 0.0
        %3717 = vmatprep.subr.mxu0 0.0
        %3718 = vmatpush1.msra.mxu0 0.0
        %3719 = vmatprep.subr.mxu0 0.0
        %3720 = vmatpush1.msra.mxu0 0.0
        %3721 = vmatprep.subr.mxu0 0.0
        %3722 = vmatpush1.msra.mxu0 0.0
        %3723 = vmatprep.subr.mxu0 0.0
        %3724 = vmatpush1.msra.mxu0 0.0
        %3725 = vmatprep.subr.mxu0 0.0
        %3726 = vmatpush1.msra.mxu0 0.0
        %3727 = vmatprep.subr.mxu0 0.0
        %3728 = vmatpush1.msra.mxu0 0.0
        %3729 = vmatprep.mubr.f32.mxu0 0.0
        %3730 = vmatmul.mubr.f32.gmra.mrb[0].mxu0 %v3660
        %v3731 = vpop.f32.mrb[0].mxu0
        %v3732 = vadd.f32 0.0, %v3731
        %v3733 = vpop.f32.mrb[0].mxu0
        %3734 = vmatprep.mubr.f32.mxu0 0.0
        %3735 = vmatmul.mubr.f32.gmra.mrb[0].mxu0 %v3663
        %v3736 = vpop.f32.mrb[0].mxu0
        %v3737 = vadd.f32 0.0, %v3736
        %v3738 = vpop.f32.mrb[0].mxu0
        %3739 = vdwg.mxu0
        %v3740 = vpack.c.bf16 %v3737, %v3732
        %3741 = vmatprep.subr.bf16.mxu0 0
        %3742 = vmatpush1.bf16.msra.mxu0 %v506
        %3743 = vmatprep.subr.bf16.mxu0 0
        %3744 = vmatpush1.bf16.msra.mxu0 %v507
        %3745 = vmatprep.subr.bf16.mxu0 0
        %3746 = vmatpush1.bf16.msra.mxu0 %v508
        %3747 = vmatprep.subr.bf16.mxu0 0
        %3748 = vmatpush1.bf16.msra.mxu0 %v509
        %3749 = vmatprep.subr.bf16.mxu0 0
        %3750 = vmatpush1.bf16.msra.mxu0 %v510
        %3751 = vmatprep.subr.bf16.mxu0 0
        %3752 = vmatpush1.bf16.msra.mxu0 %v511
        %3753 = vmatprep.subr.bf16.mxu0 0
        %3754 = vmatpush1.bf16.msra.mxu0 %v512
        %3755 = vmatprep.subr.bf16.mxu0 0
        %3756 = vmatpush1.bf16.msra.mxu0 %v513
        %3757 = vmatprep.subr.bf16.mxu0 0
        %3758 = vmatpush1.bf16.msra.mxu0 0
        %3759 = vmatprep.subr.bf16.mxu0 0
        %3760 = vmatpush1.bf16.msra.mxu0 0
        %3761 = vmatprep.subr.bf16.mxu0 0
        %3762 = vmatpush1.bf16.msra.mxu0 0
        %3763 = vmatprep.subr.bf16.mxu0 0
        %3764 = vmatpush1.bf16.msra.mxu0 0
        %3765 = vmatprep.subr.bf16.mxu0 0
        %3766 = vmatpush1.bf16.msra.mxu0 0
        %3767 = vmatprep.subr.bf16.mxu0 0
        %3768 = vmatpush1.bf16.msra.mxu0 0
        %3769 = vmatprep.subr.bf16.mxu0 0
        %3770 = vmatpush1.bf16.msra.mxu0 0
        %3771 = vmatprep.subr.bf16.mxu0 0
        %3772 = vmatpush1.bf16.msra.mxu0 0
        %3773 = vmatprep.mubr.bf16.mxu0 0
        %3774 = vmatmul.mubr.bf16.gmra.mrb[0].mxu0 %v3740
        %v3775 = vpop.f32.mrb[0].mxu0
        %v3776 = vadd.f32 %v472, %v3775
        %v3777 = vpop.f32.mrb[0].mxu0
        %v3778 = vpop.f32.mrb[0].mxu0
        %v3779 = vadd.f32 %v472, %v3778
        %v3780 = vpop.f32.mrb[0].mxu0
        %3781 = vdwg.mxu0
        %v3782 = vmax.f32 %v3776, 0.0
        %v3783 = vmax.f32 %v3779, 0.0
        %3784 = vmatprep.subr.mxu0 0.0
        %3785 = vmatpush1.msra.mxu0 %v3782
        %3786 = vmatprep.subr.mxu0 0.0
        %3787 = vmatpush1.msra.mxu0 %v3783
        %3788 = vmatprep.subr.mxu0 0.0
        %3789 = vmatpush1.msra.mxu0 0.0
        %3790 = vmatprep.subr.mxu0 0.0
        %3791 = vmatpush1.msra.mxu0 0.0
        %3792 = vmatprep.subr.mxu0 0.0
        %3793 = vmatpush1.msra.mxu0 0.0
        %3794 = vmatprep.subr.mxu0 0.0
        %3795 = vmatpush1.msra.mxu0 0.0
        %3796 = vmatprep.subr.mxu0 0.0
        %3797 = vmatpush1.msra.mxu0 0.0
        %3798 = vmatprep.subr.mxu0 0.0
        %3799 = vmatpush1.msra.mxu0 0.0
        %3800 = vmatprep.subr.mxu0 0.0
        %3801 = vmatpush1.msra.mxu0 0.0
        %3802 = vmatprep.subr.mxu0 0.0
        %3803 = vmatpush1.msra.mxu0 0.0
        %3804 = vmatprep.subr.mxu0 0.0
        %3805 = vmatpush1.msra.mxu0 0.0
        %3806 = vmatprep.subr.mxu0 0.0
        %3807 = vmatpush1.msra.mxu0 0.0
        %3808 = vmatprep.subr.mxu0 0.0
        %3809 = vmatpush1.msra.mxu0 0.0
        %3810 = vmatprep.subr.mxu0 0.0
        %3811 = vmatpush1.msra.mxu0 0.0
        %3812 = vmatprep.subr.mxu0 0.0
        %3813 = vmatpush1.msra.mxu0 0.0
        %3814 = vmatprep.subr.mxu0 0.0
        %3815 = vmatpush1.msra.mxu0 0.0
        %3816 = vmatprep.subr.mxu0 0.0
        %3817 = vmatpush1.msra.mxu0 0.0
        %3818 = vmatprep.subr.mxu0 0.0
        %3819 = vmatpush1.msra.mxu0 0.0
        %3820 = vmatprep.subr.mxu0 0.0
        %3821 = vmatpush1.msra.mxu0 0.0
        %3822 = vmatprep.subr.mxu0 0.0
        %3823 = vmatpush1.msra.mxu0 0.0
        %3824 = vmatprep.subr.mxu0 0.0
        %3825 = vmatpush1.msra.mxu0 0.0
        %3826 = vmatprep.subr.mxu0 0.0
        %3827 = vmatpush1.msra.mxu0 0.0
        %3828 = vmatprep.subr.mxu0 0.0
        %3829 = vmatpush1.msra.mxu0 0.0
        %3830 = vmatprep.subr.mxu0 0.0
        %3831 = vmatpush1.msra.mxu0 0.0
        %3832 = vmatprep.subr.mxu0 0.0
        %3833 = vmatpush1.msra.mxu0 0.0
        %3834 = vmatprep.subr.mxu0 0.0
        %3835 = vmatpush1.msra.mxu0 0.0
        %3836 = vmatprep.subr.mxu0 0.0
        %3837 = vmatpush1.msra.mxu0 0.0
        %3838 = vmatprep.subr.mxu0 0.0
        %3839 = vmatpush1.msra.mxu0 0.0
        %3840 = vmatprep.subr.mxu0 0.0
        %3841 = vmatpush1.msra.mxu0 0.0
        %3842 = vmatprep.subr.mxu0 0.0
        %3843 = vmatpush1.msra.mxu0 0.0
        %3844 = vmatprep.subr.mxu0 0.0
        %3845 = vmatpush1.msra.mxu0 0.0
        %3846 = vmatprep.subr.mxu0 0.0
        %3847 = vmatpush1.msra.mxu0 0.0
        %3848 = vmatprep.mubr.f32.mxu0 0.0
        %3849 = vmatmul.mubr.f32.gmra.mrb[0].mxu0 %v3660
        %v3850 = vpop.f32.mrb[0].mxu0
        %v3851 = vadd.f32 0.0, %v3850
        %v3852 = vpop.f32.mrb[0].mxu0
        %3853 = vmatprep.mubr.f32.mxu0 0.0
        %3854 = vmatmul.mubr.f32.gmra.mrb[0].mxu0 %v3663
        %v3855 = vpop.f32.mrb[0].mxu0
        %v3856 = vadd.f32 0.0, %v3855
        %v3857 = vpop.f32.mrb[0].mxu0
        %3858 = vdwg.mxu0
        %v3859 = vpack.c.bf16 %v3856, %v3851
        %3860 = vmatprep.subr.bf16.mxu0 0
        %3861 = vmatpush1.bf16.msra.mxu0 %v690
        %3862 = vmatprep.subr.bf16.mxu0 0
        %3863 = vmatpush1.bf16.msra.mxu0 %v691
        %3864 = vmatprep.subr.bf16.mxu0 0
        %3865 = vmatpush1.bf16.msra.mxu0 %v692
        %3866 = vmatprep.subr.bf16.mxu0 0
        %3867 = vmatpush1.bf16.msra.mxu0 %v693
        %3868 = vmatprep.subr.bf16.mxu0 0
        %3869 = vmatpush1.bf16.msra.mxu0 %v694
        %3870 = vmatprep.subr.bf16.mxu0 0
        %3871 = vmatpush1.bf16.msra.mxu0 %v695
        %3872 = vmatprep.subr.bf16.mxu0 0
        %3873 = vmatpush1.bf16.msra.mxu0 %v696
        %3874 = vmatprep.subr.bf16.mxu0 0
        %3875 = vmatpush1.bf16.msra.mxu0 %v697
        %3876 = vmatprep.subr.bf16.mxu0 0
        %3877 = vmatpush1.bf16.msra.mxu0 0
        %3878 = vmatprep.subr.bf16.mxu0 0
        %3879 = vmatpush1.bf16.msra.mxu0 0
        %3880 = vmatprep.subr.bf16.mxu0 0
        %3881 = vmatpush1.bf16.msra.mxu0 0
        %3882 = vmatprep.subr.bf16.mxu0 0
        %3883 = vmatpush1.bf16.msra.mxu0 0
        %3884 = vmatprep.subr.bf16.mxu0 0
        %3885 = vmatpush1.bf16.msra.mxu0 0
        %3886 = vmatprep.subr.bf16.mxu0 0
        %3887 = vmatpush1.bf16.msra.mxu0 0
        %3888 = vmatprep.subr.bf16.mxu0 0
        %3889 = vmatpush1.bf16.msra.mxu0 0
        %3890 = vmatprep.subr.bf16.mxu0 0
        %3891 = vmatpush1.bf16.msra.mxu0 0
        %3892 = vmatprep.mubr.bf16.mxu0 0
        %3893 = vmatmul.mubr.bf16.gmra.mrb[0].mxu0 %v3859
        %v3894 = vpop.f32.mrb[0].mxu0
        %v3895 = vadd.f32 0.0, %v3894
        %v3896 = vpop.f32.mrb[0].mxu0
        %v3897 = vpop.f32.mrb[0].mxu0
        %v3898 = vadd.f32 0.0, %v3897
        %v3899 = vpop.f32.mrb[0].mxu0
        %3900 = vdwg.mxu0
        %v3901 = vadd.f32 %v3895, %v3898
        %v3902 = vrot.slane %v3901, 4
        %v3903 = vadd.f32 %v3901, %v3902
        %v3904 = vrot.slane %v3903, 2
        %v3905 = vadd.f32 %v3903, %v3904
        %v3906 = vrot.slane %v3905, 1
        %v3907 = vadd.f32 %v3905, %v3906
        %v3908 = vmul.f32 %v3907, %v754
        %v3909 = vmul.f32 %v3895, %v3895
        %v3910 = vmul.f32 %v3898, %v3898
        %v3911 = vadd.f32 %v3909, %v3910
        %v3912 = vrot.slane %v3911, 4
        %v3913 = vadd.f32 %v3911, %v3912
        %v3914 = vrot.slane %v3913, 2
        %v3915 = vadd.f32 %v3913, %v3914
        %v3916 = vrot.slane %v3915, 1
        %v3917 = vadd.f32 %v3915, %v3916
        %v3918 = vmul.f32 %v3917, %v754
        %v3919 = vmul.f32 %v3908, %v3908
        %v3920 = vsub.f32 %v3918, %v3919
        %v3921 = vmax.f32 %v3920, 0.0
        %v3922 = vadd.f32 %v3921, 1e-05
        %v3923 = vrsqrt.pop %v3922
        %v3924 = vmul.f32 %v770, %v3923
        %v3925 = vmul.f32 %v3908, %v3924
        %v3926 = vsub.f32 %v775, %v3925
        %v3928 = vlaneseq
        %v3929 = vshrl.u32 %v3928, 7
        %v3930 = vsub.s32 0, %v3929
        %v3931 = vrot.slane %v3924, %v3930
        %v3933 = vmul.f32 %v3895, %v3931
        %v3934 = vmul.f32 %v3898, %v3931
        %v3936 = vlaneseq
        %v3937 = vshrl.u32 %v3936, 7
        %v3938 = vsub.s32 0, %v3937
        %v3939 = vrot.slane %v3926, %v3938
        %v3941 = vadd.f32 %v3933, %v3939
        %v3942 = vadd.f32 %v3934, %v3939
        %v3943 = vmax.f32 %v3941, 0.0
        %v3944 = vmax.f32 %v3942, 0.0
        %3945 = vmatprep.subr.mxu0 0.0
        %3946 = vmatpush1.msra.mxu0 %v3943
        %3947 = vmatprep.subr.mxu0 0.0
        %3948 = vmatpush1.msra.mxu0 %v3944
        %3949 = vmatprep.subr.mxu0 0.0
        %3950 = vmatpush1.msra.mxu0 0.0
        %3951 = vmatprep.subr.mxu0 0.0
        %3952 = vmatpush1.msra.mxu0 0.0
        %3953 = vmatprep.subr.mxu0 0.0
        %3954 = vmatpush1.msra.mxu0 0.0
        %3955 = vmatprep.subr.mxu0 0.0
        %3956 = vmatpush1.msra.mxu0 0.0
        %3957 = vmatprep.subr.mxu0 0.0
        %3958 = vmatpush1.msra.mxu0 0.0
        %3959 = vmatprep.subr.mxu0 0.0
        %3960 = vmatpush1.msra.mxu0 0.0
        %3961 = vmatprep.subr.mxu0 0.0
        %3962 = vmatpush1.msra.mxu0 0.0
        %3963 = vmatprep.subr.mxu0 0.0
        %3964 = vmatpush1.msra.mxu0 0.0
        %3965 = vmatprep.subr.mxu0 0.0
        %3966 = vmatpush1.msra.mxu0 0.0
        %3967 = vmatprep.subr.mxu0 0.0
        %3968 = vmatpush1.msra.mxu0 0.0
        %3969 = vmatprep.subr.mxu0 0.0
        %3970 = vmatpush1.msra.mxu0 0.0
        %3971 = vmatprep.subr.mxu0 0.0
        %3972 = vmatpush1.msra.mxu0 0.0
        %3973 = vmatprep.subr.mxu0 0.0
        %3974 = vmatpush1.msra.mxu0 0.0
        %3975 = vmatprep.subr.mxu0 0.0
        %3976 = vmatpush1.msra.mxu0 0.0
        %3977 = vmatprep.subr.mxu0 0.0
        %3978 = vmatpush1.msra.mxu0 0.0
        %3979 = vmatprep.subr.mxu0 0.0
        %3980 = vmatpush1.msra.mxu0 0.0
        %3981 = vmatprep.subr.mxu0 0.0
        %3982 = vmatpush1.msra.mxu0 0.0
        %3983 = vmatprep.subr.mxu0 0.0
        %3984 = vmatpush1.msra.mxu0 0.0
        %3985 = vmatprep.subr.mxu0 0.0
        %3986 = vmatpush1.msra.mxu0 0.0
        %3987 = vmatprep.subr.mxu0 0.0
        %3988 = vmatpush1.msra.mxu0 0.0
        %3989 = vmatprep.subr.mxu0 0.0
        %3990 = vmatpush1.msra.mxu0 0.0
        %3991 = vmatprep.subr.mxu0 0.0
        %3992 = vmatpush1.msra.mxu0 0.0
        %3993 = vmatprep.subr.mxu0 0.0
        %3994 = vmatpush1.msra.mxu0 0.0
        %3995 = vmatprep.subr.mxu0 0.0
        %3996 = vmatpush1.msra.mxu0 0.0
        %3997 = vmatprep.subr.mxu0 0.0
        %3998 = vmatpush1.msra.mxu0 0.0
        %3999 = vmatprep.subr.mxu0 0.0
        %4000 = vmatpush1.msra.mxu0 0.0
        %4001 = vmatprep.subr.mxu0 0.0
        %4002 = vmatpush1.msra.mxu0 0.0
        %4003 = vmatprep.subr.mxu0 0.0
        %4004 = vmatpush1.msra.mxu0 0.0
        %4005 = vmatprep.subr.mxu0 0.0
        %4006 = vmatpush1.msra.mxu0 0.0
        %4007 = vmatprep.subr.mxu0 0.0
        %4008 = vmatpush1.msra.mxu0 0.0
        %4009 = vmatprep.mubr.f32.mxu0 0.0
        %4010 = vmatmul.mubr.f32.gmra.mrb[0].mxu0 %v3660
        %v4011 = vpop.f32.mrb[0].mxu0
        %v4012 = vadd.f32 0.0, %v4011
        %v4013 = vpop.f32.mrb[0].mxu0
        %4014 = vmatprep.mubr.f32.mxu0 0.0
        %4015 = vmatmul.mubr.f32.gmra.mrb[0].mxu0 %v3663
        %v4016 = vpop.f32.mrb[0].mxu0
        %v4017 = vadd.f32 0.0, %v4016
        %v4018 = vpop.f32.mrb[0].mxu0
        %4019 = vdwg.mxu0
        %v4020 = vpack.c.bf16 %v4017, %v4012
        %4021 = vmatprep.subr.bf16.mxu0 0
        %4022 = vmatpush1.bf16.msra.mxu0 %v921
        %4023 = vmatprep.subr.bf16.mxu0 0
        %4024 = vmatpush1.bf16.msra.mxu0 %v922
        %4025 = vmatprep.subr.bf16.mxu0 0
        %4026 = vmatpush1.bf16.msra.mxu0 %v923
        %4027 = vmatprep.subr.bf16.mxu0 0
        %4028 = vmatpush1.bf16.msra.mxu0 %v924
        %4029 = vmatprep.subr.bf16.mxu0 0
        %4030 = vmatpush1.bf16.msra.mxu0 %v925
        %4031 = vmatprep.subr.bf16.mxu0 0
        %4032 = vmatpush1.bf16.msra.mxu0 %v926
        %4033 = vmatprep.subr.bf16.mxu0 0
        %4034 = vmatpush1.bf16.msra.mxu0 %v927
        %4035 = vmatprep.subr.bf16.mxu0 0
        %4036 = vmatpush1.bf16.msra.mxu0 %v928
        %4037 = vmatprep.subr.bf16.mxu0 0
        %4038 = vmatpush1.bf16.msra.mxu0 0
        %4039 = vmatprep.subr.bf16.mxu0 0
        %4040 = vmatpush1.bf16.msra.mxu0 0
        %4041 = vmatprep.subr.bf16.mxu0 0
        %4042 = vmatpush1.bf16.msra.mxu0 0
        %4043 = vmatprep.subr.bf16.mxu0 0
        %4044 = vmatpush1.bf16.msra.mxu0 0
        %4045 = vmatprep.subr.bf16.mxu0 0
        %4046 = vmatpush1.bf16.msra.mxu0 0
        %4047 = vmatprep.subr.bf16.mxu0 0
        %4048 = vmatpush1.bf16.msra.mxu0 0
        %4049 = vmatprep.subr.bf16.mxu0 0
        %4050 = vmatpush1.bf16.msra.mxu0 0
        %4051 = vmatprep.subr.bf16.mxu0 0
        %4052 = vmatpush1.bf16.msra.mxu0 0
        %4053 = vmatprep.mubr.bf16.mxu0 0
        %4054 = vmatmul.mubr.bf16.gmra.mrb[0].mxu0 %v4020
        %v4055 = vpop.f32.mrb[0].mxu0
        %v4056 = vadd.f32 0.0, %v4055
        %v4057 = vpop.f32.mrb[0].mxu0
        %v4058 = vpop.f32.mrb[0].mxu0
        %v4059 = vadd.f32 0.0, %v4058
        %v4060 = vpop.f32.mrb[0].mxu0
        %4061 = vdwg.mxu0
        %v4062 = vadd.f32 %v4056, %v4059
        %v4063 = vrot.slane %v4062, 4
        %v4064 = vadd.f32 %v4062, %v4063
        %v4065 = vrot.slane %v4064, 2
        %v4066 = vadd.f32 %v4064, %v4065
        %v4067 = vrot.slane %v4066, 1
        %v4068 = vadd.f32 %v4066, %v4067
        %v4069 = vmul.f32 %v4068, %v754
        %v4070 = vmul.f32 %v4056, %v4056
        %v4071 = vmul.f32 %v4059, %v4059
        %v4072 = vadd.f32 %v4070, %v4071
        %v4073 = vrot.slane %v4072, 4
        %v4074 = vadd.f32 %v4072, %v4073
        %v4075 = vrot.slane %v4074, 2
        %v4076 = vadd.f32 %v4074, %v4075
        %v4077 = vrot.slane %v4076, 1
        %v4078 = vadd.f32 %v4076, %v4077
        %v4079 = vmul.f32 %v4078, %v754
        %v4080 = vmul.f32 %v4069, %v4069
        %v4081 = vsub.f32 %v4079, %v4080
        %v4082 = vmax.f32 %v4081, 0.0
        %v4083 = vadd.f32 %v4082, 1e-05
        %v4084 = vrsqrt.pop %v4083
        %v4085 = vmul.f32 %v1000, %v4084
        %v4086 = vmul.f32 %v4069, %v4085
        %v4087 = vsub.f32 %v1005, %v4086
        %v4089 = vlaneseq
        %v4090 = vshrl.u32 %v4089, 7
        %v4091 = vsub.s32 0, %v4090
        %v4092 = vrot.slane %v4085, %v4091
        %v4094 = vmul.f32 %v4056, %v4092
        %v4095 = vmul.f32 %v4059, %v4092
        %v4097 = vlaneseq
        %v4098 = vshrl.u32 %v4097, 7
        %v4099 = vsub.s32 0, %v4098
        %v4100 = vrot.slane %v4087, %v4099
        %v4102 = vadd.f32 %v4094, %v4100
        %v4103 = vadd.f32 %v4095, %v4100
        %v4104 = vmax.f32 %v4102, 0.0
        %v4105 = vmax.f32 %v4103, 0.0
        %v4106 = vadd.f32 %v4104, %v3782
        %v4107 = vadd.f32 %v4105, %v3783
        %4108 = vmatprep.subr.mxu0 0.0
        %4109 = vmatpush1.msra.mxu0 %v4106
        %4110 = vmatprep.subr.mxu0 0.0
        %4111 = vmatpush1.msra.mxu0 %v4107
        %4112 = vmatprep.subr.mxu0 0.0
        %4113 = vmatpush1.msra.mxu0 0.0
        %4114 = vmatprep.subr.mxu0 0.0
        %4115 = vmatpush1.msra.mxu0 0.0
        %4116 = vmatprep.subr.mxu0 0.0
        %4117 = vmatpush1.msra.mxu0 0.0
        %4118 = vmatprep.subr.mxu0 0.0
        %4119 = vmatpush1.msra.mxu0 0.0
        %4120 = vmatprep.subr.mxu0 0.0
        %4121 = vmatpush1.msra.mxu0 0.0
        %4122 = vmatprep.subr.mxu0 0.0
        %4123 = vmatpush1.msra.mxu0 0.0
        %4124 = vmatprep.subr.mxu0 0.0
        %4125 = vmatpush1.msra.mxu0 0.0
        %4126 = vmatprep.subr.mxu0 0.0
        %4127 = vmatpush1.msra.mxu0 0.0
        %4128 = vmatprep.subr.mxu0 0.0
        %4129 = vmatpush1.msra.mxu0 0.0
        %4130 = vmatprep.subr.mxu0 0.0
        %4131 = vmatpush1.msra.mxu0 0.0
        %4132 = vmatprep.subr.mxu0 0.0
        %4133 = vmatpush1.msra.mxu0 0.0
        %4134 = vmatprep.subr.mxu0 0.0
        %4135 = vmatpush1.msra.mxu0 0.0
        %4136 = vmatprep.subr.mxu0 0.0
        %4137 = vmatpush1.msra.mxu0 0.0
        %4138 = vmatprep.subr.mxu0 0.0
        %4139 = vmatpush1.msra.mxu0 0.0
        %4140 = vmatprep.subr.mxu0 0.0
        %4141 = vmatpush1.msra.mxu0 0.0
        %4142 = vmatprep.subr.mxu0 0.0
        %4143 = vmatpush1.msra.mxu0 0.0
        %4144 = vmatprep.subr.mxu0 0.0
        %4145 = vmatpush1.msra.mxu0 0.0
        %4146 = vmatprep.subr.mxu0 0.0
        %4147 = vmatpush1.msra.mxu0 0.0
        %4148 = vmatprep.subr.mxu0 0.0
        %4149 = vmatpush1.msra.mxu0 0.0
        %4150 = vmatprep.subr.mxu0 0.0
        %4151 = vmatpush1.msra.mxu0 0.0
        %4152 = vmatprep.subr.mxu0 0.0
        %4153 = vmatpush1.msra.mxu0 0.0
        %4154 = vmatprep.subr.mxu0 0.0
        %4155 = vmatpush1.msra.mxu0 0.0
        %4156 = vmatprep.subr.mxu0 0.0
        %4157 = vmatpush1.msra.mxu0 0.0
        %4158 = vmatprep.subr.mxu0 0.0
        %4159 = vmatpush1.msra.mxu0 0.0
        %4160 = vmatprep.subr.mxu0 0.0
        %4161 = vmatpush1.msra.mxu0 0.0
        %4162 = vmatprep.subr.mxu0 0.0
        %4163 = vmatpush1.msra.mxu0 0.0
        %4164 = vmatprep.subr.mxu0 0.0
        %4165 = vmatpush1.msra.mxu0 0.0
        %4166 = vmatprep.subr.mxu0 0.0
        %4167 = vmatpush1.msra.mxu0 0.0
        %4168 = vmatprep.subr.mxu0 0.0
        %4169 = vmatpush1.msra.mxu0 0.0
        %4170 = vmatprep.subr.mxu0 0.0
        %4171 = vmatpush1.msra.mxu0 0.0
        %4172 = vmatprep.mubr.f32.mxu0 0.0
        %4173 = vmatmul.mubr.f32.gmra.mrb[0].mxu0 %v3660
        %v4174 = vpop.f32.mrb[0].mxu0
        %v4175 = vadd.f32 0.0, %v4174
        %v4176 = vpop.f32.mrb[0].mxu0
        %4177 = vmatprep.mubr.f32.mxu0 0.0
        %4178 = vmatmul.mubr.f32.gmra.mrb[0].mxu0 %v3663
        %v4179 = vpop.f32.mrb[0].mxu0
        %v4180 = vadd.f32 0.0, %v4179
        %v4181 = vpop.f32.mrb[0].mxu0
        %4182 = vdwg.mxu0
        %v4183 = vpack.c.bf16 %v4180, %v4175
        %4184 = vmatprep.subr.bf16.mxu0 0
        %4185 = vmatpush1.bf16.msra.mxu0 %v1153
        %4186 = vmatprep.subr.bf16.mxu0 0
        %4187 = vmatpush1.bf16.msra.mxu0 %v1154
        %4188 = vmatprep.subr.bf16.mxu0 0
        %4189 = vmatpush1.bf16.msra.mxu0 %v1155
        %4190 = vmatprep.subr.bf16.mxu0 0
        %4191 = vmatpush1.bf16.msra.mxu0 %v1156
        %4192 = vmatprep.subr.bf16.mxu0 0
        %4193 = vmatpush1.bf16.msra.mxu0 %v1157
        %4194 = vmatprep.subr.bf16.mxu0 0
        %4195 = vmatpush1.bf16.msra.mxu0 %v1158
        %4196 = vmatprep.subr.bf16.mxu0 0
        %4197 = vmatpush1.bf16.msra.mxu0 %v1159
        %4198 = vmatprep.subr.bf16.mxu0 0
        %4199 = vmatpush1.bf16.msra.mxu0 %v1160
        %4200 = vmatprep.subr.bf16.mxu0 0
        %4201 = vmatpush1.bf16.msra.mxu0 0
        %4202 = vmatprep.subr.bf16.mxu0 0
        %4203 = vmatpush1.bf16.msra.mxu0 0
        %4204 = vmatprep.subr.bf16.mxu0 0
        %4205 = vmatpush1.bf16.msra.mxu0 0
        %4206 = vmatprep.subr.bf16.mxu0 0
        %4207 = vmatpush1.bf16.msra.mxu0 0
        %4208 = vmatprep.subr.bf16.mxu0 0
        %4209 = vmatpush1.bf16.msra.mxu0 0
        %4210 = vmatprep.subr.bf16.mxu0 0
        %4211 = vmatpush1.bf16.msra.mxu0 0
        %4212 = vmatprep.subr.bf16.mxu0 0
        %4213 = vmatpush1.bf16.msra.mxu0 0
        %4214 = vmatprep.subr.bf16.mxu0 0
        %4215 = vmatpush1.bf16.msra.mxu0 0
        %4216 = vmatprep.mubr.bf16.mxu0 0
        %4217 = vmatmul.mubr.bf16.gmra.mrb[0].mxu0 %v4183
        %v4218 = vpop.f32.mrb[0].mxu0
        %v4219 = vadd.f32 0.0, %v4218
        %v4220 = vpop.f32.mrb[0].mxu0
        %v4221 = vpop.f32.mrb[0].mxu0
        %v4222 = vadd.f32 0.0, %v4221
        %v4223 = vpop.f32.mrb[0].mxu0
        %4224 = vdwg.mxu0
        %v4225 = vadd.f32 %v4219, %v4222
        %v4226 = vrot.slane %v4225, 4
        %v4227 = vadd.f32 %v4225, %v4226
        %v4228 = vrot.slane %v4227, 2
        %v4229 = vadd.f32 %v4227, %v4228
        %v4230 = vrot.slane %v4229, 1
        %v4231 = vadd.f32 %v4229, %v4230
        %v4232 = vmul.f32 %v4231, %v754
        %v4233 = vmul.f32 %v4219, %v4219
        %v4234 = vmul.f32 %v4222, %v4222
        %v4235 = vadd.f32 %v4233, %v4234
        %v4236 = vrot.slane %v4235, 4
        %v4237 = vadd.f32 %v4235, %v4236
        %v4238 = vrot.slane %v4237, 2
        %v4239 = vadd.f32 %v4237, %v4238
        %v4240 = vrot.slane %v4239, 1
        %v4241 = vadd.f32 %v4239, %v4240
        %v4242 = vmul.f32 %v4241, %v754
        %v4243 = vmul.f32 %v4232, %v4232
        %v4244 = vsub.f32 %v4242, %v4243
        %v4245 = vmax.f32 %v4244, 0.0
        %v4246 = vadd.f32 %v4245, 1e-05
        %v4247 = vrsqrt.pop %v4246
        %v4248 = vmul.f32 %v1232, %v4247
        %v4249 = vmul.f32 %v4232, %v4248
        %v4250 = vsub.f32 %v1237, %v4249
        %v4252 = vlaneseq
        %v4253 = vshrl.u32 %v4252, 7
        %v4254 = vsub.s32 0, %v4253
        %v4255 = vrot.slane %v4248, %v4254
        %v4257 = vmul.f32 %v4219, %v4255
        %v4258 = vmul.f32 %v4222, %v4255
        %v4260 = vlaneseq
        %v4261 = vshrl.u32 %v4260, 7
        %v4262 = vsub.s32 0, %v4261
        %v4263 = vrot.slane %v4250, %v4262
        %v4265 = vadd.f32 %v4257, %v4263
        %v4266 = vadd.f32 %v4258, %v4263
        %v4267 = vmax.f32 %v4265, 0.0
        %v4268 = vmax.f32 %v4266, 0.0
        %4269 = vmatprep.subr.mxu0 0.0
        %4270 = vmatpush1.msra.mxu0 %v4267
        %4271 = vmatprep.subr.mxu0 0.0
        %4272 = vmatpush1.msra.mxu0 %v4268
        %4273 = vmatprep.subr.mxu0 0.0
        %4274 = vmatpush1.msra.mxu0 0.0
        %4275 = vmatprep.subr.mxu0 0.0
        %4276 = vmatpush1.msra.mxu0 0.0
        %4277 = vmatprep.subr.mxu0 0.0
        %4278 = vmatpush1.msra.mxu0 0.0
        %4279 = vmatprep.subr.mxu0 0.0
        %4280 = vmatpush1.msra.mxu0 0.0
        %4281 = vmatprep.subr.mxu0 0.0
        %4282 = vmatpush1.msra.mxu0 0.0
        %4283 = vmatprep.subr.mxu0 0.0
        %4284 = vmatpush1.msra.mxu0 0.0
        %4285 = vmatprep.subr.mxu0 0.0
        %4286 = vmatpush1.msra.mxu0 0.0
        %4287 = vmatprep.subr.mxu0 0.0
        %4288 = vmatpush1.msra.mxu0 0.0
        %4289 = vmatprep.subr.mxu0 0.0
        %4290 = vmatpush1.msra.mxu0 0.0
        %4291 = vmatprep.subr.mxu0 0.0
        %4292 = vmatpush1.msra.mxu0 0.0
        %4293 = vmatprep.subr.mxu0 0.0
        %4294 = vmatpush1.msra.mxu0 0.0
        %4295 = vmatprep.subr.mxu0 0.0
        %4296 = vmatpush1.msra.mxu0 0.0
        %4297 = vmatprep.subr.mxu0 0.0
        %4298 = vmatpush1.msra.mxu0 0.0
        %4299 = vmatprep.subr.mxu0 0.0
        %4300 = vmatpush1.msra.mxu0 0.0
        %4301 = vmatprep.subr.mxu0 0.0
        %4302 = vmatpush1.msra.mxu0 0.0
        %4303 = vmatprep.subr.mxu0 0.0
        %4304 = vmatpush1.msra.mxu0 0.0
        %4305 = vmatprep.subr.mxu0 0.0
        %4306 = vmatpush1.msra.mxu0 0.0
        %4307 = vmatprep.subr.mxu0 0.0
        %4308 = vmatpush1.msra.mxu0 0.0
        %4309 = vmatprep.subr.mxu0 0.0
        %4310 = vmatpush1.msra.mxu0 0.0
        %4311 = vmatprep.subr.mxu0 0.0
        %4312 = vmatpush1.msra.mxu0 0.0
        %4313 = vmatprep.subr.mxu0 0.0
        %4314 = vmatpush1.msra.mxu0 0.0
        %4315 = vmatprep.subr.mxu0 0.0
        %4316 = vmatpush1.msra.mxu0 0.0
        %4317 = vmatprep.subr.mxu0 0.0
        %4318 = vmatpush1.msra.mxu0 0.0
        %4319 = vmatprep.subr.mxu0 0.0
        %4320 = vmatpush1.msra.mxu0 0.0
        %4321 = vmatprep.subr.mxu0 0.0
        %4322 = vmatpush1.msra.mxu0 0.0
        %4323 = vmatprep.subr.mxu0 0.0
        %4324 = vmatpush1.msra.mxu0 0.0
        %4325 = vmatprep.subr.mxu0 0.0
        %4326 = vmatpush1.msra.mxu0 0.0
        %4327 = vmatprep.subr.mxu0 0.0
        %4328 = vmatpush1.msra.mxu0 0.0
        %4329 = vmatprep.subr.mxu0 0.0
        %4330 = vmatpush1.msra.mxu0 0.0
        %4331 = vmatprep.subr.mxu0 0.0
        %4332 = vmatpush1.msra.mxu0 0.0
        %4333 = vmatprep.mubr.f32.mxu0 0.0
        %4334 = vmatmul.mubr.f32.gmra.mrb[0].mxu0 %v3660
        %v4335 = vpop.f32.mrb[0].mxu0
        %v4336 = vadd.f32 0.0, %v4335
        %v4337 = vpop.f32.mrb[0].mxu0
        %4338 = vmatprep.mubr.f32.mxu0 0.0
        %4339 = vmatmul.mubr.f32.gmra.mrb[0].mxu0 %v3663
        %v4340 = vpop.f32.mrb[0].mxu0
        %v4341 = vadd.f32 0.0, %v4340
        %v4342 = vpop.f32.mrb[0].mxu0
        %4343 = vdwg.mxu0
        %v4344 = vpack.c.bf16 %v4341, %v4336
        %4345 = vmatprep.subr.bf16.mxu0 0
        %4346 = vmatpush1.bf16.msra.mxu0 %v1383
        %4347 = vmatprep.subr.bf16.mxu0 0
        %4348 = vmatpush1.bf16.msra.mxu0 %v1384
        %4349 = vmatprep.subr.bf16.mxu0 0
        %4350 = vmatpush1.bf16.msra.mxu0 %v1385
        %4351 = vmatprep.subr.bf16.mxu0 0
        %4352 = vmatpush1.bf16.msra.mxu0 %v1386
        %4353 = vmatprep.subr.bf16.mxu0 0
        %4354 = vmatpush1.bf16.msra.mxu0 %v1387
        %4355 = vmatprep.subr.bf16.mxu0 0
        %4356 = vmatpush1.bf16.msra.mxu0 %v1388
        %4357 = vmatprep.subr.bf16.mxu0 0
        %4358 = vmatpush1.bf16.msra.mxu0 %v1389
        %4359 = vmatprep.subr.bf16.mxu0 0
        %4360 = vmatpush1.bf16.msra.mxu0 %v1390
        %4361 = vmatprep.subr.bf16.mxu0 0
        %4362 = vmatpush1.bf16.msra.mxu0 0
        %4363 = vmatprep.subr.bf16.mxu0 0
        %4364 = vmatpush1.bf16.msra.mxu0 0
        %4365 = vmatprep.subr.bf16.mxu0 0
        %4366 = vmatpush1.bf16.msra.mxu0 0
        %4367 = vmatprep.subr.bf16.mxu0 0
        %4368 = vmatpush1.bf16.msra.mxu0 0
        %4369 = vmatprep.subr.bf16.mxu0 0
        %4370 = vmatpush1.bf16.msra.mxu0 0
        %4371 = vmatprep.subr.bf16.mxu0 0
        %4372 = vmatpush1.bf16.msra.mxu0 0
        %4373 = vmatprep.subr.bf16.mxu0 0
        %4374 = vmatpush1.bf16.msra.mxu0 0
        %4375 = vmatprep.subr.bf16.mxu0 0
        %4376 = vmatpush1.bf16.msra.mxu0 0
        %4377 = vmatprep.mubr.bf16.mxu0 0
        %4378 = vmatmul.mubr.bf16.gmra.mrb[0].mxu0 %v4344
        %v4379 = vpop.f32.mrb[0].mxu0
        %v4380 = vadd.f32 0.0, %v4379
        %v4381 = vpop.f32.mrb[0].mxu0
        %v4382 = vpop.f32.mrb[0].mxu0
        %v4383 = vadd.f32 0.0, %v4382
        %v4384 = vpop.f32.mrb[0].mxu0
        %4385 = vdwg.mxu0
        %v4386 = vadd.f32 %v4380, %v4383
        %v4387 = vrot.slane %v4386, 4
        %v4388 = vadd.f32 %v4386, %v4387
        %v4389 = vrot.slane %v4388, 2
        %v4390 = vadd.f32 %v4388, %v4389
        %v4391 = vrot.slane %v4390, 1
        %v4392 = vadd.f32 %v4390, %v4391
        %v4393 = vmul.f32 %v4392, %v754
        %v4394 = vmul.f32 %v4380, %v4380
        %v4395 = vmul.f32 %v4383, %v4383
        %v4396 = vadd.f32 %v4394, %v4395
        %v4397 = vrot.slane %v4396, 4
        %v4398 = vadd.f32 %v4396, %v4397
        %v4399 = vrot.slane %v4398, 2
        %v4400 = vadd.f32 %v4398, %v4399
        %v4401 = vrot.slane %v4400, 1
        %v4402 = vadd.f32 %v4400, %v4401
        %v4403 = vmul.f32 %v4402, %v754
        %v4404 = vmul.f32 %v4393, %v4393
        %v4405 = vsub.f32 %v4403, %v4404
        %v4406 = vmax.f32 %v4405, 0.0
        %v4407 = vadd.f32 %v4406, 1e-05
        %v4408 = vrsqrt.pop %v4407
        %v4409 = vmul.f32 %v1462, %v4408
        %v4410 = vmul.f32 %v4393, %v4409
        %v4411 = vsub.f32 %v1467, %v4410
        %v4413 = vlaneseq
        %v4414 = vshrl.u32 %v4413, 7
        %v4415 = vsub.s32 0, %v4414
        %v4416 = vrot.slane %v4409, %v4415
        %v4418 = vmul.f32 %v4380, %v4416
        %v4419 = vmul.f32 %v4383, %v4416
        %v4421 = vlaneseq
        %v4422 = vshrl.u32 %v4421, 7
        %v4423 = vsub.s32 0, %v4422
        %v4424 = vrot.slane %v4411, %v4423
        %v4426 = vadd.f32 %v4418, %v4424
        %v4427 = vadd.f32 %v4419, %v4424
        %v4428 = vmax.f32 %v4426, 0.0
        %v4429 = vmax.f32 %v4427, 0.0
        %4430 = vmatprep.subr.bf16.mxu0 0
        %4431 = vmatpush1.bf16.msra.mxu0 %v1537
        %4432 = vmatprep.subr.bf16.mxu0 0
        %4433 = vmatpush1.bf16.msra.mxu0 %v1538
        %4434 = vmatprep.subr.bf16.mxu0 0
        %4435 = vmatpush1.bf16.msra.mxu0 %v1539
        %4436 = vmatprep.subr.bf16.mxu0 0
        %4437 = vmatpush1.bf16.msra.mxu0 %v1540
        %4438 = vmatprep.subr.bf16.mxu0 0
        %4439 = vmatpush1.bf16.msra.mxu0 %v1541
        %4440 = vmatprep.subr.bf16.mxu0 0
        %4441 = vmatpush1.bf16.msra.mxu0 %v1542
        %4442 = vmatprep.subr.bf16.mxu0 0
        %4443 = vmatpush1.bf16.msra.mxu0 %v1543
        %4444 = vmatprep.subr.bf16.mxu0 0
        %4445 = vmatpush1.bf16.msra.mxu0 %v1544
        %4446 = vmatprep.subr.bf16.mxu0 0
        %4447 = vmatpush1.bf16.msra.mxu0 0
        %4448 = vmatprep.subr.bf16.mxu0 0
        %4449 = vmatpush1.bf16.msra.mxu0 0
        %4450 = vmatprep.subr.bf16.mxu0 0
        %4451 = vmatpush1.bf16.msra.mxu0 0
        %4452 = vmatprep.subr.bf16.mxu0 0
        %4453 = vmatpush1.bf16.msra.mxu0 0
        %4454 = vmatprep.subr.bf16.mxu0 0
        %4455 = vmatpush1.bf16.msra.mxu0 0
        %4456 = vmatprep.subr.bf16.mxu0 0
        %4457 = vmatpush1.bf16.msra.mxu0 0
        %4458 = vmatprep.subr.bf16.mxu0 0
        %4459 = vmatpush1.bf16.msra.mxu0 0
        %4460 = vmatprep.subr.bf16.mxu0 0
        %4461 = vmatpush1.bf16.msra.mxu0 0
        %4462 = vmatprep.mubr.bf16.mxu0 0
        %4463 = vmatmul.mubr.bf16.gmra.mrb[0].mxu0 %v4183
        %v4464 = vpop.f32.mrb[0].mxu0
        %v4465 = vadd.f32 0.0, %v4464
        %v4466 = vpop.f32.mrb[0].mxu0
        %v4467 = vpop.f32.mrb[0].mxu0
        %v4468 = vadd.f32 0.0, %v4467
        %v4469 = vpop.f32.mrb[0].mxu0
        %4470 = vdwg.mxu0
        %v4471 = vadd.f32 %v4465, %v4468
        %v4472 = vrot.slane %v4471, 4
        %v4473 = vadd.f32 %v4471, %v4472
        %v4474 = vrot.slane %v4473, 2
        %v4475 = vadd.f32 %v4473, %v4474
        %v4476 = vrot.slane %v4475, 1
        %v4477 = vadd.f32 %v4475, %v4476
        %v4478 = vmul.f32 %v4477, %v754
        %v4479 = vmul.f32 %v4465, %v4465
        %v4480 = vmul.f32 %v4468, %v4468
        %v4481 = vadd.f32 %v4479, %v4480
        %v4482 = vrot.slane %v4481, 4
        %v4483 = vadd.f32 %v4481, %v4482
        %v4484 = vrot.slane %v4483, 2
        %v4485 = vadd.f32 %v4483, %v4484
        %v4486 = vrot.slane %v4485, 1
        %v4487 = vadd.f32 %v4485, %v4486
        %v4488 = vmul.f32 %v4487, %v754
        %v4489 = vmul.f32 %v4478, %v4478
        %v4490 = vsub.f32 %v4488, %v4489
        %v4491 = vmax.f32 %v4490, 0.0
        %v4492 = vadd.f32 %v4491, 1e-05
        %v4493 = vrsqrt.pop %v4492
        %v4494 = vmul.f32 %v1616, %v4493
        %v4495 = vmul.f32 %v4478, %v4494
        %v4496 = vsub.f32 %v1621, %v4495
        %v4498 = vlaneseq
        %v4499 = vshrl.u32 %v4498, 7
        %v4500 = vsub.s32 0, %v4499
        %v4501 = vrot.slane %v4494, %v4500
        %v4503 = vmul.f32 %v4465, %v4501
        %v4504 = vmul.f32 %v4468, %v4501
        %v4506 = vlaneseq
        %v4507 = vshrl.u32 %v4506, 7
        %v4508 = vsub.s32 0, %v4507
        %v4509 = vrot.slane %v4496, %v4508
        %v4511 = vadd.f32 %v4503, %v4509
        %v4512 = vadd.f32 %v4504, %v4509
        %v4513 = vadd.f32 %v4428, %v4511
        %v4514 = vadd.f32 %v4429, %v4512
        %4515 = vmatprep.subr.mxu0 0.0
        %4516 = vmatpush1.msra.mxu0 %v4513
        %4517 = vmatprep.subr.mxu0 0.0
        %4518 = vmatpush1.msra.mxu0 %v4514
        %4519 = vmatprep.subr.mxu0 0.0
        %4520 = vmatpush1.msra.mxu0 0.0
        %4521 = vmatprep.subr.mxu0 0.0
        %4522 = vmatpush1.msra.mxu0 0.0
        %4523 = vmatprep.subr.mxu0 0.0
        %4524 = vmatpush1.msra.mxu0 0.0
        %4525 = vmatprep.subr.mxu0 0.0
        %4526 = vmatpush1.msra.mxu0 0.0
        %4527 = vmatprep.subr.mxu0 0.0
        %4528 = vmatpush1.msra.mxu0 0.0
        %4529 = vmatprep.subr.mxu0 0.0
        %4530 = vmatpush1.msra.mxu0 0.0
        %4531 = vmatprep.subr.mxu0 0.0
        %4532 = vmatpush1.msra.mxu0 0.0
        %4533 = vmatprep.subr.mxu0 0.0
        %4534 = vmatpush1.msra.mxu0 0.0
        %4535 = vmatprep.subr.mxu0 0.0
        %4536 = vmatpush1.msra.mxu0 0.0
        %4537 = vmatprep.subr.mxu0 0.0
        %4538 = vmatpush1.msra.mxu0 0.0
        %4539 = vmatprep.subr.mxu0 0.0
        %4540 = vmatpush1.msra.mxu0 0.0
        %4541 = vmatprep.subr.mxu0 0.0
        %4542 = vmatpush1.msra.mxu0 0.0
        %4543 = vmatprep.subr.mxu0 0.0
        %4544 = vmatpush1.msra.mxu0 0.0
        %4545 = vmatprep.subr.mxu0 0.0
        %4546 = vmatpush1.msra.mxu0 0.0
        %4547 = vmatprep.subr.mxu0 0.0
        %4548 = vmatpush1.msra.mxu0 0.0
        %4549 = vmatprep.subr.mxu0 0.0
        %4550 = vmatpush1.msra.mxu0 0.0
        %4551 = vmatprep.subr.mxu0 0.0
        %4552 = vmatpush1.msra.mxu0 0.0
        %4553 = vmatprep.subr.mxu0 0.0
        %4554 = vmatpush1.msra.mxu0 0.0
        %4555 = vmatprep.subr.mxu0 0.0
        %4556 = vmatpush1.msra.mxu0 0.0
        %4557 = vmatprep.subr.mxu0 0.0
        %4558 = vmatpush1.msra.mxu0 0.0
        %4559 = vmatprep.subr.mxu0 0.0
        %4560 = vmatpush1.msra.mxu0 0.0
        %4561 = vmatprep.subr.mxu0 0.0
        %4562 = vmatpush1.msra.mxu0 0.0
        %4563 = vmatprep.subr.mxu0 0.0
        %4564 = vmatpush1.msra.mxu0 0.0
        %4565 = vmatprep.subr.mxu0 0.0
        %4566 = vmatpush1.msra.mxu0 0.0
        %4567 = vmatprep.subr.mxu0 0.0
        %4568 = vmatpush1.msra.mxu0 0.0
        %4569 = vmatprep.subr.mxu0 0.0
        %4570 = vmatpush1.msra.mxu0 0.0
        %4571 = vmatprep.subr.mxu0 0.0
        %4572 = vmatpush1.msra.mxu0 0.0
        %4573 = vmatprep.subr.mxu0 0.0
        %4574 = vmatpush1.msra.mxu0 0.0
        %4575 = vmatprep.subr.mxu0 0.0
        %4576 = vmatpush1.msra.mxu0 0.0
        %4577 = vmatprep.subr.mxu0 0.0
        %4578 = vmatpush1.msra.mxu0 0.0
        %4579 = vmatprep.mubr.f32.mxu0 0.0
        %4580 = vmatmul.mubr.f32.gmra.mrb[0].mxu0 %v3660
        %v4581 = vpop.f32.mrb[0].mxu0
        %v4582 = vadd.f32 0.0, %v4581
        %v4583 = vpop.f32.mrb[0].mxu0
        %4584 = vmatprep.mubr.f32.mxu0 0.0
        %4585 = vmatmul.mubr.f32.gmra.mrb[0].mxu0 %v3663
        %v4586 = vpop.f32.mrb[0].mxu0
        %v4587 = vadd.f32 0.0, %v4586
        %v4588 = vpop.f32.mrb[0].mxu0
        %4589 = vdwg.mxu0
        %v4590 = vpack.c.bf16 %v4587, %v4582
        %4591 = vmatprep.subr.bf16.mxu0 0
        %4592 = vmatpush1.bf16.msra.mxu0 %v1767
        %4593 = vmatprep.subr.bf16.mxu0 0
        %4594 = vmatpush1.bf16.msra.mxu0 %v1768
        %4595 = vmatprep.subr.bf16.mxu0 0
        %4596 = vmatpush1.bf16.msra.mxu0 %v1769
        %4597 = vmatprep.subr.bf16.mxu0 0
        %4598 = vmatpush1.bf16.msra.mxu0 %v1770
        %4599 = vmatprep.subr.bf16.mxu0 0
        %4600 = vmatpush1.bf16.msra.mxu0 %v1771
        %4601 = vmatprep.subr.bf16.mxu0 0
        %4602 = vmatpush1.bf16.msra.mxu0 %v1772
        %4603 = vmatprep.subr.bf16.mxu0 0
        %4604 = vmatpush1.bf16.msra.mxu0 %v1773
        %4605 = vmatprep.subr.bf16.mxu0 0
        %4606 = vmatpush1.bf16.msra.mxu0 %v1774
        %4607 = vmatprep.subr.bf16.mxu0 0
        %4608 = vmatpush1.bf16.msra.mxu0 0
        %4609 = vmatprep.subr.bf16.mxu0 0
        %4610 = vmatpush1.bf16.msra.mxu0 0
        %4611 = vmatprep.subr.bf16.mxu0 0
        %4612 = vmatpush1.bf16.msra.mxu0 0
        %4613 = vmatprep.subr.bf16.mxu0 0
        %4614 = vmatpush1.bf16.msra.mxu0 0
        %4615 = vmatprep.subr.bf16.mxu0 0
        %4616 = vmatpush1.bf16.msra.mxu0 0
        %4617 = vmatprep.subr.bf16.mxu0 0
        %4618 = vmatpush1.bf16.msra.mxu0 0
        %4619 = vmatprep.subr.bf16.mxu0 0
        %4620 = vmatpush1.bf16.msra.mxu0 0
        %4621 = vmatprep.subr.bf16.mxu0 0
        %4622 = vmatpush1.bf16.msra.mxu0 0
        %4623 = vmatprep.mubr.bf16.mxu0 0
        %4624 = vmatmul.mubr.bf16.gmra.mrb[0].mxu0 %v4590
        %v4625 = vpop.f32.mrb[0].mxu0
        %v4626 = vadd.f32 0.0, %v4625
        %v4627 = vpop.f32.mrb[0].mxu0
        %v4628 = vpop.f32.mrb[0].mxu0
        %v4629 = vadd.f32 0.0, %v4628
        %v4630 = vpop.f32.mrb[0].mxu0
        %4631 = vdwg.mxu0
        %v4632 = vadd.f32 %v4626, %v4629
        %v4633 = vrot.slane %v4632, 4
        %v4634 = vadd.f32 %v4632, %v4633
        %v4635 = vrot.slane %v4634, 2
        %v4636 = vadd.f32 %v4634, %v4635
        %v4637 = vrot.slane %v4636, 1
        %v4638 = vadd.f32 %v4636, %v4637
        %v4639 = vmul.f32 %v4638, %v754
        %v4640 = vmul.f32 %v4626, %v4626
        %v4641 = vmul.f32 %v4629, %v4629
        %v4642 = vadd.f32 %v4640, %v4641
        %v4643 = vrot.slane %v4642, 4
        %v4644 = vadd.f32 %v4642, %v4643
        %v4645 = vrot.slane %v4644, 2
        %v4646 = vadd.f32 %v4644, %v4645
        %v4647 = vrot.slane %v4646, 1
        %v4648 = vadd.f32 %v4646, %v4647
        %v4649 = vmul.f32 %v4648, %v754
        %v4650 = vmul.f32 %v4639, %v4639
        %v4651 = vsub.f32 %v4649, %v4650
        %v4652 = vmax.f32 %v4651, 0.0
        %v4653 = vadd.f32 %v4652, 1e-05
        %v4654 = vrsqrt.pop %v4653
        %v4655 = vmul.f32 %v1846, %v4654
        %v4656 = vmul.f32 %v4639, %v4655
        %v4657 = vsub.f32 %v1851, %v4656
        %v4659 = vlaneseq
        %v4660 = vshrl.u32 %v4659, 7
        %v4661 = vsub.s32 0, %v4660
        %v4662 = vrot.slane %v4655, %v4661
        %v4664 = vmul.f32 %v4626, %v4662
        %v4665 = vmul.f32 %v4629, %v4662
        %v4667 = vlaneseq
        %v4668 = vshrl.u32 %v4667, 7
        %v4669 = vsub.s32 0, %v4668
        %v4670 = vrot.slane %v4657, %v4669
        %v4672 = vadd.f32 %v4664, %v4670
        %v4673 = vadd.f32 %v4665, %v4670
        %v4674 = vmax.f32 %v4672, 0.0
        %v4675 = vmax.f32 %v4673, 0.0
        %4676 = vmatprep.subr.mxu0 0.0
        %4677 = vmatpush1.msra.mxu0 %v4674
        %4678 = vmatprep.subr.mxu0 0.0
        %4679 = vmatpush1.msra.mxu0 %v4675
        %4680 = vmatprep.subr.mxu0 0.0
        %4681 = vmatpush1.msra.mxu0 0.0
        %4682 = vmatprep.subr.mxu0 0.0
        %4683 = vmatpush1.msra.mxu0 0.0
        %4684 = vmatprep.subr.mxu0 0.0
        %4685 = vmatpush1.msra.mxu0 0.0
        %4686 = vmatprep.subr.mxu0 0.0
        %4687 = vmatpush1.msra.mxu0 0.0
        %4688 = vmatprep.subr.mxu0 0.0
        %4689 = vmatpush1.msra.mxu0 0.0
        %4690 = vmatprep.subr.mxu0 0.0
        %4691 = vmatpush1.msra.mxu0 0.0
        %4692 = vmatprep.subr.mxu0 0.0
        %4693 = vmatpush1.msra.mxu0 0.0
        %4694 = vmatprep.subr.mxu0 0.0
        %4695 = vmatpush1.msra.mxu0 0.0
        %4696 = vmatprep.subr.mxu0 0.0
        %4697 = vmatpush1.msra.mxu0 0.0
        %4698 = vmatprep.subr.mxu0 0.0
        %4699 = vmatpush1.msra.mxu0 0.0
        %4700 = vmatprep.subr.mxu0 0.0
        %4701 = vmatpush1.msra.mxu0 0.0
        %4702 = vmatprep.subr.mxu0 0.0
        %4703 = vmatpush1.msra.mxu0 0.0
        %4704 = vmatprep.subr.mxu0 0.0
        %4705 = vmatpush1.msra.mxu0 0.0
        %4706 = vmatprep.subr.mxu0 0.0
        %4707 = vmatpush1.msra.mxu0 0.0
        %4708 = vmatprep.subr.mxu0 0.0
        %4709 = vmatpush1.msra.mxu0 0.0
        %4710 = vmatprep.subr.mxu0 0.0
        %4711 = vmatpush1.msra.mxu0 0.0
        %4712 = vmatprep.subr.mxu0 0.0
        %4713 = vmatpush1.msra.mxu0 0.0
        %4714 = vmatprep.subr.mxu0 0.0
        %4715 = vmatpush1.msra.mxu0 0.0
        %4716 = vmatprep.subr.mxu0 0.0
        %4717 = vmatpush1.msra.mxu0 0.0
        %4718 = vmatprep.subr.mxu0 0.0
        %4719 = vmatpush1.msra.mxu0 0.0
        %4720 = vmatprep.subr.mxu0 0.0
        %4721 = vmatpush1.msra.mxu0 0.0
        %4722 = vmatprep.subr.mxu0 0.0
        %4723 = vmatpush1.msra.mxu0 0.0
        %4724 = vmatprep.subr.mxu0 0.0
        %4725 = vmatpush1.msra.mxu0 0.0
        %4726 = vmatprep.subr.mxu0 0.0
        %4727 = vmatpush1.msra.mxu0 0.0
        %4728 = vmatprep.subr.mxu0 0.0
        %4729 = vmatpush1.msra.mxu0 0.0
        %4730 = vmatprep.subr.mxu0 0.0
        %4731 = vmatpush1.msra.mxu0 0.0
        %4732 = vmatprep.subr.mxu0 0.0
        %4733 = vmatpush1.msra.mxu0 0.0
        %4734 = vmatprep.subr.mxu0 0.0
        %4735 = vmatpush1.msra.mxu0 0.0
        %4736 = vmatprep.subr.mxu0 0.0
        %4737 = vmatpush1.msra.mxu0 0.0
        %4738 = vmatprep.subr.mxu0 0.0
        %4739 = vmatpush1.msra.mxu0 0.0
        %4740 = vmatprep.mubr.f32.mxu0 0.0
        %4741 = vmatmul.mubr.f32.gmra.mrb[0].mxu0 %v3660
        %v4742 = vpop.f32.mrb[0].mxu0
        %v4743 = vadd.f32 0.0, %v4742
        %v4744 = vpop.f32.mrb[0].mxu0
        %4745 = vmatprep.mubr.f32.mxu0 0.0
        %4746 = vmatmul.mubr.f32.gmra.mrb[0].mxu0 %v3663
        %v4747 = vpop.f32.mrb[0].mxu0
        %v4748 = vadd.f32 0.0, %v4747
        %v4749 = vpop.f32.mrb[0].mxu0
        %4750 = vdwg.mxu0
        %v4751 = vpack.c.bf16 %v4748, %v4743
        %4752 = vmatprep.subr.bf16.mxu0 0
        %4753 = vmatpush1.bf16.msra.mxu0 %v1997
        %4754 = vmatprep.subr.bf16.mxu0 0
        %4755 = vmatpush1.bf16.msra.mxu0 %v1998
        %4756 = vmatprep.subr.bf16.mxu0 0
        %4757 = vmatpush1.bf16.msra.mxu0 %v1999
        %4758 = vmatprep.subr.bf16.mxu0 0
        %4759 = vmatpush1.bf16.msra.mxu0 %v2000
        %4760 = vmatprep.subr.bf16.mxu0 0
        %4761 = vmatpush1.bf16.msra.mxu0 %v2001
        %4762 = vmatprep.subr.bf16.mxu0 0
        %4763 = vmatpush1.bf16.msra.mxu0 %v2002
        %4764 = vmatprep.subr.bf16.mxu0 0
        %4765 = vmatpush1.bf16.msra.mxu0 %v2003
        %4766 = vmatprep.subr.bf16.mxu0 0
        %4767 = vmatpush1.bf16.msra.mxu0 %v2004
        %4768 = vmatprep.subr.bf16.mxu0 0
        %4769 = vmatpush1.bf16.msra.mxu0 0
        %4770 = vmatprep.subr.bf16.mxu0 0
        %4771 = vmatpush1.bf16.msra.mxu0 0
        %4772 = vmatprep.subr.bf16.mxu0 0
        %4773 = vmatpush1.bf16.msra.mxu0 0
        %4774 = vmatprep.subr.bf16.mxu0 0
        %4775 = vmatpush1.bf16.msra.mxu0 0
        %4776 = vmatprep.subr.bf16.mxu0 0
        %4777 = vmatpush1.bf16.msra.mxu0 0
        %4778 = vmatprep.subr.bf16.mxu0 0
        %4779 = vmatpush1.bf16.msra.mxu0 0
        %4780 = vmatprep.subr.bf16.mxu0 0
        %4781 = vmatpush1.bf16.msra.mxu0 0
        %4782 = vmatprep.subr.bf16.mxu0 0
        %4783 = vmatpush1.bf16.msra.mxu0 0
        %4784 = vmatprep.mubr.bf16.mxu0 0
        %4785 = vmatmul.mubr.bf16.gmra.mrb[0].mxu0 %v4751
        %v4786 = vpop.f32.mrb[0].mxu0
        %v4787 = vadd.f32 0.0, %v4786
        %v4788 = vpop.f32.mrb[0].mxu0
        %v4789 = vpop.f32.mrb[0].mxu0
        %v4790 = vadd.f32 0.0, %v4789
        %v4791 = vpop.f32.mrb[0].mxu0
        %4792 = vdwg.mxu0
        %v4793 = vadd.f32 %v4787, %v4790
        %v4794 = vrot.slane %v4793, 4
        %v4795 = vadd.f32 %v4793, %v4794
        %v4796 = vrot.slane %v4795, 2
        %v4797 = vadd.f32 %v4795, %v4796
        %v4798 = vrot.slane %v4797, 1
        %v4799 = vadd.f32 %v4797, %v4798
        %v4800 = vmul.f32 %v4799, %v754
        %v4801 = vmul.f32 %v4787, %v4787
        %v4802 = vmul.f32 %v4790, %v4790
        %v4803 = vadd.f32 %v4801, %v4802
        %v4804 = vrot.slane %v4803, 4
        %v4805 = vadd.f32 %v4803, %v4804
        %v4806 = vrot.slane %v4805, 2
        %v4807 = vadd.f32 %v4805, %v4806
        %v4808 = vrot.slane %v4807, 1
        %v4809 = vadd.f32 %v4807, %v4808
        %v4810 = vmul.f32 %v4809, %v754
        %v4811 = vmul.f32 %v4800, %v4800
        %v4812 = vsub.f32 %v4810, %v4811
        %v4813 = vmax.f32 %v4812, 0.0
        %v4814 = vadd.f32 %v4813, 1e-05
        %v4815 = vrsqrt.pop %v4814
        %v4816 = vmul.f32 %v2076, %v4815
        %v4817 = vmul.f32 %v4800, %v4816
        %v4818 = vsub.f32 %v2081, %v4817
        %v4820 = vlaneseq
        %v4821 = vshrl.u32 %v4820, 7
        %v4822 = vsub.s32 0, %v4821
        %v4823 = vrot.slane %v4816, %v4822
        %v4825 = vmul.f32 %v4787, %v4823
        %v4826 = vmul.f32 %v4790, %v4823
        %v4828 = vlaneseq
        %v4829 = vshrl.u32 %v4828, 7
        %v4830 = vsub.s32 0, %v4829
        %v4831 = vrot.slane %v4818, %v4830
        %v4833 = vadd.f32 %v4825, %v4831
        %v4834 = vadd.f32 %v4826, %v4831
        %v4835 = vmax.f32 %v4833, 0.0
        %v4836 = vmax.f32 %v4834, 0.0
        %v4837 = vadd.f32 %v4835, %v4513
        %v4838 = vadd.f32 %v4836, %v4514
        %4839 = vmatprep.subr.mxu0 0.0
        %4840 = vmatpush1.msra.mxu0 %v4837
        %4841 = vmatprep.subr.mxu0 0.0
        %4842 = vmatpush1.msra.mxu0 %v4838
        %4843 = vmatprep.subr.mxu0 0.0
        %4844 = vmatpush1.msra.mxu0 0.0
        %4845 = vmatprep.subr.mxu0 0.0
        %4846 = vmatpush1.msra.mxu0 0.0
        %4847 = vmatprep.subr.mxu0 0.0
        %4848 = vmatpush1.msra.mxu0 0.0
        %4849 = vmatprep.subr.mxu0 0.0
        %4850 = vmatpush1.msra.mxu0 0.0
        %4851 = vmatprep.subr.mxu0 0.0
        %4852 = vmatpush1.msra.mxu0 0.0
        %4853 = vmatprep.subr.mxu0 0.0
        %4854 = vmatpush1.msra.mxu0 0.0
        %4855 = vmatprep.subr.mxu0 0.0
        %4856 = vmatpush1.msra.mxu0 0.0
        %4857 = vmatprep.subr.mxu0 0.0
        %4858 = vmatpush1.msra.mxu0 0.0
        %4859 = vmatprep.subr.mxu0 0.0
        %4860 = vmatpush1.msra.mxu0 0.0
        %4861 = vmatprep.subr.mxu0 0.0
        %4862 = vmatpush1.msra.mxu0 0.0
        %4863 = vmatprep.subr.mxu0 0.0
        %4864 = vmatpush1.msra.mxu0 0.0
        %4865 = vmatprep.subr.mxu0 0.0
        %4866 = vmatpush1.msra.mxu0 0.0
        %4867 = vmatprep.subr.mxu0 0.0
        %4868 = vmatpush1.msra.mxu0 0.0
        %4869 = vmatprep.subr.mxu0 0.0
        %4870 = vmatpush1.msra.mxu0 0.0
        %4871 = vmatprep.subr.mxu0 0.0
        %4872 = vmatpush1.msra.mxu0 0.0
        %4873 = vmatprep.subr.mxu0 0.0
        %4874 = vmatpush1.msra.mxu0 0.0
        %4875 = vmatprep.subr.mxu0 0.0
        %4876 = vmatpush1.msra.mxu0 0.0
        %4877 = vmatprep.subr.mxu0 0.0
        %4878 = vmatpush1.msra.mxu0 0.0
        %4879 = vmatprep.subr.mxu0 0.0
        %4880 = vmatpush1.msra.mxu0 0.0
        %4881 = vmatprep.subr.mxu0 0.0
        %4882 = vmatpush1.msra.mxu0 0.0
        %4883 = vmatprep.subr.mxu0 0.0
        %4884 = vmatpush1.msra.mxu0 0.0
        %4885 = vmatprep.subr.mxu0 0.0
        %4886 = vmatpush1.msra.mxu0 0.0
        %4887 = vmatprep.subr.mxu0 0.0
        %4888 = vmatpush1.msra.mxu0 0.0
        %4889 = vmatprep.subr.mxu0 0.0
        %4890 = vmatpush1.msra.mxu0 0.0
        %4891 = vmatprep.subr.mxu0 0.0
        %4892 = vmatpush1.msra.mxu0 0.0
        %4893 = vmatprep.subr.mxu0 0.0
        %4894 = vmatpush1.msra.mxu0 0.0
        %4895 = vmatprep.subr.mxu0 0.0
        %4896 = vmatpush1.msra.mxu0 0.0
        %4897 = vmatprep.subr.mxu0 0.0
        %4898 = vmatpush1.msra.mxu0 0.0
        %4899 = vmatprep.subr.mxu0 0.0
        %4900 = vmatpush1.msra.mxu0 0.0
        %4901 = vmatprep.subr.mxu0 0.0
        %4902 = vmatpush1.msra.mxu0 0.0
        %4903 = vmatprep.mubr.f32.mxu0 0.0
        %4904 = vmatmul.mubr.f32.gmra.mrb[0].mxu0 %v3660
        %v4905 = vpop.f32.mrb[0].mxu0
        %v4906 = vadd.f32 0.0, %v4905
        %v4907 = vpop.f32.mrb[0].mxu0
        %4908 = vmatprep.mubr.f32.mxu0 0.0
        %4909 = vmatmul.mubr.f32.gmra.mrb[0].mxu0 %v3663
        %v4910 = vpop.f32.mrb[0].mxu0
        %v4911 = vadd.f32 0.0, %v4910
        %v4912 = vpop.f32.mrb[0].mxu0
        %4913 = vdwg.mxu0
        %v4914 = vpack.c.bf16 %v4911, %v4906
        %4915 = vmatprep.subr.bf16.mxu0 0
        %4916 = vmatpush1.bf16.msra.mxu0 %v2237
        %4917 = vmatprep.subr.bf16.mxu0 0
        %4918 = vmatpush1.bf16.msra.mxu0 %v2238
        %4919 = vmatprep.subr.bf16.mxu0 0
        %4920 = vmatpush1.bf16.msra.mxu0 %v2239
        %4921 = vmatprep.subr.bf16.mxu0 0
        %4922 = vmatpush1.bf16.msra.mxu0 %v2240
        %4923 = vmatprep.subr.bf16.mxu0 0
        %4924 = vmatpush1.bf16.msra.mxu0 %v2241
        %4925 = vmatprep.subr.bf16.mxu0 0
        %4926 = vmatpush1.bf16.msra.mxu0 %v2242
        %4927 = vmatprep.subr.bf16.mxu0 0
        %4928 = vmatpush1.bf16.msra.mxu0 %v2243
        %4929 = vmatprep.subr.bf16.mxu0 0
        %4930 = vmatpush1.bf16.msra.mxu0 %v2244
        %4931 = vmatprep.subr.bf16.mxu0 0
        %4932 = vmatpush1.bf16.msra.mxu0 0
        %4933 = vmatprep.subr.bf16.mxu0 0
        %4934 = vmatpush1.bf16.msra.mxu0 0
        %4935 = vmatprep.subr.bf16.mxu0 0
        %4936 = vmatpush1.bf16.msra.mxu0 0
        %4937 = vmatprep.subr.bf16.mxu0 0
        %4938 = vmatpush1.bf16.msra.mxu0 0
        %4939 = vmatprep.subr.bf16.mxu0 0
        %4940 = vmatpush1.bf16.msra.mxu0 0
        %4941 = vmatprep.subr.bf16.mxu0 0
        %4942 = vmatpush1.bf16.msra.mxu0 0
        %4943 = vmatprep.subr.bf16.mxu0 0
        %4944 = vmatpush1.bf16.msra.mxu0 0
        %4945 = vmatprep.subr.bf16.mxu0 0
        %4946 = vmatpush1.bf16.msra.mxu0 0
        %4947 = vmatprep.mubr.bf16.mxu0 0
        %4948 = vmatmul.mubr.bf16.gmra.mrb[0].mxu0 %v4914
        %v4949 = vpop.f32.mrb[0].mxu0
        %v4950 = vadd.f32 %v2203, %v4949
        %v4951 = vpop.f32.mrb[0].mxu0
        %v4952 = vpop.f32.mrb[0].mxu0
        %v4953 = vadd.f32 %v2203, %v4952
        %v4954 = vpop.f32.mrb[0].mxu0
        %4955 = vdwg.mxu0
        %v4956 = vadd.f32 %v4950, %v4953
        %v4957 = vrot.slane %v4956, 4
        %v4958 = vadd.f32 %v4956, %v4957
        %v4959 = vrot.slane %v4958, 2
        %v4960 = vadd.f32 %v4958, %v4959
        %v4961 = vrot.slane %v4960, 1
        %v4962 = vadd.f32 %v4960, %v4961
        %v4963 = vmul.f32 %v4962, %v754
        %s4964 = scalar_lea.vmem %s290, 48 [#allocation2]
        %v4965 = vld [vmem:[%s4964] sm:$0xff]
        %v4966 = vld [vmem:[%s4964 + $0x8] sm:$0xff]
        %s4967 = scalar_lea.vmem %s299, 48 [#allocation5]
        %v4968 = vld [vmem:[%s4967] sm:$0xff]
        %v4969 = vld [vmem:[%s4967 + $0x8] sm:$0xff]
        %v4970 = vmul.f32 %v4968, %v4968
        %v4971 = vmul.f32 %v4969, %v4969
        %v4972 = vadd.f32 %v4970, %v4971
        %v4973 = vrot.slane %v4972, 4
        %v4974 = vadd.f32 %v4972, %v4973
        %v4975 = vrot.slane %v4974, 2
        %v4976 = vadd.f32 %v4974, %v4975
        %v4977 = vrot.slane %v4976, 1
        %v4978 = vadd.f32 %v4976, %v4977
        %v4979 = vrsqrt.pop %v4978
        %v4980 = vmul.f32 %v4978, %v4979
        %vm4981 = vcmp.eq.f32.partialorder %v4978, inf
        %v4982 = vsel %vm4981, %v4978, %v4980
        %vm4983 = vcmp.eq.f32.partialorder %v4978, 0.0
        %v4984 = vand.u32 %v4978, 2147483648
        %v4985 = vsel %vm4983, %v4984, %v4982
        %v4986 = vmax.f32 %v4985, 1e-12
        %v4987 = vrcp.pop %v4986
        %v4988 = vmul.f32 %v4968, %v4987
        %v4989 = vmul.f32 %v4969, %v4987
        %v4991 = vsel %vm368, %v4965, 0
        %v4994 = vsel %vm368, %v4966, 0
        %4996 = vmatprep.subr.mxu0 0.0
        %4997 = vmatpush1.msra.mxu0 %v4988
        %4998 = vmatprep.subr.mxu0 0.0
        %4999 = vmatpush1.msra.mxu0 %v4989
        %5000 = vmatprep.subr.mxu0 0.0
        %5001 = vmatpush1.msra.mxu0 0.0
        %5002 = vmatprep.subr.mxu0 0.0
        %5003 = vmatpush1.msra.mxu0 0.0
        %5004 = vmatprep.subr.mxu0 0.0
        %5005 = vmatpush1.msra.mxu0 0.0
        %5006 = vmatprep.subr.mxu0 0.0
        %5007 = vmatpush1.msra.mxu0 0.0
        %5008 = vmatprep.subr.mxu0 0.0
        %5009 = vmatpush1.msra.mxu0 0.0
        %5010 = vmatprep.subr.mxu0 0.0
        %5011 = vmatpush1.msra.mxu0 0.0
        %5012 = vmatprep.subr.mxu0 0.0
        %5013 = vmatpush1.msra.mxu0 0.0
        %5014 = vmatprep.subr.mxu0 0.0
        %5015 = vmatpush1.msra.mxu0 0.0
        %5016 = vmatprep.subr.mxu0 0.0
        %5017 = vmatpush1.msra.mxu0 0.0
        %5018 = vmatprep.subr.mxu0 0.0
        %5019 = vmatpush1.msra.mxu0 0.0
        %5020 = vmatprep.subr.mxu0 0.0
        %5021 = vmatpush1.msra.mxu0 0.0
        %5022 = vmatprep.subr.mxu0 0.0
        %5023 = vmatpush1.msra.mxu0 0.0
        %5024 = vmatprep.subr.mxu0 0.0
        %5025 = vmatpush1.msra.mxu0 0.0
        %5026 = vmatprep.subr.mxu0 0.0
        %5027 = vmatpush1.msra.mxu0 0.0
        %5028 = vmatprep.subr.mxu0 0.0
        %5029 = vmatpush1.msra.mxu0 0.0
        %5030 = vmatprep.subr.mxu0 0.0
        %5031 = vmatpush1.msra.mxu0 0.0
        %5032 = vmatprep.subr.mxu0 0.0
        %5033 = vmatpush1.msra.mxu0 0.0
        %5034 = vmatprep.subr.mxu0 0.0
        %5035 = vmatpush1.msra.mxu0 0.0
        %5036 = vmatprep.subr.mxu0 0.0
        %5037 = vmatpush1.msra.mxu0 0.0
        %5038 = vmatprep.subr.mxu0 0.0
        %5039 = vmatpush1.msra.mxu0 0.0
        %5040 = vmatprep.subr.mxu0 0.0
        %5041 = vmatpush1.msra.mxu0 0.0
        %5042 = vmatprep.subr.mxu0 0.0
        %5043 = vmatpush1.msra.mxu0 0.0
        %5044 = vmatprep.subr.mxu0 0.0
        %5045 = vmatpush1.msra.mxu0 0.0
        %5046 = vmatprep.subr.mxu0 0.0
        %5047 = vmatpush1.msra.mxu0 0.0
        %5048 = vmatprep.subr.mxu0 0.0
        %5049 = vmatpush1.msra.mxu0 0.0
        %5050 = vmatprep.subr.mxu0 0.0
        %5051 = vmatpush1.msra.mxu0 0.0
        %5052 = vmatprep.subr.mxu0 0.0
        %5053 = vmatpush1.msra.mxu0 0.0
        %5054 = vmatprep.subr.mxu0 0.0
        %5055 = vmatpush1.msra.mxu0 0.0
        %5056 = vmatprep.subr.mxu0 0.0
        %5057 = vmatpush1.msra.mxu0 0.0
        %5058 = vmatprep.subr.mxu0 0.0
        %5059 = vmatpush1.msra.mxu0 0.0
        %5060 = vmatprep.mubr.f32.mxu0 0.0
        %5061 = vmatmul.mubr.f32.gmra.mrb[0].mxu0 %v4991
        %v5062 = vpop.f32.mrb[0].mxu0
        %v5063 = vadd.f32 0.0, %v5062
        %v5064 = vpop.f32.mrb[0].mxu0
        %5065 = vmatprep.mubr.f32.mxu0 0.0
        %5066 = vmatmul.mubr.f32.gmra.mrb[0].mxu0 %v4994
        %v5067 = vpop.f32.mrb[0].mxu0
        %v5068 = vadd.f32 0.0, %v5067
        %v5069 = vpop.f32.mrb[0].mxu0
        %5070 = vdwg.mxu0
        %v5071 = vpack.c.bf16 %v5068, %v5063
        %5072 = vmatprep.subr.bf16.mxu0 0
        %5073 = vmatpush1.bf16.msra.mxu0 %v506
        %5074 = vmatprep.subr.bf16.mxu0 0
        %5075 = vmatpush1.bf16.msra.mxu0 %v507
        %5076 = vmatprep.subr.bf16.mxu0 0
        %5077 = vmatpush1.bf16.msra.mxu0 %v508
        %5078 = vmatprep.subr.bf16.mxu0 0
        %5079 = vmatpush1.bf16.msra.mxu0 %v509
        %5080 = vmatprep.subr.bf16.mxu0 0
        %5081 = vmatpush1.bf16.msra.mxu0 %v510
        %5082 = vmatprep.subr.bf16.mxu0 0
        %5083 = vmatpush1.bf16.msra.mxu0 %v511
        %5084 = vmatprep.subr.bf16.mxu0 0
        %5085 = vmatpush1.bf16.msra.mxu0 %v512
        %5086 = vmatprep.subr.bf16.mxu0 0
        %5087 = vmatpush1.bf16.msra.mxu0 %v513
        %5088 = vmatprep.subr.bf16.mxu0 0
        %5089 = vmatpush1.bf16.msra.mxu0 0
        %5090 = vmatprep.subr.bf16.mxu0 0
        %5091 = vmatpush1.bf16.msra.mxu0 0
        %5092 = vmatprep.subr.bf16.mxu0 0
        %5093 = vmatpush1.bf16.msra.mxu0 0
        %5094 = vmatprep.subr.bf16.mxu0 0
        %5095 = vmatpush1.bf16.msra.mxu0 0
        %5096 = vmatprep.subr.bf16.mxu0 0
        %5097 = vmatpush1.bf16.msra.mxu0 0
        %5098 = vmatprep.subr.bf16.mxu0 0
        %5099 = vmatpush1.bf16.msra.mxu0 0
        %5100 = vmatprep.subr.bf16.mxu0 0
        %5101 = vmatpush1.bf16.msra.mxu0 0
        %5102 = vmatprep.subr.bf16.mxu0 0
        %5103 = vmatpush1.bf16.msra.mxu0 0
        %5104 = vmatprep.mubr.bf16.mxu0 0
        %5105 = vmatmul.mubr.bf16.gmra.mrb[0].mxu0 %v5071
        %v5106 = vpop.f32.mrb[0].mxu0
        %v5107 = vadd.f32 %v472, %v5106
        %v5108 = vpop.f32.mrb[0].mxu0
        %v5109 = vpop.f32.mrb[0].mxu0
        %v5110 = vadd.f32 %v472, %v5109
        %v5111 = vpop.f32.mrb[0].mxu0
        %5112 = vdwg.mxu0
        %v5113 = vmax.f32 %v5107, 0.0
        %v5114 = vmax.f32 %v5110, 0.0
        %5115 = vmatprep.subr.mxu0 0.0
        %5116 = vmatpush1.msra.mxu0 %v5113
        %5117 = vmatprep.subr.mxu0 0.0
        %5118 = vmatpush1.msra.mxu0 %v5114
        %5119 = vmatprep.subr.mxu0 0.0
        %5120 = vmatpush1.msra.mxu0 0.0
        %5121 = vmatprep.subr.mxu0 0.0
        %5122 = vmatpush1.msra.mxu0 0.0
        %5123 = vmatprep.subr.mxu0 0.0
        %5124 = vmatpush1.msra.mxu0 0.0
        %5125 = vmatprep.subr.mxu0 0.0
        %5126 = vmatpush1.msra.mxu0 0.0
        %5127 = vmatprep.subr.mxu0 0.0
        %5128 = vmatpush1.msra.mxu0 0.0
        %5129 = vmatprep.subr.mxu0 0.0
        %5130 = vmatpush1.msra.mxu0 0.0
        %5131 = vmatprep.subr.mxu0 0.0
        %5132 = vmatpush1.msra.mxu0 0.0
        %5133 = vmatprep.subr.mxu0 0.0
        %5134 = vmatpush1.msra.mxu0 0.0
        %5135 = vmatprep.subr.mxu0 0.0
        %5136 = vmatpush1.msra.mxu0 0.0
        %5137 = vmatprep.subr.mxu0 0.0
        %5138 = vmatpush1.msra.mxu0 0.0
        %5139 = vmatprep.subr.mxu0 0.0
        %5140 = vmatpush1.msra.mxu0 0.0
        %5141 = vmatprep.subr.mxu0 0.0
        %5142 = vmatpush1.msra.mxu0 0.0
        %5143 = vmatprep.subr.mxu0 0.0
        %5144 = vmatpush1.msra.mxu0 0.0
        %5145 = vmatprep.subr.mxu0 0.0
        %5146 = vmatpush1.msra.mxu0 0.0
        %5147 = vmatprep.subr.mxu0 0.0
        %5148 = vmatpush1.msra.mxu0 0.0
        %5149 = vmatprep.subr.mxu0 0.0
        %5150 = vmatpush1.msra.mxu0 0.0
        %5151 = vmatprep.subr.mxu0 0.0
        %5152 = vmatpush1.msra.mxu0 0.0
        %5153 = vmatprep.subr.mxu0 0.0
        %5154 = vmatpush1.msra.mxu0 0.0
        %5155 = vmatprep.subr.mxu0 0.0
        %5156 = vmatpush1.msra.mxu0 0.0
        %5157 = vmatprep.subr.mxu0 0.0
        %5158 = vmatpush1.msra.mxu0 0.0
        %5159 = vmatprep.subr.mxu0 0.0
        %5160 = vmatpush1.msra.mxu0 0.0
        %5161 = vmatprep.subr.mxu0 0.0
        %5162 = vmatpush1.msra.mxu0 0.0
        %5163 = vmatprep.subr.mxu0 0.0
        %5164 = vmatpush1.msra.mxu0 0.0
        %5165 = vmatprep.subr.mxu0 0.0
        %5166 = vmatpush1.msra.mxu0 0.0
        %5167 = vmatprep.subr.mxu0 0.0
        %5168 = vmatpush1.msra.mxu0 0.0
        %5169 = vmatprep.subr.mxu0 0.0
        %5170 = vmatpush1.msra.mxu0 0.0
        %5171 = vmatprep.subr.mxu0 0.0
        %5172 = vmatpush1.msra.mxu0 0.0
        %5173 = vmatprep.subr.mxu0 0.0
        %5174 = vmatpush1.msra.mxu0 0.0
        %5175 = vmatprep.subr.mxu0 0.0
        %5176 = vmatpush1.msra.mxu0 0.0
        %5177 = vmatprep.subr.mxu0 0.0
        %5178 = vmatpush1.msra.mxu0 0.0
        %5179 = vmatprep.mubr.f32.mxu0 0.0
        %5180 = vmatmul.mubr.f32.gmra.mrb[0].mxu0 %v4991
        %v5181 = vpop.f32.mrb[0].mxu0
        %v5182 = vadd.f32 0.0, %v5181
        %v5183 = vpop.f32.mrb[0].mxu0
        %5184 = vmatprep.mubr.f32.mxu0 0.0
        %5185 = vmatmul.mubr.f32.gmra.mrb[0].mxu0 %v4994
        %v5186 = vpop.f32.mrb[0].mxu0
        %v5187 = vadd.f32 0.0, %v5186
        %v5188 = vpop.f32.mrb[0].mxu0
        %5189 = vdwg.mxu0
        %v5190 = vpack.c.bf16 %v5187, %v5182
        %5191 = vmatprep.subr.bf16.mxu0 0
        %5192 = vmatpush1.bf16.msra.mxu0 %v690
        %5193 = vmatprep.subr.bf16.mxu0 0
        %5194 = vmatpush1.bf16.msra.mxu0 %v691
        %5195 = vmatprep.subr.bf16.mxu0 0
        %5196 = vmatpush1.bf16.msra.mxu0 %v692
        %5197 = vmatprep.subr.bf16.mxu0 0
        %5198 = vmatpush1.bf16.msra.mxu0 %v693
        %5199 = vmatprep.subr.bf16.mxu0 0
        %5200 = vmatpush1.bf16.msra.mxu0 %v694
        %5201 = vmatprep.subr.bf16.mxu0 0
        %5202 = vmatpush1.bf16.msra.mxu0 %v695
        %5203 = vmatprep.subr.bf16.mxu0 0
        %5204 = vmatpush1.bf16.msra.mxu0 %v696
        %5205 = vmatprep.subr.bf16.mxu0 0
        %5206 = vmatpush1.bf16.msra.mxu0 %v697
        %5207 = vmatprep.subr.bf16.mxu0 0
        %5208 = vmatpush1.bf16.msra.mxu0 0
        %5209 = vmatprep.subr.bf16.mxu0 0
        %5210 = vmatpush1.bf16.msra.mxu0 0
        %5211 = vmatprep.subr.bf16.mxu0 0
        %5212 = vmatpush1.bf16.msra.mxu0 0
        %5213 = vmatprep.subr.bf16.mxu0 0
        %5214 = vmatpush1.bf16.msra.mxu0 0
        %5215 = vmatprep.subr.bf16.mxu0 0
        %5216 = vmatpush1.bf16.msra.mxu0 0
        %5217 = vmatprep.subr.bf16.mxu0 0
        %5218 = vmatpush1.bf16.msra.mxu0 0
        %5219 = vmatprep.subr.bf16.mxu0 0
        %5220 = vmatpush1.bf16.msra.mxu0 0
        %5221 = vmatprep.subr.bf16.mxu0 0
        %5222 = vmatpush1.bf16.msra.mxu0 0
        %5223 = vmatprep.mubr.bf16.mxu0 0
        %5224 = vmatmul.mubr.bf16.gmra.mrb[0].mxu0 %v5190
        %v5225 = vpop.f32.mrb[0].mxu0
        %v5226 = vadd.f32 0.0, %v5225
        %v5227 = vpop.f32.mrb[0].mxu0
        %v5228 = vpop.f32.mrb[0].mxu0
        %v5229 = vadd.f32 0.0, %v5228
        %v5230 = vpop.f32.mrb[0].mxu0
        %5231 = vdwg.mxu0
        %v5232 = vadd.f32 %v5226, %v5229
        %v5233 = vrot.slane %v5232, 4
        %v5234 = vadd.f32 %v5232, %v5233
        %v5235 = vrot.slane %v5234, 2
        %v5236 = vadd.f32 %v5234, %v5235
        %v5237 = vrot.slane %v5236, 1
        %v5238 = vadd.f32 %v5236, %v5237
        %v5239 = vmul.f32 %v5238, %v754
        %v5240 = vmul.f32 %v5226, %v5226
        %v5241 = vmul.f32 %v5229, %v5229
        %v5242 = vadd.f32 %v5240, %v5241
        %v5243 = vrot.slane %v5242, 4
        %v5244 = vadd.f32 %v5242, %v5243
        %v5245 = vrot.slane %v5244, 2
        %v5246 = vadd.f32 %v5244, %v5245
        %v5247 = vrot.slane %v5246, 1
        %v5248 = vadd.f32 %v5246, %v5247
        %v5249 = vmul.f32 %v5248, %v754
        %v5250 = vmul.f32 %v5239, %v5239
        %v5251 = vsub.f32 %v5249, %v5250
        %v5252 = vmax.f32 %v5251, 0.0
        %v5253 = vadd.f32 %v5252, 1e-05
        %v5254 = vrsqrt.pop %v5253
        %v5255 = vmul.f32 %v770, %v5254
        %v5256 = vmul.f32 %v5239, %v5255
        %v5257 = vsub.f32 %v775, %v5256
        %v5259 = vlaneseq
        %v5260 = vshrl.u32 %v5259, 7
        %v5261 = vsub.s32 0, %v5260
        %v5262 = vrot.slane %v5255, %v5261
        %v5264 = vmul.f32 %v5226, %v5262
        %v5265 = vmul.f32 %v5229, %v5262
        %v5267 = vlaneseq
        %v5268 = vshrl.u32 %v5267, 7
        %v5269 = vsub.s32 0, %v5268
        %v5270 = vrot.slane %v5257, %v5269
        %v5272 = vadd.f32 %v5264, %v5270
        %v5273 = vadd.f32 %v5265, %v5270
        %v5274 = vmax.f32 %v5272, 0.0
        %v5275 = vmax.f32 %v5273, 0.0
        %5276 = vmatprep.subr.mxu0 0.0
        %5277 = vmatpush1.msra.mxu0 %v5274
        %5278 = vmatprep.subr.mxu0 0.0
        %5279 = vmatpush1.msra.mxu0 %v5275
        %5280 = vmatprep.subr.mxu0 0.0
        %5281 = vmatpush1.msra.mxu0 0.0
        %5282 = vmatprep.subr.mxu0 0.0
        %5283 = vmatpush1.msra.mxu0 0.0
        %5284 = vmatprep.subr.mxu0 0.0
        %5285 = vmatpush1.msra.mxu0 0.0
        %5286 = vmatprep.subr.mxu0 0.0
        %5287 = vmatpush1.msra.mxu0 0.0
        %5288 = vmatprep.subr.mxu0 0.0
        %5289 = vmatpush1.msra.mxu0 0.0
        %5290 = vmatprep.subr.mxu0 0.0
        %5291 = vmatpush1.msra.mxu0 0.0
        %5292 = vmatprep.subr.mxu0 0.0
        %5293 = vmatpush1.msra.mxu0 0.0
        %5294 = vmatprep.subr.mxu0 0.0
        %5295 = vmatpush1.msra.mxu0 0.0
        %5296 = vmatprep.subr.mxu0 0.0
        %5297 = vmatpush1.msra.mxu0 0.0
        %5298 = vmatprep.subr.mxu0 0.0
        %5299 = vmatpush1.msra.mxu0 0.0
        %5300 = vmatprep.subr.mxu0 0.0
        %5301 = vmatpush1.msra.mxu0 0.0
        %5302 = vmatprep.subr.mxu0 0.0
        %5303 = vmatpush1.msra.mxu0 0.0
        %5304 = vmatprep.subr.mxu0 0.0
        %5305 = vmatpush1.msra.mxu0 0.0
        %5306 = vmatprep.subr.mxu0 0.0
        %5307 = vmatpush1.msra.mxu0 0.0
        %5308 = vmatprep.subr.mxu0 0.0
        %5309 = vmatpush1.msra.mxu0 0.0
        %5310 = vmatprep.subr.mxu0 0.0
        %5311 = vmatpush1.msra.mxu0 0.0
        %5312 = vmatprep.subr.mxu0 0.0
        %5313 = vmatpush1.msra.mxu0 0.0
        %5314 = vmatprep.subr.mxu0 0.0
        %5315 = vmatpush1.msra.mxu0 0.0
        %5316 = vmatprep.subr.mxu0 0.0
        %5317 = vmatpush1.msra.mxu0 0.0
        %5318 = vmatprep.subr.mxu0 0.0
        %5319 = vmatpush1.msra.mxu0 0.0
        %5320 = vmatprep.subr.mxu0 0.0
        %5321 = vmatpush1.msra.mxu0 0.0
        %5322 = vmatprep.subr.mxu0 0.0
        %5323 = vmatpush1.msra.mxu0 0.0
        %5324 = vmatprep.subr.mxu0 0.0
        %5325 = vmatpush1.msra.mxu0 0.0
        %5326 = vmatprep.subr.mxu0 0.0
        %5327 = vmatpush1.msra.mxu0 0.0
        %5328 = vmatprep.subr.mxu0 0.0
        %5329 = vmatpush1.msra.mxu0 0.0
        %5330 = vmatprep.subr.mxu0 0.0
        %5331 = vmatpush1.msra.mxu0 0.0
        %5332 = vmatprep.subr.mxu0 0.0
        %5333 = vmatpush1.msra.mxu0 0.0
        %5334 = vmatprep.subr.mxu0 0.0
        %5335 = vmatpush1.msra.mxu0 0.0
        %5336 = vmatprep.subr.mxu0 0.0
        %5337 = vmatpush1.msra.mxu0 0.0
        %5338 = vmatprep.subr.mxu0 0.0
        %5339 = vmatpush1.msra.mxu0 0.0
        %5340 = vmatprep.mubr.f32.mxu0 0.0
        %5341 = vmatmul.mubr.f32.gmra.mrb[0].mxu0 %v4991
        %v5342 = vpop.f32.mrb[0].mxu0
        %v5343 = vadd.f32 0.0, %v5342
        %v5344 = vpop.f32.mrb[0].mxu0
        %5345 = vmatprep.mubr.f32.mxu0 0.0
        %5346 = vmatmul.mubr.f32.gmra.mrb[0].mxu0 %v4994
        %v5347 = vpop.f32.mrb[0].mxu0
        %v5348 = vadd.f32 0.0, %v5347
        %v5349 = vpop.f32.mrb[0].mxu0
        %5350 = vdwg.mxu0
        %v5351 = vpack.c.bf16 %v5348, %v5343
        %5352 = vmatprep.subr.bf16.mxu0 0
        %5353 = vmatpush1.bf16.msra.mxu0 %v921
        %5354 = vmatprep.subr.bf16.mxu0 0
        %5355 = vmatpush1.bf16.msra.mxu0 %v922
        %5356 = vmatprep.subr.bf16.mxu0 0
        %5357 = vmatpush1.bf16.msra.mxu0 %v923
        %5358 = vmatprep.subr.bf16.mxu0 0
        %5359 = vmatpush1.bf16.msra.mxu0 %v924
        %5360 = vmatprep.subr.bf16.mxu0 0
        %5361 = vmatpush1.bf16.msra.mxu0 %v925
        %5362 = vmatprep.subr.bf16.mxu0 0
        %5363 = vmatpush1.bf16.msra.mxu0 %v926
        %5364 = vmatprep.subr.bf16.mxu0 0
        %5365 = vmatpush1.bf16.msra.mxu0 %v927
        %5366 = vmatprep.subr.bf16.mxu0 0
        %5367 = vmatpush1.bf16.msra.mxu0 %v928
        %5368 = vmatprep.subr.bf16.mxu0 0
        %5369 = vmatpush1.bf16.msra.mxu0 0
        %5370 = vmatprep.subr.bf16.mxu0 0
        %5371 = vmatpush1.bf16.msra.mxu0 0
        %5372 = vmatprep.subr.bf16.mxu0 0
        %5373 = vmatpush1.bf16.msra.mxu0 0
        %5374 = vmatprep.subr.bf16.mxu0 0
        %5375 = vmatpush1.bf16.msra.mxu0 0
        %5376 = vmatprep.subr.bf16.mxu0 0
        %5377 = vmatpush1.bf16.msra.mxu0 0
        %5378 = vmatprep.subr.bf16.mxu0 0
        %5379 = vmatpush1.bf16.msra.mxu0 0
        %5380 = vmatprep.subr.bf16.mxu0 0
        %5381 = vmatpush1.bf16.msra.mxu0 0
        %5382 = vmatprep.subr.bf16.mxu0 0
        %5383 = vmatpush1.bf16.msra.mxu0 0
        %5384 = vmatprep.mubr.bf16.mxu0 0
        %5385 = vmatmul.mubr.bf16.gmra.mrb[0].mxu0 %v5351
        %v5386 = vpop.f32.mrb[0].mxu0
        %v5387 = vadd.f32 0.0, %v5386
        %v5388 = vpop.f32.mrb[0].mxu0
        %v5389 = vpop.f32.mrb[0].mxu0
        %v5390 = vadd.f32 0.0, %v5389
        %v5391 = vpop.f32.mrb[0].mxu0
        %5392 = vdwg.mxu0
        %v5393 = vadd.f32 %v5387, %v5390
        %v5394 = vrot.slane %v5393, 4
        %v5395 = vadd.f32 %v5393, %v5394
        %v5396 = vrot.slane %v5395, 2
        %v5397 = vadd.f32 %v5395, %v5396
        %v5398 = vrot.slane %v5397, 1
        %v5399 = vadd.f32 %v5397, %v5398
        %v5400 = vmul.f32 %v5399, %v754
        %v5401 = vmul.f32 %v5387, %v5387
        %v5402 = vmul.f32 %v5390, %v5390
        %v5403 = vadd.f32 %v5401, %v5402
        %v5404 = vrot.slane %v5403, 4
        %v5405 = vadd.f32 %v5403, %v5404
        %v5406 = vrot.slane %v5405, 2
        %v5407 = vadd.f32 %v5405, %v5406
        %v5408 = vrot.slane %v5407, 1
        %v5409 = vadd.f32 %v5407, %v5408
        %v5410 = vmul.f32 %v5409, %v754
        %v5411 = vmul.f32 %v5400, %v5400
        %v5412 = vsub.f32 %v5410, %v5411
        %v5413 = vmax.f32 %v5412, 0.0
        %v5414 = vadd.f32 %v5413, 1e-05
        %v5415 = vrsqrt.pop %v5414
        %v5416 = vmul.f32 %v1000, %v5415
        %v5417 = vmul.f32 %v5400, %v5416
        %v5418 = vsub.f32 %v1005, %v5417
        %v5420 = vlaneseq
        %v5421 = vshrl.u32 %v5420, 7
        %v5422 = vsub.s32 0, %v5421
        %v5423 = vrot.slane %v5416, %v5422
        %v5425 = vmul.f32 %v5387, %v5423
        %v5426 = vmul.f32 %v5390, %v5423
        %v5428 = vlaneseq
        %v5429 = vshrl.u32 %v5428, 7
        %v5430 = vsub.s32 0, %v5429
        %v5431 = vrot.slane %v5418, %v5430
        %v5433 = vadd.f32 %v5425, %v5431
        %v5434 = vadd.f32 %v5426, %v5431
        %v5435 = vmax.f32 %v5433, 0.0
        %v5436 = vmax.f32 %v5434, 0.0
        %v5437 = vadd.f32 %v5435, %v5113
        %v5438 = vadd.f32 %v5436, %v5114
        %5439 = vmatprep.subr.mxu0 0.0
        %5440 = vmatpush1.msra.mxu0 %v5437
        %5441 = vmatprep.subr.mxu0 0.0
        %5442 = vmatpush1.msra.mxu0 %v5438
        %5443 = vmatprep.subr.mxu0 0.0
        %5444 = vmatpush1.msra.mxu0 0.0
        %5445 = vmatprep.subr.mxu0 0.0
        %5446 = vmatpush1.msra.mxu0 0.0
        %5447 = vmatprep.subr.mxu0 0.0
        %5448 = vmatpush1.msra.mxu0 0.0
        %5449 = vmatprep.subr.mxu0 0.0
        %5450 = vmatpush1.msra.mxu0 0.0
        %5451 = vmatprep.subr.mxu0 0.0
        %5452 = vmatpush1.msra.mxu0 0.0
        %5453 = vmatprep.subr.mxu0 0.0
        %5454 = vmatpush1.msra.mxu0 0.0
        %5455 = vmatprep.subr.mxu0 0.0
        %5456 = vmatpush1.msra.mxu0 0.0
        %5457 = vmatprep.subr.mxu0 0.0
        %5458 = vmatpush1.msra.mxu0 0.0
        %5459 = vmatprep.subr.mxu0 0.0
        %5460 = vmatpush1.msra.mxu0 0.0
        %5461 = vmatprep.subr.mxu0 0.0
        %5462 = vmatpush1.msra.mxu0 0.0
        %5463 = vmatprep.subr.mxu0 0.0
        %5464 = vmatpush1.msra.mxu0 0.0
        %5465 = vmatprep.subr.mxu0 0.0
        %5466 = vmatpush1.msra.mxu0 0.0
        %5467 = vmatprep.subr.mxu0 0.0
        %5468 = vmatpush1.msra.mxu0 0.0
        %5469 = vmatprep.subr.mxu0 0.0
        %5470 = vmatpush1.msra.mxu0 0.0
        %5471 = vmatprep.subr.mxu0 0.0
        %5472 = vmatpush1.msra.mxu0 0.0
        %5473 = vmatprep.subr.mxu0 0.0
        %5474 = vmatpush1.msra.mxu0 0.0
        %5475 = vmatprep.subr.mxu0 0.0
        %5476 = vmatpush1.msra.mxu0 0.0
        %5477 = vmatprep.subr.mxu0 0.0
        %5478 = vmatpush1.msra.mxu0 0.0
        %5479 = vmatprep.subr.mxu0 0.0
        %5480 = vmatpush1.msra.mxu0 0.0
        %5481 = vmatprep.subr.mxu0 0.0
        %5482 = vmatpush1.msra.mxu0 0.0
        %5483 = vmatprep.subr.mxu0 0.0
        %5484 = vmatpush1.msra.mxu0 0.0
        %5485 = vmatprep.subr.mxu0 0.0
        %5486 = vmatpush1.msra.mxu0 0.0
        %5487 = vmatprep.subr.mxu0 0.0
        %5488 = vmatpush1.msra.mxu0 0.0
        %5489 = vmatprep.subr.mxu0 0.0
        %5490 = vmatpush1.msra.mxu0 0.0
        %5491 = vmatprep.subr.mxu0 0.0
        %5492 = vmatpush1.msra.mxu0 0.0
        %5493 = vmatprep.subr.mxu0 0.0
        %5494 = vmatpush1.msra.mxu0 0.0
        %5495 = vmatprep.subr.mxu0 0.0
        %5496 = vmatpush1.msra.mxu0 0.0
        %5497 = vmatprep.subr.mxu0 0.0
        %5498 = vmatpush1.msra.mxu0 0.0
        %5499 = vmatprep.subr.mxu0 0.0
        %5500 = vmatpush1.msra.mxu0 0.0
        %5501 = vmatprep.subr.mxu0 0.0
        %5502 = vmatpush1.msra.mxu0 0.0
        %5503 = vmatprep.mubr.f32.mxu0 0.0
        %5504 = vmatmul.mubr.f32.gmra.mrb[0].mxu0 %v4991
        %v5505 = vpop.f32.mrb[0].mxu0
        %v5506 = vadd.f32 0.0, %v5505
        %v5507 = vpop.f32.mrb[0].mxu0
        %5508 = vmatprep.mubr.f32.mxu0 0.0
        %5509 = vmatmul.mubr.f32.gmra.mrb[0].mxu0 %v4994
        %v5510 = vpop.f32.mrb[0].mxu0
        %v5511 = vadd.f32 0.0, %v5510
        %v5512 = vpop.f32.mrb[0].mxu0
        %5513 = vdwg.mxu0
        %v5514 = vpack.c.bf16 %v5511, %v5506
        %5515 = vmatprep.subr.bf16.mxu0 0
        %5516 = vmatpush1.bf16.msra.mxu0 %v1153
        %5517 = vmatprep.subr.bf16.mxu0 0
        %5518 = vmatpush1.bf16.msra.mxu0 %v1154
        %5519 = vmatprep.subr.bf16.mxu0 0
        %5520 = vmatpush1.bf16.msra.mxu0 %v1155
        %5521 = vmatprep.subr.bf16.mxu0 0
        %5522 = vmatpush1.bf16.msra.mxu0 %v1156
        %5523 = vmatprep.subr.bf16.mxu0 0
        %5524 = vmatpush1.bf16.msra.mxu0 %v1157
        %5525 = vmatprep.subr.bf16.mxu0 0
        %5526 = vmatpush1.bf16.msra.mxu0 %v1158
        %5527 = vmatprep.subr.bf16.mxu0 0
        %5528 = vmatpush1.bf16.msra.mxu0 %v1159
        %5529 = vmatprep.subr.bf16.mxu0 0
        %5530 = vmatpush1.bf16.msra.mxu0 %v1160
        %5531 = vmatprep.subr.bf16.mxu0 0
        %5532 = vmatpush1.bf16.msra.mxu0 0
        %5533 = vmatprep.subr.bf16.mxu0 0
        %5534 = vmatpush1.bf16.msra.mxu0 0
        %5535 = vmatprep.subr.bf16.mxu0 0
        %5536 = vmatpush1.bf16.msra.mxu0 0
        %5537 = vmatprep.subr.bf16.mxu0 0
        %5538 = vmatpush1.bf16.msra.mxu0 0
        %5539 = vmatprep.subr.bf16.mxu0 0
        %5540 = vmatpush1.bf16.msra.mxu0 0
        %5541 = vmatprep.subr.bf16.mxu0 0
        %5542 = vmatpush1.bf16.msra.mxu0 0
        %5543 = vmatprep.subr.bf16.mxu0 0
        %5544 = vmatpush1.bf16.msra.mxu0 0
        %5545 = vmatprep.subr.bf16.mxu0 0
        %5546 = vmatpush1.bf16.msra.mxu0 0
        %5547 = vmatprep.mubr.bf16.mxu0 0
        %5548 = vmatmul.mubr.bf16.gmra.mrb[0].mxu0 %v5514
        %v5549 = vpop.f32.mrb[0].mxu0
        %v5550 = vadd.f32 0.0, %v5549
        %v5551 = vpop.f32.mrb[0].mxu0
        %v5552 = vpop.f32.mrb[0].mxu0
        %v5553 = vadd.f32 0.0, %v5552
        %v5554 = vpop.f32.mrb[0].mxu0
        %5555 = vdwg.mxu0
        %v5556 = vadd.f32 %v5550, %v5553
        %v5557 = vrot.slane %v5556, 4
        %v5558 = vadd.f32 %v5556, %v5557
        %v5559 = vrot.slane %v5558, 2
        %v5560 = vadd.f32 %v5558, %v5559
        %v5561 = vrot.slane %v5560, 1
        %v5562 = vadd.f32 %v5560, %v5561
        %v5563 = vmul.f32 %v5562, %v754
        %v5564 = vmul.f32 %v5550, %v5550
        %v5565 = vmul.f32 %v5553, %v5553
        %v5566 = vadd.f32 %v5564, %v5565
        %v5567 = vrot.slane %v5566, 4
        %v5568 = vadd.f32 %v5566, %v5567
        %v5569 = vrot.slane %v5568, 2
        %v5570 = vadd.f32 %v5568, %v5569
        %v5571 = vrot.slane %v5570, 1
        %v5572 = vadd.f32 %v5570, %v5571
        %v5573 = vmul.f32 %v5572, %v754
        %v5574 = vmul.f32 %v5563, %v5563
        %v5575 = vsub.f32 %v5573, %v5574
        %v5576 = vmax.f32 %v5575, 0.0
        %v5577 = vadd.f32 %v5576, 1e-05
        %v5578 = vrsqrt.pop %v5577
        %v5579 = vmul.f32 %v1232, %v5578
        %v5580 = vmul.f32 %v5563, %v5579
        %v5581 = vsub.f32 %v1237, %v5580
        %v5583 = vlaneseq
        %v5584 = vshrl.u32 %v5583, 7
        %v5585 = vsub.s32 0, %v5584
        %v5586 = vrot.slane %v5579, %v5585
        %v5588 = vmul.f32 %v5550, %v5586
        %v5589 = vmul.f32 %v5553, %v5586
        %v5591 = vlaneseq
        %v5592 = vshrl.u32 %v5591, 7
        %v5593 = vsub.s32 0, %v5592
        %v5594 = vrot.slane %v5581, %v5593
        %v5596 = vadd.f32 %v5588, %v5594
        %v5597 = vadd.f32 %v5589, %v5594
        %v5598 = vmax.f32 %v5596, 0.0
        %v5599 = vmax.f32 %v5597, 0.0
        %5600 = vmatprep.subr.mxu0 0.0
        %5601 = vmatpush1.msra.mxu0 %v5598
        %5602 = vmatprep.subr.mxu0 0.0
        %5603 = vmatpush1.msra.mxu0 %v5599
        %5604 = vmatprep.subr.mxu0 0.0
        %5605 = vmatpush1.msra.mxu0 0.0
        %5606 = vmatprep.subr.mxu0 0.0
        %5607 = vmatpush1.msra.mxu0 0.0
        %5608 = vmatprep.subr.mxu0 0.0
        %5609 = vmatpush1.msra.mxu0 0.0
        %5610 = vmatprep.subr.mxu0 0.0
        %5611 = vmatpush1.msra.mxu0 0.0
        %5612 = vmatprep.subr.mxu0 0.0
        %5613 = vmatpush1.msra.mxu0 0.0
        %5614 = vmatprep.subr.mxu0 0.0
        %5615 = vmatpush1.msra.mxu0 0.0
        %5616 = vmatprep.subr.mxu0 0.0
        %5617 = vmatpush1.msra.mxu0 0.0
        %5618 = vmatprep.subr.mxu0 0.0
        %5619 = vmatpush1.msra.mxu0 0.0
        %5620 = vmatprep.subr.mxu0 0.0
        %5621 = vmatpush1.msra.mxu0 0.0
        %5622 = vmatprep.subr.mxu0 0.0
        %5623 = vmatpush1.msra.mxu0 0.0
        %5624 = vmatprep.subr.mxu0 0.0
        %5625 = vmatpush1.msra.mxu0 0.0
        %5626 = vmatprep.subr.mxu0 0.0
        %5627 = vmatpush1.msra.mxu0 0.0
        %5628 = vmatprep.subr.mxu0 0.0
        %5629 = vmatpush1.msra.mxu0 0.0
        %5630 = vmatprep.subr.mxu0 0.0
        %5631 = vmatpush1.msra.mxu0 0.0
        %5632 = vmatprep.subr.mxu0 0.0
        %5633 = vmatpush1.msra.mxu0 0.0
        %5634 = vmatprep.subr.mxu0 0.0
        %5635 = vmatpush1.msra.mxu0 0.0
        %5636 = vmatprep.subr.mxu0 0.0
        %5637 = vmatpush1.msra.mxu0 0.0
        %5638 = vmatprep.subr.mxu0 0.0
        %5639 = vmatpush1.msra.mxu0 0.0
        %5640 = vmatprep.subr.mxu0 0.0
        %5641 = vmatpush1.msra.mxu0 0.0
        %5642 = vmatprep.subr.mxu0 0.0
        %5643 = vmatpush1.msra.mxu0 0.0
        %5644 = vmatprep.subr.mxu0 0.0
        %5645 = vmatpush1.msra.mxu0 0.0
        %5646 = vmatprep.subr.mxu0 0.0
        %5647 = vmatpush1.msra.mxu0 0.0
        %5648 = vmatprep.subr.mxu0 0.0
        %5649 = vmatpush1.msra.mxu0 0.0
        %5650 = vmatprep.subr.mxu0 0.0
        %5651 = vmatpush1.msra.mxu0 0.0
        %5652 = vmatprep.subr.mxu0 0.0
        %5653 = vmatpush1.msra.mxu0 0.0
        %5654 = vmatprep.subr.mxu0 0.0
        %5655 = vmatpush1.msra.mxu0 0.0
        %5656 = vmatprep.subr.mxu0 0.0
        %5657 = vmatpush1.msra.mxu0 0.0
        %5658 = vmatprep.subr.mxu0 0.0
        %5659 = vmatpush1.msra.mxu0 0.0
        %5660 = vmatprep.subr.mxu0 0.0
        %5661 = vmatpush1.msra.mxu0 0.0
        %5662 = vmatprep.subr.mxu0 0.0
        %5663 = vmatpush1.msra.mxu0 0.0
        %5664 = vmatprep.mubr.f32.mxu0 0.0
        %5665 = vmatmul.mubr.f32.gmra.mrb[0].mxu0 %v4991
        %v5666 = vpop.f32.mrb[0].mxu0
        %v5667 = vadd.f32 0.0, %v5666
        %v5668 = vpop.f32.mrb[0].mxu0
        %5669 = vmatprep.mubr.f32.mxu0 0.0
        %5670 = vmatmul.mubr.f32.gmra.mrb[0].mxu0 %v4994
        %v5671 = vpop.f32.mrb[0].mxu0
        %v5672 = vadd.f32 0.0, %v5671
        %v5673 = vpop.f32.mrb[0].mxu0
        %5674 = vdwg.mxu0
        %v5675 = vpack.c.bf16 %v5672, %v5667
        %5676 = vmatprep.subr.bf16.mxu0 0
        %5677 = vmatpush1.bf16.msra.mxu0 %v1383
        %5678 = vmatprep.subr.bf16.mxu0 0
        %5679 = vmatpush1.bf16.msra.mxu0 %v1384
        %5680 = vmatprep.subr.bf16.mxu0 0
        %5681 = vmatpush1.bf16.msra.mxu0 %v1385
        %5682 = vmatprep.subr.bf16.mxu0 0
        %5683 = vmatpush1.bf16.msra.mxu0 %v1386
        %5684 = vmatprep.subr.bf16.mxu0 0
        %5685 = vmatpush1.bf16.msra.mxu0 %v1387
        %5686 = vmatprep.subr.bf16.mxu0 0
        %5687 = vmatpush1.bf16.msra.mxu0 %v1388
        %5688 = vmatprep.subr.bf16.mxu0 0
        %5689 = vmatpush1.bf16.msra.mxu0 %v1389
        %5690 = vmatprep.subr.bf16.mxu0 0
        %5691 = vmatpush1.bf16.msra.mxu0 %v1390
        %5692 = vmatprep.subr.bf16.mxu0 0
        %5693 = vmatpush1.bf16.msra.mxu0 0
        %5694 = vmatprep.subr.bf16.mxu0 0
        %5695 = vmatpush1.bf16.msra.mxu0 0
        %5696 = vmatprep.subr.bf16.mxu0 0
        %5697 = vmatpush1.bf16.msra.mxu0 0
        %5698 = vmatprep.subr.bf16.mxu0 0
        %5699 = vmatpush1.bf16.msra.mxu0 0
        %5700 = vmatprep.subr.bf16.mxu0 0
        %5701 = vmatpush1.bf16.msra.mxu0 0
        %5702 = vmatprep.subr.bf16.mxu0 0
        %5703 = vmatpush1.bf16.msra.mxu0 0
        %5704 = vmatprep.subr.bf16.mxu0 0
        %5705 = vmatpush1.bf16.msra.mxu0 0
        %5706 = vmatprep.subr.bf16.mxu0 0
        %5707 = vmatpush1.bf16.msra.mxu0 0
        %5708 = vmatprep.mubr.bf16.mxu0 0
        %5709 = vmatmul.mubr.bf16.gmra.mrb[0].mxu0 %v5675
        %v5710 = vpop.f32.mrb[0].mxu0
        %v5711 = vadd.f32 0.0, %v5710
        %v5712 = vpop.f32.mrb[0].mxu0
        %v5713 = vpop.f32.mrb[0].mxu0
        %v5714 = vadd.f32 0.0, %v5713
        %v5715 = vpop.f32.mrb[0].mxu0
        %5716 = vdwg.mxu0
        %v5717 = vadd.f32 %v5711, %v5714
        %v5718 = vrot.slane %v5717, 4
        %v5719 = vadd.f32 %v5717, %v5718
        %v5720 = vrot.slane %v5719, 2
        %v5721 = vadd.f32 %v5719, %v5720
        %v5722 = vrot.slane %v5721, 1
        %v5723 = vadd.f32 %v5721, %v5722
        %v5724 = vmul.f32 %v5723, %v754
        %v5725 = vmul.f32 %v5711, %v5711
        %v5726 = vmul.f32 %v5714, %v5714
        %v5727 = vadd.f32 %v5725, %v5726
        %v5728 = vrot.slane %v5727, 4
        %v5729 = vadd.f32 %v5727, %v5728
        %v5730 = vrot.slane %v5729, 2
        %v5731 = vadd.f32 %v5729, %v5730
        %v5732 = vrot.slane %v5731, 1
        %v5733 = vadd.f32 %v5731, %v5732
        %v5734 = vmul.f32 %v5733, %v754
        %v5735 = vmul.f32 %v5724, %v5724
        %v5736 = vsub.f32 %v5734, %v5735
        %v5737 = vmax.f32 %v5736, 0.0
        %v5738 = vadd.f32 %v5737, 1e-05
        %v5739 = vrsqrt.pop %v5738
        %v5740 = vmul.f32 %v1462, %v5739
        %v5741 = vmul.f32 %v5724, %v5740
        %v5742 = vsub.f32 %v1467, %v5741
        %v5744 = vlaneseq
        %v5745 = vshrl.u32 %v5744, 7
        %v5746 = vsub.s32 0, %v5745
        %v5747 = vrot.slane %v5740, %v5746
        %v5749 = vmul.f32 %v5711, %v5747
        %v5750 = vmul.f32 %v5714, %v5747
        %v5752 = vlaneseq
        %v5753 = vshrl.u32 %v5752, 7
        %v5754 = vsub.s32 0, %v5753
        %v5755 = vrot.slane %v5742, %v5754
        %v5757 = vadd.f32 %v5749, %v5755
        %v5758 = vadd.f32 %v5750, %v5755
        %v5759 = vmax.f32 %v5757, 0.0
        %v5760 = vmax.f32 %v5758, 0.0
        %5761 = vmatprep.subr.bf16.mxu0 0
        %5762 = vmatpush1.bf16.msra.mxu0 %v1537
        %5763 = vmatprep.subr.bf16.mxu0 0
        %5764 = vmatpush1.bf16.msra.mxu0 %v1538
        %5765 = vmatprep.subr.bf16.mxu0 0
        %5766 = vmatpush1.bf16.msra.mxu0 %v1539
        %5767 = vmatprep.subr.bf16.mxu0 0
        %5768 = vmatpush1.bf16.msra.mxu0 %v1540
        %5769 = vmatprep.subr.bf16.mxu0 0
        %5770 = vmatpush1.bf16.msra.mxu0 %v1541
        %5771 = vmatprep.subr.bf16.mxu0 0
        %5772 = vmatpush1.bf16.msra.mxu0 %v1542
        %5773 = vmatprep.subr.bf16.mxu0 0
        %5774 = vmatpush1.bf16.msra.mxu0 %v1543
        %5775 = vmatprep.subr.bf16.mxu0 0
        %5776 = vmatpush1.bf16.msra.mxu0 %v1544
        %5777 = vmatprep.subr.bf16.mxu0 0
        %5778 = vmatpush1.bf16.msra.mxu0 0
        %5779 = vmatprep.subr.bf16.mxu0 0
        %5780 = vmatpush1.bf16.msra.mxu0 0
        %5781 = vmatprep.subr.bf16.mxu0 0
        %5782 = vmatpush1.bf16.msra.mxu0 0
        %5783 = vmatprep.subr.bf16.mxu0 0
        %5784 = vmatpush1.bf16.msra.mxu0 0
        %5785 = vmatprep.subr.bf16.mxu0 0
        %5786 = vmatpush1.bf16.msra.mxu0 0
        %5787 = vmatprep.subr.bf16.mxu0 0
        %5788 = vmatpush1.bf16.msra.mxu0 0
        %5789 = vmatprep.subr.bf16.mxu0 0
        %5790 = vmatpush1.bf16.msra.mxu0 0
        %5791 = vmatprep.subr.bf16.mxu0 0
        %5792 = vmatpush1.bf16.msra.mxu0 0
        %5793 = vmatprep.mubr.bf16.mxu0 0
        %5794 = vmatmul.mubr.bf16.gmra.mrb[0].mxu0 %v5514
        %v5795 = vpop.f32.mrb[0].mxu0
        %v5796 = vadd.f32 0.0, %v5795
        %v5797 = vpop.f32.mrb[0].mxu0
        %v5798 = vpop.f32.mrb[0].mxu0
        %v5799 = vadd.f32 0.0, %v5798
        %v5800 = vpop.f32.mrb[0].mxu0
        %5801 = vdwg.mxu0
        %v5802 = vadd.f32 %v5796, %v5799
        %v5803 = vrot.slane %v5802, 4
        %v5804 = vadd.f32 %v5802, %v5803
        %v5805 = vrot.slane %v5804, 2
        %v5806 = vadd.f32 %v5804, %v5805
        %v5807 = vrot.slane %v5806, 1
        %v5808 = vadd.f32 %v5806, %v5807
        %v5809 = vmul.f32 %v5808, %v754
        %v5810 = vmul.f32 %v5796, %v5796
        %v5811 = vmul.f32 %v5799, %v5799
        %v5812 = vadd.f32 %v5810, %v5811
        %v5813 = vrot.slane %v5812, 4
        %v5814 = vadd.f32 %v5812, %v5813
        %v5815 = vrot.slane %v5814, 2
        %v5816 = vadd.f32 %v5814, %v5815
        %v5817 = vrot.slane %v5816, 1
        %v5818 = vadd.f32 %v5816, %v5817
        %v5819 = vmul.f32 %v5818, %v754
        %v5820 = vmul.f32 %v5809, %v5809
        %v5821 = vsub.f32 %v5819, %v5820
        %v5822 = vmax.f32 %v5821, 0.0
        %v5823 = vadd.f32 %v5822, 1e-05
        %v5824 = vrsqrt.pop %v5823
        %v5825 = vmul.f32 %v1616, %v5824
        %v5826 = vmul.f32 %v5809, %v5825
        %v5827 = vsub.f32 %v1621, %v5826
        %v5829 = vlaneseq
        %v5830 = vshrl.u32 %v5829, 7
        %v5831 = vsub.s32 0, %v5830
        %v5832 = vrot.slane %v5825, %v5831
        %v5834 = vmul.f32 %v5796, %v5832
        %v5835 = vmul.f32 %v5799, %v5832
        %v5837 = vlaneseq
        %v5838 = vshrl.u32 %v5837, 7
        %v5839 = vsub.s32 0, %v5838
        %v5840 = vrot.slane %v5827, %v5839
        %v5842 = vadd.f32 %v5834, %v5840
        %v5843 = vadd.f32 %v5835, %v5840
        %v5844 = vadd.f32 %v5759, %v5842
        %v5845 = vadd.f32 %v5760, %v5843
        %5846 = vmatprep.subr.mxu0 0.0
        %5847 = vmatpush1.msra.mxu0 %v5844
        %5848 = vmatprep.subr.mxu0 0.0
        %5849 = vmatpush1.msra.mxu0 %v5845
        %5850 = vmatprep.subr.mxu0 0.0
        %5851 = vmatpush1.msra.mxu0 0.0
        %5852 = vmatprep.subr.mxu0 0.0
        %5853 = vmatpush1.msra.mxu0 0.0
        %5854 = vmatprep.subr.mxu0 0.0
        %5855 = vmatpush1.msra.mxu0 0.0
        %5856 = vmatprep.subr.mxu0 0.0
        %5857 = vmatpush1.msra.mxu0 0.0
        %5858 = vmatprep.subr.mxu0 0.0
        %5859 = vmatpush1.msra.mxu0 0.0
        %5860 = vmatprep.subr.mxu0 0.0
        %5861 = vmatpush1.msra.mxu0 0.0
        %5862 = vmatprep.subr.mxu0 0.0
        %5863 = vmatpush1.msra.mxu0 0.0
        %5864 = vmatprep.subr.mxu0 0.0
        %5865 = vmatpush1.msra.mxu0 0.0
        %5866 = vmatprep.subr.mxu0 0.0
        %5867 = vmatpush1.msra.mxu0 0.0
        %5868 = vmatprep.subr.mxu0 0.0
        %5869 = vmatpush1.msra.mxu0 0.0
        %5870 = vmatprep.subr.mxu0 0.0
        %5871 = vmatpush1.msra.mxu0 0.0
        %5872 = vmatprep.subr.mxu0 0.0
        %5873 = vmatpush1.msra.mxu0 0.0
        %5874 = vmatprep.subr.mxu0 0.0
        %5875 = vmatpush1.msra.mxu0 0.0
        %5876 = vmatprep.subr.mxu0 0.0
        %5877 = vmatpush1.msra.mxu0 0.0
        %5878 = vmatprep.subr.mxu0 0.0
        %5879 = vmatpush1.msra.mxu0 0.0
        %5880 = vmatprep.subr.mxu0 0.0
        %5881 = vmatpush1.msra.mxu0 0.0
        %5882 = vmatprep.subr.mxu0 0.0
        %5883 = vmatpush1.msra.mxu0 0.0
        %5884 = vmatprep.subr.mxu0 0.0
        %5885 = vmatpush1.msra.mxu0 0.0
        %5886 = vmatprep.subr.mxu0 0.0
        %5887 = vmatpush1.msra.mxu0 0.0
        %5888 = vmatprep.subr.mxu0 0.0
        %5889 = vmatpush1.msra.mxu0 0.0
        %5890 = vmatprep.subr.mxu0 0.0
        %5891 = vmatpush1.msra.mxu0 0.0
        %5892 = vmatprep.subr.mxu0 0.0
        %5893 = vmatpush1.msra.mxu0 0.0
        %5894 = vmatprep.subr.mxu0 0.0
        %5895 = vmatpush1.msra.mxu0 0.0
        %5896 = vmatprep.subr.mxu0 0.0
        %5897 = vmatpush1.msra.mxu0 0.0
        %5898 = vmatprep.subr.mxu0 0.0
        %5899 = vmatpush1.msra.mxu0 0.0
        %5900 = vmatprep.subr.mxu0 0.0
        %5901 = vmatpush1.msra.mxu0 0.0
        %5902 = vmatprep.subr.mxu0 0.0
        %5903 = vmatpush1.msra.mxu0 0.0
        %5904 = vmatprep.subr.mxu0 0.0
        %5905 = vmatpush1.msra.mxu0 0.0
        %5906 = vmatprep.subr.mxu0 0.0
        %5907 = vmatpush1.msra.mxu0 0.0
        %5908 = vmatprep.subr.mxu0 0.0
        %5909 = vmatpush1.msra.mxu0 0.0
        %5910 = vmatprep.mubr.f32.mxu0 0.0
        %5911 = vmatmul.mubr.f32.gmra.mrb[0].mxu0 %v4991
        %v5912 = vpop.f32.mrb[0].mxu0
        %v5913 = vadd.f32 0.0, %v5912
        %v5914 = vpop.f32.mrb[0].mxu0
        %5915 = vmatprep.mubr.f32.mxu0 0.0
        %5916 = vmatmul.mubr.f32.gmra.mrb[0].mxu0 %v4994
        %v5917 = vpop.f32.mrb[0].mxu0
        %v5918 = vadd.f32 0.0, %v5917
        %v5919 = vpop.f32.mrb[0].mxu0
        %5920 = vdwg.mxu0
        %v5921 = vpack.c.bf16 %v5918, %v5913
        %5922 = vmatprep.subr.bf16.mxu0 0
        %5923 = vmatpush1.bf16.msra.mxu0 %v1767
        %5924 = vmatprep.subr.bf16.mxu0 0
        %5925 = vmatpush1.bf16.msra.mxu0 %v1768
        %5926 = vmatprep.subr.bf16.mxu0 0
        %5927 = vmatpush1.bf16.msra.mxu0 %v1769
        %5928 = vmatprep.subr.bf16.mxu0 0
        %5929 = vmatpush1.bf16.msra.mxu0 %v1770
        %5930 = vmatprep.subr.bf16.mxu0 0
        %5931 = vmatpush1.bf16.msra.mxu0 %v1771
        %5932 = vmatprep.subr.bf16.mxu0 0
        %5933 = vmatpush1.bf16.msra.mxu0 %v1772
        %5934 = vmatprep.subr.bf16.mxu0 0
        %5935 = vmatpush1.bf16.msra.mxu0 %v1773
        %5936 = vmatprep.subr.bf16.mxu0 0
        %5937 = vmatpush1.bf16.msra.mxu0 %v1774
        %5938 = vmatprep.subr.bf16.mxu0 0
        %5939 = vmatpush1.bf16.msra.mxu0 0
        %5940 = vmatprep.subr.bf16.mxu0 0
        %5941 = vmatpush1.bf16.msra.mxu0 0
        %5942 = vmatprep.subr.bf16.mxu0 0
        %5943 = vmatpush1.bf16.msra.mxu0 0
        %5944 = vmatprep.subr.bf16.mxu0 0
        %5945 = vmatpush1.bf16.msra.mxu0 0
        %5946 = vmatprep.subr.bf16.mxu0 0
        %5947 = vmatpush1.bf16.msra.mxu0 0
        %5948 = vmatprep.subr.bf16.mxu0 0
        %5949 = vmatpush1.bf16.msra.mxu0 0
        %5950 = vmatprep.subr.bf16.mxu0 0
        %5951 = vmatpush1.bf16.msra.mxu0 0
        %5952 = vmatprep.subr.bf16.mxu0 0
        %5953 = vmatpush1.bf16.msra.mxu0 0
        %5954 = vmatprep.mubr.bf16.mxu0 0
        %5955 = vmatmul.mubr.bf16.gmra.mrb[0].mxu0 %v5921
        %v5956 = vpop.f32.mrb[0].mxu0
        %v5957 = vadd.f32 0.0, %v5956
        %v5958 = vpop.f32.mrb[0].mxu0
        %v5959 = vpop.f32.mrb[0].mxu0
        %v5960 = vadd.f32 0.0, %v5959
        %v5961 = vpop.f32.mrb[0].mxu0
        %5962 = vdwg.mxu0
        %v5963 = vadd.f32 %v5957, %v5960
        %v5964 = vrot.slane %v5963, 4
        %v5965 = vadd.f32 %v5963, %v5964
        %v5966 = vrot.slane %v5965, 2
        %v5967 = vadd.f32 %v5965, %v5966
        %v5968 = vrot.slane %v5967, 1
        %v5969 = vadd.f32 %v5967, %v5968
        %v5970 = vmul.f32 %v5969, %v754
        %v5971 = vmul.f32 %v5957, %v5957
        %v5972 = vmul.f32 %v5960, %v5960
        %v5973 = vadd.f32 %v5971, %v5972
        %v5974 = vrot.slane %v5973, 4
        %v5975 = vadd.f32 %v5973, %v5974
        %v5976 = vrot.slane %v5975, 2
        %v5977 = vadd.f32 %v5975, %v5976
        %v5978 = vrot.slane %v5977, 1
        %v5979 = vadd.f32 %v5977, %v5978
        %v5980 = vmul.f32 %v5979, %v754
        %v5981 = vmul.f32 %v5970, %v5970
        %v5982 = vsub.f32 %v5980, %v5981
        %v5983 = vmax.f32 %v5982, 0.0
        %v5984 = vadd.f32 %v5983, 1e-05
        %v5985 = vrsqrt.pop %v5984
        %v5986 = vmul.f32 %v1846, %v5985
        %v5987 = vmul.f32 %v5970, %v5986
        %v5988 = vsub.f32 %v1851, %v5987
        %v5990 = vlaneseq
        %v5991 = vshrl.u32 %v5990, 7
        %v5992 = vsub.s32 0, %v5991
        %v5993 = vrot.slane %v5986, %v5992
        %v5995 = vmul.f32 %v5957, %v5993
        %v5996 = vmul.f32 %v5960, %v5993
        %v5998 = vlaneseq
        %v5999 = vshrl.u32 %v5998, 7
        %v6000 = vsub.s32 0, %v5999
        %v6001 = vrot.slane %v5988, %v6000
        %v6003 = vadd.f32 %v5995, %v6001
        %v6004 = vadd.f32 %v5996, %v6001
        %v6005 = vmax.f32 %v6003, 0.0
        %v6006 = vmax.f32 %v6004, 0.0
        %6007 = vmatprep.subr.mxu0 0.0
        %6008 = vmatpush1.msra.mxu0 %v6005
        %6009 = vmatprep.subr.mxu0 0.0
        %6010 = vmatpush1.msra.mxu0 %v6006
        %6011 = vmatprep.subr.mxu0 0.0
        %6012 = vmatpush1.msra.mxu0 0.0
        %6013 = vmatprep.subr.mxu0 0.0
        %6014 = vmatpush1.msra.mxu0 0.0
        %6015 = vmatprep.subr.mxu0 0.0
        %6016 = vmatpush1.msra.mxu0 0.0
        %6017 = vmatprep.subr.mxu0 0.0
        %6018 = vmatpush1.msra.mxu0 0.0
        %6019 = vmatprep.subr.mxu0 0.0
        %6020 = vmatpush1.msra.mxu0 0.0
        %6021 = vmatprep.subr.mxu0 0.0
        %6022 = vmatpush1.msra.mxu0 0.0
        %6023 = vmatprep.subr.mxu0 0.0
        %6024 = vmatpush1.msra.mxu0 0.0
        %6025 = vmatprep.subr.mxu0 0.0
        %6026 = vmatpush1.msra.mxu0 0.0
        %6027 = vmatprep.subr.mxu0 0.0
        %6028 = vmatpush1.msra.mxu0 0.0
        %6029 = vmatprep.subr.mxu0 0.0
        %6030 = vmatpush1.msra.mxu0 0.0
        %6031 = vmatprep.subr.mxu0 0.0
        %6032 = vmatpush1.msra.mxu0 0.0
        %6033 = vmatprep.subr.mxu0 0.0
        %6034 = vmatpush1.msra.mxu0 0.0
        %6035 = vmatprep.subr.mxu0 0.0
        %6036 = vmatpush1.msra.mxu0 0.0
        %6037 = vmatprep.subr.mxu0 0.0
        %6038 = vmatpush1.msra.mxu0 0.0
        %6039 = vmatprep.subr.mxu0 0.0
        %6040 = vmatpush1.msra.mxu0 0.0
        %6041 = vmatprep.subr.mxu0 0.0
        %6042 = vmatpush1.msra.mxu0 0.0
        %6043 = vmatprep.subr.mxu0 0.0
        %6044 = vmatpush1.msra.mxu0 0.0
        %6045 = vmatprep.subr.mxu0 0.0
        %6046 = vmatpush1.msra.mxu0 0.0
        %6047 = vmatprep.subr.mxu0 0.0
        %6048 = vmatpush1.msra.mxu0 0.0
        %6049 = vmatprep.subr.mxu0 0.0
        %6050 = vmatpush1.msra.mxu0 0.0
        %6051 = vmatprep.subr.mxu0 0.0
        %6052 = vmatpush1.msra.mxu0 0.0
        %6053 = vmatprep.subr.mxu0 0.0
        %6054 = vmatpush1.msra.mxu0 0.0
        %6055 = vmatprep.subr.mxu0 0.0
        %6056 = vmatpush1.msra.mxu0 0.0
        %6057 = vmatprep.subr.mxu0 0.0
        %6058 = vmatpush1.msra.mxu0 0.0
        %6059 = vmatprep.subr.mxu0 0.0
        %6060 = vmatpush1.msra.mxu0 0.0
        %6061 = vmatprep.subr.mxu0 0.0
        %6062 = vmatpush1.msra.mxu0 0.0
        %6063 = vmatprep.subr.mxu0 0.0
        %6064 = vmatpush1.msra.mxu0 0.0
        %6065 = vmatprep.subr.mxu0 0.0
        %6066 = vmatpush1.msra.mxu0 0.0
        %6067 = vmatprep.subr.mxu0 0.0
        %6068 = vmatpush1.msra.mxu0 0.0
        %6069 = vmatprep.subr.mxu0 0.0
        %6070 = vmatpush1.msra.mxu0 0.0
        %6071 = vmatprep.mubr.f32.mxu0 0.0
        %6072 = vmatmul.mubr.f32.gmra.mrb[0].mxu0 %v4991
        %v6073 = vpop.f32.mrb[0].mxu0
        %v6074 = vadd.f32 0.0, %v6073
        %v6075 = vpop.f32.mrb[0].mxu0
        %6076 = vmatprep.mubr.f32.mxu0 0.0
        %6077 = vmatmul.mubr.f32.gmra.mrb[0].mxu0 %v4994
        %v6078 = vpop.f32.mrb[0].mxu0
        %v6079 = vadd.f32 0.0, %v6078
        %v6080 = vpop.f32.mrb[0].mxu0
        %6081 = vdwg.mxu0
        %v6082 = vpack.c.bf16 %v6079, %v6074
        %6083 = vmatprep.subr.bf16.mxu0 0
        %6084 = vmatpush1.bf16.msra.mxu0 %v1997
        %6085 = vmatprep.subr.bf16.mxu0 0
        %6086 = vmatpush1.bf16.msra.mxu0 %v1998
        %6087 = vmatprep.subr.bf16.mxu0 0
        %6088 = vmatpush1.bf16.msra.mxu0 %v1999
        %6089 = vmatprep.subr.bf16.mxu0 0
        %6090 = vmatpush1.bf16.msra.mxu0 %v2000
        %6091 = vmatprep.subr.bf16.mxu0 0
        %6092 = vmatpush1.bf16.msra.mxu0 %v2001
        %6093 = vmatprep.subr.bf16.mxu0 0
        %6094 = vmatpush1.bf16.msra.mxu0 %v2002
        %6095 = vmatprep.subr.bf16.mxu0 0
        %6096 = vmatpush1.bf16.msra.mxu0 %v2003
        %6097 = vmatprep.subr.bf16.mxu0 0
        %6098 = vmatpush1.bf16.msra.mxu0 %v2004
        %6099 = vmatprep.subr.bf16.mxu0 0
        %6100 = vmatpush1.bf16.msra.mxu0 0
        %6101 = vmatprep.subr.bf16.mxu0 0
        %6102 = vmatpush1.bf16.msra.mxu0 0
        %6103 = vmatprep.subr.bf16.mxu0 0
        %6104 = vmatpush1.bf16.msra.mxu0 0
        %6105 = vmatprep.subr.bf16.mxu0 0
        %6106 = vmatpush1.bf16.msra.mxu0 0
        %6107 = vmatprep.subr.bf16.mxu0 0
        %6108 = vmatpush1.bf16.msra.mxu0 0
        %6109 = vmatprep.subr.bf16.mxu0 0
        %6110 = vmatpush1.bf16.msra.mxu0 0
        %6111 = vmatprep.subr.bf16.mxu0 0
        %6112 = vmatpush1.bf16.msra.mxu0 0
        %6113 = vmatprep.subr.bf16.mxu0 0
        %6114 = vmatpush1.bf16.msra.mxu0 0
        %6115 = vmatprep.mubr.bf16.mxu0 0
        %6116 = vmatmul.mubr.bf16.gmra.mrb[0].mxu0 %v6082
        %v6117 = vpop.f32.mrb[0].mxu0
        %v6118 = vadd.f32 0.0, %v6117
        %v6119 = vpop.f32.mrb[0].mxu0
        %v6120 = vpop.f32.mrb[0].mxu0
        %v6121 = vadd.f32 0.0, %v6120
        %v6122 = vpop.f32.mrb[0].mxu0
        %6123 = vdwg.mxu0
        %v6124 = vadd.f32 %v6118, %v6121
        %v6125 = vrot.slane %v6124, 4
        %v6126 = vadd.f32 %v6124, %v6125
        %v6127 = vrot.slane %v6126, 2
        %v6128 = vadd.f32 %v6126, %v6127
        %v6129 = vrot.slane %v6128, 1
        %v6130 = vadd.f32 %v6128, %v6129
        %v6131 = vmul.f32 %v6130, %v754
        %v6132 = vmul.f32 %v6118, %v6118
        %v6133 = vmul.f32 %v6121, %v6121
        %v6134 = vadd.f32 %v6132, %v6133
        %v6135 = vrot.slane %v6134, 4
        %v6136 = vadd.f32 %v6134, %v6135
        %v6137 = vrot.slane %v6136, 2
        %v6138 = vadd.f32 %v6136, %v6137
        %v6139 = vrot.slane %v6138, 1
        %v6140 = vadd.f32 %v6138, %v6139
        %v6141 = vmul.f32 %v6140, %v754
        %v6142 = vmul.f32 %v6131, %v6131
        %v6143 = vsub.f32 %v6141, %v6142
        %v6144 = vmax.f32 %v6143, 0.0
        %v6145 = vadd.f32 %v6144, 1e-05
        %v6146 = vrsqrt.pop %v6145
        %v6147 = vmul.f32 %v2076, %v6146
        %v6148 = vmul.f32 %v6131, %v6147
        %v6149 = vsub.f32 %v2081, %v6148
        %v6151 = vlaneseq
        %v6152 = vshrl.u32 %v6151, 7
        %v6153 = vsub.s32 0, %v6152
        %v6154 = vrot.slane %v6147, %v6153
        %v6156 = vmul.f32 %v6118, %v6154
        %v6157 = vmul.f32 %v6121, %v6154
        %v6159 = vlaneseq
        %v6160 = vshrl.u32 %v6159, 7
        %v6161 = vsub.s32 0, %v6160
        %v6162 = vrot.slane %v6149, %v6161
        %v6164 = vadd.f32 %v6156, %v6162
        %v6165 = vadd.f32 %v6157, %v6162
        %v6166 = vmax.f32 %v6164, 0.0
        %v6167 = vmax.f32 %v6165, 0.0
        %v6168 = vadd.f32 %v6166, %v5844
        %v6169 = vadd.f32 %v6167, %v5845
        %6170 = vmatprep.subr.mxu0 0.0
        %6171 = vmatpush1.msra.mxu0 %v6168
        %6172 = vmatprep.subr.mxu0 0.0
        %6173 = vmatpush1.msra.mxu0 %v6169
        %6174 = vmatprep.subr.mxu0 0.0
        %6175 = vmatpush1.msra.mxu0 0.0
        %6176 = vmatprep.subr.mxu0 0.0
        %6177 = vmatpush1.msra.mxu0 0.0
        %6178 = vmatprep.subr.mxu0 0.0
        %6179 = vmatpush1.msra.mxu0 0.0
        %6180 = vmatprep.subr.mxu0 0.0
        %6181 = vmatpush1.msra.mxu0 0.0
        %6182 = vmatprep.subr.mxu0 0.0
        %6183 = vmatpush1.msra.mxu0 0.0
        %6184 = vmatprep.subr.mxu0 0.0
        %6185 = vmatpush1.msra.mxu0 0.0
        %6186 = vmatprep.subr.mxu0 0.0
        %6187 = vmatpush1.msra.mxu0 0.0
        %6188 = vmatprep.subr.mxu0 0.0
        %6189 = vmatpush1.msra.mxu0 0.0
        %6190 = vmatprep.subr.mxu0 0.0
        %6191 = vmatpush1.msra.mxu0 0.0
        %6192 = vmatprep.subr.mxu0 0.0
        %6193 = vmatpush1.msra.mxu0 0.0
        %6194 = vmatprep.subr.mxu0 0.0
        %6195 = vmatpush1.msra.mxu0 0.0
        %6196 = vmatprep.subr.mxu0 0.0
        %6197 = vmatpush1.msra.mxu0 0.0
        %6198 = vmatprep.subr.mxu0 0.0
        %6199 = vmatpush1.msra.mxu0 0.0
        %6200 = vmatprep.subr.mxu0 0.0
        %6201 = vmatpush1.msra.mxu0 0.0
        %6202 = vmatprep.subr.mxu0 0.0
        %6203 = vmatpush1.msra.mxu0 0.0
        %6204 = vmatprep.subr.mxu0 0.0
        %6205 = vmatpush1.msra.mxu0 0.0
        %6206 = vmatprep.subr.mxu0 0.0
        %6207 = vmatpush1.msra.mxu0 0.0
        %6208 = vmatprep.subr.mxu0 0.0
        %6209 = vmatpush1.msra.mxu0 0.0
        %6210 = vmatprep.subr.mxu0 0.0
        %6211 = vmatpush1.msra.mxu0 0.0
        %6212 = vmatprep.subr.mxu0 0.0
        %6213 = vmatpush1.msra.mxu0 0.0
        %6214 = vmatprep.subr.mxu0 0.0
        %6215 = vmatpush1.msra.mxu0 0.0
        %6216 = vmatprep.subr.mxu0 0.0
        %6217 = vmatpush1.msra.mxu0 0.0
        %6218 = vmatprep.subr.mxu0 0.0
        %6219 = vmatpush1.msra.mxu0 0.0
        %6220 = vmatprep.subr.mxu0 0.0
        %6221 = vmatpush1.msra.mxu0 0.0
        %6222 = vmatprep.subr.mxu0 0.0
        %6223 = vmatpush1.msra.mxu0 0.0
        %6224 = vmatprep.subr.mxu0 0.0
        %6225 = vmatpush1.msra.mxu0 0.0
        %6226 = vmatprep.subr.mxu0 0.0
        %6227 = vmatpush1.msra.mxu0 0.0
        %6228 = vmatprep.subr.mxu0 0.0
        %6229 = vmatpush1.msra.mxu0 0.0
        %6230 = vmatprep.subr.mxu0 0.0
        %6231 = vmatpush1.msra.mxu0 0.0
        %6232 = vmatprep.subr.mxu0 0.0
        %6233 = vmatpush1.msra.mxu0 0.0
        %6234 = vmatprep.mubr.f32.mxu0 0.0
        %6235 = vmatmul.mubr.f32.gmra.mrb[0].mxu0 %v4991
        %v6236 = vpop.f32.mrb[0].mxu0
        %v6237 = vadd.f32 0.0, %v6236
        %v6238 = vpop.f32.mrb[0].mxu0
        %6239 = vmatprep.mubr.f32.mxu0 0.0
        %6240 = vmatmul.mubr.f32.gmra.mrb[0].mxu0 %v4994
        %v6241 = vpop.f32.mrb[0].mxu0
        %v6242 = vadd.f32 0.0, %v6241
        %v6243 = vpop.f32.mrb[0].mxu0
        %6244 = vdwg.mxu0
        %v6245 = vpack.c.bf16 %v6242, %v6237
        %6246 = vmatprep.subr.bf16.mxu0 0
        %6247 = vmatpush1.bf16.msra.mxu0 %v2237
        %6248 = vmatprep.subr.bf16.mxu0 0
        %6249 = vmatpush1.bf16.msra.mxu0 %v2238
        %6250 = vmatprep.subr.bf16.mxu0 0
        %6251 = vmatpush1.bf16.msra.mxu0 %v2239
        %6252 = vmatprep.subr.bf16.mxu0 0
        %6253 = vmatpush1.bf16.msra.mxu0 %v2240
        %6254 = vmatprep.subr.bf16.mxu0 0
        %6255 = vmatpush1.bf16.msra.mxu0 %v2241
        %6256 = vmatprep.subr.bf16.mxu0 0
        %6257 = vmatpush1.bf16.msra.mxu0 %v2242
        %6258 = vmatprep.subr.bf16.mxu0 0
        %6259 = vmatpush1.bf16.msra.mxu0 %v2243
        %6260 = vmatprep.subr.bf16.mxu0 0
        %6261 = vmatpush1.bf16.msra.mxu0 %v2244
        %6262 = vmatprep.subr.bf16.mxu0 0
        %6263 = vmatpush1.bf16.msra.mxu0 0
        %6264 = vmatprep.subr.bf16.mxu0 0
        %6265 = vmatpush1.bf16.msra.mxu0 0
        %6266 = vmatprep.subr.bf16.mxu0 0
        %6267 = vmatpush1.bf16.msra.mxu0 0
        %6268 = vmatprep.subr.bf16.mxu0 0
        %6269 = vmatpush1.bf16.msra.mxu0 0
        %6270 = vmatprep.subr.bf16.mxu0 0
        %6271 = vmatpush1.bf16.msra.mxu0 0
        %6272 = vmatprep.subr.bf16.mxu0 0
        %6273 = vmatpush1.bf16.msra.mxu0 0
        %6274 = vmatprep.subr.bf16.mxu0 0
        %6275 = vmatpush1.bf16.msra.mxu0 0
        %6276 = vmatprep.subr.bf16.mxu0 0
        %6277 = vmatpush1.bf16.msra.mxu0 0
        %6278 = vmatprep.mubr.bf16.mxu0 0
        %6279 = vmatmul.mubr.bf16.gmra.mrb[0].mxu0 %v6245
        %v6280 = vpop.f32.mrb[0].mxu0
        %v6281 = vadd.f32 %v2203, %v6280
        %v6282 = vpop.f32.mrb[0].mxu0
        %v6283 = vpop.f32.mrb[0].mxu0
        %v6284 = vadd.f32 %v2203, %v6283
        %v6285 = vpop.f32.mrb[0].mxu0
        %6286 = vdwg.mxu0
        %v6287 = vadd.f32 %v6281, %v6284
        %v6288 = vrot.slane %v6287, 4
        %v6289 = vadd.f32 %v6287, %v6288
        %v6290 = vrot.slane %v6289, 2
        %v6291 = vadd.f32 %v6289, %v6290
        %v6292 = vrot.slane %v6291, 1
        %v6293 = vadd.f32 %v6291, %v6292
        %v6294 = vmul.f32 %v6293, %v754
        %vm6295 = vcmask 1040384
        %v6296 = vsel %vm6295, %v2301, %v3632
        %vm6297 = vcmask 1041408
        %v6298 = vsel %vm6297, %v6296, %v4963
        %vm6299 = vcmask 1042432
        %v6300 = vsel %vm6299, %v6298, %v6294
        %6301 = vst [vmem:[%s340] sm:$0xf] %v6300
        %s6302 = sand.u32 %s171, 1
        %s6303 = scalar_lea.sflag [#allocation4], %s6302
        %s6304 = sand.u32 %s171, 1
        %s6305 = smul.addr %s6304, 4
        %s6306 = scalar_lea.vmem [#allocation10], %s6305
        // Predicated region
        $region61: #{resnet_gcn_forward.1} parent=43 // pred_check
          %p6307 = pneg %p181
        $region62: #{resnet_gcn_forward.1} parent=43 // pred_check_branch
          %6309 = sbr.rel (%p6307) target = $region64
        $region63: #{resnet_gcn_forward.1} parent=43 // pred_region
          %s6311 = ssub.s32 64, 64
          %6312 = vsyncadd %s6303, %s6311
          %s6313 = smul.addr %s27, 64
          %s6314 = scalar_lea.hbm %s6, %s6313
          %s6316 = sshll.u32 %s6306, 4
          %s6317 = int_to_ptr.vmem [resolvable:$true] %s6316
          %6319 = dma.vmem_to_hbm [thread:$0]  %s6317, 64, %s6314, %s6303
        $region64: #{resnet_gcn_forward.1} parent=43 // pred_fallthru
          _
      $region44: #{resnet_gcn_forward.1} parent=5 // pred_fallthru
        _
      %p6320 = scmp.le.s32.totalorder 2, %s22
      // Predicated region
      $region65: #{resnet_gcn_forward.1} parent=5 // pred_check
        %p6321 = pneg %p6320
      $region66: #{resnet_gcn_forward.1} parent=5 // pred_check_branch
        %6323 = sbr.rel (%p6321) target = $region68
      $region67: #{resnet_gcn_forward.1} parent=5 // pred_region
        %s6324 = ssub.s32 %s22, 2
        // Predicated region
        $region69: #{resnet_gcn_forward.1} parent=67 // pred_check
          %p6325 = pneg %p187
        $region70: #{resnet_gcn_forward.1} parent=67 // pred_check_branch
          %6327 = sbr.rel (%p6325) target = $region72
        $region71: #{resnet_gcn_forward.1} parent=67 // pred_region
          %s6328 = sand.u32 %s172, 1
          %s6329 = scalar_lea.sflag [#allocation4], %s6328
          %s6330 = sand.u32 %s172, 1
          %s6331 = smul.addr %s6330, 4
          %s6332 = scalar_lea.vmem [#allocation10], %s6331
          %6333 = dma.done %s6329, 64
        $region72: #{resnet_gcn_forward.1} parent=67 // pred_fallthru
          _
      $region68: #{resnet_gcn_forward.1} parent=5 // pred_fallthru
        _
    $region6: #{resnet_gcn_forward.1} parent=1 // loop_footer
      %s26 = sadd.s32 1, %s22
    $region7: #{resnet_gcn_forward.1} parent=1 // loop_footer_branch
      %21 = sbr.rel target = $region3
    $region8: #{resnet_gcn_forward.1} parent=1 // loop_exit
      _
    %6334 = vsyncpa [#allocation3], 1
    %s6335 = scalar_lea.sflag [#allocation3], 1
    %6336 = vsyncpa %s6335, 1
    %6337 = vsyncpa [#allocation6], 1
    %s6338 = scalar_lea.sflag [#allocation6], 1
    %6339 = vsyncpa %s6338, 1
    %6340 = vsyncpa [#allocation9], 1
    %6341 = vsyncpa [#allocation4], 1
    %s6342 = scalar_lea.sflag [#allocation4], 1
    %6343 = vsyncpa %s6342, 1

</llo_original>
